<compile_context>
chip_gen: v7x
topology: tpu7x:2x2x1
jax: 0.10.0
libtpu: 0.0.40
codegen_flags: <defaults>
</compile_context>

<pallas_src>
import jax
import jax.numpy as jnp
from jax.experimental import pallas as pl
from jax.experimental.pallas import tpu as pltpu

# ---- module hyper-parameters (MetaGamma defaults, small test channel count) ----
C_IN = 4                        # c   (module input/output channels)
C_MID = 64                      # c_mid
K_ENC = 3                       # encoder conv kernel (padding 1)
K_UP = 5                        # reassembly kernel
KK = K_UP * K_UP                # 25 reassembly taps
SCALE = 2                       # upsample scale
N_SUB = SCALE * SCALE           # 4 sub-pixel positions
K_OUT = N_SUB * KK              # 100 encoder output channels
GROUP = 32                      # per-sub-pixel logit row stride (>= KK), 8-aligned
KO_PAD = N_SUB * GROUP          # 128: encoder channels zero-padded for lane density
PAD_X = K_UP // 2               # 2: original-resolution halo needed by the 5x5 taps
BN_EPS = 1e-5


# --------------------------------------------------------------------------
# Fused MetaGamma kernel (one grid step == one (batch, row-band) tile)
# --------------------------------------------------------------------------
def metagamma_kernel(xb_ref, mask_ref, wcT_ref, bcT_ref, weT_ref, beT_ref, o_ref):
    # xb_ref  : (1, 1, C_IN, (band+5)*Wp) x, channel-major, rows flattened with
    #                                      stride Wp=w+4, 2+3 row / 2+2 col halo
    # mask_ref: (1, 1, (band+3)*Wp)       1.0 where the comp pixel is a real
    #                                      (non zero-padding) pixel, else 0.0
    # wcT_ref : (C_MID, C_IN)             comp 1x1 weights, BN1 folded, transposed
    # bcT_ref : (C_MID, 1)                folded BN1 bias (column)
    # weT_ref : (9, KO_PAD, C_MID)        enc 3x3 weights per tap, BN2 folded,
    #                                      out-channel rows permuted to s*32 + k
    # beT_ref : (KO_PAD, 1)               folded / permuted BN2 bias (column)
    # o_ref   : (1, N_SUB*C_IN, band*Wp)  out rows s*C_IN + c, lanes = row*Wp+col
    lx = xb_ref.shape[3]
    lc = mask_ref.shape[2]
    mb = o_ref.shape[2]
    wp = (lx - lc) // 2                      # padded row stride = w + 4
    c = xb_ref.shape[2]
    c_mid = wcT_ref.shape[0]
    ko_pad = weT_ref.shape[1]

    xall = xb_ref[0, 0]                                          # (C_IN, LX)

    # ---- (1) comp = SiLU(BN(conv1x1(clamp(x,0,1)**1.0))), lane axis = pixels ---
    xin = jnp.clip(xall[:, wp:wp + lc], 0.0, 1.0)                # (C_IN, LC)
    pre = jnp.zeros((c_mid, lc), jnp.float32) + bcT_ref[...]
    for ci in range(c):                       # K=4 contraction: VPU broadcast-FMAs
        pre = pre + wcT_ref[:, ci:ci + 1] * xin[ci:ci + 1, :]
    comp = (pre * jax.nn.sigmoid(pre)) * mask_ref[0]             # (C_MID, LC)

    # ---- (2) encoder 3x3 conv (+folded BN): 9 accumulated MXU matmuls over ----
    #          lane-shifted windows of comp; logits already (channel, pixel).
    y = jnp.zeros((ko_pad, mb), jnp.float32) + beT_ref[...]
    for t in range(K_ENC * K_ENC):
        dy, dx = t // K_ENC, t % K_ENC
        off = dy * wp + dx + 1
        y = y + jnp.dot(weT_ref[t], comp[:, off:off + mb],
                        preferred_element_type=jnp.float32)      # (KO_PAD, MB)

    # ---- (3) per-sub-pixel softmax over the 25 logit rows ---------------------
    ps = []
    for s in range(N_SUB):
        lg = y[s * GROUP:s * GROUP + KK, :]                      # (25, MB)
        mx = jnp.max(lg, axis=0, keepdims=True)
        e = jnp.exp(lg - mx)
        inv = pl.reciprocal(jnp.sum(e, axis=0, keepdims=True), approx=False)
        ps.append(e * inv)

    # ---- (4) CARAFE reassembly: 25 lane-shifted x windows, broadcast FMAs; ----
    #          each tap slice is read once and reused by all 4 sub-pixels.
    accs = [jnp.zeros((c, mb), jnp.float32) for _ in range(N_SUB)]
    for k in range(KK):
        ky, kx = k // K_UP, k % K_UP
        tap = xall[:, ky * wp + kx:ky * wp + kx + mb]            # (C_IN, MB) raw x
        for s in range(N_SUB):
            accs[s] = accs[s] + ps[s][k:k + 1, :] * tap
    for s in range(N_SUB):
        o_ref[0, s * c:(s + 1) * c, :] = accs[s]


# --------------------------------------------------------------------------
# Wrapper: NCHW in / NCHW out, one fused pallas_call, grid = (batch, row-band)
# --------------------------------------------------------------------------
@jax.jit
def meta_gamma_forward(x_nchw, packed):
    b, c, h, w = x_nchw.shape
    wp = w + 2 * PAD_X                        # common padded row stride
    band = h if h <= 32 else 32               # output rows per grid step
    if h % band != 0 or (band != h and (band * wp) % 128 != 0):
        band = h                              # fall back to a single band
    n_bands = h // band
    lx = (band + 5) * wp                      # x block flat length (with halos)
    lc = (band + 3) * wp                      # comp flat length
    mb = band * wp                            # output lanes per band

    x = x_nchw.astype(jnp.float32)
    # channel-major; pad 2 rows top / 3 bottom (slice-overrun safety row),
    # 2 cols left / right.
    xpad = jnp.pad(x, ((0, 0), (0, 0), (PAD_X, PAD_X + 1), (PAD_X, PAD_X)))
    # halo-overlapped row bands, rows flattened with stride wp
    xb = jnp.stack([xpad[:, :, n * band:n * band + band + 5, :]
                    for n in range(n_bands)], axis=1)
    xb = xb.reshape(b, n_bands, c, lx)

    # per-band 0/1 mask marking real comp pixels (encoder-conv zero padding)
    er = jnp.arange(band + 3)[None, :, None]
    cx = jnp.arange(wp)[None, None, :]
    nb = jnp.arange(n_bands)[:, None, None]
    g_row = nb * band + er - 1
    valid = (g_row >= 0) & (g_row < h) & (cx >= PAD_X) & (cx < w + PAD_X)
    mask = valid.astype(jnp.float32).reshape(n_bands, 1, lc)

    out = pl.pallas_call(
        metagamma_kernel,
        grid=(b, n_bands),
        in_specs=[
            pl.BlockSpec((1, 1, c, lx), lambda bi, ni: (bi, ni, 0, 0)),
            pl.BlockSpec((1, 1, lc), lambda bi, ni: (ni, 0, 0)),
            pl.BlockSpec((C_MID, C_IN), lambda bi, ni: (0, 0)),
            pl.BlockSpec((C_MID, 1), lambda bi, ni: (0, 0)),
            pl.BlockSpec((K_ENC * K_ENC, KO_PAD, C_MID), lambda bi, ni: (0, 0, 0)),
            pl.BlockSpec((KO_PAD, 1), lambda bi, ni: (0, 0)),
        ],
        out_specs=pl.BlockSpec((1, N_SUB * C_IN, mb), lambda bi, ni: (bi, 0, ni)),
        out_shape=jax.ShapeDtypeStruct((b, N_SUB * C_IN, h * wp), jnp.float32),
        compiler_params=pltpu.CompilerParams(
            dimension_semantics=("parallel", "parallel"),
            vmem_limit_bytes=64 * 1024 * 1024),
    )(xb, mask, packed["wcT"], packed["bcT"], packed["weT"], packed["beT"])

    # (b, 16, h*wp) -> drop padding cols -> NCHW (b, c, 2h, 2w); s = dy*2 + dx
    out = out.reshape(b, N_SUB, c, h, wp)[:, :, :, :, :w]
    out = out.reshape(b, SCALE, SCALE, c, h, w)
    out = jnp.transpose(out, (0, 3, 4, 1, 5, 2)).reshape(
        b, c, h * SCALE, w * SCALE)
    return out


# --------------------------------------------------------------------------
# Deterministic raw parameters (synthetic init, eval-mode BatchNorm stats)
# --------------------------------------------------------------------------
def make_params(key):
    ks = jax.random.split(key, 10)
    w_comp = 0.1 * jax.random.normal(ks[0], (C_IN, C_MID), jnp.float32)
    g1 = 0.5 + jax.random.uniform(ks[1], (C_MID,), jnp.float32)
    b1 = 0.1 * jax.random.normal(ks[2], (C_MID,), jnp.float32)
    m1 = 0.1 * jax.random.normal(ks[3], (C_MID,), jnp.float32)
    v1 = 0.5 + jax.random.uniform(ks[4], (C_MID,), jnp.float32)
    w_enc = (1.0 / (K_ENC * K_ENC * C_MID) ** 0.5) * jax.random.normal(
        ks[5], (K_ENC, K_ENC, C_MID, K_OUT), jnp.float32)
    g2 = 0.5 + jax.random.uniform(ks[6], (K_OUT,), jnp.float32)
    b2 = 0.1 * jax.random.normal(ks[7], (K_OUT,), jnp.float32)
    m2 = 0.1 * jax.random.normal(ks[8], (K_OUT,), jnp.float32)
    v2 = 0.5 + jax.random.uniform(ks[9], (K_OUT,), jnp.float32)
    return dict(w_comp=w_comp, g1=g1, b1=b1, m1=m1, v1=v1,
                w_enc=w_enc, g2=g2, b2=b2, m2=m2, v2=v2)


# --------------------------------------------------------------------------
# Fold eval-mode BN, transpose / permute / pad the weights into kernel layout
# --------------------------------------------------------------------------
def pack_params(raw):
    s1 = raw["g1"] / jnp.sqrt(raw["v1"] + BN_EPS)
    wcT = (raw["w_comp"] * s1[None, :]).T                     # (C_MID, C_IN)
    bcT = (raw["b1"] - raw["m1"] * s1)[:, None]               # (C_MID, 1)

    s2 = raw["g2"] / jnp.sqrt(raw["v2"] + BN_EPS)
    t2 = raw["b2"] - raw["m2"] * s2                           # (K_OUT,)
    wfs = raw["w_enc"] * s2[None, None, None, :]              # (3,3,64,100)
    wt = jnp.transpose(wfs, (0, 1, 3, 2)).reshape(
        K_ENC * K_ENC, K_OUT, C_MID)                          # [t, ko, cm]

    # row permutation: original enc channel ko = k*4 + s  ->  s*GROUP + k
    s_ar = jnp.arange(N_SUB)
    k_ar = jnp.arange(KK)
    new_rows = (s_ar[:, None] * GROUP + k_ar[None, :]).reshape(-1)
    old_rows = (k_ar[None, :] * N_SUB + s_ar[:, None]).reshape(-1)
    weT = jnp.zeros((K_ENC * K_ENC, KO_PAD, C_MID), jnp.float32)
    weT = weT.at[:, new_rows, :].set(wt[:, old_rows, :])
    beT = jnp.zeros((KO_PAD, 1), jnp.float32).at[new_rows, 0].set(t2[old_rows])
    return dict(wcT=wcT, bcT=bcT, weT=weT, beT=beT)


# --------------------------------------------------------------------------
# Pure-JAX reference of the module's math (sanity check)
# --------------------------------------------------------------------------
def reference_forward(x_nchw, raw):
    b, c, h, w = x_nchw.shape
    h_, w_ = h * SCALE, w * SCALE
    x = x_nchw.astype(jnp.float32)

    # comp: clamp + pow(1.0) + 1x1 conv + BN + SiLU (exact f32 elementwise)
    s1 = raw["g1"] / jnp.sqrt(raw["v1"] + BN_EPS)
    t1 = raw["b1"] - raw["m1"] * s1
    wc = raw["w_comp"] * s1[None, :]
    xc = jnp.clip(x, 0.0, 1.0)
    comp = jnp.zeros((b, h, w, C_MID), jnp.float32) + t1
    for ci in range(c):
        comp = comp + xc[:, ci, :, :, None] * wc[ci]
    comp = comp * jax.nn.sigmoid(comp)                         # (b, h, w, C_MID)

    # enc: 3x3 conv, padding=1, no activation, BN folded
    s2 = raw["g2"] / jnp.sqrt(raw["v2"] + BN_EPS)
    t2 = raw["b2"] - raw["m2"] * s2
    enc = jax.lax.conv_general_dilated(
        comp, raw["w_enc"], (1, 1), ((1, 1), (1, 1)),
        dimension_numbers=("NHWC", "HWIO", "NHWC"))
    enc = enc * s2 + t2                                        # (b, h, w, 100)

    # PixelShuffle(2) + softmax over the 25 reassembly weights
    Wl = enc.reshape(b, h, w, KK, SCALE, SCALE)
    Wl = jnp.transpose(Wl, (0, 1, 4, 2, 5, 3)).reshape(b, h_, w_, KK)
    P = jax.nn.softmax(Wl, axis=-1)

    # nearest upsample + Unfold(5, dilation=2, padding=4) + einsum
    x_nhwc = jnp.transpose(x, (0, 2, 3, 1))
    x_up = jnp.repeat(jnp.repeat(x_nhwc, SCALE, axis=1), SCALE, axis=2)
    p4 = (K_UP // 2) * SCALE
    xpd = jnp.pad(x_up, ((0, 0), (p4, p4), (p4, p4), (0, 0)))
    out = jnp.zeros((b, h_, w_, c), jnp.float32)
    for ky in range(K_UP):
        for kx in range(K_UP):
            k = ky * K_UP + kx
            out = out + P[..., k:k + 1] * xpd[:, ky * SCALE:ky * SCALE + h_,
                                              kx * SCALE:kx * SCALE + w_, :]
    return jnp.transpose(out, (0, 3, 1, 2))


if __name__ == "__main__":
    key = jax.random.PRNGKey(0)
    kx_, kp_ = jax.random.split(key)

    b, h, w = 2, 16, 16
    x = jax.random.normal(kx_, (b, C_IN, h, w), jnp.float32)   # NCHW like PyTorch
    raw = make_params(kp_)
    packed = pack_params(raw)

    out = meta_gamma_forward(x, packed)
    out = jax.block_until_ready(out)
    assert out.shape == (b, C_IN, h * SCALE, w * SCALE), out.shape

    ref = reference_forward(x, raw)
    err = float(jnp.max(jnp.abs(out - ref)))
    assert jnp.allclose(out, ref, atol=1e-4, rtol=1e-4), err

    print("KERNEL_OK")
</pallas_src>

<mosaic_0001>
module attributes {stable_mosaic.version = 11 : i64} {
  func.func @metagamma_kernel(%arg0: i32, %arg1: i32, %arg2: memref<1x1x4x420xf32, #tpu.memory_space<vmem>>, %arg3: memref<1x1x380xf32, #tpu.memory_space<vmem>>, %arg4: memref<64x4xf32, #tpu.memory_space<vmem>>, %arg5: memref<64x1xf32, #tpu.memory_space<vmem>>, %arg6: memref<9x128x64xf32, #tpu.memory_space<vmem>>, %arg7: memref<128x1xf32, #tpu.memory_space<vmem>>, %arg8: memref<1x16x320xf32, #tpu.memory_space<vmem>>) attributes {dimension_semantics = [#tpu.dimension_semantics<parallel>, #tpu.dimension_semantics<parallel>], iteration_bounds = array<i64: 2, 1>, scalar_prefetch = 0 : i64, scratch_operands = 0 : i64, tpu.core_type = #tpu.core_type<tc>, window_params = [{transform_indices = @transform_0, window_bounds = array<i64: 1, 1, 4, 420>}, {transform_indices = @transform_1, window_bounds = array<i64: 1, 1, 380>}, {pipeline_mode = #tpu.pipeline_mode<synchronous>, transform_indices = @transform_2, window_bounds = array<i64: 64, 4>}, {pipeline_mode = #tpu.pipeline_mode<synchronous>, transform_indices = @transform_3, window_bounds = array<i64: 64, 1>}, {pipeline_mode = #tpu.pipeline_mode<synchronous>, transform_indices = @transform_4, window_bounds = array<i64: 9, 128, 64>}, {pipeline_mode = #tpu.pipeline_mode<synchronous>, transform_indices = @transform_5, window_bounds = array<i64: 128, 1>}, {transform_indices = @transform_6, window_bounds = array<i64: 1, 16, 320>}]} {
    %c0 = arith.constant 0 : index
    %c0_0 = arith.constant 0 : index
    %c0_1 = arith.constant 0 : index
    %c0_2 = arith.constant 0 : index
    %0 = vector.load %arg2[%c0, %c0_0, %c0_1, %c0_2] : memref<1x1x4x420xf32, #tpu.memory_space<vmem>>, vector<1x1x4x420xf32>
    %1 = vector.shape_cast %0 : vector<1x1x4x420xf32> to vector<4x420xf32>
    %2 = vector.extract_strided_slice %1 {offsets = [0, 20], sizes = [4, 380], strides = [1, 1]} : vector<4x420xf32> to vector<4x380xf32>
    %cst = arith.constant 0.000000e+00 : f32
    %cst_3 = arith.constant 1.000000e+00 : f32
    %3 = vector.broadcast %cst : f32 to vector<4x380xf32>
    %4 = arith.maximumf %3, %2 : vector<4x380xf32>
    %5 = vector.broadcast %cst_3 : f32 to vector<4x380xf32>
    %6 = arith.minimumf %5, %4 : vector<4x380xf32>
    %cst_4 = arith.constant 0.000000e+00 : f32
    %7 = vector.broadcast %cst_4 : f32 to vector<64x380xf32>
    %c0_5 = arith.constant 0 : index
    %c0_6 = arith.constant 0 : index
    %8 = vector.load %arg5[%c0_5, %c0_6] : memref<64x1xf32, #tpu.memory_space<vmem>>, vector<64x1xf32>
    %9 = vector.broadcast %8 : vector<64x1xf32> to vector<64x380xf32>
    %10 = arith.addf %7, %9 : vector<64x380xf32>
    %c0_7 = arith.constant 0 : index
    %c0_8 = arith.constant 0 : index
    %11 = vector.load %arg4[%c0_7, %c0_8] : memref<64x4xf32, #tpu.memory_space<vmem>>, vector<64x1xf32>
    %12 = vector.extract_strided_slice %6 {offsets = [0, 0], sizes = [1, 380], strides = [1, 1]} : vector<4x380xf32> to vector<1x380xf32>
    %13 = vector.broadcast %11 : vector<64x1xf32> to vector<64x380xf32>
    %14 = vector.broadcast %12 : vector<1x380xf32> to vector<64x380xf32>
    %15 = arith.mulf %13, %14 : vector<64x380xf32>
    %16 = arith.addf %10, %15 : vector<64x380xf32>
    %c0_9 = arith.constant 0 : index
    %c1 = arith.constant 1 : index
    %17 = vector.load %arg4[%c0_9, %c1] : memref<64x4xf32, #tpu.memory_space<vmem>>, vector<64x1xf32>
    %18 = vector.extract_strided_slice %6 {offsets = [1, 0], sizes = [1, 380], strides = [1, 1]} : vector<4x380xf32> to vector<1x380xf32>
    %19 = vector.broadcast %17 : vector<64x1xf32> to vector<64x380xf32>
    %20 = vector.broadcast %18 : vector<1x380xf32> to vector<64x380xf32>
    %21 = arith.mulf %19, %20 : vector<64x380xf32>
    %22 = arith.addf %16, %21 : vector<64x380xf32>
    %c0_10 = arith.constant 0 : index
    %c2 = arith.constant 2 : index
    %23 = vector.load %arg4[%c0_10, %c2] : memref<64x4xf32, #tpu.memory_space<vmem>>, vector<64x1xf32>
    %24 = vector.extract_strided_slice %6 {offsets = [2, 0], sizes = [1, 380], strides = [1, 1]} : vector<4x380xf32> to vector<1x380xf32>
    %25 = vector.broadcast %23 : vector<64x1xf32> to vector<64x380xf32>
    %26 = vector.broadcast %24 : vector<1x380xf32> to vector<64x380xf32>
    %27 = arith.mulf %25, %26 : vector<64x380xf32>
    %28 = arith.addf %22, %27 : vector<64x380xf32>
    %c0_11 = arith.constant 0 : index
    %c3 = arith.constant 3 : index
    %29 = vector.load %arg4[%c0_11, %c3] : memref<64x4xf32, #tpu.memory_space<vmem>>, vector<64x1xf32>
    %30 = vector.extract_strided_slice %6 {offsets = [3, 0], sizes = [1, 380], strides = [1, 1]} : vector<4x380xf32> to vector<1x380xf32>
    %31 = vector.broadcast %29 : vector<64x1xf32> to vector<64x380xf32>
    %32 = vector.broadcast %30 : vector<1x380xf32> to vector<64x380xf32>
    %33 = arith.mulf %31, %32 : vector<64x380xf32>
    %34 = arith.addf %28, %33 : vector<64x380xf32>
    %35 = arith.negf %34 : vector<64x380xf32>
    %36 = math.exp %35 : vector<64x380xf32>
    %cst_12 = arith.constant 1.000000e+00 : f32
    %37 = vector.broadcast %cst_12 : f32 to vector<64x380xf32>
    %38 = arith.addf %37, %36 : vector<64x380xf32>
    %39 = arith.divf %37, %38 : vector<64x380xf32>
    %40 = arith.mulf %34, %39 : vector<64x380xf32>
    %c0_13 = arith.constant 0 : index
    %c0_14 = arith.constant 0 : index
    %c0_15 = arith.constant 0 : index
    %41 = vector.load %arg3[%c0_13, %c0_14, %c0_15] : memref<1x1x380xf32, #tpu.memory_space<vmem>>, vector<1x1x380xf32>
    %42 = vector.shape_cast %41 : vector<1x1x380xf32> to vector<1x380xf32>
    %43 = vector.broadcast %42 : vector<1x380xf32> to vector<64x380xf32>
    %44 = arith.mulf %40, %43 : vector<64x380xf32>
    %cst_16 = arith.constant 0.000000e+00 : f32
    %45 = vector.broadcast %cst_16 : f32 to vector<128x320xf32>
    %c0_17 = arith.constant 0 : index
    %c0_18 = arith.constant 0 : index
    %46 = vector.load %arg7[%c0_17, %c0_18] : memref<128x1xf32, #tpu.memory_space<vmem>>, vector<128x1xf32>
    %47 = vector.broadcast %46 : vector<128x1xf32> to vector<128x320xf32>
    %48 = arith.addf %45, %47 : vector<128x320xf32>
    %c0_19 = arith.constant 0 : index
    %c0_20 = arith.constant 0 : index
    %c0_21 = arith.constant 0 : index
    %49 = vector.load %arg6[%c0_19, %c0_20, %c0_21] : memref<9x128x64xf32, #tpu.memory_space<vmem>>, vector<1x128x64xf32>
    %50 = vector.shape_cast %49 : vector<1x128x64xf32> to vector<128x64xf32>
    %51 = vector.extract_strided_slice %44 {offsets = [0, 1], sizes = [64, 320], strides = [1, 1]} : vector<64x380xf32> to vector<64x320xf32>
    %cst_22 = arith.constant dense<0.000000e+00> : vector<128x320xf32>
    %52 = tpu.matmul %50, %51, %cst_22 {dimension_numbers = #tpu.dot_dimension_numbers<[1], [0], [0], [1], [0, 0, 1, 1], [], []>} : vector<128x64xf32>, vector<64x320xf32>, vector<128x320xf32> -> vector<128x320xf32>
    %53 = arith.addf %48, %52 : vector<128x320xf32>
    %c1_23 = arith.constant 1 : index
    %c0_24 = arith.constant 0 : index
    %c0_25 = arith.constant 0 : index
    %54 = vector.load %arg6[%c1_23, %c0_24, %c0_25] : memref<9x128x64xf32, #tpu.memory_space<vmem>>, vector<1x128x64xf32>
    %55 = vector.shape_cast %54 : vector<1x128x64xf32> to vector<128x64xf32>
    %56 = vector.extract_strided_slice %44 {offsets = [0, 2], sizes = [64, 320], strides = [1, 1]} : vector<64x380xf32> to vector<64x320xf32>
    %cst_26 = arith.constant dense<0.000000e+00> : vector<128x320xf32>
    %57 = tpu.matmul %55, %56, %cst_26 {dimension_numbers = #tpu.dot_dimension_numbers<[1], [0], [0], [1], [0, 0, 1, 1], [], []>} : vector<128x64xf32>, vector<64x320xf32>, vector<128x320xf32> -> vector<128x320xf32>
    %58 = arith.addf %53, %57 : vector<128x320xf32>
    %c2_27 = arith.constant 2 : index
    %c0_28 = arith.constant 0 : index
    %c0_29 = arith.constant 0 : index
    %59 = vector.load %arg6[%c2_27, %c0_28, %c0_29] : memref<9x128x64xf32, #tpu.memory_space<vmem>>, vector<1x128x64xf32>
    %60 = vector.shape_cast %59 : vector<1x128x64xf32> to vector<128x64xf32>
    %61 = vector.extract_strided_slice %44 {offsets = [0, 3], sizes = [64, 320], strides = [1, 1]} : vector<64x380xf32> to vector<64x320xf32>
    %cst_30 = arith.constant dense<0.000000e+00> : vector<128x320xf32>
    %62 = tpu.matmul %60, %61, %cst_30 {dimension_numbers = #tpu.dot_dimension_numbers<[1], [0], [0], [1], [0, 0, 1, 1], [], []>} : vector<128x64xf32>, vector<64x320xf32>, vector<128x320xf32> -> vector<128x320xf32>
    %63 = arith.addf %58, %62 : vector<128x320xf32>
    %c3_31 = arith.constant 3 : index
    %c0_32 = arith.constant 0 : index
    %c0_33 = arith.constant 0 : index
    %64 = vector.load %arg6[%c3_31, %c0_32, %c0_33] : memref<9x128x64xf32, #tpu.memory_space<vmem>>, vector<1x128x64xf32>
    %65 = vector.shape_cast %64 : vector<1x128x64xf32> to vector<128x64xf32>
    %66 = vector.extract_strided_slice %44 {offsets = [0, 21], sizes = [64, 320], strides = [1, 1]} : vector<64x380xf32> to vector<64x320xf32>
    %cst_34 = arith.constant dense<0.000000e+00> : vector<128x320xf32>
    %67 = tpu.matmul %65, %66, %cst_34 {dimension_numbers = #tpu.dot_dimension_numbers<[1], [0], [0], [1], [0, 0, 1, 1], [], []>} : vector<128x64xf32>, vector<64x320xf32>, vector<128x320xf32> -> vector<128x320xf32>
    %68 = arith.addf %63, %67 : vector<128x320xf32>
    %c4 = arith.constant 4 : index
    %c0_35 = arith.constant 0 : index
    %c0_36 = arith.constant 0 : index
    %69 = vector.load %arg6[%c4, %c0_35, %c0_36] : memref<9x128x64xf32, #tpu.memory_space<vmem>>, vector<1x128x64xf32>
    %70 = vector.shape_cast %69 : vector<1x128x64xf32> to vector<128x64xf32>
    %71 = vector.extract_strided_slice %44 {offsets = [0, 22], sizes = [64, 320], strides = [1, 1]} : vector<64x380xf32> to vector<64x320xf32>
    %cst_37 = arith.constant dense<0.000000e+00> : vector<128x320xf32>
    %72 = tpu.matmul %70, %71, %cst_37 {dimension_numbers = #tpu.dot_dimension_numbers<[1], [0], [0], [1], [0, 0, 1, 1], [], []>} : vector<128x64xf32>, vector<64x320xf32>, vector<128x320xf32> -> vector<128x320xf32>
    %73 = arith.addf %68, %72 : vector<128x320xf32>
    %c5 = arith.constant 5 : index
    %c0_38 = arith.constant 0 : index
    %c0_39 = arith.constant 0 : index
    %74 = vector.load %arg6[%c5, %c0_38, %c0_39] : memref<9x128x64xf32, #tpu.memory_space<vmem>>, vector<1x128x64xf32>
    %75 = vector.shape_cast %74 : vector<1x128x64xf32> to vector<128x64xf32>
    %76 = vector.extract_strided_slice %44 {offsets = [0, 23], sizes = [64, 320], strides = [1, 1]} : vector<64x380xf32> to vector<64x320xf32>
    %cst_40 = arith.constant dense<0.000000e+00> : vector<128x320xf32>
    %77 = tpu.matmul %75, %76, %cst_40 {dimension_numbers = #tpu.dot_dimension_numbers<[1], [0], [0], [1], [0, 0, 1, 1], [], []>} : vector<128x64xf32>, vector<64x320xf32>, vector<128x320xf32> -> vector<128x320xf32>
    %78 = arith.addf %73, %77 : vector<128x320xf32>
    %c6 = arith.constant 6 : index
    %c0_41 = arith.constant 0 : index
    %c0_42 = arith.constant 0 : index
    %79 = vector.load %arg6[%c6, %c0_41, %c0_42] : memref<9x128x64xf32, #tpu.memory_space<vmem>>, vector<1x128x64xf32>
    %80 = vector.shape_cast %79 : vector<1x128x64xf32> to vector<128x64xf32>
    %81 = vector.extract_strided_slice %44 {offsets = [0, 41], sizes = [64, 320], strides = [1, 1]} : vector<64x380xf32> to vector<64x320xf32>
    %cst_43 = arith.constant dense<0.000000e+00> : vector<128x320xf32>
    %82 = tpu.matmul %80, %81, %cst_43 {dimension_numbers = #tpu.dot_dimension_numbers<[1], [0], [0], [1], [0, 0, 1, 1], [], []>} : vector<128x64xf32>, vector<64x320xf32>, vector<128x320xf32> -> vector<128x320xf32>
    %83 = arith.addf %78, %82 : vector<128x320xf32>
    %c7 = arith.constant 7 : index
    %c0_44 = arith.constant 0 : index
    %c0_45 = arith.constant 0 : index
    %84 = vector.load %arg6[%c7, %c0_44, %c0_45] : memref<9x128x64xf32, #tpu.memory_space<vmem>>, vector<1x128x64xf32>
    %85 = vector.shape_cast %84 : vector<1x128x64xf32> to vector<128x64xf32>
    %86 = vector.extract_strided_slice %44 {offsets = [0, 42], sizes = [64, 320], strides = [1, 1]} : vector<64x380xf32> to vector<64x320xf32>
    %cst_46 = arith.constant dense<0.000000e+00> : vector<128x320xf32>
    %87 = tpu.matmul %85, %86, %cst_46 {dimension_numbers = #tpu.dot_dimension_numbers<[1], [0], [0], [1], [0, 0, 1, 1], [], []>} : vector<128x64xf32>, vector<64x320xf32>, vector<128x320xf32> -> vector<128x320xf32>
    %88 = arith.addf %83, %87 : vector<128x320xf32>
    %c8 = arith.constant 8 : index
    %c0_47 = arith.constant 0 : index
    %c0_48 = arith.constant 0 : index
    %89 = vector.load %arg6[%c8, %c0_47, %c0_48] : memref<9x128x64xf32, #tpu.memory_space<vmem>>, vector<1x128x64xf32>
    %90 = vector.shape_cast %89 : vector<1x128x64xf32> to vector<128x64xf32>
    %91 = vector.extract_strided_slice %44 {offsets = [0, 43], sizes = [64, 320], strides = [1, 1]} : vector<64x380xf32> to vector<64x320xf32>
    %cst_49 = arith.constant dense<0.000000e+00> : vector<128x320xf32>
    %92 = tpu.matmul %90, %91, %cst_49 {dimension_numbers = #tpu.dot_dimension_numbers<[1], [0], [0], [1], [0, 0, 1, 1], [], []>} : vector<128x64xf32>, vector<64x320xf32>, vector<128x320xf32> -> vector<128x320xf32>
    %93 = arith.addf %88, %92 : vector<128x320xf32>
    %94 = vector.extract_strided_slice %93 {offsets = [0, 0], sizes = [25, 320], strides = [1, 1]} : vector<128x320xf32> to vector<25x320xf32>
    %cst_50 = arith.constant dense<0xFF800000> : vector<320xf32>
    %95 = vector.multi_reduction <maximumf>, %94, %cst_50 [0] : vector<25x320xf32> to vector<320xf32>
    %96 = vector.shape_cast %95 : vector<320xf32> to vector<1x320xf32>
    %97 = vector.broadcast %96 : vector<1x320xf32> to vector<25x320xf32>
    %98 = arith.subf %94, %97 : vector<25x320xf32>
    %99 = math.exp %98 : vector<25x320xf32>
    %cst_51 = arith.constant dense<0.000000e+00> : vector<320xf32>
    %100 = vector.multi_reduction <add>, %99, %cst_51 [0] : vector<25x320xf32> to vector<320xf32>
    %101 = vector.shape_cast %100 : vector<320xf32> to vector<1x320xf32>
    %102 = tpu.reciprocal %101 : vector<1x320xf32> -> vector<1x320xf32>
    %103 = vector.broadcast %102 : vector<1x320xf32> to vector<25x320xf32>
    %104 = arith.mulf %99, %103 : vector<25x320xf32>
    %105 = vector.extract_strided_slice %93 {offsets = [32, 0], sizes = [25, 320], strides = [1, 1]} : vector<128x320xf32> to vector<25x320xf32>
    %cst_52 = arith.constant dense<0xFF800000> : vector<320xf32>
    %106 = vector.multi_reduction <maximumf>, %105, %cst_52 [0] : vector<25x320xf32> to vector<320xf32>
    %107 = vector.shape_cast %106 : vector<320xf32> to vector<1x320xf32>
    %108 = vector.broadcast %107 : vector<1x320xf32> to vector<25x320xf32>
    %109 = arith.subf %105, %108 : vector<25x320xf32>
    %110 = math.exp %109 : vector<25x320xf32>
    %cst_53 = arith.constant dense<0.000000e+00> : vector<320xf32>
    %111 = vector.multi_reduction <add>, %110, %cst_53 [0] : vector<25x320xf32> to vector<320xf32>
    %112 = vector.shape_cast %111 : vector<320xf32> to vector<1x320xf32>
    %113 = tpu.reciprocal %112 : vector<1x320xf32> -> vector<1x320xf32>
    %114 = vector.broadcast %113 : vector<1x320xf32> to vector<25x320xf32>
    %115 = arith.mulf %110, %114 : vector<25x320xf32>
    %116 = vector.extract_strided_slice %93 {offsets = [64, 0], sizes = [25, 320], strides = [1, 1]} : vector<128x320xf32> to vector<25x320xf32>
    %cst_54 = arith.constant dense<0xFF800000> : vector<320xf32>
    %117 = vector.multi_reduction <maximumf>, %116, %cst_54 [0] : vector<25x320xf32> to vector<320xf32>
    %118 = vector.shape_cast %117 : vector<320xf32> to vector<1x320xf32>
    %119 = vector.broadcast %118 : vector<1x320xf32> to vector<25x320xf32>
    %120 = arith.subf %116, %119 : vector<25x320xf32>
    %121 = math.exp %120 : vector<25x320xf32>
    %cst_55 = arith.constant dense<0.000000e+00> : vector<320xf32>
    %122 = vector.multi_reduction <add>, %121, %cst_55 [0] : vector<25x320xf32> to vector<320xf32>
    %123 = vector.shape_cast %122 : vector<320xf32> to vector<1x320xf32>
    %124 = tpu.reciprocal %123 : vector<1x320xf32> -> vector<1x320xf32>
    %125 = vector.broadcast %124 : vector<1x320xf32> to vector<25x320xf32>
    %126 = arith.mulf %121, %125 : vector<25x320xf32>
    %127 = vector.extract_strided_slice %93 {offsets = [96, 0], sizes = [25, 320], strides = [1, 1]} : vector<128x320xf32> to vector<25x320xf32>
    %cst_56 = arith.constant dense<0xFF800000> : vector<320xf32>
    %128 = vector.multi_reduction <maximumf>, %127, %cst_56 [0] : vector<25x320xf32> to vector<320xf32>
    %129 = vector.shape_cast %128 : vector<320xf32> to vector<1x320xf32>
    %130 = vector.broadcast %129 : vector<1x320xf32> to vector<25x320xf32>
    %131 = arith.subf %127, %130 : vector<25x320xf32>
    %132 = math.exp %131 : vector<25x320xf32>
    %cst_57 = arith.constant dense<0.000000e+00> : vector<320xf32>
    %133 = vector.multi_reduction <add>, %132, %cst_57 [0] : vector<25x320xf32> to vector<320xf32>
    %134 = vector.shape_cast %133 : vector<320xf32> to vector<1x320xf32>
    %135 = tpu.reciprocal %134 : vector<1x320xf32> -> vector<1x320xf32>
    %136 = vector.broadcast %135 : vector<1x320xf32> to vector<25x320xf32>
    %137 = arith.mulf %132, %136 : vector<25x320xf32>
    %cst_58 = arith.constant 0.000000e+00 : f32
    %138 = vector.broadcast %cst_58 : f32 to vector<4x320xf32>
    %cst_59 = arith.constant 0.000000e+00 : f32
    %139 = vector.broadcast %cst_59 : f32 to vector<4x320xf32>
    %cst_60 = arith.constant 0.000000e+00 : f32
    %140 = vector.broadcast %cst_60 : f32 to vector<4x320xf32>
    %cst_61 = arith.constant 0.000000e+00 : f32
    %141 = vector.broadcast %cst_61 : f32 to vector<4x320xf32>
    %142 = vector.extract_strided_slice %1 {offsets = [0, 0], sizes = [4, 320], strides = [1, 1]} : vector<4x420xf32> to vector<4x320xf32>
    %143 = vector.extract_strided_slice %104 {offsets = [0, 0], sizes = [1, 320], strides = [1, 1]} : vector<25x320xf32> to vector<1x320xf32>
    %144 = vector.broadcast %143 : vector<1x320xf32> to vector<4x320xf32>
    %145 = arith.mulf %144, %142 : vector<4x320xf32>
    %146 = arith.addf %138, %145 : vector<4x320xf32>
    %147 = vector.extract_strided_slice %115 {offsets = [0, 0], sizes = [1, 320], strides = [1, 1]} : vector<25x320xf32> to vector<1x320xf32>
    %148 = vector.broadcast %147 : vector<1x320xf32> to vector<4x320xf32>
    %149 = arith.mulf %148, %142 : vector<4x320xf32>
    %150 = arith.addf %139, %149 : vector<4x320xf32>
    %151 = vector.extract_strided_slice %126 {offsets = [0, 0], sizes = [1, 320], strides = [1, 1]} : vector<25x320xf32> to vector<1x320xf32>
    %152 = vector.broadcast %151 : vector<1x320xf32> to vector<4x320xf32>
    %153 = arith.mulf %152, %142 : vector<4x320xf32>
    %154 = arith.addf %140, %153 : vector<4x320xf32>
    %155 = vector.extract_strided_slice %137 {offsets = [0, 0], sizes = [1, 320], strides = [1, 1]} : vector<25x320xf32> to vector<1x320xf32>
    %156 = vector.broadcast %155 : vector<1x320xf32> to vector<4x320xf32>
    %157 = arith.mulf %156, %142 : vector<4x320xf32>
    %158 = arith.addf %141, %157 : vector<4x320xf32>
    %159 = vector.extract_strided_slice %1 {offsets = [0, 1], sizes = [4, 320], strides = [1, 1]} : vector<4x420xf32> to vector<4x320xf32>
    %160 = vector.extract_strided_slice %104 {offsets = [1, 0], sizes = [1, 320], strides = [1, 1]} : vector<25x320xf32> to vector<1x320xf32>
    %161 = vector.broadcast %160 : vector<1x320xf32> to vector<4x320xf32>
    %162 = arith.mulf %161, %159 : vector<4x320xf32>
    %163 = arith.addf %146, %162 : vector<4x320xf32>
    %164 = vector.extract_strided_slice %115 {offsets = [1, 0], sizes = [1, 320], strides = [1, 1]} : vector<25x320xf32> to vector<1x320xf32>
    %165 = vector.broadcast %164 : vector<1x320xf32> to vector<4x320xf32>
    %166 = arith.mulf %165, %159 : vector<4x320xf32>
    %167 = arith.addf %150, %166 : vector<4x320xf32>
    %168 = vector.extract_strided_slice %126 {offsets = [1, 0], sizes = [1, 320], strides = [1, 1]} : vector<25x320xf32> to vector<1x320xf32>
    %169 = vector.broadcast %168 : vector<1x320xf32> to vector<4x320xf32>
    %170 = arith.mulf %169, %159 : vector<4x320xf32>
    %171 = arith.addf %154, %170 : vector<4x320xf32>
    %172 = vector.extract_strided_slice %137 {offsets = [1, 0], sizes = [1, 320], strides = [1, 1]} : vector<25x320xf32> to vector<1x320xf32>
    %173 = vector.broadcast %172 : vector<1x320xf32> to vector<4x320xf32>
    %174 = arith.mulf %173, %159 : vector<4x320xf32>
    %175 = arith.addf %158, %174 : vector<4x320xf32>
    %176 = vector.extract_strided_slice %1 {offsets = [0, 2], sizes = [4, 320], strides = [1, 1]} : vector<4x420xf32> to vector<4x320xf32>
    %177 = vector.extract_strided_slice %104 {offsets = [2, 0], sizes = [1, 320], strides = [1, 1]} : vector<25x320xf32> to vector<1x320xf32>
    %178 = vector.broadcast %177 : vector<1x320xf32> to vector<4x320xf32>
    %179 = arith.mulf %178, %176 : vector<4x320xf32>
    %180 = arith.addf %163, %179 : vector<4x320xf32>
    %181 = vector.extract_strided_slice %115 {offsets = [2, 0], sizes = [1, 320], strides = [1, 1]} : vector<25x320xf32> to vector<1x320xf32>
    %182 = vector.broadcast %181 : vector<1x320xf32> to vector<4x320xf32>
    %183 = arith.mulf %182, %176 : vector<4x320xf32>
    %184 = arith.addf %167, %183 : vector<4x320xf32>
    %185 = vector.extract_strided_slice %126 {offsets = [2, 0], sizes = [1, 320], strides = [1, 1]} : vector<25x320xf32> to vector<1x320xf32>
    %186 = vector.broadcast %185 : vector<1x320xf32> to vector<4x320xf32>
    %187 = arith.mulf %186, %176 : vector<4x320xf32>
    %188 = arith.addf %171, %187 : vector<4x320xf32>
    %189 = vector.extract_strided_slice %137 {offsets = [2, 0], sizes = [1, 320], strides = [1, 1]} : vector<25x320xf32> to vector<1x320xf32>
    %190 = vector.broadcast %189 : vector<1x320xf32> to vector<4x320xf32>
    %191 = arith.mulf %190, %176 : vector<4x320xf32>
    %192 = arith.addf %175, %191 : vector<4x320xf32>
    %193 = vector.extract_strided_slice %1 {offsets = [0, 3], sizes = [4, 320], strides = [1, 1]} : vector<4x420xf32> to vector<4x320xf32>
    %194 = vector.extract_strided_slice %104 {offsets = [3, 0], sizes = [1, 320], strides = [1, 1]} : vector<25x320xf32> to vector<1x320xf32>
    %195 = vector.broadcast %194 : vector<1x320xf32> to vector<4x320xf32>
    %196 = arith.mulf %195, %193 : vector<4x320xf32>
    %197 = arith.addf %180, %196 : vector<4x320xf32>
    %198 = vector.extract_strided_slice %115 {offsets = [3, 0], sizes = [1, 320], strides = [1, 1]} : vector<25x320xf32> to vector<1x320xf32>
    %199 = vector.broadcast %198 : vector<1x320xf32> to vector<4x320xf32>
    %200 = arith.mulf %199, %193 : vector<4x320xf32>
    %201 = arith.addf %184, %200 : vector<4x320xf32>
    %202 = vector.extract_strided_slice %126 {offsets = [3, 0], sizes = [1, 320], strides = [1, 1]} : vector<25x320xf32> to vector<1x320xf32>
    %203 = vector.broadcast %202 : vector<1x320xf32> to vector<4x320xf32>
    %204 = arith.mulf %203, %193 : vector<4x320xf32>
    %205 = arith.addf %188, %204 : vector<4x320xf32>
    %206 = vector.extract_strided_slice %137 {offsets = [3, 0], sizes = [1, 320], strides = [1, 1]} : vector<25x320xf32> to vector<1x320xf32>
    %207 = vector.broadcast %206 : vector<1x320xf32> to vector<4x320xf32>
    %208 = arith.mulf %207, %193 : vector<4x320xf32>
    %209 = arith.addf %192, %208 : vector<4x320xf32>
    %210 = vector.extract_strided_slice %1 {offsets = [0, 4], sizes = [4, 320], strides = [1, 1]} : vector<4x420xf32> to vector<4x320xf32>
    %211 = vector.extract_strided_slice %104 {offsets = [4, 0], sizes = [1, 320], strides = [1, 1]} : vector<25x320xf32> to vector<1x320xf32>
    %212 = vector.broadcast %211 : vector<1x320xf32> to vector<4x320xf32>
    %213 = arith.mulf %212, %210 : vector<4x320xf32>
    %214 = arith.addf %197, %213 : vector<4x320xf32>
    %215 = vector.extract_strided_slice %115 {offsets = [4, 0], sizes = [1, 320], strides = [1, 1]} : vector<25x320xf32> to vector<1x320xf32>
    %216 = vector.broadcast %215 : vector<1x320xf32> to vector<4x320xf32>
    %217 = arith.mulf %216, %210 : vector<4x320xf32>
    %218 = arith.addf %201, %217 : vector<4x320xf32>
    %219 = vector.extract_strided_slice %126 {offsets = [4, 0], sizes = [1, 320], strides = [1, 1]} : vector<25x320xf32> to vector<1x320xf32>
    %220 = vector.broadcast %219 : vector<1x320xf32> to vector<4x320xf32>
    %221 = arith.mulf %220, %210 : vector<4x320xf32>
    %222 = arith.addf %205, %221 : vector<4x320xf32>
    %223 = vector.extract_strided_slice %137 {offsets = [4, 0], sizes = [1, 320], strides = [1, 1]} : vector<25x320xf32> to vector<1x320xf32>
    %224 = vector.broadcast %223 : vector<1x320xf32> to vector<4x320xf32>
    %225 = arith.mulf %224, %210 : vector<4x320xf32>
    %226 = arith.addf %209, %225 : vector<4x320xf32>
    %227 = vector.extract_strided_slice %1 {offsets = [0, 20], sizes = [4, 320], strides = [1, 1]} : vector<4x420xf32> to vector<4x320xf32>
    %228 = vector.extract_strided_slice %104 {offsets = [5, 0], sizes = [1, 320], strides = [1, 1]} : vector<25x320xf32> to vector<1x320xf32>
    %229 = vector.broadcast %228 : vector<1x320xf32> to vector<4x320xf32>
    %230 = arith.mulf %229, %227 : vector<4x320xf32>
    %231 = arith.addf %214, %230 : vector<4x320xf32>
    %232 = vector.extract_strided_slice %115 {offsets = [5, 0], sizes = [1, 320], strides = [1, 1]} : vector<25x320xf32> to vector<1x320xf32>
    %233 = vector.broadcast %232 : vector<1x320xf32> to vector<4x320xf32>
    %234 = arith.mulf %233, %227 : vector<4x320xf32>
    %235 = arith.addf %218, %234 : vector<4x320xf32>
    %236 = vector.extract_strided_slice %126 {offsets = [5, 0], sizes = [1, 320], strides = [1, 1]} : vector<25x320xf32> to vector<1x320xf32>
    %237 = vector.broadcast %236 : vector<1x320xf32> to vector<4x320xf32>
    %238 = arith.mulf %237, %227 : vector<4x320xf32>
    %239 = arith.addf %222, %238 : vector<4x320xf32>
    %240 = vector.extract_strided_slice %137 {offsets = [5, 0], sizes = [1, 320], strides = [1, 1]} : vector<25x320xf32> to vector<1x320xf32>
    %241 = vector.broadcast %240 : vector<1x320xf32> to vector<4x320xf32>
    %242 = arith.mulf %241, %227 : vector<4x320xf32>
    %243 = arith.addf %226, %242 : vector<4x320xf32>
    %244 = vector.extract_strided_slice %1 {offsets = [0, 21], sizes = [4, 320], strides = [1, 1]} : vector<4x420xf32> to vector<4x320xf32>
    %245 = vector.extract_strided_slice %104 {offsets = [6, 0], sizes = [1, 320], strides = [1, 1]} : vector<25x320xf32> to vector<1x320xf32>
    %246 = vector.broadcast %245 : vector<1x320xf32> to vector<4x320xf32>
    %247 = arith.mulf %246, %244 : vector<4x320xf32>
    %248 = arith.addf %231, %247 : vector<4x320xf32>
    %249 = vector.extract_strided_slice %115 {offsets = [6, 0], sizes = [1, 320], strides = [1, 1]} : vector<25x320xf32> to vector<1x320xf32>
    %250 = vector.broadcast %249 : vector<1x320xf32> to vector<4x320xf32>
    %251 = arith.mulf %250, %244 : vector<4x320xf32>
    %252 = arith.addf %235, %251 : vector<4x320xf32>
    %253 = vector.extract_strided_slice %126 {offsets = [6, 0], sizes = [1, 320], strides = [1, 1]} : vector<25x320xf32> to vector<1x320xf32>
    %254 = vector.broadcast %253 : vector<1x320xf32> to vector<4x320xf32>
    %255 = arith.mulf %254, %244 : vector<4x320xf32>
    %256 = arith.addf %239, %255 : vector<4x320xf32>
    %257 = vector.extract_strided_slice %137 {offsets = [6, 0], sizes = [1, 320], strides = [1, 1]} : vector<25x320xf32> to vector<1x320xf32>
    %258 = vector.broadcast %257 : vector<1x320xf32> to vector<4x320xf32>
    %259 = arith.mulf %258, %244 : vector<4x320xf32>
    %260 = arith.addf %243, %259 : vector<4x320xf32>
    %261 = vector.extract_strided_slice %1 {offsets = [0, 22], sizes = [4, 320], strides = [1, 1]} : vector<4x420xf32> to vector<4x320xf32>
    %262 = vector.extract_strided_slice %104 {offsets = [7, 0], sizes = [1, 320], strides = [1, 1]} : vector<25x320xf32> to vector<1x320xf32>
    %263 = vector.broadcast %262 : vector<1x320xf32> to vector<4x320xf32>
    %264 = arith.mulf %263, %261 : vector<4x320xf32>
    %265 = arith.addf %248, %264 : vector<4x320xf32>
    %266 = vector.extract_strided_slice %115 {offsets = [7, 0], sizes = [1, 320], strides = [1, 1]} : vector<25x320xf32> to vector<1x320xf32>
    %267 = vector.broadcast %266 : vector<1x320xf32> to vector<4x320xf32>
    %268 = arith.mulf %267, %261 : vector<4x320xf32>
    %269 = arith.addf %252, %268 : vector<4x320xf32>
    %270 = vector.extract_strided_slice %126 {offsets = [7, 0], sizes = [1, 320], strides = [1, 1]} : vector<25x320xf32> to vector<1x320xf32>
    %271 = vector.broadcast %270 : vector<1x320xf32> to vector<4x320xf32>
    %272 = arith.mulf %271, %261 : vector<4x320xf32>
    %273 = arith.addf %256, %272 : vector<4x320xf32>
    %274 = vector.extract_strided_slice %137 {offsets = [7, 0], sizes = [1, 320], strides = [1, 1]} : vector<25x320xf32> to vector<1x320xf32>
    %275 = vector.broadcast %274 : vector<1x320xf32> to vector<4x320xf32>
    %276 = arith.mulf %275, %261 : vector<4x320xf32>
    %277 = arith.addf %260, %276 : vector<4x320xf32>
    %278 = vector.extract_strided_slice %1 {offsets = [0, 23], sizes = [4, 320], strides = [1, 1]} : vector<4x420xf32> to vector<4x320xf32>
    %279 = vector.extract_strided_slice %104 {offsets = [8, 0], sizes = [1, 320], strides = [1, 1]} : vector<25x320xf32> to vector<1x320xf32>
    %280 = vector.broadcast %279 : vector<1x320xf32> to vector<4x320xf32>
    %281 = arith.mulf %280, %278 : vector<4x320xf32>
    %282 = arith.addf %265, %281 : vector<4x320xf32>
    %283 = vector.extract_strided_slice %115 {offsets = [8, 0], sizes = [1, 320], strides = [1, 1]} : vector<25x320xf32> to vector<1x320xf32>
    %284 = vector.broadcast %283 : vector<1x320xf32> to vector<4x320xf32>
    %285 = arith.mulf %284, %278 : vector<4x320xf32>
    %286 = arith.addf %269, %285 : vector<4x320xf32>
    %287 = vector.extract_strided_slice %126 {offsets = [8, 0], sizes = [1, 320], strides = [1, 1]} : vector<25x320xf32> to vector<1x320xf32>
    %288 = vector.broadcast %287 : vector<1x320xf32> to vector<4x320xf32>
    %289 = arith.mulf %288, %278 : vector<4x320xf32>
    %290 = arith.addf %273, %289 : vector<4x320xf32>
    %291 = vector.extract_strided_slice %137 {offsets = [8, 0], sizes = [1, 320], strides = [1, 1]} : vector<25x320xf32> to vector<1x320xf32>
    %292 = vector.broadcast %291 : vector<1x320xf32> to vector<4x320xf32>
    %293 = arith.mulf %292, %278 : vector<4x320xf32>
    %294 = arith.addf %277, %293 : vector<4x320xf32>
    %295 = vector.extract_strided_slice %1 {offsets = [0, 24], sizes = [4, 320], strides = [1, 1]} : vector<4x420xf32> to vector<4x320xf32>
    %296 = vector.extract_strided_slice %104 {offsets = [9, 0], sizes = [1, 320], strides = [1, 1]} : vector<25x320xf32> to vector<1x320xf32>
    %297 = vector.broadcast %296 : vector<1x320xf32> to vector<4x320xf32>
    %298 = arith.mulf %297, %295 : vector<4x320xf32>
    %299 = arith.addf %282, %298 : vector<4x320xf32>
    %300 = vector.extract_strided_slice %115 {offsets = [9, 0], sizes = [1, 320], strides = [1, 1]} : vector<25x320xf32> to vector<1x320xf32>
    %301 = vector.broadcast %300 : vector<1x320xf32> to vector<4x320xf32>
    %302 = arith.mulf %301, %295 : vector<4x320xf32>
    %303 = arith.addf %286, %302 : vector<4x320xf32>
    %304 = vector.extract_strided_slice %126 {offsets = [9, 0], sizes = [1, 320], strides = [1, 1]} : vector<25x320xf32> to vector<1x320xf32>
    %305 = vector.broadcast %304 : vector<1x320xf32> to vector<4x320xf32>
    %306 = arith.mulf %305, %295 : vector<4x320xf32>
    %307 = arith.addf %290, %306 : vector<4x320xf32>
    %308 = vector.extract_strided_slice %137 {offsets = [9, 0], sizes = [1, 320], strides = [1, 1]} : vector<25x320xf32> to vector<1x320xf32>
    %309 = vector.broadcast %308 : vector<1x320xf32> to vector<4x320xf32>
    %310 = arith.mulf %309, %295 : vector<4x320xf32>
    %311 = arith.addf %294, %310 : vector<4x320xf32>
    %312 = vector.extract_strided_slice %1 {offsets = [0, 40], sizes = [4, 320], strides = [1, 1]} : vector<4x420xf32> to vector<4x320xf32>
    %313 = vector.extract_strided_slice %104 {offsets = [10, 0], sizes = [1, 320], strides = [1, 1]} : vector<25x320xf32> to vector<1x320xf32>
    %314 = vector.broadcast %313 : vector<1x320xf32> to vector<4x320xf32>
    %315 = arith.mulf %314, %312 : vector<4x320xf32>
    %316 = arith.addf %299, %315 : vector<4x320xf32>
    %317 = vector.extract_strided_slice %115 {offsets = [10, 0], sizes = [1, 320], strides = [1, 1]} : vector<25x320xf32> to vector<1x320xf32>
    %318 = vector.broadcast %317 : vector<1x320xf32> to vector<4x320xf32>
    %319 = arith.mulf %318, %312 : vector<4x320xf32>
    %320 = arith.addf %303, %319 : vector<4x320xf32>
    %321 = vector.extract_strided_slice %126 {offsets = [10, 0], sizes = [1, 320], strides = [1, 1]} : vector<25x320xf32> to vector<1x320xf32>
    %322 = vector.broadcast %321 : vector<1x320xf32> to vector<4x320xf32>
    %323 = arith.mulf %322, %312 : vector<4x320xf32>
    %324 = arith.addf %307, %323 : vector<4x320xf32>
    %325 = vector.extract_strided_slice %137 {offsets = [10, 0], sizes = [1, 320], strides = [1, 1]} : vector<25x320xf32> to vector<1x320xf32>
    %326 = vector.broadcast %325 : vector<1x320xf32> to vector<4x320xf32>
    %327 = arith.mulf %326, %312 : vector<4x320xf32>
    %328 = arith.addf %311, %327 : vector<4x320xf32>
    %329 = vector.extract_strided_slice %1 {offsets = [0, 41], sizes = [4, 320], strides = [1, 1]} : vector<4x420xf32> to vector<4x320xf32>
    %330 = vector.extract_strided_slice %104 {offsets = [11, 0], sizes = [1, 320], strides = [1, 1]} : vector<25x320xf32> to vector<1x320xf32>
    %331 = vector.broadcast %330 : vector<1x320xf32> to vector<4x320xf32>
    %332 = arith.mulf %331, %329 : vector<4x320xf32>
    %333 = arith.addf %316, %332 : vector<4x320xf32>
    %334 = vector.extract_strided_slice %115 {offsets = [11, 0], sizes = [1, 320], strides = [1, 1]} : vector<25x320xf32> to vector<1x320xf32>
    %335 = vector.broadcast %334 : vector<1x320xf32> to vector<4x320xf32>
    %336 = arith.mulf %335, %329 : vector<4x320xf32>
    %337 = arith.addf %320, %336 : vector<4x320xf32>
    %338 = vector.extract_strided_slice %126 {offsets = [11, 0], sizes = [1, 320], strides = [1, 1]} : vector<25x320xf32> to vector<1x320xf32>
    %339 = vector.broadcast %338 : vector<1x320xf32> to vector<4x320xf32>
    %340 = arith.mulf %339, %329 : vector<4x320xf32>
    %341 = arith.addf %324, %340 : vector<4x320xf32>
    %342 = vector.extract_strided_slice %137 {offsets = [11, 0], sizes = [1, 320], strides = [1, 1]} : vector<25x320xf32> to vector<1x320xf32>
    %343 = vector.broadcast %342 : vector<1x320xf32> to vector<4x320xf32>
    %344 = arith.mulf %343, %329 : vector<4x320xf32>
    %345 = arith.addf %328, %344 : vector<4x320xf32>
    %346 = vector.extract_strided_slice %1 {offsets = [0, 42], sizes = [4, 320], strides = [1, 1]} : vector<4x420xf32> to vector<4x320xf32>
    %347 = vector.extract_strided_slice %104 {offsets = [12, 0], sizes = [1, 320], strides = [1, 1]} : vector<25x320xf32> to vector<1x320xf32>
    %348 = vector.broadcast %347 : vector<1x320xf32> to vector<4x320xf32>
    %349 = arith.mulf %348, %346 : vector<4x320xf32>
    %350 = arith.addf %333, %349 : vector<4x320xf32>
    %351 = vector.extract_strided_slice %115 {offsets = [12, 0], sizes = [1, 320], strides = [1, 1]} : vector<25x320xf32> to vector<1x320xf32>
    %352 = vector.broadcast %351 : vector<1x320xf32> to vector<4x320xf32>
    %353 = arith.mulf %352, %346 : vector<4x320xf32>
    %354 = arith.addf %337, %353 : vector<4x320xf32>
    %355 = vector.extract_strided_slice %126 {offsets = [12, 0], sizes = [1, 320], strides = [1, 1]} : vector<25x320xf32> to vector<1x320xf32>
    %356 = vector.broadcast %355 : vector<1x320xf32> to vector<4x320xf32>
    %357 = arith.mulf %356, %346 : vector<4x320xf32>
    %358 = arith.addf %341, %357 : vector<4x320xf32>
    %359 = vector.extract_strided_slice %137 {offsets = [12, 0], sizes = [1, 320], strides = [1, 1]} : vector<25x320xf32> to vector<1x320xf32>
    %360 = vector.broadcast %359 : vector<1x320xf32> to vector<4x320xf32>
    %361 = arith.mulf %360, %346 : vector<4x320xf32>
    %362 = arith.addf %345, %361 : vector<4x320xf32>
    %363 = vector.extract_strided_slice %1 {offsets = [0, 43], sizes = [4, 320], strides = [1, 1]} : vector<4x420xf32> to vector<4x320xf32>
    %364 = vector.extract_strided_slice %104 {offsets = [13, 0], sizes = [1, 320], strides = [1, 1]} : vector<25x320xf32> to vector<1x320xf32>
    %365 = vector.broadcast %364 : vector<1x320xf32> to vector<4x320xf32>
    %366 = arith.mulf %365, %363 : vector<4x320xf32>
    %367 = arith.addf %350, %366 : vector<4x320xf32>
    %368 = vector.extract_strided_slice %115 {offsets = [13, 0], sizes = [1, 320], strides = [1, 1]} : vector<25x320xf32> to vector<1x320xf32>
    %369 = vector.broadcast %368 : vector<1x320xf32> to vector<4x320xf32>
    %370 = arith.mulf %369, %363 : vector<4x320xf32>
    %371 = arith.addf %354, %370 : vector<4x320xf32>
    %372 = vector.extract_strided_slice %126 {offsets = [13, 0], sizes = [1, 320], strides = [1, 1]} : vector<25x320xf32> to vector<1x320xf32>
    %373 = vector.broadcast %372 : vector<1x320xf32> to vector<4x320xf32>
    %374 = arith.mulf %373, %363 : vector<4x320xf32>
    %375 = arith.addf %358, %374 : vector<4x320xf32>
    %376 = vector.extract_strided_slice %137 {offsets = [13, 0], sizes = [1, 320], strides = [1, 1]} : vector<25x320xf32> to vector<1x320xf32>
    %377 = vector.broadcast %376 : vector<1x320xf32> to vector<4x320xf32>
    %378 = arith.mulf %377, %363 : vector<4x320xf32>
    %379 = arith.addf %362, %378 : vector<4x320xf32>
    %380 = vector.extract_strided_slice %1 {offsets = [0, 44], sizes = [4, 320], strides = [1, 1]} : vector<4x420xf32> to vector<4x320xf32>
    %381 = vector.extract_strided_slice %104 {offsets = [14, 0], sizes = [1, 320], strides = [1, 1]} : vector<25x320xf32> to vector<1x320xf32>
    %382 = vector.broadcast %381 : vector<1x320xf32> to vector<4x320xf32>
    %383 = arith.mulf %382, %380 : vector<4x320xf32>
    %384 = arith.addf %367, %383 : vector<4x320xf32>
    %385 = vector.extract_strided_slice %115 {offsets = [14, 0], sizes = [1, 320], strides = [1, 1]} : vector<25x320xf32> to vector<1x320xf32>
    %386 = vector.broadcast %385 : vector<1x320xf32> to vector<4x320xf32>
    %387 = arith.mulf %386, %380 : vector<4x320xf32>
    %388 = arith.addf %371, %387 : vector<4x320xf32>
    %389 = vector.extract_strided_slice %126 {offsets = [14, 0], sizes = [1, 320], strides = [1, 1]} : vector<25x320xf32> to vector<1x320xf32>
    %390 = vector.broadcast %389 : vector<1x320xf32> to vector<4x320xf32>
    %391 = arith.mulf %390, %380 : vector<4x320xf32>
    %392 = arith.addf %375, %391 : vector<4x320xf32>
    %393 = vector.extract_strided_slice %137 {offsets = [14, 0], sizes = [1, 320], strides = [1, 1]} : vector<25x320xf32> to vector<1x320xf32>
    %394 = vector.broadcast %393 : vector<1x320xf32> to vector<4x320xf32>
    %395 = arith.mulf %394, %380 : vector<4x320xf32>
    %396 = arith.addf %379, %395 : vector<4x320xf32>
    %397 = vector.extract_strided_slice %1 {offsets = [0, 60], sizes = [4, 320], strides = [1, 1]} : vector<4x420xf32> to vector<4x320xf32>
    %398 = vector.extract_strided_slice %104 {offsets = [15, 0], sizes = [1, 320], strides = [1, 1]} : vector<25x320xf32> to vector<1x320xf32>
    %399 = vector.broadcast %398 : vector<1x320xf32> to vector<4x320xf32>
    %400 = arith.mulf %399, %397 : vector<4x320xf32>
    %401 = arith.addf %384, %400 : vector<4x320xf32>
    %402 = vector.extract_strided_slice %115 {offsets = [15, 0], sizes = [1, 320], strides = [1, 1]} : vector<25x320xf32> to vector<1x320xf32>
    %403 = vector.broadcast %402 : vector<1x320xf32> to vector<4x320xf32>
    %404 = arith.mulf %403, %397 : vector<4x320xf32>
    %405 = arith.addf %388, %404 : vector<4x320xf32>
    %406 = vector.extract_strided_slice %126 {offsets = [15, 0], sizes = [1, 320], strides = [1, 1]} : vector<25x320xf32> to vector<1x320xf32>
    %407 = vector.broadcast %406 : vector<1x320xf32> to vector<4x320xf32>
    %408 = arith.mulf %407, %397 : vector<4x320xf32>
    %409 = arith.addf %392, %408 : vector<4x320xf32>
    %410 = vector.extract_strided_slice %137 {offsets = [15, 0], sizes = [1, 320], strides = [1, 1]} : vector<25x320xf32> to vector<1x320xf32>
    %411 = vector.broadcast %410 : vector<1x320xf32> to vector<4x320xf32>
    %412 = arith.mulf %411, %397 : vector<4x320xf32>
    %413 = arith.addf %396, %412 : vector<4x320xf32>
    %414 = vector.extract_strided_slice %1 {offsets = [0, 61], sizes = [4, 320], strides = [1, 1]} : vector<4x420xf32> to vector<4x320xf32>
    %415 = vector.extract_strided_slice %104 {offsets = [16, 0], sizes = [1, 320], strides = [1, 1]} : vector<25x320xf32> to vector<1x320xf32>
    %416 = vector.broadcast %415 : vector<1x320xf32> to vector<4x320xf32>
    %417 = arith.mulf %416, %414 : vector<4x320xf32>
    %418 = arith.addf %401, %417 : vector<4x320xf32>
    %419 = vector.extract_strided_slice %115 {offsets = [16, 0], sizes = [1, 320], strides = [1, 1]} : vector<25x320xf32> to vector<1x320xf32>
    %420 = vector.broadcast %419 : vector<1x320xf32> to vector<4x320xf32>
    %421 = arith.mulf %420, %414 : vector<4x320xf32>
    %422 = arith.addf %405, %421 : vector<4x320xf32>
    %423 = vector.extract_strided_slice %126 {offsets = [16, 0], sizes = [1, 320], strides = [1, 1]} : vector<25x320xf32> to vector<1x320xf32>
    %424 = vector.broadcast %423 : vector<1x320xf32> to vector<4x320xf32>
    %425 = arith.mulf %424, %414 : vector<4x320xf32>
    %426 = arith.addf %409, %425 : vector<4x320xf32>
    %427 = vector.extract_strided_slice %137 {offsets = [16, 0], sizes = [1, 320], strides = [1, 1]} : vector<25x320xf32> to vector<1x320xf32>
    %428 = vector.broadcast %427 : vector<1x320xf32> to vector<4x320xf32>
    %429 = arith.mulf %428, %414 : vector<4x320xf32>
    %430 = arith.addf %413, %429 : vector<4x320xf32>
    %431 = vector.extract_strided_slice %1 {offsets = [0, 62], sizes = [4, 320], strides = [1, 1]} : vector<4x420xf32> to vector<4x320xf32>
    %432 = vector.extract_strided_slice %104 {offsets = [17, 0], sizes = [1, 320], strides = [1, 1]} : vector<25x320xf32> to vector<1x320xf32>
    %433 = vector.broadcast %432 : vector<1x320xf32> to vector<4x320xf32>
    %434 = arith.mulf %433, %431 : vector<4x320xf32>
    %435 = arith.addf %418, %434 : vector<4x320xf32>
    %436 = vector.extract_strided_slice %115 {offsets = [17, 0], sizes = [1, 320], strides = [1, 1]} : vector<25x320xf32> to vector<1x320xf32>
    %437 = vector.broadcast %436 : vector<1x320xf32> to vector<4x320xf32>
    %438 = arith.mulf %437, %431 : vector<4x320xf32>
    %439 = arith.addf %422, %438 : vector<4x320xf32>
    %440 = vector.extract_strided_slice %126 {offsets = [17, 0], sizes = [1, 320], strides = [1, 1]} : vector<25x320xf32> to vector<1x320xf32>
    %441 = vector.broadcast %440 : vector<1x320xf32> to vector<4x320xf32>
    %442 = arith.mulf %441, %431 : vector<4x320xf32>
    %443 = arith.addf %426, %442 : vector<4x320xf32>
    %444 = vector.extract_strided_slice %137 {offsets = [17, 0], sizes = [1, 320], strides = [1, 1]} : vector<25x320xf32> to vector<1x320xf32>
    %445 = vector.broadcast %444 : vector<1x320xf32> to vector<4x320xf32>
    %446 = arith.mulf %445, %431 : vector<4x320xf32>
    %447 = arith.addf %430, %446 : vector<4x320xf32>
    %448 = vector.extract_strided_slice %1 {offsets = [0, 63], sizes = [4, 320], strides = [1, 1]} : vector<4x420xf32> to vector<4x320xf32>
    %449 = vector.extract_strided_slice %104 {offsets = [18, 0], sizes = [1, 320], strides = [1, 1]} : vector<25x320xf32> to vector<1x320xf32>
    %450 = vector.broadcast %449 : vector<1x320xf32> to vector<4x320xf32>
    %451 = arith.mulf %450, %448 : vector<4x320xf32>
    %452 = arith.addf %435, %451 : vector<4x320xf32>
    %453 = vector.extract_strided_slice %115 {offsets = [18, 0], sizes = [1, 320], strides = [1, 1]} : vector<25x320xf32> to vector<1x320xf32>
    %454 = vector.broadcast %453 : vector<1x320xf32> to vector<4x320xf32>
    %455 = arith.mulf %454, %448 : vector<4x320xf32>
    %456 = arith.addf %439, %455 : vector<4x320xf32>
    %457 = vector.extract_strided_slice %126 {offsets = [18, 0], sizes = [1, 320], strides = [1, 1]} : vector<25x320xf32> to vector<1x320xf32>
    %458 = vector.broadcast %457 : vector<1x320xf32> to vector<4x320xf32>
    %459 = arith.mulf %458, %448 : vector<4x320xf32>
    %460 = arith.addf %443, %459 : vector<4x320xf32>
    %461 = vector.extract_strided_slice %137 {offsets = [18, 0], sizes = [1, 320], strides = [1, 1]} : vector<25x320xf32> to vector<1x320xf32>
    %462 = vector.broadcast %461 : vector<1x320xf32> to vector<4x320xf32>
    %463 = arith.mulf %462, %448 : vector<4x320xf32>
    %464 = arith.addf %447, %463 : vector<4x320xf32>
    %465 = vector.extract_strided_slice %1 {offsets = [0, 64], sizes = [4, 320], strides = [1, 1]} : vector<4x420xf32> to vector<4x320xf32>
    %466 = vector.extract_strided_slice %104 {offsets = [19, 0], sizes = [1, 320], strides = [1, 1]} : vector<25x320xf32> to vector<1x320xf32>
    %467 = vector.broadcast %466 : vector<1x320xf32> to vector<4x320xf32>
    %468 = arith.mulf %467, %465 : vector<4x320xf32>
    %469 = arith.addf %452, %468 : vector<4x320xf32>
    %470 = vector.extract_strided_slice %115 {offsets = [19, 0], sizes = [1, 320], strides = [1, 1]} : vector<25x320xf32> to vector<1x320xf32>
    %471 = vector.broadcast %470 : vector<1x320xf32> to vector<4x320xf32>
    %472 = arith.mulf %471, %465 : vector<4x320xf32>
    %473 = arith.addf %456, %472 : vector<4x320xf32>
    %474 = vector.extract_strided_slice %126 {offsets = [19, 0], sizes = [1, 320], strides = [1, 1]} : vector<25x320xf32> to vector<1x320xf32>
    %475 = vector.broadcast %474 : vector<1x320xf32> to vector<4x320xf32>
    %476 = arith.mulf %475, %465 : vector<4x320xf32>
    %477 = arith.addf %460, %476 : vector<4x320xf32>
    %478 = vector.extract_strided_slice %137 {offsets = [19, 0], sizes = [1, 320], strides = [1, 1]} : vector<25x320xf32> to vector<1x320xf32>
    %479 = vector.broadcast %478 : vector<1x320xf32> to vector<4x320xf32>
    %480 = arith.mulf %479, %465 : vector<4x320xf32>
    %481 = arith.addf %464, %480 : vector<4x320xf32>
    %482 = vector.extract_strided_slice %1 {offsets = [0, 80], sizes = [4, 320], strides = [1, 1]} : vector<4x420xf32> to vector<4x320xf32>
    %483 = vector.extract_strided_slice %104 {offsets = [20, 0], sizes = [1, 320], strides = [1, 1]} : vector<25x320xf32> to vector<1x320xf32>
    %484 = vector.broadcast %483 : vector<1x320xf32> to vector<4x320xf32>
    %485 = arith.mulf %484, %482 : vector<4x320xf32>
    %486 = arith.addf %469, %485 : vector<4x320xf32>
    %487 = vector.extract_strided_slice %115 {offsets = [20, 0], sizes = [1, 320], strides = [1, 1]} : vector<25x320xf32> to vector<1x320xf32>
    %488 = vector.broadcast %487 : vector<1x320xf32> to vector<4x320xf32>
    %489 = arith.mulf %488, %482 : vector<4x320xf32>
    %490 = arith.addf %473, %489 : vector<4x320xf32>
    %491 = vector.extract_strided_slice %126 {offsets = [20, 0], sizes = [1, 320], strides = [1, 1]} : vector<25x320xf32> to vector<1x320xf32>
    %492 = vector.broadcast %491 : vector<1x320xf32> to vector<4x320xf32>
    %493 = arith.mulf %492, %482 : vector<4x320xf32>
    %494 = arith.addf %477, %493 : vector<4x320xf32>
    %495 = vector.extract_strided_slice %137 {offsets = [20, 0], sizes = [1, 320], strides = [1, 1]} : vector<25x320xf32> to vector<1x320xf32>
    %496 = vector.broadcast %495 : vector<1x320xf32> to vector<4x320xf32>
    %497 = arith.mulf %496, %482 : vector<4x320xf32>
    %498 = arith.addf %481, %497 : vector<4x320xf32>
    %499 = vector.extract_strided_slice %1 {offsets = [0, 81], sizes = [4, 320], strides = [1, 1]} : vector<4x420xf32> to vector<4x320xf32>
    %500 = vector.extract_strided_slice %104 {offsets = [21, 0], sizes = [1, 320], strides = [1, 1]} : vector<25x320xf32> to vector<1x320xf32>
    %501 = vector.broadcast %500 : vector<1x320xf32> to vector<4x320xf32>
    %502 = arith.mulf %501, %499 : vector<4x320xf32>
    %503 = arith.addf %486, %502 : vector<4x320xf32>
    %504 = vector.extract_strided_slice %115 {offsets = [21, 0], sizes = [1, 320], strides = [1, 1]} : vector<25x320xf32> to vector<1x320xf32>
    %505 = vector.broadcast %504 : vector<1x320xf32> to vector<4x320xf32>
    %506 = arith.mulf %505, %499 : vector<4x320xf32>
    %507 = arith.addf %490, %506 : vector<4x320xf32>
    %508 = vector.extract_strided_slice %126 {offsets = [21, 0], sizes = [1, 320], strides = [1, 1]} : vector<25x320xf32> to vector<1x320xf32>
    %509 = vector.broadcast %508 : vector<1x320xf32> to vector<4x320xf32>
    %510 = arith.mulf %509, %499 : vector<4x320xf32>
    %511 = arith.addf %494, %510 : vector<4x320xf32>
    %512 = vector.extract_strided_slice %137 {offsets = [21, 0], sizes = [1, 320], strides = [1, 1]} : vector<25x320xf32> to vector<1x320xf32>
    %513 = vector.broadcast %512 : vector<1x320xf32> to vector<4x320xf32>
    %514 = arith.mulf %513, %499 : vector<4x320xf32>
    %515 = arith.addf %498, %514 : vector<4x320xf32>
    %516 = vector.extract_strided_slice %1 {offsets = [0, 82], sizes = [4, 320], strides = [1, 1]} : vector<4x420xf32> to vector<4x320xf32>
    %517 = vector.extract_strided_slice %104 {offsets = [22, 0], sizes = [1, 320], strides = [1, 1]} : vector<25x320xf32> to vector<1x320xf32>
    %518 = vector.broadcast %517 : vector<1x320xf32> to vector<4x320xf32>
    %519 = arith.mulf %518, %516 : vector<4x320xf32>
    %520 = arith.addf %503, %519 : vector<4x320xf32>
    %521 = vector.extract_strided_slice %115 {offsets = [22, 0], sizes = [1, 320], strides = [1, 1]} : vector<25x320xf32> to vector<1x320xf32>
    %522 = vector.broadcast %521 : vector<1x320xf32> to vector<4x320xf32>
    %523 = arith.mulf %522, %516 : vector<4x320xf32>
    %524 = arith.addf %507, %523 : vector<4x320xf32>
    %525 = vector.extract_strided_slice %126 {offsets = [22, 0], sizes = [1, 320], strides = [1, 1]} : vector<25x320xf32> to vector<1x320xf32>
    %526 = vector.broadcast %525 : vector<1x320xf32> to vector<4x320xf32>
    %527 = arith.mulf %526, %516 : vector<4x320xf32>
    %528 = arith.addf %511, %527 : vector<4x320xf32>
    %529 = vector.extract_strided_slice %137 {offsets = [22, 0], sizes = [1, 320], strides = [1, 1]} : vector<25x320xf32> to vector<1x320xf32>
    %530 = vector.broadcast %529 : vector<1x320xf32> to vector<4x320xf32>
    %531 = arith.mulf %530, %516 : vector<4x320xf32>
    %532 = arith.addf %515, %531 : vector<4x320xf32>
    %533 = vector.extract_strided_slice %1 {offsets = [0, 83], sizes = [4, 320], strides = [1, 1]} : vector<4x420xf32> to vector<4x320xf32>
    %534 = vector.extract_strided_slice %104 {offsets = [23, 0], sizes = [1, 320], strides = [1, 1]} : vector<25x320xf32> to vector<1x320xf32>
    %535 = vector.broadcast %534 : vector<1x320xf32> to vector<4x320xf32>
    %536 = arith.mulf %535, %533 : vector<4x320xf32>
    %537 = arith.addf %520, %536 : vector<4x320xf32>
    %538 = vector.extract_strided_slice %115 {offsets = [23, 0], sizes = [1, 320], strides = [1, 1]} : vector<25x320xf32> to vector<1x320xf32>
    %539 = vector.broadcast %538 : vector<1x320xf32> to vector<4x320xf32>
    %540 = arith.mulf %539, %533 : vector<4x320xf32>
    %541 = arith.addf %524, %540 : vector<4x320xf32>
    %542 = vector.extract_strided_slice %126 {offsets = [23, 0], sizes = [1, 320], strides = [1, 1]} : vector<25x320xf32> to vector<1x320xf32>
    %543 = vector.broadcast %542 : vector<1x320xf32> to vector<4x320xf32>
    %544 = arith.mulf %543, %533 : vector<4x320xf32>
    %545 = arith.addf %528, %544 : vector<4x320xf32>
    %546 = vector.extract_strided_slice %137 {offsets = [23, 0], sizes = [1, 320], strides = [1, 1]} : vector<25x320xf32> to vector<1x320xf32>
    %547 = vector.broadcast %546 : vector<1x320xf32> to vector<4x320xf32>
    %548 = arith.mulf %547, %533 : vector<4x320xf32>
    %549 = arith.addf %532, %548 : vector<4x320xf32>
    %550 = vector.extract_strided_slice %1 {offsets = [0, 84], sizes = [4, 320], strides = [1, 1]} : vector<4x420xf32> to vector<4x320xf32>
    %551 = vector.extract_strided_slice %104 {offsets = [24, 0], sizes = [1, 320], strides = [1, 1]} : vector<25x320xf32> to vector<1x320xf32>
    %552 = vector.broadcast %551 : vector<1x320xf32> to vector<4x320xf32>
    %553 = arith.mulf %552, %550 : vector<4x320xf32>
    %554 = arith.addf %537, %553 : vector<4x320xf32>
    %555 = vector.extract_strided_slice %115 {offsets = [24, 0], sizes = [1, 320], strides = [1, 1]} : vector<25x320xf32> to vector<1x320xf32>
    %556 = vector.broadcast %555 : vector<1x320xf32> to vector<4x320xf32>
    %557 = arith.mulf %556, %550 : vector<4x320xf32>
    %558 = arith.addf %541, %557 : vector<4x320xf32>
    %559 = vector.extract_strided_slice %126 {offsets = [24, 0], sizes = [1, 320], strides = [1, 1]} : vector<25x320xf32> to vector<1x320xf32>
    %560 = vector.broadcast %559 : vector<1x320xf32> to vector<4x320xf32>
    %561 = arith.mulf %560, %550 : vector<4x320xf32>
    %562 = arith.addf %545, %561 : vector<4x320xf32>
    %563 = vector.extract_strided_slice %137 {offsets = [24, 0], sizes = [1, 320], strides = [1, 1]} : vector<25x320xf32> to vector<1x320xf32>
    %564 = vector.broadcast %563 : vector<1x320xf32> to vector<4x320xf32>
    %565 = arith.mulf %564, %550 : vector<4x320xf32>
    %566 = arith.addf %549, %565 : vector<4x320xf32>
    %c0_62 = arith.constant 0 : index
    %c0_63 = arith.constant 0 : index
    %c0_64 = arith.constant 0 : index
    %567 = vector.load %arg8[%c0_62, %c0_63, %c0_64] : memref<1x16x320xf32, #tpu.memory_space<vmem>>, vector<1x4x320xf32>
    %568 = vector.shape_cast %567 : vector<1x4x320xf32> to vector<4x320xf32>
    %569 = vector.shape_cast %554 : vector<4x320xf32> to vector<1x4x320xf32>
    tpu.vector_store %arg8[%c0_62, %c0_63, %c0_64], %569 {strides = array<i32>} : memref<1x16x320xf32, #tpu.memory_space<vmem>>, vector<1x4x320xf32>,
    %c0_65 = arith.constant 0 : index
    %c4_66 = arith.constant 4 : index
    %c0_67 = arith.constant 0 : index
    %570 = vector.load %arg8[%c0_65, %c4_66, %c0_67] : memref<1x16x320xf32, #tpu.memory_space<vmem>>, vector<1x4x320xf32>
    %571 = vector.shape_cast %570 : vector<1x4x320xf32> to vector<4x320xf32>
    %572 = vector.shape_cast %558 : vector<4x320xf32> to vector<1x4x320xf32>
    tpu.vector_store %arg8[%c0_65, %c4_66, %c0_67], %572 {strides = array<i32>} : memref<1x16x320xf32, #tpu.memory_space<vmem>>, vector<1x4x320xf32>,
    %c0_68 = arith.constant 0 : index
    %c8_69 = arith.constant 8 : index
    %c0_70 = arith.constant 0 : index
    %573 = vector.load %arg8[%c0_68, %c8_69, %c0_70] : memref<1x16x320xf32, #tpu.memory_space<vmem>>, vector<1x4x320xf32>
    %574 = vector.shape_cast %573 : vector<1x4x320xf32> to vector<4x320xf32>
    %575 = vector.shape_cast %562 : vector<4x320xf32> to vector<1x4x320xf32>
    tpu.vector_store %arg8[%c0_68, %c8_69, %c0_70], %575 {strides = array<i32>} : memref<1x16x320xf32, #tpu.memory_space<vmem>>, vector<1x4x320xf32>,
    %c0_71 = arith.constant 0 : index
    %c12 = arith.constant 12 : index
    %c0_72 = arith.constant 0 : index
    %576 = vector.load %arg8[%c0_71, %c12, %c0_72] : memref<1x16x320xf32, #tpu.memory_space<vmem>>, vector<1x4x320xf32>
    %577 = vector.shape_cast %576 : vector<1x4x320xf32> to vector<4x320xf32>
    %578 = vector.shape_cast %566 : vector<4x320xf32> to vector<1x4x320xf32>
    tpu.vector_store %arg8[%c0_71, %c12, %c0_72], %578 {strides = array<i32>} : memref<1x16x320xf32, #tpu.memory_space<vmem>>, vector<1x4x320xf32>,
    return
  }
  func.func @transform_0(%arg0: i32, %arg1: i32) -> (i32, i32, i32, i32) {
    %c0_i32 = arith.constant 0 : i32
    %c0_i32_0 = arith.constant 0 : i32
    %c0_i32_1 = arith.constant 0 : i32
    return %arg0, %arg1, %c0_i32, %c0_i32_0 : i32, i32, i32, i32
  }
  func.func @transform_1(%arg0: i32, %arg1: i32) -> (i32, i32, i32) {
    %c0_i32 = arith.constant 0 : i32
    %c0_i32_0 = arith.constant 0 : i32
    %c0_i32_1 = arith.constant 0 : i32
    return %arg1, %c0_i32, %c0_i32_0 : i32, i32, i32
  }
  func.func @transform_2(%arg0: i32, %arg1: i32) -> (i32, i32) {
    %c0_i32 = arith.constant 0 : i32
    %c0_i32_0 = arith.constant 0 : i32
    %c0_i32_1 = arith.constant 0 : i32
    return %c0_i32, %c0_i32_0 : i32, i32
  }
  func.func @transform_3(%arg0: i32, %arg1: i32) -> (i32, i32) {
    %c0_i32 = arith.constant 0 : i32
    %c0_i32_0 = arith.constant 0 : i32
    %c0_i32_1 = arith.constant 0 : i32
    return %c0_i32, %c0_i32_0 : i32, i32
  }
  func.func @transform_4(%arg0: i32, %arg1: i32) -> (i32, i32, i32) {
    %c0_i32 = arith.constant 0 : i32
    %c0_i32_0 = arith.constant 0 : i32
    %c0_i32_1 = arith.constant 0 : i32
    %c0_i32_2 = arith.constant 0 : i32
    return %c0_i32, %c0_i32_0, %c0_i32_1 : i32, i32, i32
  }
  func.func @transform_5(%arg0: i32, %arg1: i32) -> (i32, i32) {
    %c0_i32 = arith.constant 0 : i32
    %c0_i32_0 = arith.constant 0 : i32
    %c0_i32_1 = arith.constant 0 : i32
    return %c0_i32, %c0_i32_0 : i32, i32
  }
  func.func @transform_6(%arg0: i32, %arg1: i32) -> (i32, i32, i32) {
    %c0_i32 = arith.constant 0 : i32
    %c0_i32_0 = arith.constant 0 : i32
    return %arg0, %c0_i32, %arg1 : i32, i32, i32
  }
}

</mosaic_0001>

<llo_original>
// kernel: meta_gamma_forward.1
$region0: #{meta_gamma_forward.1}
  #allocation0 [shape = 'u32[]', space=smem, size = 0x4, offset = 0x4, fixed_abs, tag = 'smem constant byte address 0x4 - core index']
  #allocation1 [shape = 'u32[144,128]{1,0:T(1,128)}', space=vmem, size = 0x12000, scoped, tag = 'internal scratch']
  %s0 = inlined_call_operand.hbm [shape: f32[2,1,4,420], index: 0, kind: input, shape index: {}]
  %s1 = inlined_call_operand.hbm [shape: f32[1,1,380], index: 1, kind: input, shape index: {}]
  %s2 = inlined_call_operand.hbm [shape: f32[64,4], index: 2, kind: input, shape index: {}]
  %s3 = inlined_call_operand.hbm [shape: f32[64,1], index: 3, kind: input, shape index: {}]
  %s4 = inlined_call_operand.hbm [shape: f32[9,128,64], index: 4, kind: input, shape index: {}]
  %s5 = inlined_call_operand.hbm [shape: f32[128,1], index: 5, kind: input, shape index: {}]
  %s6 = inlined_call_operand.hbm [shape: f32[2,16,320], index: 6, kind: output, shape index: {}]
  %s7 = sld [smem:[#allocation0]]
  $region81: #{meta_gamma_forward.1} parent=0
    _
  %s9 = ssub.s32 1, %s7
  %s10 = scalar_select 0, %s9, %s7
  $region1: #{meta_gamma_forward.1} parent=0
    #allocation2 [shape = 'u8[16384]{0}', space=vmem, size = 0x4000, scoped, tag = 'input window, operand 0']
    #allocation3 [shape = 's32[2]{0}', space=sflag, size = 0x8, scoped, tag = 'scoped memory for meta_gamma_forward.1']
    #allocation4 [shape = 's32[2]{0}', space=sflag, size = 0x8, scoped, tag = 'scoped memory for meta_gamma_forward.1']
    #allocation5 [shape = 'u8[1536]{0}', space=vmem, size = 0x800, scoped, tag = 'input window, operand 1, single buffered']
    #allocation6 [shape = 's32[1]{0}', space=sflag, size = 0x4, scoped, tag = 'scoped memory for meta_gamma_forward.1']
    #allocation7 [shape = 'u8[32768]{0}', space=vmem, size = 0x8000, scoped, tag = 'input window, operand 2, single buffered']
    #allocation8 [shape = 'u8[32768]{0}', space=vmem, size = 0x8000, scoped, tag = 'input window, operand 3, single buffered']
    #allocation9 [shape = 's32[1]{0}', space=sflag, size = 0x4, scoped, tag = 'scoped memory for meta_gamma_forward.1']
    #allocation10 [shape = 'u8[589824]{0}', space=vmem, size = 0x90000, scoped, tag = 'input window, operand 4, single buffered']
    #allocation11 [shape = 'u8[65536]{0}', space=vmem, size = 0x10000, scoped, tag = 'input window, operand 5, single buffered']
    #allocation12 [shape = 's32[1]{0}', space=sflag, size = 0x4, scoped, tag = 'scoped memory for meta_gamma_forward.1']
    #allocation13 [shape = 'u8[49152]{0}', space=vmem, size = 0xc000, scoped, tag = 'output window, operand 0']
    %11 = vsyncpa [#allocation3], 0
    %s12 = scalar_lea.sflag [#allocation3], 1
    %13 = vsyncpa %s12, 0
    %14 = vsyncpa [#allocation6], 0
    %15 = vsyncpa [#allocation9], 0
    %16 = vsyncpa [#allocation12], 0
    %17 = vsyncpa [#allocation4], 0
    %s18 = scalar_lea.sflag [#allocation4], 1
    %19 = vsyncpa %s18, 0
    loop: start=0, step=1, limit=4
    $region2: #{meta_gamma_forward.1} parent=1 // loop_pre_header
      _
    $region3: #{meta_gamma_forward.1} parent=1 // loop_header
      %s21 = sphi 0, %s25
      %p22 = scmp.ge.s32.totalorder %s21, 4
      %s28 = sphi 0, %s40
      %s29 = sphi 0, %s36
      %s30 = sphi 0, %s28
      %s31 = sphi 0, %s29
      %s32 = sphi 0, %s30
      %s33 = sphi 0, %s31
      %s45 = sphi 0, %s47
      %s48 = sphi 0, %s45
      %s49 = sphi 0, %s48
      %s65 = sphi 0, %s49
      %s71 = sphi 0, %s73
      %s74 = sphi 0, %s71
      %s75 = sphi 0, %s74
      %s91 = sphi 0, %s75
      %s95 = sphi 0, %s95
      %s97 = sphi 0, %s95
      %s98 = sphi 0, %s97
      %s112 = sphi 0, %s98
      %s116 = sphi 0, %s116
      %s118 = sphi 0, %s116
      %s119 = sphi 0, %s118
      %s133 = sphi 0, %s119
      %s137 = sphi 0, %s137
      %s139 = sphi 0, %s137
      %s140 = sphi 0, %s139
      %s154 = sphi 0, %s140
      %s158 = sphi 0, %s158
      %s160 = sphi 0, %s158
      %s161 = sphi 0, %s160
      %s175 = sphi 0, %s161
      %s183 = sphi 0, %s185
      %s186 = sphi 0, %s183
      %s187 = sphi 0, %s186
      %s203 = sphi 0, %s187
    $region4: #{meta_gamma_forward.1} parent=1 // loop_header_branch
      %24 = sbr.rel (%p22) target = $region8
    $region5: #{meta_gamma_forward.1} parent=1 // loop_body
      %s26 = ssub.s32 %s21, 1
      %s27 = ssub.s32 %s21, 2
      %s34 = sadd.s32 1, %s29
      %p35 = scmp.ge.s32.totalorder %s34, 1
      %s36 = scalar_select %p35, 0, %s34
      %s37 = sadd.s32 1, %s28
      %s38 = scalar_select %p35, %s37, %s28
      %p39 = scmp.ge.s32.totalorder %s38, 2
      %s40 = scalar_select %p39, 0, %s38
      %s41 = ssub.s32 %s28, %s40
      %s42 = ssub.s32 %s29, %s36
      %s43 = sor.u32 %s41, %s42
      %p44 = scmp.eq.s32.totalorder %s43, 0
      %s46 = sadd.s32 %s45, 1
      %s47 = scalar_select %p44, %s45, %s46
      %p50 = pneg %p44
      %p51 = scmp.eq.s32.totalorder %s21, 1
      %p52 = por %p50, %p51
      %p53 = scmp.ne.s32.totalorder %s45, %s48
      %p54 = scmp.eq.s32.totalorder %s21, 0
      %p55 = por %p53, %p54
      %p56 = scmp.ne.s32.totalorder %s45, %s48
      %p57 = scmp.eq.s32.totalorder %s26, 1
      %p58 = por %p56, %p57
      %p59 = scmp.ne.s32.totalorder %s48, %s49
      %p60 = scmp.eq.s32.totalorder %s26, 0
      %p61 = por %p59, %p60
      %p62 = scmp.ne.s32.totalorder %s48, %s49
      %p63 = scmp.eq.s32.totalorder %s27, 1
      %p64 = por %p62, %p63
      %p66 = scmp.ne.s32.totalorder %s49, %s65
      %p67 = scmp.eq.s32.totalorder %s27, 0
      %p68 = por %p66, %p67
      %s69 = ssub.s32 %s29, %s36
      %p70 = scmp.eq.s32.totalorder %s69, 0
      %s72 = sadd.s32 %s71, 1
      %s73 = scalar_select %p70, %s71, %s72
      %p76 = pneg %p70
      %p77 = scmp.eq.s32.totalorder %s21, 1
      %p78 = por %p76, %p77
      %p79 = scmp.ne.s32.totalorder %s71, %s74
      %p80 = scmp.eq.s32.totalorder %s21, 0
      %p81 = por %p79, %p80
      %p82 = scmp.ne.s32.totalorder %s71, %s74
      %p83 = scmp.eq.s32.totalorder %s26, 1
      %p84 = por %p82, %p83
      %p85 = scmp.ne.s32.totalorder %s74, %s75
      %p86 = scmp.eq.s32.totalorder %s26, 0
      %p87 = por %p85, %p86
      %p88 = scmp.ne.s32.totalorder %s74, %s75
      %p89 = scmp.eq.s32.totalorder %s27, 1
      %p90 = por %p88, %p89
      %p92 = scmp.ne.s32.totalorder %s75, %s91
      %p93 = scmp.eq.s32.totalorder %s27, 0
      %p94 = por %p92, %p93
      %s96 = sadd.s32 %s95, 1
      %p99 = scmp.eq.s32.totalorder %s21, 1
      %p100 = scmp.ne.s32.totalorder %s95, %s97
      %p101 = scmp.eq.s32.totalorder %s21, 0
      %p102 = por %p100, %p101
      %p103 = scmp.ne.s32.totalorder %s95, %s97
      %p104 = scmp.eq.s32.totalorder %s26, 1
      %p105 = por %p103, %p104
      %p106 = scmp.ne.s32.totalorder %s97, %s98
      %p107 = scmp.eq.s32.totalorder %s26, 0
      %p108 = por %p106, %p107
      %p109 = scmp.ne.s32.totalorder %s97, %s98
      %p110 = scmp.eq.s32.totalorder %s27, 1
      %p111 = por %p109, %p110
      %p113 = scmp.ne.s32.totalorder %s98, %s112
      %p114 = scmp.eq.s32.totalorder %s27, 0
      %p115 = por %p113, %p114
      %s117 = sadd.s32 %s116, 1
      %p120 = scmp.eq.s32.totalorder %s21, 1
      %p121 = scmp.ne.s32.totalorder %s116, %s118
      %p122 = scmp.eq.s32.totalorder %s21, 0
      %p123 = por %p121, %p122
      %p124 = scmp.ne.s32.totalorder %s116, %s118
      %p125 = scmp.eq.s32.totalorder %s26, 1
      %p126 = por %p124, %p125
      %p127 = scmp.ne.s32.totalorder %s118, %s119
      %p128 = scmp.eq.s32.totalorder %s26, 0
      %p129 = por %p127, %p128
      %p130 = scmp.ne.s32.totalorder %s118, %s119
      %p131 = scmp.eq.s32.totalorder %s27, 1
      %p132 = por %p130, %p131
      %p134 = scmp.ne.s32.totalorder %s119, %s133
      %p135 = scmp.eq.s32.totalorder %s27, 0
      %p136 = por %p134, %p135
      %s138 = sadd.s32 %s137, 1
      %p141 = scmp.eq.s32.totalorder %s21, 1
      %p142 = scmp.ne.s32.totalorder %s137, %s139
      %p143 = scmp.eq.s32.totalorder %s21, 0
      %p144 = por %p142, %p143
      %p145 = scmp.ne.s32.totalorder %s137, %s139
      %p146 = scmp.eq.s32.totalorder %s26, 1
      %p147 = por %p145, %p146
      %p148 = scmp.ne.s32.totalorder %s139, %s140
      %p149 = scmp.eq.s32.totalorder %s26, 0
      %p150 = por %p148, %p149
      %p151 = scmp.ne.s32.totalorder %s139, %s140
      %p152 = scmp.eq.s32.totalorder %s27, 1
      %p153 = por %p151, %p152
      %p155 = scmp.ne.s32.totalorder %s140, %s154
      %p156 = scmp.eq.s32.totalorder %s27, 0
      %p157 = por %p155, %p156
      %s159 = sadd.s32 %s158, 1
      %p162 = scmp.eq.s32.totalorder %s21, 1
      %p163 = scmp.ne.s32.totalorder %s158, %s160
      %p164 = scmp.eq.s32.totalorder %s21, 0
      %p165 = por %p163, %p164
      %p166 = scmp.ne.s32.totalorder %s158, %s160
      %p167 = scmp.eq.s32.totalorder %s26, 1
      %p168 = por %p166, %p167
      %p169 = scmp.ne.s32.totalorder %s160, %s161
      %p170 = scmp.eq.s32.totalorder %s26, 0
      %p171 = por %p169, %p170
      %p172 = scmp.ne.s32.totalorder %s160, %s161
      %p173 = scmp.eq.s32.totalorder %s27, 1
      %p174 = por %p172, %p173
      %p176 = scmp.ne.s32.totalorder %s161, %s175
      %p177 = scmp.eq.s32.totalorder %s27, 0
      %p178 = por %p176, %p177
      %s179 = ssub.s32 %s28, %s40
      %s180 = ssub.s32 %s29, %s36
      %s181 = sor.u32 %s179, %s180
      %p182 = scmp.eq.s32.totalorder %s181, 0
      %s184 = sadd.s32 %s183, 1
      %s185 = scalar_select %p182, %s183, %s184
      %p188 = pneg %p182
      %p189 = scmp.eq.s32.totalorder %s21, 1
      %p190 = por %p188, %p189
      %p191 = scmp.ne.s32.totalorder %s183, %s186
      %p192 = scmp.eq.s32.totalorder %s21, 0
      %p193 = por %p191, %p192
      %p194 = scmp.ne.s32.totalorder %s183, %s186
      %p195 = scmp.eq.s32.totalorder %s26, 1
      %p196 = por %p194, %p195
      %p197 = scmp.ne.s32.totalorder %s186, %s187
      %p198 = scmp.eq.s32.totalorder %s26, 0
      %p199 = por %p197, %p198
      %p200 = scmp.ne.s32.totalorder %s186, %s187
      %p201 = scmp.eq.s32.totalorder %s27, 1
      %p202 = por %p200, %p201
      %p204 = scmp.ne.s32.totalorder %s187, %s203
      %p205 = scmp.eq.s32.totalorder %s27, 0
      %p206 = por %p204, %p205
      %p207 = scmp.le.s32.totalorder 1, %s21
      %p208 = scmp.lt.s32.totalorder %s21, 3
      %p209 = pnand %p207, %p208
      %p210 = pneg %p209
      // Predicated region
      $region9: #{meta_gamma_forward.1} parent=5 // pred_check
        _
      $region10: #{meta_gamma_forward.1} parent=5 // pred_check_branch
        %212 = sbr.rel (%p209) target = $region12
      $region11: #{meta_gamma_forward.1} parent=5 // pred_region
        %s213 = ssub.s32 %s21, 1
        // Predicated region
        $region13: #{meta_gamma_forward.1} parent=11 // pred_check
          %p214 = pneg %p87
        $region14: #{meta_gamma_forward.1} parent=11 // pred_check_branch
          %216 = sbr.rel (%p214) target = $region16
        $region15: #{meta_gamma_forward.1} parent=11 // pred_region
          %s218 = ssub.s32 48, 48
          %219 = vsyncadd [#allocation6], %s218
          %s220 = smul.addr %s31, 3
          %s221 = smul.addr %s220, 16
          %s222 = scalar_lea.hbm %s1, %s221
          %s224 = sshll.u32 [#allocation5], 4
          %s225 = int_to_ptr.vmem [resolvable:$true] %s224
          %227 = dma.hbm_to_vmem [thread:$0]  %s222, 48, %s225, [#allocation6]
        $region16: #{meta_gamma_forward.1} parent=11 // pred_fallthru
          _
        // Predicated region
        $region17: #{meta_gamma_forward.1} parent=11 // pred_check
          %p228 = pneg %p108
        $region18: #{meta_gamma_forward.1} parent=11 // pred_check_branch
          %230 = sbr.rel (%p228) target = $region20
        $region19: #{meta_gamma_forward.1} parent=11 // pred_region
          %s232 = ssub.s32 1024, 1024
          %233 = vsyncadd [#allocation6], %s232
          %s234 = sshll.u32 [#allocation7], 4
          %s235 = int_to_ptr.vmem [resolvable:$true] %s234
          %240 = dma.hbm_to_vmem [thread:$0]  %s2, 1024, %s235, [#allocation6], 128, 128, 8
        $region20: #{meta_gamma_forward.1} parent=11 // pred_fallthru
          _
        // Predicated region
        $region21: #{meta_gamma_forward.1} parent=11 // pred_check
          %p241 = pneg %p129
        $region22: #{meta_gamma_forward.1} parent=11 // pred_check_branch
          %243 = sbr.rel (%p241) target = $region24
        $region23: #{meta_gamma_forward.1} parent=11 // pred_region
          %s245 = ssub.s32 1024, 1024
          %246 = vsyncadd [#allocation9], %s245
          %s247 = sshll.u32 [#allocation8], 4
          %s248 = int_to_ptr.vmem [resolvable:$true] %s247
          %253 = dma.hbm_to_vmem [thread:$0]  %s3, 1024, %s248, [#allocation9], 128, 128, 8
        $region24: #{meta_gamma_forward.1} parent=11 // pred_fallthru
          _
        // Predicated region
        $region25: #{meta_gamma_forward.1} parent=11 // pred_check
          %p254 = pneg %p150
        $region26: #{meta_gamma_forward.1} parent=11 // pred_check_branch
          %256 = sbr.rel (%p254) target = $region28
        $region27: #{meta_gamma_forward.1} parent=11 // pred_region
          %s258 = ssub.s32 18432, 18432
          %259 = vsyncadd [#allocation9], %s258
          %s260 = sshll.u32 [#allocation10], 4
          %s261 = int_to_ptr.vmem [resolvable:$true] %s260
          %266 = dma.hbm_to_vmem [thread:$0]  %s4, 18432, %s261, [#allocation9], 128, 128, 8
        $region28: #{meta_gamma_forward.1} parent=11 // pred_fallthru
          _
        // Predicated region
        $region29: #{meta_gamma_forward.1} parent=11 // pred_check
          %p267 = pneg %p171
        $region30: #{meta_gamma_forward.1} parent=11 // pred_check_branch
          %269 = sbr.rel (%p267) target = $region32
        $region31: #{meta_gamma_forward.1} parent=11 // pred_region
          %s271 = ssub.s32 2048, 2048
          %272 = vsyncadd [#allocation12], %s271
          %s273 = sshll.u32 [#allocation11], 4
          %s274 = int_to_ptr.vmem [resolvable:$true] %s273
          %279 = dma.hbm_to_vmem [thread:$0]  %s5, 2048, %s274, [#allocation12], 128, 128, 8
        $region32: #{meta_gamma_forward.1} parent=11 // pred_fallthru
          _
      $region12: #{meta_gamma_forward.1} parent=5 // pred_fallthru
        _
      %p280 = scmp.lt.s32.totalorder %s21, 2
      // Predicated region
      $region33: #{meta_gamma_forward.1} parent=5 // pred_check
        %p281 = pneg %p280
      $region34: #{meta_gamma_forward.1} parent=5 // pred_check_branch
        %283 = sbr.rel (%p281) target = $region36
      $region35: #{meta_gamma_forward.1} parent=5 // pred_region
        // Predicated region
        $region37: #{meta_gamma_forward.1} parent=35 // pred_check
          %p284 = pneg %p55
        $region38: #{meta_gamma_forward.1} parent=35 // pred_check_branch
          %286 = sbr.rel (%p284) target = $region40
        $region39: #{meta_gamma_forward.1} parent=35 // pred_region
          %s287 = sand.u32 %s45, 1
          %s288 = scalar_lea.sflag [#allocation3], %s287
          %s289 = sand.u32 %s45, 1
          %s290 = smul.addr %s289, 16
          %s291 = scalar_lea.vmem [#allocation2], %s290
          %s293 = ssub.s32 256, 256
          %294 = vsyncadd %s288, %s293
          %s295 = smul.addr %s29, 4
          %s296 = smul.addr %s28, 4
          %s297 = sadd.s32 %s295, %s296
          %s298 = smul.addr %s297, 64
          %s299 = scalar_lea.hbm %s0, %s298
          %s301 = sshll.u32 %s291, 4
          %s302 = int_to_ptr.vmem [resolvable:$true] %s301
          %304 = dma.hbm_to_vmem [thread:$0]  %s299, 256, %s302, %s288
        $region40: #{meta_gamma_forward.1} parent=35 // pred_fallthru
          _
      $region36: #{meta_gamma_forward.1} parent=5 // pred_fallthru
        _
      %p305 = scmp.le.s32.totalorder 1, %s21
      %p306 = scmp.lt.s32.totalorder %s21, 3
      %p307 = pnand %p305, %p306
      %p308 = pneg %p307
      // Predicated region
      $region41: #{meta_gamma_forward.1} parent=5 // pred_check
        _
      $region42: #{meta_gamma_forward.1} parent=5 // pred_check_branch
        %310 = sbr.rel (%p307) target = $region44
      $region43: #{meta_gamma_forward.1} parent=5 // pred_region
        %s311 = ssub.s32 %s21, 1
        %s312 = sand.u32 %s48, 1
        %s313 = scalar_lea.sflag [#allocation3], %s312
        %s314 = sand.u32 %s48, 1
        %s315 = smul.addr %s314, 16
        %s316 = scalar_lea.vmem [#allocation2], %s315
        // Predicated region
        $region45: #{meta_gamma_forward.1} parent=43 // pred_check
          %p317 = pneg %p61
        $region46: #{meta_gamma_forward.1} parent=43 // pred_check_branch
          %319 = sbr.rel (%p317) target = $region48
        $region47: #{meta_gamma_forward.1} parent=43 // pred_region
          %320 = dma.done %s313, 256
        $region48: #{meta_gamma_forward.1} parent=43 // pred_fallthru
          _
        // Predicated region
        $region49: #{meta_gamma_forward.1} parent=43 // pred_check
          %p321 = pneg %p87
        $region50: #{meta_gamma_forward.1} parent=43 // pred_check_branch
          %323 = sbr.rel (%p321) target = $region52
        $region51: #{meta_gamma_forward.1} parent=43 // pred_region
          %324 = dma.done [#allocation6], 48
        $region52: #{meta_gamma_forward.1} parent=43 // pred_fallthru
          _
        // Predicated region
        $region53: #{meta_gamma_forward.1} parent=43 // pred_check
          %p325 = pneg %p108
        $region54: #{meta_gamma_forward.1} parent=43 // pred_check_branch
          %327 = sbr.rel (%p325) target = $region56
        $region55: #{meta_gamma_forward.1} parent=43 // pred_region
          %328 = dma.done [#allocation6], 1024
        $region56: #{meta_gamma_forward.1} parent=43 // pred_fallthru
          _
        // Predicated region
        $region57: #{meta_gamma_forward.1} parent=43 // pred_check
          %p329 = pneg %p129
        $region58: #{meta_gamma_forward.1} parent=43 // pred_check_branch
          %331 = sbr.rel (%p329) target = $region60
        $region59: #{meta_gamma_forward.1} parent=43 // pred_region
          %332 = dma.done [#allocation9], 1024
        $region60: #{meta_gamma_forward.1} parent=43 // pred_fallthru
          _
        // Predicated region
        $region61: #{meta_gamma_forward.1} parent=43 // pred_check
          %p333 = pneg %p150
        $region62: #{meta_gamma_forward.1} parent=43 // pred_check_branch
          %335 = sbr.rel (%p333) target = $region64
        $region63: #{meta_gamma_forward.1} parent=43 // pred_region
          %336 = dma.done [#allocation9], 18432
        $region64: #{meta_gamma_forward.1} parent=43 // pred_fallthru
          _
        // Predicated region
        $region65: #{meta_gamma_forward.1} parent=43 // pred_check
          %p337 = pneg %p171
        $region66: #{meta_gamma_forward.1} parent=43 // pred_check_branch
          %339 = sbr.rel (%p337) target = $region68
        $region67: #{meta_gamma_forward.1} parent=43 // pred_region
          %340 = dma.done [#allocation12], 2048
        $region68: #{meta_gamma_forward.1} parent=43 // pred_fallthru
          _
        %s341 = sand.u32 %s48, 1
        %s342 = scalar_lea.sflag [#allocation3], %s341
        %s343 = sand.u32 %s48, 1
        %s344 = smul.addr %s343, 16
        %s345 = scalar_lea.vmem [#allocation2], %s344
        %p346 = pneg %p61
        %p347 = pneg %p58
        %p348 = pneg %p87
        %p349 = pneg %p84
        %p350 = pneg %p108
        %p351 = pneg %p105
        %p352 = pneg %p129
        %p353 = pneg %p126
        %p354 = pneg %p150
        %p355 = pneg %p147
        %p356 = pneg %p171
        %p357 = pneg %p168
        %p358 = pneg %p199
        %p359 = pneg %p196
        %s360 = sand.u32 %s186, 1
        %s361 = scalar_lea.sflag [#allocation4], %s360
        %s362 = sand.u32 %s186, 1
        %s363 = smul.addr %s362, 48
        %s364 = scalar_lea.vmem [#allocation13], %s363
        %s365 = smul.u32 3, %s31
        %v366 = vld [vmem:[%s316] sm:$0xff]
        %v367 = vld [vmem:[%s316 + $0x8] sm:$0xff]
        %v368 = vmax.f32 %v366, 0.0
        %v369 = vmax.f32 %v367, 0.0
        %v370 = vmin.f32 %v368, 1.0
        %v371 = vmin.f32 %v369, 1.0
        %v372 = vld [vmem:[#allocation8] sm:$0xff]
        %v373 = vld [vmem:[#allocation8 + $0x8] sm:$0xff]
        %v374 = vld [vmem:[#allocation8 + $0x10] sm:$0xff]
        %v375 = vld [vmem:[#allocation8 + $0x18] sm:$0xff]
        %v376 = vld [vmem:[#allocation8 + $0x20] sm:$0xff]
        %v377 = vld [vmem:[#allocation8 + $0x28] sm:$0xff]
        %v378 = vld [vmem:[#allocation8 + $0x30] sm:$0xff]
        %v379 = vld [vmem:[#allocation8 + $0x38] sm:$0xff]
        %381 = vset.pattern.permute.xlu0 0
        %382 = vperm.xlu0 %381, %v372
        %v383 = vpop.permute.xlu0 %382
        %386 = vset.pattern.permute.xlu0 0
        %387 = vperm.xlu0 %386, %v373
        %v388 = vpop.permute.xlu0 %387
        %391 = vset.pattern.permute.xlu0 0
        %392 = vperm.xlu0 %391, %v374
        %v393 = vpop.permute.xlu0 %392
        %396 = vset.pattern.permute.xlu0 0
        %397 = vperm.xlu0 %396, %v375
        %v398 = vpop.permute.xlu0 %397
        %401 = vset.pattern.permute.xlu0 0
        %402 = vperm.xlu0 %401, %v376
        %v403 = vpop.permute.xlu0 %402
        %406 = vset.pattern.permute.xlu0 0
        %407 = vperm.xlu0 %406, %v377
        %v408 = vpop.permute.xlu0 %407
        %411 = vset.pattern.permute.xlu0 0
        %412 = vperm.xlu0 %411, %v378
        %v413 = vpop.permute.xlu0 %412
        %416 = vset.pattern.permute.xlu0 0
        %417 = vperm.xlu0 %416, %v379
        %v418 = vpop.permute.xlu0 %417
        %v420 = vadd.f32 %v383, 0.0
        %v421 = vadd.f32 %v388, 0.0
        %v422 = vadd.f32 %v393, 0.0
        %v423 = vadd.f32 %v398, 0.0
        %v424 = vadd.f32 %v403, 0.0
        %v425 = vadd.f32 %v408, 0.0
        %v426 = vadd.f32 %v413, 0.0
        %v427 = vadd.f32 %v418, 0.0
        %v428 = vld [vmem:[#allocation7] sm:$0xff]
        %v429 = vld [vmem:[#allocation7 + $0x8] sm:$0xff]
        %v430 = vld [vmem:[#allocation7 + $0x10] sm:$0xff]
        %v431 = vld [vmem:[#allocation7 + $0x18] sm:$0xff]
        %v432 = vld [vmem:[#allocation7 + $0x20] sm:$0xff]
        %v433 = vld [vmem:[#allocation7 + $0x28] sm:$0xff]
        %v434 = vld [vmem:[#allocation7 + $0x30] sm:$0xff]
        %v435 = vld [vmem:[#allocation7 + $0x38] sm:$0xff]
        %437 = vset.pattern.permute.xlu0 0
        %438 = vperm.xlu0 %437, %v428
        %v439 = vpop.permute.xlu0 %438
        %442 = vset.pattern.permute.xlu0 0
        %443 = vperm.xlu0 %442, %v429
        %v444 = vpop.permute.xlu0 %443
        %447 = vset.pattern.permute.xlu0 0
        %448 = vperm.xlu0 %447, %v430
        %v449 = vpop.permute.xlu0 %448
        %452 = vset.pattern.permute.xlu0 0
        %453 = vperm.xlu0 %452, %v431
        %v454 = vpop.permute.xlu0 %453
        %457 = vset.pattern.permute.xlu0 0
        %458 = vperm.xlu0 %457, %v432
        %v459 = vpop.permute.xlu0 %458
        %462 = vset.pattern.permute.xlu0 0
        %463 = vperm.xlu0 %462, %v433
        %v464 = vpop.permute.xlu0 %463
        %467 = vset.pattern.permute.xlu0 0
        %468 = vperm.xlu0 %467, %v434
        %v469 = vpop.permute.xlu0 %468
        %472 = vset.pattern.permute.xlu0 0
        %473 = vperm.xlu0 %472, %v435
        %v474 = vpop.permute.xlu0 %473
        %v478 = vlaneseq
        %v479 = vshrl.u32 %v478, 7
        %v480 = vsub.s32 0, %v479
        %v481 = vrot.slane %v370, %v480
        %v482 = vlaneseq
        %v483 = vshrl.u32 %v482, 7
        %v484 = vsub.s32 4, %v483
        %v485 = vrot.slane %v370, %v484
        %v486 = vlaneseq
        %v487 = vshrl.u32 %v486, 7
        %v488 = vsub.s32 0, %v487
        %v489 = vrot.slane %v371, %v488
        %v493 = vlaneseq
        %v494 = vshrl.u32 %v493, 7
        %v495 = vsub.s32 0, %v494
        %v496 = vrot.slane %v481, %v495
        %v497 = vlaneseq
        %v498 = vshrl.u32 %v497, 7
        %v499 = vsub.s32 0, %v498
        %v500 = vrot.slane %v485, %v499
        %v501 = vlaneseq
        %v502 = vshrl.u32 %v501, 7
        %v503 = vsub.s32 0, %v502
        %v504 = vrot.slane %v489, %v503
        %v505 = vmul.f32 %v439, %v496
        %v506 = vmul.f32 %v439, %v500
        %v507 = vmul.f32 %v439, %v504
        %v508 = vmul.f32 %v444, %v496
        %v509 = vmul.f32 %v444, %v500
        %v510 = vmul.f32 %v444, %v504
        %v511 = vmul.f32 %v449, %v496
        %v512 = vmul.f32 %v449, %v500
        %v513 = vmul.f32 %v449, %v504
        %v514 = vmul.f32 %v454, %v496
        %v515 = vmul.f32 %v454, %v500
        %v516 = vmul.f32 %v454, %v504
        %v517 = vmul.f32 %v459, %v496
        %v518 = vmul.f32 %v459, %v500
        %v519 = vmul.f32 %v459, %v504
        %v520 = vmul.f32 %v464, %v496
        %v521 = vmul.f32 %v464, %v500
        %v522 = vmul.f32 %v464, %v504
        %v523 = vmul.f32 %v469, %v496
        %v524 = vmul.f32 %v469, %v500
        %v525 = vmul.f32 %v469, %v504
        %v526 = vmul.f32 %v474, %v496
        %v527 = vmul.f32 %v474, %v500
        %v528 = vmul.f32 %v474, %v504
        %v529 = vadd.f32 %v420, %v505
        %v530 = vadd.f32 %v420, %v506
        %v531 = vadd.f32 %v420, %v507
        %v532 = vadd.f32 %v421, %v508
        %v533 = vadd.f32 %v421, %v509
        %v534 = vadd.f32 %v421, %v510
        %v535 = vadd.f32 %v422, %v511
        %v536 = vadd.f32 %v422, %v512
        %v537 = vadd.f32 %v422, %v513
        %v538 = vadd.f32 %v423, %v514
        %v539 = vadd.f32 %v423, %v515
        %v540 = vadd.f32 %v423, %v516
        %v541 = vadd.f32 %v424, %v517
        %v542 = vadd.f32 %v424, %v518
        %v543 = vadd.f32 %v424, %v519
        %v544 = vadd.f32 %v425, %v520
        %v545 = vadd.f32 %v425, %v521
        %v546 = vadd.f32 %v425, %v522
        %v547 = vadd.f32 %v426, %v523
        %v548 = vadd.f32 %v426, %v524
        %v549 = vadd.f32 %v426, %v525
        %v550 = vadd.f32 %v427, %v526
        %v551 = vadd.f32 %v427, %v527
        %v552 = vadd.f32 %v427, %v528
        %553 = vset.pattern.permute.xlu0 1
        %554 = vperm.xlu0 %553, %v428
        %v555 = vpop.permute.xlu0 %554
        %557 = vset.pattern.permute.xlu0 1
        %558 = vperm.xlu0 %557, %v429
        %v559 = vpop.permute.xlu0 %558
        %561 = vset.pattern.permute.xlu0 1
        %562 = vperm.xlu0 %561, %v430
        %v563 = vpop.permute.xlu0 %562
        %565 = vset.pattern.permute.xlu0 1
        %566 = vperm.xlu0 %565, %v431
        %v567 = vpop.permute.xlu0 %566
        %569 = vset.pattern.permute.xlu0 1
        %570 = vperm.xlu0 %569, %v432
        %v571 = vpop.permute.xlu0 %570
        %573 = vset.pattern.permute.xlu0 1
        %574 = vperm.xlu0 %573, %v433
        %v575 = vpop.permute.xlu0 %574
        %577 = vset.pattern.permute.xlu0 1
        %578 = vperm.xlu0 %577, %v434
        %v579 = vpop.permute.xlu0 %578
        %581 = vset.pattern.permute.xlu0 1
        %582 = vperm.xlu0 %581, %v435
        %v583 = vpop.permute.xlu0 %582
        %v585 = vlaneseq
        %v586 = vshrl.u32 %v585, 7
        %v587 = vsub.s32 1, %v586
        %v588 = vrot.slane %v370, %v587
        %v589 = vlaneseq
        %v590 = vshrl.u32 %v589, 7
        %v591 = vsub.s32 5, %v590
        %v592 = vrot.slane %v370, %v591
        %v593 = vlaneseq
        %v594 = vshrl.u32 %v593, 7
        %v595 = vsub.s32 1, %v594
        %v596 = vrot.slane %v371, %v595
        %v600 = vlaneseq
        %v601 = vshrl.u32 %v600, 7
        %v602 = vsub.s32 1, %v601
        %v603 = vrot.slane %v588, %v602
        %v604 = vlaneseq
        %v605 = vshrl.u32 %v604, 7
        %v606 = vsub.s32 1, %v605
        %v607 = vrot.slane %v592, %v606
        %v608 = vlaneseq
        %v609 = vshrl.u32 %v608, 7
        %v610 = vsub.s32 1, %v609
        %v611 = vrot.slane %v596, %v610
        %v612 = vmul.f32 %v555, %v603
        %v613 = vmul.f32 %v555, %v607
        %v614 = vmul.f32 %v555, %v611
        %v615 = vmul.f32 %v559, %v603
        %v616 = vmul.f32 %v559, %v607
        %v617 = vmul.f32 %v559, %v611
        %v618 = vmul.f32 %v563, %v603
        %v619 = vmul.f32 %v563, %v607
        %v620 = vmul.f32 %v563, %v611
        %v621 = vmul.f32 %v567, %v603
        %v622 = vmul.f32 %v567, %v607
        %v623 = vmul.f32 %v567, %v611
        %v624 = vmul.f32 %v571, %v603
        %v625 = vmul.f32 %v571, %v607
        %v626 = vmul.f32 %v571, %v611
        %v627 = vmul.f32 %v575, %v603
        %v628 = vmul.f32 %v575, %v607
        %v629 = vmul.f32 %v575, %v611
        %v630 = vmul.f32 %v579, %v603
        %v631 = vmul.f32 %v579, %v607
        %v632 = vmul.f32 %v579, %v611
        %v633 = vmul.f32 %v583, %v603
        %v634 = vmul.f32 %v583, %v607
        %v635 = vmul.f32 %v583, %v611
        %v636 = vadd.f32 %v529, %v612
        %v637 = vadd.f32 %v530, %v613
        %v638 = vadd.f32 %v531, %v614
        %v639 = vadd.f32 %v532, %v615
        %v640 = vadd.f32 %v533, %v616
        %v641 = vadd.f32 %v534, %v617
        %v642 = vadd.f32 %v535, %v618
        %v643 = vadd.f32 %v536, %v619
        %v644 = vadd.f32 %v537, %v620
        %v645 = vadd.f32 %v538, %v621
        %v646 = vadd.f32 %v539, %v622
        %v647 = vadd.f32 %v540, %v623
        %v648 = vadd.f32 %v541, %v624
        %v649 = vadd.f32 %v542, %v625
        %v650 = vadd.f32 %v543, %v626
        %v651 = vadd.f32 %v544, %v627
        %v652 = vadd.f32 %v545, %v628
        %v653 = vadd.f32 %v546, %v629
        %v654 = vadd.f32 %v547, %v630
        %v655 = vadd.f32 %v548, %v631
        %v656 = vadd.f32 %v549, %v632
        %v657 = vadd.f32 %v550, %v633
        %v658 = vadd.f32 %v551, %v634
        %v659 = vadd.f32 %v552, %v635
        %660 = vset.pattern.permute.xlu0 2
        %661 = vperm.xlu0 %660, %v428
        %v662 = vpop.permute.xlu0 %661
        %664 = vset.pattern.permute.xlu0 2
        %665 = vperm.xlu0 %664, %v429
        %v666 = vpop.permute.xlu0 %665
        %668 = vset.pattern.permute.xlu0 2
        %669 = vperm.xlu0 %668, %v430
        %v670 = vpop.permute.xlu0 %669
        %672 = vset.pattern.permute.xlu0 2
        %673 = vperm.xlu0 %672, %v431
        %v674 = vpop.permute.xlu0 %673
        %676 = vset.pattern.permute.xlu0 2
        %677 = vperm.xlu0 %676, %v432
        %v678 = vpop.permute.xlu0 %677
        %680 = vset.pattern.permute.xlu0 2
        %681 = vperm.xlu0 %680, %v433
        %v682 = vpop.permute.xlu0 %681
        %684 = vset.pattern.permute.xlu0 2
        %685 = vperm.xlu0 %684, %v434
        %v686 = vpop.permute.xlu0 %685
        %688 = vset.pattern.permute.xlu0 2
        %689 = vperm.xlu0 %688, %v435
        %v690 = vpop.permute.xlu0 %689
        %v692 = vlaneseq
        %v693 = vshrl.u32 %v692, 7
        %v694 = vsub.s32 2, %v693
        %v695 = vrot.slane %v370, %v694
        %v696 = vlaneseq
        %v697 = vshrl.u32 %v696, 7
        %v698 = vsub.s32 6, %v697
        %v699 = vrot.slane %v370, %v698
        %v700 = vlaneseq
        %v701 = vshrl.u32 %v700, 7
        %v702 = vsub.s32 2, %v701
        %v703 = vrot.slane %v371, %v702
        %v707 = vlaneseq
        %v708 = vshrl.u32 %v707, 7
        %v709 = vsub.s32 2, %v708
        %v710 = vrot.slane %v695, %v709
        %v711 = vlaneseq
        %v712 = vshrl.u32 %v711, 7
        %v713 = vsub.s32 2, %v712
        %v714 = vrot.slane %v699, %v713
        %v715 = vlaneseq
        %v716 = vshrl.u32 %v715, 7
        %v717 = vsub.s32 2, %v716
        %v718 = vrot.slane %v703, %v717
        %v719 = vmul.f32 %v662, %v710
        %v720 = vmul.f32 %v662, %v714
        %v721 = vmul.f32 %v662, %v718
        %v722 = vmul.f32 %v666, %v710
        %v723 = vmul.f32 %v666, %v714
        %v724 = vmul.f32 %v666, %v718
        %v725 = vmul.f32 %v670, %v710
        %v726 = vmul.f32 %v670, %v714
        %v727 = vmul.f32 %v670, %v718
        %v728 = vmul.f32 %v674, %v710
        %v729 = vmul.f32 %v674, %v714
        %v730 = vmul.f32 %v674, %v718
        %v731 = vmul.f32 %v678, %v710
        %v732 = vmul.f32 %v678, %v714
        %v733 = vmul.f32 %v678, %v718
        %v734 = vmul.f32 %v682, %v710
        %v735 = vmul.f32 %v682, %v714
        %v736 = vmul.f32 %v682, %v718
        %v737 = vmul.f32 %v686, %v710
        %v738 = vmul.f32 %v686, %v714
        %v739 = vmul.f32 %v686, %v718
        %v740 = vmul.f32 %v690, %v710
        %v741 = vmul.f32 %v690, %v714
        %v742 = vmul.f32 %v690, %v718
        %v743 = vadd.f32 %v636, %v719
        %v744 = vadd.f32 %v637, %v720
        %v745 = vadd.f32 %v638, %v721
        %v746 = vadd.f32 %v639, %v722
        %v747 = vadd.f32 %v640, %v723
        %v748 = vadd.f32 %v641, %v724
        %v749 = vadd.f32 %v642, %v725
        %v750 = vadd.f32 %v643, %v726
        %v751 = vadd.f32 %v644, %v727
        %v752 = vadd.f32 %v645, %v728
        %v753 = vadd.f32 %v646, %v729
        %v754 = vadd.f32 %v647, %v730
        %v755 = vadd.f32 %v648, %v731
        %v756 = vadd.f32 %v649, %v732
        %v757 = vadd.f32 %v650, %v733
        %v758 = vadd.f32 %v651, %v734
        %v759 = vadd.f32 %v652, %v735
        %v760 = vadd.f32 %v653, %v736
        %v761 = vadd.f32 %v654, %v737
        %v762 = vadd.f32 %v655, %v738
        %v763 = vadd.f32 %v656, %v739
        %v764 = vadd.f32 %v657, %v740
        %v765 = vadd.f32 %v658, %v741
        %v766 = vadd.f32 %v659, %v742
        %767 = vset.pattern.permute.xlu0 3
        %768 = vperm.xlu0 %767, %v428
        %v769 = vpop.permute.xlu0 %768
        %771 = vset.pattern.permute.xlu0 3
        %772 = vperm.xlu0 %771, %v429
        %v773 = vpop.permute.xlu0 %772
        %775 = vset.pattern.permute.xlu0 3
        %776 = vperm.xlu0 %775, %v430
        %v777 = vpop.permute.xlu0 %776
        %779 = vset.pattern.permute.xlu0 3
        %780 = vperm.xlu0 %779, %v431
        %v781 = vpop.permute.xlu0 %780
        %783 = vset.pattern.permute.xlu0 3
        %784 = vperm.xlu0 %783, %v432
        %v785 = vpop.permute.xlu0 %784
        %787 = vset.pattern.permute.xlu0 3
        %788 = vperm.xlu0 %787, %v433
        %v789 = vpop.permute.xlu0 %788
        %791 = vset.pattern.permute.xlu0 3
        %792 = vperm.xlu0 %791, %v434
        %v793 = vpop.permute.xlu0 %792
        %795 = vset.pattern.permute.xlu0 3
        %796 = vperm.xlu0 %795, %v435
        %v797 = vpop.permute.xlu0 %796
        %v799 = vlaneseq
        %v800 = vshrl.u32 %v799, 7
        %v801 = vsub.s32 3, %v800
        %v802 = vrot.slane %v370, %v801
        %v803 = vlaneseq
        %v804 = vshrl.u32 %v803, 7
        %v805 = vsub.s32 7, %v804
        %v806 = vrot.slane %v370, %v805
        %v807 = vlaneseq
        %v808 = vshrl.u32 %v807, 7
        %v809 = vsub.s32 3, %v808
        %v810 = vrot.slane %v371, %v809
        %v814 = vlaneseq
        %v815 = vshrl.u32 %v814, 7
        %v816 = vsub.s32 3, %v815
        %v817 = vrot.slane %v802, %v816
        %v818 = vlaneseq
        %v819 = vshrl.u32 %v818, 7
        %v820 = vsub.s32 3, %v819
        %v821 = vrot.slane %v806, %v820
        %v822 = vlaneseq
        %v823 = vshrl.u32 %v822, 7
        %v824 = vsub.s32 3, %v823
        %v825 = vrot.slane %v810, %v824
        %v826 = vmul.f32 %v769, %v817
        %v827 = vmul.f32 %v769, %v821
        %v828 = vmul.f32 %v769, %v825
        %v829 = vmul.f32 %v773, %v817
        %v830 = vmul.f32 %v773, %v821
        %v831 = vmul.f32 %v773, %v825
        %v832 = vmul.f32 %v777, %v817
        %v833 = vmul.f32 %v777, %v821
        %v834 = vmul.f32 %v777, %v825
        %v835 = vmul.f32 %v781, %v817
        %v836 = vmul.f32 %v781, %v821
        %v837 = vmul.f32 %v781, %v825
        %v838 = vmul.f32 %v785, %v817
        %v839 = vmul.f32 %v785, %v821
        %v840 = vmul.f32 %v785, %v825
        %v841 = vmul.f32 %v789, %v817
        %v842 = vmul.f32 %v789, %v821
        %v843 = vmul.f32 %v789, %v825
        %v844 = vmul.f32 %v793, %v817
        %v845 = vmul.f32 %v793, %v821
        %v846 = vmul.f32 %v793, %v825
        %v847 = vmul.f32 %v797, %v817
        %v848 = vmul.f32 %v797, %v821
        %v849 = vmul.f32 %v797, %v825
        %v850 = vadd.f32 %v743, %v826
        %v851 = vadd.f32 %v744, %v827
        %v852 = vadd.f32 %v745, %v828
        %v853 = vadd.f32 %v746, %v829
        %v854 = vadd.f32 %v747, %v830
        %v855 = vadd.f32 %v748, %v831
        %v856 = vadd.f32 %v749, %v832
        %v857 = vadd.f32 %v750, %v833
        %v858 = vadd.f32 %v751, %v834
        %v859 = vadd.f32 %v752, %v835
        %v860 = vadd.f32 %v753, %v836
        %v861 = vadd.f32 %v754, %v837
        %v862 = vadd.f32 %v755, %v838
        %v863 = vadd.f32 %v756, %v839
        %v864 = vadd.f32 %v757, %v840
        %v865 = vadd.f32 %v758, %v841
        %v866 = vadd.f32 %v759, %v842
        %v867 = vadd.f32 %v760, %v843
        %v868 = vadd.f32 %v761, %v844
        %v869 = vadd.f32 %v762, %v845
        %v870 = vadd.f32 %v763, %v846
        %v871 = vadd.f32 %v764, %v847
        %v872 = vadd.f32 %v765, %v848
        %v873 = vadd.f32 %v766, %v849
        %v874 = vxor.u32 %v850, 2147483648
        %v875 = vxor.u32 %v851, 2147483648
        %v876 = vxor.u32 %v852, 2147483648
        %v877 = vxor.u32 %v853, 2147483648
        %v878 = vxor.u32 %v854, 2147483648
        %v879 = vxor.u32 %v855, 2147483648
        %v880 = vxor.u32 %v856, 2147483648
        %v881 = vxor.u32 %v857, 2147483648
        %v882 = vxor.u32 %v858, 2147483648
        %v883 = vxor.u32 %v859, 2147483648
        %v884 = vxor.u32 %v860, 2147483648
        %v885 = vxor.u32 %v861, 2147483648
        %v886 = vxor.u32 %v862, 2147483648
        %v887 = vxor.u32 %v863, 2147483648
        %v888 = vxor.u32 %v864, 2147483648
        %v889 = vxor.u32 %v865, 2147483648
        %v890 = vxor.u32 %v866, 2147483648
        %v891 = vxor.u32 %v867, 2147483648
        %v892 = vxor.u32 %v868, 2147483648
        %v893 = vxor.u32 %v869, 2147483648
        %v894 = vxor.u32 %v870, 2147483648
        %v895 = vxor.u32 %v871, 2147483648
        %v896 = vxor.u32 %v872, 2147483648
        %v897 = vxor.u32 %v873, 2147483648
        %v898 = vmul.f32 %v874, 1.442695
        %v899 = vpow.pop %v898
        %v900 = vmul.f32 %v875, 1.442695
        %v901 = vpow.pop %v900
        %v902 = vmul.f32 %v876, 1.442695
        %v903 = vpow.pop %v902
        %v904 = vmul.f32 %v877, 1.442695
        %v905 = vpow.pop %v904
        %v906 = vmul.f32 %v878, 1.442695
        %v907 = vpow.pop %v906
        %v908 = vmul.f32 %v879, 1.442695
        %v909 = vpow.pop %v908
        %v910 = vmul.f32 %v880, 1.442695
        %v911 = vpow.pop %v910
        %v912 = vmul.f32 %v881, 1.442695
        %v913 = vpow.pop %v912
        %v914 = vmul.f32 %v882, 1.442695
        %v915 = vpow.pop %v914
        %v916 = vmul.f32 %v883, 1.442695
        %v917 = vpow.pop %v916
        %v918 = vmul.f32 %v884, 1.442695
        %v919 = vpow.pop %v918
        %v920 = vmul.f32 %v885, 1.442695
        %v921 = vpow.pop %v920
        %v922 = vmul.f32 %v886, 1.442695
        %v923 = vpow.pop %v922
        %v924 = vmul.f32 %v887, 1.442695
        %v925 = vpow.pop %v924
        %v926 = vmul.f32 %v888, 1.442695
        %v927 = vpow.pop %v926
        %v928 = vmul.f32 %v889, 1.442695
        %v929 = vpow.pop %v928
        %v930 = vmul.f32 %v890, 1.442695
        %v931 = vpow.pop %v930
        %v932 = vmul.f32 %v891, 1.442695
        %v933 = vpow.pop %v932
        %v934 = vmul.f32 %v892, 1.442695
        %v935 = vpow.pop %v934
        %v936 = vmul.f32 %v893, 1.442695
        %v937 = vpow.pop %v936
        %v938 = vmul.f32 %v894, 1.442695
        %v939 = vpow.pop %v938
        %v940 = vmul.f32 %v895, 1.442695
        %v941 = vpow.pop %v940
        %v942 = vmul.f32 %v896, 1.442695
        %v943 = vpow.pop %v942
        %v944 = vmul.f32 %v897, 1.442695
        %v945 = vpow.pop %v944
        %v946 = vadd.f32 %v899, 1.0
        %v947 = vadd.f32 %v901, 1.0
        %v948 = vadd.f32 %v903, 1.0
        %v949 = vadd.f32 %v905, 1.0
        %v950 = vadd.f32 %v907, 1.0
        %v951 = vadd.f32 %v909, 1.0
        %v952 = vadd.f32 %v911, 1.0
        %v953 = vadd.f32 %v913, 1.0
        %v954 = vadd.f32 %v915, 1.0
        %v955 = vadd.f32 %v917, 1.0
        %v956 = vadd.f32 %v919, 1.0
        %v957 = vadd.f32 %v921, 1.0
        %v958 = vadd.f32 %v923, 1.0
        %v959 = vadd.f32 %v925, 1.0
        %v960 = vadd.f32 %v927, 1.0
        %v961 = vadd.f32 %v929, 1.0
        %v962 = vadd.f32 %v931, 1.0
        %v963 = vadd.f32 %v933, 1.0
        %v964 = vadd.f32 %v935, 1.0
        %v965 = vadd.f32 %v937, 1.0
        %v966 = vadd.f32 %v939, 1.0
        %v967 = vadd.f32 %v941, 1.0
        %v968 = vadd.f32 %v943, 1.0
        %v969 = vadd.f32 %v945, 1.0
        %v970 = vrcp.pop %v946
        %v971 = vmul.f32 1.0, %v970
        %v972 = vrcp.pop %v947
        %v973 = vmul.f32 1.0, %v972
        %v974 = vrcp.pop %v948
        %v975 = vmul.f32 1.0, %v974
        %v976 = vrcp.pop %v949
        %v977 = vmul.f32 1.0, %v976
        %v978 = vrcp.pop %v950
        %v979 = vmul.f32 1.0, %v978
        %v980 = vrcp.pop %v951
        %v981 = vmul.f32 1.0, %v980
        %v982 = vrcp.pop %v952
        %v983 = vmul.f32 1.0, %v982
        %v984 = vrcp.pop %v953
        %v985 = vmul.f32 1.0, %v984
        %v986 = vrcp.pop %v954
        %v987 = vmul.f32 1.0, %v986
        %v988 = vrcp.pop %v955
        %v989 = vmul.f32 1.0, %v988
        %v990 = vrcp.pop %v956
        %v991 = vmul.f32 1.0, %v990
        %v992 = vrcp.pop %v957
        %v993 = vmul.f32 1.0, %v992
        %v994 = vrcp.pop %v958
        %v995 = vmul.f32 1.0, %v994
        %v996 = vrcp.pop %v959
        %v997 = vmul.f32 1.0, %v996
        %v998 = vrcp.pop %v960
        %v999 = vmul.f32 1.0, %v998
        %v1000 = vrcp.pop %v961
        %v1001 = vmul.f32 1.0, %v1000
        %v1002 = vrcp.pop %v962
        %v1003 = vmul.f32 1.0, %v1002
        %v1004 = vrcp.pop %v963
        %v1005 = vmul.f32 1.0, %v1004
        %v1006 = vrcp.pop %v964
        %v1007 = vmul.f32 1.0, %v1006
        %v1008 = vrcp.pop %v965
        %v1009 = vmul.f32 1.0, %v1008
        %v1010 = vrcp.pop %v966
        %v1011 = vmul.f32 1.0, %v1010
        %v1012 = vrcp.pop %v967
        %v1013 = vmul.f32 1.0, %v1012
        %v1014 = vrcp.pop %v968
        %v1015 = vmul.f32 1.0, %v1014
        %v1016 = vrcp.pop %v969
        %v1017 = vmul.f32 1.0, %v1016
        %v1018 = vmul.f32 %v850, %v971
        %v1019 = vmul.f32 %v851, %v973
        %v1020 = vmul.f32 %v852, %v975
        %v1021 = vmul.f32 %v853, %v977
        %v1022 = vmul.f32 %v854, %v979
        %v1023 = vmul.f32 %v855, %v981
        %v1024 = vmul.f32 %v856, %v983
        %v1025 = vmul.f32 %v857, %v985
        %v1026 = vmul.f32 %v858, %v987
        %v1027 = vmul.f32 %v859, %v989
        %v1028 = vmul.f32 %v860, %v991
        %v1029 = vmul.f32 %v861, %v993
        %v1030 = vmul.f32 %v862, %v995
        %v1031 = vmul.f32 %v863, %v997
        %v1032 = vmul.f32 %v864, %v999
        %v1033 = vmul.f32 %v865, %v1001
        %v1034 = vmul.f32 %v866, %v1003
        %v1035 = vmul.f32 %v867, %v1005
        %v1036 = vmul.f32 %v868, %v1007
        %v1037 = vmul.f32 %v869, %v1009
        %v1038 = vmul.f32 %v870, %v1011
        %v1039 = vmul.f32 %v871, %v1013
        %v1040 = vmul.f32 %v872, %v1015
        %v1041 = vmul.f32 %v873, %v1017
        %v1042 = vld [vmem:[#allocation5] sm:$0x7]
        %v1044 = vlaneseq
        %v1045 = vshrl.u32 %v1044, 7
        %v1046 = vsub.s32 0, %v1045
        %v1047 = vrot.slane %v1042, %v1046
        %v1048 = vlaneseq
        %v1049 = vshrl.u32 %v1048, 7
        %v1050 = vsub.s32 1, %v1049
        %v1051 = vrot.slane %v1042, %v1050
        %v1052 = vlaneseq
        %v1053 = vshrl.u32 %v1052, 7
        %v1054 = vsub.s32 2, %v1053
        %v1055 = vrot.slane %v1042, %v1054
        %1056 = vrot.lane.b32.xlu0 %v1047, 20
        %v1057 = vpop.permute.xlu0 %1056
        %1058 = vrot.lane.b32.xlu0 %v1051, 20
        %v1059 = vpop.permute.xlu0 %1058
        %1060 = vrot.lane.b32.xlu0 %v1055, 20
        %v1061 = vpop.permute.xlu0 %1060
        %vm1062 = vcmask 162816
        %v1063 = vsel %vm1062, %v1057, %v1059
        %v1064 = vsel %vm1062, %v1059, %v1061
        %v1068 = vmul.f32 %v1018, %v1057
        %v1069 = vmul.f32 %v1019, %v1063
        %v1070 = vmul.f32 %v1020, %v1064
        %v1071 = vmul.f32 %v1021, %v1057
        %v1072 = vmul.f32 %v1022, %v1063
        %v1073 = vmul.f32 %v1023, %v1064
        %v1074 = vmul.f32 %v1024, %v1057
        %v1075 = vmul.f32 %v1025, %v1063
        %v1076 = vmul.f32 %v1026, %v1064
        %v1077 = vmul.f32 %v1027, %v1057
        %v1078 = vmul.f32 %v1028, %v1063
        %v1079 = vmul.f32 %v1029, %v1064
        %v1080 = vmul.f32 %v1030, %v1057
        %v1081 = vmul.f32 %v1031, %v1063
        %v1082 = vmul.f32 %v1032, %v1064
        %v1083 = vmul.f32 %v1033, %v1057
        %v1084 = vmul.f32 %v1034, %v1063
        %v1085 = vmul.f32 %v1035, %v1064
        %v1086 = vmul.f32 %v1036, %v1057
        %v1087 = vmul.f32 %v1037, %v1063
        %v1088 = vmul.f32 %v1038, %v1064
        %v1089 = vmul.f32 %v1039, %v1057
        %v1090 = vmul.f32 %v1040, %v1063
        %v1091 = vmul.f32 %v1041, %v1064
        %v1092 = vld [vmem:[#allocation11] sm:$0xff]
        %v1093 = vld [vmem:[#allocation11 + $0x8] sm:$0xff]
        %v1094 = vld [vmem:[#allocation11 + $0x10] sm:$0xff]
        %v1095 = vld [vmem:[#allocation11 + $0x18] sm:$0xff]
        %v1096 = vld [vmem:[#allocation11 + $0x20] sm:$0xff]
        %v1097 = vld [vmem:[#allocation11 + $0x28] sm:$0xff]
        %v1098 = vld [vmem:[#allocation11 + $0x30] sm:$0xff]
        %v1099 = vld [vmem:[#allocation11 + $0x38] sm:$0xff]
        %v1100 = vld [vmem:[#allocation11 + $0x40] sm:$0xff]
        %v1101 = vld [vmem:[#allocation11 + $0x48] sm:$0xff]
        %v1102 = vld [vmem:[#allocation11 + $0x50] sm:$0xff]
        %v1103 = vld [vmem:[#allocation11 + $0x58] sm:$0xff]
        %v1104 = vld [vmem:[#allocation11 + $0x60] sm:$0xff]
        %v1105 = vld [vmem:[#allocation11 + $0x68] sm:$0xff]
        %v1106 = vld [vmem:[#allocation11 + $0x70] sm:$0xff]
        %v1107 = vld [vmem:[#allocation11 + $0x78] sm:$0xff]
        %1109 = vset.pattern.permute.xlu0 0
        %1110 = vperm.xlu0 %1109, %v1092
        %v1111 = vpop.permute.xlu0 %1110
        %1114 = vset.pattern.permute.xlu0 0
        %1115 = vperm.xlu0 %1114, %v1093
        %v1116 = vpop.permute.xlu0 %1115
        %1119 = vset.pattern.permute.xlu0 0
        %1120 = vperm.xlu0 %1119, %v1094
        %v1121 = vpop.permute.xlu0 %1120
        %1124 = vset.pattern.permute.xlu0 0
        %1125 = vperm.xlu0 %1124, %v1095
        %v1126 = vpop.permute.xlu0 %1125
        %1129 = vset.pattern.permute.xlu0 0
        %1130 = vperm.xlu0 %1129, %v1096
        %v1131 = vpop.permute.xlu0 %1130
        %1134 = vset.pattern.permute.xlu0 0
        %1135 = vperm.xlu0 %1134, %v1097
        %v1136 = vpop.permute.xlu0 %1135
        %1139 = vset.pattern.permute.xlu0 0
        %1140 = vperm.xlu0 %1139, %v1098
        %v1141 = vpop.permute.xlu0 %1140
        %1144 = vset.pattern.permute.xlu0 0
        %1145 = vperm.xlu0 %1144, %v1099
        %v1146 = vpop.permute.xlu0 %1145
        %1149 = vset.pattern.permute.xlu0 0
        %1150 = vperm.xlu0 %1149, %v1100
        %v1151 = vpop.permute.xlu0 %1150
        %1154 = vset.pattern.permute.xlu0 0
        %1155 = vperm.xlu0 %1154, %v1101
        %v1156 = vpop.permute.xlu0 %1155
        %1159 = vset.pattern.permute.xlu0 0
        %1160 = vperm.xlu0 %1159, %v1102
        %v1161 = vpop.permute.xlu0 %1160
        %1164 = vset.pattern.permute.xlu0 0
        %1165 = vperm.xlu0 %1164, %v1103
        %v1166 = vpop.permute.xlu0 %1165
        %1169 = vset.pattern.permute.xlu0 0
        %1170 = vperm.xlu0 %1169, %v1104
        %v1171 = vpop.permute.xlu0 %1170
        %1174 = vset.pattern.permute.xlu0 0
        %1175 = vperm.xlu0 %1174, %v1105
        %v1176 = vpop.permute.xlu0 %1175
        %1179 = vset.pattern.permute.xlu0 0
        %1180 = vperm.xlu0 %1179, %v1106
        %v1181 = vpop.permute.xlu0 %1180
        %1184 = vset.pattern.permute.xlu0 0
        %1185 = vperm.xlu0 %1184, %v1107
        %v1186 = vpop.permute.xlu0 %1185
        %v1188 = vadd.f32 %v1111, 0.0
        %v1189 = vadd.f32 %v1116, 0.0
        %v1190 = vadd.f32 %v1121, 0.0
        %v1191 = vadd.f32 %v1126, 0.0
        %v1192 = vadd.f32 %v1131, 0.0
        %v1193 = vadd.f32 %v1136, 0.0
        %v1194 = vadd.f32 %v1141, 0.0
        %v1195 = vadd.f32 %v1146, 0.0
        %v1196 = vadd.f32 %v1151, 0.0
        %v1197 = vadd.f32 %v1156, 0.0
        %v1198 = vadd.f32 %v1161, 0.0
        %v1199 = vadd.f32 %v1166, 0.0
        %v1200 = vadd.f32 %v1171, 0.0
        %v1201 = vadd.f32 %v1176, 0.0
        %v1202 = vadd.f32 %v1181, 0.0
        %v1203 = vadd.f32 %v1186, 0.0
        %v1204 = vld [vmem:[#allocation10] sm:$0xff]
        %v1205 = vld [vmem:[#allocation10 + $0x8] sm:$0xff]
        %v1206 = vld [vmem:[#allocation10 + $0x10] sm:$0xff]
        %v1207 = vld [vmem:[#allocation10 + $0x18] sm:$0xff]
        %v1208 = vld [vmem:[#allocation10 + $0x20] sm:$0xff]
        %v1209 = vld [vmem:[#allocation10 + $0x28] sm:$0xff]
        %v1210 = vld [vmem:[#allocation10 + $0x30] sm:$0xff]
        %v1211 = vld [vmem:[#allocation10 + $0x38] sm:$0xff]
        %v1212 = vld [vmem:[#allocation10 + $0x40] sm:$0xff]
        %v1213 = vld [vmem:[#allocation10 + $0x48] sm:$0xff]
        %v1214 = vld [vmem:[#allocation10 + $0x50] sm:$0xff]
        %v1215 = vld [vmem:[#allocation10 + $0x58] sm:$0xff]
        %v1216 = vld [vmem:[#allocation10 + $0x60] sm:$0xff]
        %v1217 = vld [vmem:[#allocation10 + $0x68] sm:$0xff]
        %v1218 = vld [vmem:[#allocation10 + $0x70] sm:$0xff]
        %v1219 = vld [vmem:[#allocation10 + $0x78] sm:$0xff]
        %1244 = vrot.lane.b32.xlu0 %v1068, 107
        %v1245 = vpop.permute.xlu0 %1244
        %1246 = vrot.lane.b32.xlu0 %v1069, 107
        %v1247 = vpop.permute.xlu0 %1246
        %1248 = vrot.lane.b32.xlu0 %v1070, 107
        %v1249 = vpop.permute.xlu0 %1248
        %1250 = vrot.lane.b32.xlu0 %v1071, 107
        %v1251 = vpop.permute.xlu0 %1250
        %1252 = vrot.lane.b32.xlu0 %v1072, 107
        %v1253 = vpop.permute.xlu0 %1252
        %1254 = vrot.lane.b32.xlu0 %v1073, 107
        %v1255 = vpop.permute.xlu0 %1254
        %1256 = vrot.lane.b32.xlu0 %v1074, 107
        %v1257 = vpop.permute.xlu0 %1256
        %1258 = vrot.lane.b32.xlu0 %v1075, 107
        %v1259 = vpop.permute.xlu0 %1258
        %1260 = vrot.lane.b32.xlu0 %v1076, 107
        %v1261 = vpop.permute.xlu0 %1260
        %1262 = vrot.lane.b32.xlu0 %v1077, 107
        %v1263 = vpop.permute.xlu0 %1262
        %1264 = vrot.lane.b32.xlu0 %v1078, 107
        %v1265 = vpop.permute.xlu0 %1264
        %1266 = vrot.lane.b32.xlu0 %v1079, 107
        %v1267 = vpop.permute.xlu0 %1266
        %1268 = vrot.lane.b32.xlu0 %v1080, 107
        %v1269 = vpop.permute.xlu0 %1268
        %1270 = vrot.lane.b32.xlu0 %v1081, 107
        %v1271 = vpop.permute.xlu0 %1270
        %1272 = vrot.lane.b32.xlu0 %v1082, 107
        %v1273 = vpop.permute.xlu0 %1272
        %1274 = vrot.lane.b32.xlu0 %v1083, 107
        %v1275 = vpop.permute.xlu0 %1274
        %1276 = vrot.lane.b32.xlu0 %v1084, 107
        %v1277 = vpop.permute.xlu0 %1276
        %1278 = vrot.lane.b32.xlu0 %v1085, 107
        %v1279 = vpop.permute.xlu0 %1278
        %1280 = vrot.lane.b32.xlu0 %v1086, 107
        %v1281 = vpop.permute.xlu0 %1280
        %1282 = vrot.lane.b32.xlu0 %v1087, 107
        %v1283 = vpop.permute.xlu0 %1282
        %1284 = vrot.lane.b32.xlu0 %v1088, 107
        %v1285 = vpop.permute.xlu0 %1284
        %1286 = vrot.lane.b32.xlu0 %v1089, 107
        %v1287 = vpop.permute.xlu0 %1286
        %1288 = vrot.lane.b32.xlu0 %v1090, 107
        %v1289 = vpop.permute.xlu0 %1288
        %1290 = vrot.lane.b32.xlu0 %v1091, 107
        %v1291 = vpop.permute.xlu0 %1290
        %vm1292 = vcmask 875520
        %v1293 = vsel %vm1292, %v1245, %v1247
        %v1294 = vsel %vm1292, %v1247, %v1249
        %v1295 = vsel %vm1292, %v1251, %v1253
        %v1296 = vsel %vm1292, %v1253, %v1255
        %v1297 = vsel %vm1292, %v1257, %v1259
        %v1298 = vsel %vm1292, %v1259, %v1261
        %v1299 = vsel %vm1292, %v1263, %v1265
        %v1300 = vsel %vm1292, %v1265, %v1267
        %v1301 = vsel %vm1292, %v1269, %v1271
        %v1302 = vsel %vm1292, %v1271, %v1273
        %v1303 = vsel %vm1292, %v1275, %v1277
        %v1304 = vsel %vm1292, %v1277, %v1279
        %v1305 = vsel %vm1292, %v1281, %v1283
        %v1306 = vsel %vm1292, %v1283, %v1285
        %v1307 = vsel %vm1292, %v1287, %v1289
        %v1308 = vsel %vm1292, %v1289, %v1291
        %vm1333 = vcmask 523264
        %v1335 = vsel %vm1333, %v1204, 0
        %v1338 = vsel %vm1333, %v1205, 0
        %v1341 = vsel %vm1333, %v1206, 0
        %v1344 = vsel %vm1333, %v1207, 0
        %v1347 = vsel %vm1333, %v1208, 0
        %v1350 = vsel %vm1333, %v1209, 0
        %v1353 = vsel %vm1333, %v1210, 0
        %v1356 = vsel %vm1333, %v1211, 0
        %v1359 = vsel %vm1333, %v1212, 0
        %v1362 = vsel %vm1333, %v1213, 0
        %v1365 = vsel %vm1333, %v1214, 0
        %v1368 = vsel %vm1333, %v1215, 0
        %v1371 = vsel %vm1333, %v1216, 0
        %v1374 = vsel %vm1333, %v1217, 0
        %v1377 = vsel %vm1333, %v1218, 0
        %v1380 = vsel %vm1333, %v1219, 0
        %1382 = vmatprep.subr.mxu0 %v1294
        %1383 = vmatpush1.msra.mxu0 %v1293
        %1384 = vmatprep.subr.mxu0 %v1296
        %1385 = vmatpush1.msra.mxu0 %v1295
        %1386 = vmatprep.subr.mxu0 %v1298
        %1387 = vmatpush1.msra.mxu0 %v1297
        %1388 = vmatprep.subr.mxu0 %v1300
        %1389 = vmatpush1.msra.mxu0 %v1299
        %1390 = vmatprep.subr.mxu0 %v1302
        %1391 = vmatpush1.msra.mxu0 %v1301
        %1392 = vmatprep.subr.mxu0 %v1304
        %1393 = vmatpush1.msra.mxu0 %v1303
        %1394 = vmatprep.subr.mxu0 %v1306
        %1395 = vmatpush1.msra.mxu0 %v1305
        %1396 = vmatprep.subr.mxu0 %v1308
        %1397 = vmatpush1.msra.mxu0 %v1307
        %1398 = vmatprep.subr.mxu0 0.0
        %1399 = vmatpush1.msra.mxu0 0.0
        %1400 = vmatprep.subr.mxu0 0.0
        %1401 = vmatpush1.msra.mxu0 0.0
        %1402 = vmatprep.subr.mxu0 0.0
        %1403 = vmatpush1.msra.mxu0 0.0
        %1404 = vmatprep.subr.mxu0 0.0
        %1405 = vmatpush1.msra.mxu0 0.0
        %1406 = vmatprep.subr.mxu0 0.0
        %1407 = vmatpush1.msra.mxu0 0.0
        %1408 = vmatprep.subr.mxu0 0.0
        %1409 = vmatpush1.msra.mxu0 0.0
        %1410 = vmatprep.subr.mxu0 0.0
        %1411 = vmatpush1.msra.mxu0 0.0
        %1412 = vmatprep.subr.mxu0 0.0
        %1413 = vmatpush1.msra.mxu0 0.0
        %1414 = vmatprep.subr.mxu0 0.0
        %1415 = vmatpush1.msra.mxu0 0.0
        %1416 = vmatprep.subr.mxu0 0.0
        %1417 = vmatpush1.msra.mxu0 0.0
        %1418 = vmatprep.subr.mxu0 0.0
        %1419 = vmatpush1.msra.mxu0 0.0
        %1420 = vmatprep.subr.mxu0 0.0
        %1421 = vmatpush1.msra.mxu0 0.0
        %1422 = vmatprep.subr.mxu0 0.0
        %1423 = vmatpush1.msra.mxu0 0.0
        %1424 = vmatprep.subr.mxu0 0.0
        %1425 = vmatpush1.msra.mxu0 0.0
        %1426 = vmatprep.subr.mxu0 0.0
        %1427 = vmatpush1.msra.mxu0 0.0
        %1428 = vmatprep.subr.mxu0 0.0
        %1429 = vmatpush1.msra.mxu0 0.0
        %1430 = vmatprep.subr.mxu0 0.0
        %1431 = vmatpush1.msra.mxu0 0.0
        %1432 = vmatprep.subr.mxu0 0.0
        %1433 = vmatpush1.msra.mxu0 0.0
        %1434 = vmatprep.subr.mxu0 0.0
        %1435 = vmatpush1.msra.mxu0 0.0
        %1436 = vmatprep.subr.mxu0 0.0
        %1437 = vmatpush1.msra.mxu0 0.0
        %1438 = vmatprep.subr.mxu0 0.0
        %1439 = vmatpush1.msra.mxu0 0.0
        %1440 = vmatprep.subr.mxu0 0.0
        %1441 = vmatpush1.msra.mxu0 0.0
        %1442 = vmatprep.subr.mxu0 0.0
        %1443 = vmatpush1.msra.mxu0 0.0
        %1444 = vmatprep.subr.mxu0 0.0
        %1445 = vmatpush1.msra.mxu0 0.0
        %1446 = vmatprep.mubr.f32.mxu0 0.0
        %1447 = vmatmul.mubr.f32.gmra.mrb[0].mxu0 %v1335
        %v1448 = vpop.f32.mrb[0].mxu0
        %v1449 = vadd.f32 0.0, %v1448
        %v1450 = vpop.f32.mrb[0].mxu0
        %v1451 = vadd.f32 0.0, %v1450
        %1452 = vmatprep.mubr.f32.mxu0 0.0
        %1453 = vmatmul.mubr.f32.gmra.mrb[0].mxu0 %v1338
        %v1454 = vpop.f32.mrb[0].mxu0
        %v1455 = vadd.f32 0.0, %v1454
        %v1456 = vpop.f32.mrb[0].mxu0
        %v1457 = vadd.f32 0.0, %v1456
        %1458 = vmatprep.mubr.f32.mxu0 0.0
        %1459 = vmatmul.mubr.f32.gmra.mrb[0].mxu0 %v1341
        %v1460 = vpop.f32.mrb[0].mxu0
        %v1461 = vadd.f32 0.0, %v1460
        %v1462 = vpop.f32.mrb[0].mxu0
        %v1463 = vadd.f32 0.0, %v1462
        %1464 = vmatprep.mubr.f32.mxu0 0.0
        %1465 = vmatmul.mubr.f32.gmra.mrb[0].mxu0 %v1344
        %v1466 = vpop.f32.mrb[0].mxu0
        %v1467 = vadd.f32 0.0, %v1466
        %v1468 = vpop.f32.mrb[0].mxu0
        %v1469 = vadd.f32 0.0, %v1468
        %1470 = vmatprep.mubr.f32.mxu0 0.0
        %1471 = vmatmul.mubr.f32.gmra.mrb[0].mxu0 %v1347
        %v1472 = vpop.f32.mrb[0].mxu0
        %v1473 = vadd.f32 0.0, %v1472
        %v1474 = vpop.f32.mrb[0].mxu0
        %v1475 = vadd.f32 0.0, %v1474
        %1476 = vmatprep.mubr.f32.mxu0 0.0
        %1477 = vmatmul.mubr.f32.gmra.mrb[0].mxu0 %v1350
        %v1478 = vpop.f32.mrb[0].mxu0
        %v1479 = vadd.f32 0.0, %v1478
        %v1480 = vpop.f32.mrb[0].mxu0
        %v1481 = vadd.f32 0.0, %v1480
        %1482 = vmatprep.mubr.f32.mxu0 0.0
        %1483 = vmatmul.mubr.f32.gmra.mrb[0].mxu0 %v1353
        %v1484 = vpop.f32.mrb[0].mxu0
        %v1485 = vadd.f32 0.0, %v1484
        %v1486 = vpop.f32.mrb[0].mxu0
        %v1487 = vadd.f32 0.0, %v1486
        %1488 = vmatprep.mubr.f32.mxu0 0.0
        %1489 = vmatmul.mubr.f32.gmra.mrb[0].mxu0 %v1356
        %v1490 = vpop.f32.mrb[0].mxu0
        %v1491 = vadd.f32 0.0, %v1490
        %v1492 = vpop.f32.mrb[0].mxu0
        %v1493 = vadd.f32 0.0, %v1492
        %1494 = vmatprep.mubr.f32.mxu0 0.0
        %1495 = vmatmul.mubr.f32.gmra.mrb[0].mxu0 %v1359
        %v1496 = vpop.f32.mrb[0].mxu0
        %v1497 = vadd.f32 0.0, %v1496
        %v1498 = vpop.f32.mrb[0].mxu0
        %v1499 = vadd.f32 0.0, %v1498
        %1500 = vmatprep.mubr.f32.mxu0 0.0
        %1501 = vmatmul.mubr.f32.gmra.mrb[0].mxu0 %v1362
        %v1502 = vpop.f32.mrb[0].mxu0
        %v1503 = vadd.f32 0.0, %v1502
        %v1504 = vpop.f32.mrb[0].mxu0
        %v1505 = vadd.f32 0.0, %v1504
        %1506 = vmatprep.mubr.f32.mxu0 0.0
        %1507 = vmatmul.mubr.f32.gmra.mrb[0].mxu0 %v1365
        %v1508 = vpop.f32.mrb[0].mxu0
        %v1509 = vadd.f32 0.0, %v1508
        %v1510 = vpop.f32.mrb[0].mxu0
        %v1511 = vadd.f32 0.0, %v1510
        %1512 = vmatprep.mubr.f32.mxu0 0.0
        %1513 = vmatmul.mubr.f32.gmra.mrb[0].mxu0 %v1368
        %v1514 = vpop.f32.mrb[0].mxu0
        %v1515 = vadd.f32 0.0, %v1514
        %v1516 = vpop.f32.mrb[0].mxu0
        %v1517 = vadd.f32 0.0, %v1516
        %1518 = vmatprep.mubr.f32.mxu0 0.0
        %1519 = vmatmul.mubr.f32.gmra.mrb[0].mxu0 %v1371
        %v1520 = vpop.f32.mrb[0].mxu0
        %v1521 = vadd.f32 0.0, %v1520
        %v1522 = vpop.f32.mrb[0].mxu0
        %v1523 = vadd.f32 0.0, %v1522
        %1524 = vmatprep.mubr.f32.mxu0 0.0
        %1525 = vmatmul.mubr.f32.gmra.mrb[0].mxu0 %v1374
        %v1526 = vpop.f32.mrb[0].mxu0
        %v1527 = vadd.f32 0.0, %v1526
        %v1528 = vpop.f32.mrb[0].mxu0
        %v1529 = vadd.f32 0.0, %v1528
        %1530 = vmatprep.mubr.f32.mxu0 0.0
        %1531 = vmatmul.mubr.f32.gmra.mrb[0].mxu0 %v1377
        %v1532 = vpop.f32.mrb[0].mxu0
        %v1533 = vadd.f32 0.0, %v1532
        %v1534 = vpop.f32.mrb[0].mxu0
        %v1535 = vadd.f32 0.0, %v1534
        %1536 = vmatprep.mubr.f32.mxu0 0.0
        %1537 = vmatmul.mubr.f32.gmra.mrb[0].mxu0 %v1380
        %v1538 = vpop.f32.mrb[0].mxu0
        %v1539 = vadd.f32 0.0, %v1538
        %v1540 = vpop.f32.mrb[0].mxu0
        %v1541 = vadd.f32 0.0, %v1540
        %1542 = vdwg.mxu0
        %1543 = vmatprep.subr.mxu0 0.0
        %1544 = vmatpush1.msra.mxu0 %v1249
        %1545 = vmatprep.subr.mxu0 0.0
        %1546 = vmatpush1.msra.mxu0 %v1255
        %1547 = vmatprep.subr.mxu0 0.0
        %1548 = vmatpush1.msra.mxu0 %v1261
        %1549 = vmatprep.subr.mxu0 0.0
        %1550 = vmatpush1.msra.mxu0 %v1267
        %1551 = vmatprep.subr.mxu0 0.0
        %1552 = vmatpush1.msra.mxu0 %v1273
        %1553 = vmatprep.subr.mxu0 0.0
        %1554 = vmatpush1.msra.mxu0 %v1279
        %1555 = vmatprep.subr.mxu0 0.0
        %1556 = vmatpush1.msra.mxu0 %v1285
        %1557 = vmatprep.subr.mxu0 0.0
        %1558 = vmatpush1.msra.mxu0 %v1291
        %1559 = vmatprep.subr.mxu0 0.0
        %1560 = vmatpush1.msra.mxu0 0.0
        %1561 = vmatprep.subr.mxu0 0.0
        %1562 = vmatpush1.msra.mxu0 0.0
        %1563 = vmatprep.subr.mxu0 0.0
        %1564 = vmatpush1.msra.mxu0 0.0
        %1565 = vmatprep.subr.mxu0 0.0
        %1566 = vmatpush1.msra.mxu0 0.0
        %1567 = vmatprep.subr.mxu0 0.0
        %1568 = vmatpush1.msra.mxu0 0.0
        %1569 = vmatprep.subr.mxu0 0.0
        %1570 = vmatpush1.msra.mxu0 0.0
        %1571 = vmatprep.subr.mxu0 0.0
        %1572 = vmatpush1.msra.mxu0 0.0
        %1573 = vmatprep.subr.mxu0 0.0
        %1574 = vmatpush1.msra.mxu0 0.0
        %1575 = vmatprep.subr.mxu0 0.0
        %1576 = vmatpush1.msra.mxu0 0.0
        %1577 = vmatprep.subr.mxu0 0.0
        %1578 = vmatpush1.msra.mxu0 0.0
        %1579 = vmatprep.subr.mxu0 0.0
        %1580 = vmatpush1.msra.mxu0 0.0
        %1581 = vmatprep.subr.mxu0 0.0
        %1582 = vmatpush1.msra.mxu0 0.0
        %1583 = vmatprep.subr.mxu0 0.0
        %1584 = vmatpush1.msra.mxu0 0.0
        %1585 = vmatprep.subr.mxu0 0.0
        %1586 = vmatpush1.msra.mxu0 0.0
        %1587 = vmatprep.subr.mxu0 0.0
        %1588 = vmatpush1.msra.mxu0 0.0
        %1589 = vmatprep.subr.mxu0 0.0
        %1590 = vmatpush1.msra.mxu0 0.0
        %1591 = vmatprep.subr.mxu0 0.0
        %1592 = vmatpush1.msra.mxu0 0.0
        %1593 = vmatprep.subr.mxu0 0.0
        %1594 = vmatpush1.msra.mxu0 0.0
        %1595 = vmatprep.subr.mxu0 0.0
        %1596 = vmatpush1.msra.mxu0 0.0
        %1597 = vmatprep.subr.mxu0 0.0
        %1598 = vmatpush1.msra.mxu0 0.0
        %1599 = vmatprep.subr.mxu0 0.0
        %1600 = vmatpush1.msra.mxu0 0.0
        %1601 = vmatprep.subr.mxu0 0.0
        %1602 = vmatpush1.msra.mxu0 0.0
        %1603 = vmatprep.subr.mxu0 0.0
        %1604 = vmatpush1.msra.mxu0 0.0
        %1605 = vmatprep.subr.mxu0 0.0
        %1606 = vmatpush1.msra.mxu0 0.0
        %1607 = vmatprep.mubr.f32.mxu0 0.0
        %1608 = vmatmul.mubr.f32.gmra.mrb[0].mxu0 %v1335
        %v1609 = vpop.f32.mrb[0].mxu0
        %v1610 = vadd.f32 0.0, %v1609
        %v1611 = vpop.f32.mrb[0].mxu0
        %1612 = vmatprep.mubr.f32.mxu0 0.0
        %1613 = vmatmul.mubr.f32.gmra.mrb[0].mxu0 %v1338
        %v1614 = vpop.f32.mrb[0].mxu0
        %v1615 = vadd.f32 0.0, %v1614
        %v1616 = vpop.f32.mrb[0].mxu0
        %1617 = vmatprep.mubr.f32.mxu0 0.0
        %1618 = vmatmul.mubr.f32.gmra.mrb[0].mxu0 %v1341
        %v1619 = vpop.f32.mrb[0].mxu0
        %v1620 = vadd.f32 0.0, %v1619
        %v1621 = vpop.f32.mrb[0].mxu0
        %1622 = vmatprep.mubr.f32.mxu0 0.0
        %1623 = vmatmul.mubr.f32.gmra.mrb[0].mxu0 %v1344
        %v1624 = vpop.f32.mrb[0].mxu0
        %v1625 = vadd.f32 0.0, %v1624
        %v1626 = vpop.f32.mrb[0].mxu0
        %1627 = vmatprep.mubr.f32.mxu0 0.0
        %1628 = vmatmul.mubr.f32.gmra.mrb[0].mxu0 %v1347
        %v1629 = vpop.f32.mrb[0].mxu0
        %v1630 = vadd.f32 0.0, %v1629
        %v1631 = vpop.f32.mrb[0].mxu0
        %1632 = vmatprep.mubr.f32.mxu0 0.0
        %1633 = vmatmul.mubr.f32.gmra.mrb[0].mxu0 %v1350
        %v1634 = vpop.f32.mrb[0].mxu0
        %v1635 = vadd.f32 0.0, %v1634
        %v1636 = vpop.f32.mrb[0].mxu0
        %1637 = vmatprep.mubr.f32.mxu0 0.0
        %1638 = vmatmul.mubr.f32.gmra.mrb[0].mxu0 %v1353
        %v1639 = vpop.f32.mrb[0].mxu0
        %v1640 = vadd.f32 0.0, %v1639
        %v1641 = vpop.f32.mrb[0].mxu0
        %1642 = vmatprep.mubr.f32.mxu0 0.0
        %1643 = vmatmul.mubr.f32.gmra.mrb[0].mxu0 %v1356
        %v1644 = vpop.f32.mrb[0].mxu0
        %v1645 = vadd.f32 0.0, %v1644
        %v1646 = vpop.f32.mrb[0].mxu0
        %1647 = vmatprep.mubr.f32.mxu0 0.0
        %1648 = vmatmul.mubr.f32.gmra.mrb[0].mxu0 %v1359
        %v1649 = vpop.f32.mrb[0].mxu0
        %v1650 = vadd.f32 0.0, %v1649
        %v1651 = vpop.f32.mrb[0].mxu0
        %1652 = vmatprep.mubr.f32.mxu0 0.0
        %1653 = vmatmul.mubr.f32.gmra.mrb[0].mxu0 %v1362
        %v1654 = vpop.f32.mrb[0].mxu0
        %v1655 = vadd.f32 0.0, %v1654
        %v1656 = vpop.f32.mrb[0].mxu0
        %1657 = vmatprep.mubr.f32.mxu0 0.0
        %1658 = vmatmul.mubr.f32.gmra.mrb[0].mxu0 %v1365
        %v1659 = vpop.f32.mrb[0].mxu0
        %v1660 = vadd.f32 0.0, %v1659
        %v1661 = vpop.f32.mrb[0].mxu0
        %1662 = vmatprep.mubr.f32.mxu0 0.0
        %1663 = vmatmul.mubr.f32.gmra.mrb[0].mxu0 %v1368
        %v1664 = vpop.f32.mrb[0].mxu0
        %v1665 = vadd.f32 0.0, %v1664
        %v1666 = vpop.f32.mrb[0].mxu0
        %1667 = vmatprep.mubr.f32.mxu0 0.0
        %1668 = vmatmul.mubr.f32.gmra.mrb[0].mxu0 %v1371
        %v1669 = vpop.f32.mrb[0].mxu0
        %v1670 = vadd.f32 0.0, %v1669
        %v1671 = vpop.f32.mrb[0].mxu0
        %1672 = vmatprep.mubr.f32.mxu0 0.0
        %1673 = vmatmul.mubr.f32.gmra.mrb[0].mxu0 %v1374
        %v1674 = vpop.f32.mrb[0].mxu0
        %v1675 = vadd.f32 0.0, %v1674
        %v1676 = vpop.f32.mrb[0].mxu0
        %1677 = vmatprep.mubr.f32.mxu0 0.0
        %1678 = vmatmul.mubr.f32.gmra.mrb[0].mxu0 %v1377
        %v1679 = vpop.f32.mrb[0].mxu0
        %v1680 = vadd.f32 0.0, %v1679
        %v1681 = vpop.f32.mrb[0].mxu0
        %1682 = vmatprep.mubr.f32.mxu0 0.0
        %1683 = vmatmul.mubr.f32.gmra.mrb[0].mxu0 %v1380
        %v1684 = vpop.f32.mrb[0].mxu0
        %v1685 = vadd.f32 0.0, %v1684
        %v1686 = vpop.f32.mrb[0].mxu0
        %1687 = vdwg.mxu0
        %v1688 = vadd.f32 %v1188, %v1449
        %v1689 = vadd.f32 %v1188, %v1451
        %v1690 = vadd.f32 %v1188, %v1610
        %v1691 = vadd.f32 %v1189, %v1455
        %v1692 = vadd.f32 %v1189, %v1457
        %v1693 = vadd.f32 %v1189, %v1615
        %v1694 = vadd.f32 %v1190, %v1461
        %v1695 = vadd.f32 %v1190, %v1463
        %v1696 = vadd.f32 %v1190, %v1620
        %v1697 = vadd.f32 %v1191, %v1467
        %v1698 = vadd.f32 %v1191, %v1469
        %v1699 = vadd.f32 %v1191, %v1625
        %v1700 = vadd.f32 %v1192, %v1473
        %v1701 = vadd.f32 %v1192, %v1475
        %v1702 = vadd.f32 %v1192, %v1630
        %v1703 = vadd.f32 %v1193, %v1479
        %v1704 = vadd.f32 %v1193, %v1481
        %v1705 = vadd.f32 %v1193, %v1635
        %v1706 = vadd.f32 %v1194, %v1485
        %v1707 = vadd.f32 %v1194, %v1487
        %v1708 = vadd.f32 %v1194, %v1640
        %v1709 = vadd.f32 %v1195, %v1491
        %v1710 = vadd.f32 %v1195, %v1493
        %v1711 = vadd.f32 %v1195, %v1645
        %v1712 = vadd.f32 %v1196, %v1497
        %v1713 = vadd.f32 %v1196, %v1499
        %v1714 = vadd.f32 %v1196, %v1650
        %v1715 = vadd.f32 %v1197, %v1503
        %v1716 = vadd.f32 %v1197, %v1505
        %v1717 = vadd.f32 %v1197, %v1655
        %v1718 = vadd.f32 %v1198, %v1509
        %v1719 = vadd.f32 %v1198, %v1511
        %v1720 = vadd.f32 %v1198, %v1660
        %v1721 = vadd.f32 %v1199, %v1515
        %v1722 = vadd.f32 %v1199, %v1517
        %v1723 = vadd.f32 %v1199, %v1665
        %v1724 = vadd.f32 %v1200, %v1521
        %v1725 = vadd.f32 %v1200, %v1523
        %v1726 = vadd.f32 %v1200, %v1670
        %v1727 = vadd.f32 %v1201, %v1527
        %v1728 = vadd.f32 %v1201, %v1529
        %v1729 = vadd.f32 %v1201, %v1675
        %v1730 = vadd.f32 %v1202, %v1533
        %v1731 = vadd.f32 %v1202, %v1535
        %v1732 = vadd.f32 %v1202, %v1680
        %v1733 = vadd.f32 %v1203, %v1539
        %v1734 = vadd.f32 %v1203, %v1541
        %v1735 = vadd.f32 %v1203, %v1685
        %s1736 = scalar_lea.vmem [#allocation10], 128
        %v1737 = vld [vmem:[%s1736] sm:$0xff]
        %v1738 = vld [vmem:[%s1736 + $0x8] sm:$0xff]
        %v1739 = vld [vmem:[%s1736 + $0x10] sm:$0xff]
        %v1740 = vld [vmem:[%s1736 + $0x18] sm:$0xff]
        %v1741 = vld [vmem:[%s1736 + $0x20] sm:$0xff]
        %v1742 = vld [vmem:[%s1736 + $0x28] sm:$0xff]
        %v1743 = vld [vmem:[%s1736 + $0x30] sm:$0xff]
        %v1744 = vld [vmem:[%s1736 + $0x38] sm:$0xff]
        %v1745 = vld [vmem:[%s1736 + $0x40] sm:$0xff]
        %v1746 = vld [vmem:[%s1736 + $0x48] sm:$0xff]
        %v1747 = vld [vmem:[%s1736 + $0x50] sm:$0xff]
        %v1748 = vld [vmem:[%s1736 + $0x58] sm:$0xff]
        %v1749 = vld [vmem:[%s1736 + $0x60] sm:$0xff]
        %v1750 = vld [vmem:[%s1736 + $0x68] sm:$0xff]
        %v1751 = vld [vmem:[%s1736 + $0x70] sm:$0xff]
        %v1752 = vld [vmem:[%s1736 + $0x78] sm:$0xff]
        %1753 = vrot.lane.b32.xlu0 %v1068, 106
        %v1754 = vpop.permute.xlu0 %1753
        %1755 = vrot.lane.b32.xlu0 %v1069, 106
        %v1756 = vpop.permute.xlu0 %1755
        %1757 = vrot.lane.b32.xlu0 %v1070, 106
        %v1758 = vpop.permute.xlu0 %1757
        %1759 = vrot.lane.b32.xlu0 %v1071, 106
        %v1760 = vpop.permute.xlu0 %1759
        %1761 = vrot.lane.b32.xlu0 %v1072, 106
        %v1762 = vpop.permute.xlu0 %1761
        %1763 = vrot.lane.b32.xlu0 %v1073, 106
        %v1764 = vpop.permute.xlu0 %1763
        %1765 = vrot.lane.b32.xlu0 %v1074, 106
        %v1766 = vpop.permute.xlu0 %1765
        %1767 = vrot.lane.b32.xlu0 %v1075, 106
        %v1768 = vpop.permute.xlu0 %1767
        %1769 = vrot.lane.b32.xlu0 %v1076, 106
        %v1770 = vpop.permute.xlu0 %1769
        %1771 = vrot.lane.b32.xlu0 %v1077, 106
        %v1772 = vpop.permute.xlu0 %1771
        %1773 = vrot.lane.b32.xlu0 %v1078, 106
        %v1774 = vpop.permute.xlu0 %1773
        %1775 = vrot.lane.b32.xlu0 %v1079, 106
        %v1776 = vpop.permute.xlu0 %1775
        %1777 = vrot.lane.b32.xlu0 %v1080, 106
        %v1778 = vpop.permute.xlu0 %1777
        %1779 = vrot.lane.b32.xlu0 %v1081, 106
        %v1780 = vpop.permute.xlu0 %1779
        %1781 = vrot.lane.b32.xlu0 %v1082, 106
        %v1782 = vpop.permute.xlu0 %1781
        %1783 = vrot.lane.b32.xlu0 %v1083, 106
        %v1784 = vpop.permute.xlu0 %1783
        %1785 = vrot.lane.b32.xlu0 %v1084, 106
        %v1786 = vpop.permute.xlu0 %1785
        %1787 = vrot.lane.b32.xlu0 %v1085, 106
        %v1788 = vpop.permute.xlu0 %1787
        %1789 = vrot.lane.b32.xlu0 %v1086, 106
        %v1790 = vpop.permute.xlu0 %1789
        %1791 = vrot.lane.b32.xlu0 %v1087, 106
        %v1792 = vpop.permute.xlu0 %1791
        %1793 = vrot.lane.b32.xlu0 %v1088, 106
        %v1794 = vpop.permute.xlu0 %1793
        %1795 = vrot.lane.b32.xlu0 %v1089, 106
        %v1796 = vpop.permute.xlu0 %1795
        %1797 = vrot.lane.b32.xlu0 %v1090, 106
        %v1798 = vpop.permute.xlu0 %1797
        %1799 = vrot.lane.b32.xlu0 %v1091, 106
        %v1800 = vpop.permute.xlu0 %1799
        %vm1801 = vcmask 867328
        %v1802 = vsel %vm1801, %v1754, %v1756
        %v1803 = vsel %vm1801, %v1756, %v1758
        %v1804 = vsel %vm1801, %v1760, %v1762
        %v1805 = vsel %vm1801, %v1762, %v1764
        %v1806 = vsel %vm1801, %v1766, %v1768
        %v1807 = vsel %vm1801, %v1768, %v1770
        %v1808 = vsel %vm1801, %v1772, %v1774
        %v1809 = vsel %vm1801, %v1774, %v1776
        %v1810 = vsel %vm1801, %v1778, %v1780
        %v1811 = vsel %vm1801, %v1780, %v1782
        %v1812 = vsel %vm1801, %v1784, %v1786
        %v1813 = vsel %vm1801, %v1786, %v1788
        %v1814 = vsel %vm1801, %v1790, %v1792
        %v1815 = vsel %vm1801, %v1792, %v1794
        %v1816 = vsel %vm1801, %v1796, %v1798
        %v1817 = vsel %vm1801, %v1798, %v1800
        %v1843 = vsel %vm1333, %v1737, 0
        %v1846 = vsel %vm1333, %v1738, 0
        %v1849 = vsel %vm1333, %v1739, 0
        %v1852 = vsel %vm1333, %v1740, 0
        %v1855 = vsel %vm1333, %v1741, 0
        %v1858 = vsel %vm1333, %v1742, 0
        %v1861 = vsel %vm1333, %v1743, 0
        %v1864 = vsel %vm1333, %v1744, 0
        %v1867 = vsel %vm1333, %v1745, 0
        %v1870 = vsel %vm1333, %v1746, 0
        %v1873 = vsel %vm1333, %v1747, 0
        %v1876 = vsel %vm1333, %v1748, 0
        %v1879 = vsel %vm1333, %v1749, 0
        %v1882 = vsel %vm1333, %v1750, 0
        %v1885 = vsel %vm1333, %v1751, 0
        %v1888 = vsel %vm1333, %v1752, 0
        %1890 = vmatprep.subr.mxu0 %v1803
        %1891 = vmatpush1.msra.mxu0 %v1802
        %1892 = vmatprep.subr.mxu0 %v1805
        %1893 = vmatpush1.msra.mxu0 %v1804
        %1894 = vmatprep.subr.mxu0 %v1807
        %1895 = vmatpush1.msra.mxu0 %v1806
        %1896 = vmatprep.subr.mxu0 %v1809
        %1897 = vmatpush1.msra.mxu0 %v1808
        %1898 = vmatprep.subr.mxu0 %v1811
        %1899 = vmatpush1.msra.mxu0 %v1810
        %1900 = vmatprep.subr.mxu0 %v1813
        %1901 = vmatpush1.msra.mxu0 %v1812
        %1902 = vmatprep.subr.mxu0 %v1815
        %1903 = vmatpush1.msra.mxu0 %v1814
        %1904 = vmatprep.subr.mxu0 %v1817
        %1905 = vmatpush1.msra.mxu0 %v1816
        %1906 = vmatprep.subr.mxu0 0.0
        %1907 = vmatpush1.msra.mxu0 0.0
        %1908 = vmatprep.subr.mxu0 0.0
        %1909 = vmatpush1.msra.mxu0 0.0
        %1910 = vmatprep.subr.mxu0 0.0
        %1911 = vmatpush1.msra.mxu0 0.0
        %1912 = vmatprep.subr.mxu0 0.0
        %1913 = vmatpush1.msra.mxu0 0.0
        %1914 = vmatprep.subr.mxu0 0.0
        %1915 = vmatpush1.msra.mxu0 0.0
        %1916 = vmatprep.subr.mxu0 0.0
        %1917 = vmatpush1.msra.mxu0 0.0
        %1918 = vmatprep.subr.mxu0 0.0
        %1919 = vmatpush1.msra.mxu0 0.0
        %1920 = vmatprep.subr.mxu0 0.0
        %1921 = vmatpush1.msra.mxu0 0.0
        %1922 = vmatprep.subr.mxu0 0.0
        %1923 = vmatpush1.msra.mxu0 0.0
        %1924 = vmatprep.subr.mxu0 0.0
        %1925 = vmatpush1.msra.mxu0 0.0
        %1926 = vmatprep.subr.mxu0 0.0
        %1927 = vmatpush1.msra.mxu0 0.0
        %1928 = vmatprep.subr.mxu0 0.0
        %1929 = vmatpush1.msra.mxu0 0.0
        %1930 = vmatprep.subr.mxu0 0.0
        %1931 = vmatpush1.msra.mxu0 0.0
        %1932 = vmatprep.subr.mxu0 0.0
        %1933 = vmatpush1.msra.mxu0 0.0
        %1934 = vmatprep.subr.mxu0 0.0
        %1935 = vmatpush1.msra.mxu0 0.0
        %1936 = vmatprep.subr.mxu0 0.0
        %1937 = vmatpush1.msra.mxu0 0.0
        %1938 = vmatprep.subr.mxu0 0.0
        %1939 = vmatpush1.msra.mxu0 0.0
        %1940 = vmatprep.subr.mxu0 0.0
        %1941 = vmatpush1.msra.mxu0 0.0
        %1942 = vmatprep.subr.mxu0 0.0
        %1943 = vmatpush1.msra.mxu0 0.0
        %1944 = vmatprep.subr.mxu0 0.0
        %1945 = vmatpush1.msra.mxu0 0.0
        %1946 = vmatprep.subr.mxu0 0.0
        %1947 = vmatpush1.msra.mxu0 0.0
        %1948 = vmatprep.subr.mxu0 0.0
        %1949 = vmatpush1.msra.mxu0 0.0
        %1950 = vmatprep.subr.mxu0 0.0
        %1951 = vmatpush1.msra.mxu0 0.0
        %1952 = vmatprep.subr.mxu0 0.0
        %1953 = vmatpush1.msra.mxu0 0.0
        %1954 = vmatprep.mubr.f32.mxu0 0.0
        %1955 = vmatmul.mubr.f32.gmra.mrb[0].mxu0 %v1843
        %v1956 = vpop.f32.mrb[0].mxu0
        %v1957 = vadd.f32 0.0, %v1956
        %v1958 = vpop.f32.mrb[0].mxu0
        %v1959 = vadd.f32 0.0, %v1958
        %1960 = vmatprep.mubr.f32.mxu0 0.0
        %1961 = vmatmul.mubr.f32.gmra.mrb[0].mxu0 %v1846
        %v1962 = vpop.f32.mrb[0].mxu0
        %v1963 = vadd.f32 0.0, %v1962
        %v1964 = vpop.f32.mrb[0].mxu0
        %v1965 = vadd.f32 0.0, %v1964
        %1966 = vmatprep.mubr.f32.mxu0 0.0
        %1967 = vmatmul.mubr.f32.gmra.mrb[0].mxu0 %v1849
        %v1968 = vpop.f32.mrb[0].mxu0
        %v1969 = vadd.f32 0.0, %v1968
        %v1970 = vpop.f32.mrb[0].mxu0
        %v1971 = vadd.f32 0.0, %v1970
        %1972 = vmatprep.mubr.f32.mxu0 0.0
        %1973 = vmatmul.mubr.f32.gmra.mrb[0].mxu0 %v1852
        %v1974 = vpop.f32.mrb[0].mxu0
        %v1975 = vadd.f32 0.0, %v1974
        %v1976 = vpop.f32.mrb[0].mxu0
        %v1977 = vadd.f32 0.0, %v1976
        %1978 = vmatprep.mubr.f32.mxu0 0.0
        %1979 = vmatmul.mubr.f32.gmra.mrb[0].mxu0 %v1855
        %v1980 = vpop.f32.mrb[0].mxu0
        %v1981 = vadd.f32 0.0, %v1980
        %v1982 = vpop.f32.mrb[0].mxu0
        %v1983 = vadd.f32 0.0, %v1982
        %1984 = vmatprep.mubr.f32.mxu0 0.0
        %1985 = vmatmul.mubr.f32.gmra.mrb[0].mxu0 %v1858
        %v1986 = vpop.f32.mrb[0].mxu0
        %v1987 = vadd.f32 0.0, %v1986
        %v1988 = vpop.f32.mrb[0].mxu0
        %v1989 = vadd.f32 0.0, %v1988
        %1990 = vmatprep.mubr.f32.mxu0 0.0
        %1991 = vmatmul.mubr.f32.gmra.mrb[0].mxu0 %v1861
        %v1992 = vpop.f32.mrb[0].mxu0
        %v1993 = vadd.f32 0.0, %v1992
        %v1994 = vpop.f32.mrb[0].mxu0
        %v1995 = vadd.f32 0.0, %v1994
        %1996 = vmatprep.mubr.f32.mxu0 0.0
        %1997 = vmatmul.mubr.f32.gmra.mrb[0].mxu0 %v1864
        %v1998 = vpop.f32.mrb[0].mxu0
        %v1999 = vadd.f32 0.0, %v1998
        %v2000 = vpop.f32.mrb[0].mxu0
        %v2001 = vadd.f32 0.0, %v2000
        %2002 = vmatprep.mubr.f32.mxu0 0.0
        %2003 = vmatmul.mubr.f32.gmra.mrb[0].mxu0 %v1867
        %v2004 = vpop.f32.mrb[0].mxu0
        %v2005 = vadd.f32 0.0, %v2004
        %v2006 = vpop.f32.mrb[0].mxu0
        %v2007 = vadd.f32 0.0, %v2006
        %2008 = vmatprep.mubr.f32.mxu0 0.0
        %2009 = vmatmul.mubr.f32.gmra.mrb[0].mxu0 %v1870
        %v2010 = vpop.f32.mrb[0].mxu0
        %v2011 = vadd.f32 0.0, %v2010
        %v2012 = vpop.f32.mrb[0].mxu0
        %v2013 = vadd.f32 0.0, %v2012
        %2014 = vmatprep.mubr.f32.mxu0 0.0
        %2015 = vmatmul.mubr.f32.gmra.mrb[0].mxu0 %v1873
        %v2016 = vpop.f32.mrb[0].mxu0
        %v2017 = vadd.f32 0.0, %v2016
        %v2018 = vpop.f32.mrb[0].mxu0
        %v2019 = vadd.f32 0.0, %v2018
        %2020 = vmatprep.mubr.f32.mxu0 0.0
        %2021 = vmatmul.mubr.f32.gmra.mrb[0].mxu0 %v1876
        %v2022 = vpop.f32.mrb[0].mxu0
        %v2023 = vadd.f32 0.0, %v2022
        %v2024 = vpop.f32.mrb[0].mxu0
        %v2025 = vadd.f32 0.0, %v2024
        %2026 = vmatprep.mubr.f32.mxu0 0.0
        %2027 = vmatmul.mubr.f32.gmra.mrb[0].mxu0 %v1879
        %v2028 = vpop.f32.mrb[0].mxu0
        %v2029 = vadd.f32 0.0, %v2028
        %v2030 = vpop.f32.mrb[0].mxu0
        %v2031 = vadd.f32 0.0, %v2030
        %2032 = vmatprep.mubr.f32.mxu0 0.0
        %2033 = vmatmul.mubr.f32.gmra.mrb[0].mxu0 %v1882
        %v2034 = vpop.f32.mrb[0].mxu0
        %v2035 = vadd.f32 0.0, %v2034
        %v2036 = vpop.f32.mrb[0].mxu0
        %v2037 = vadd.f32 0.0, %v2036
        %2038 = vmatprep.mubr.f32.mxu0 0.0
        %2039 = vmatmul.mubr.f32.gmra.mrb[0].mxu0 %v1885
        %v2040 = vpop.f32.mrb[0].mxu0
        %v2041 = vadd.f32 0.0, %v2040
        %v2042 = vpop.f32.mrb[0].mxu0
        %v2043 = vadd.f32 0.0, %v2042
        %2044 = vmatprep.mubr.f32.mxu0 0.0
        %2045 = vmatmul.mubr.f32.gmra.mrb[0].mxu0 %v1888
        %v2046 = vpop.f32.mrb[0].mxu0
        %v2047 = vadd.f32 0.0, %v2046
        %v2048 = vpop.f32.mrb[0].mxu0
        %v2049 = vadd.f32 0.0, %v2048
        %2050 = vdwg.mxu0
        %2051 = vmatprep.subr.mxu0 0.0
        %2052 = vmatpush1.msra.mxu0 %v1758
        %2053 = vmatprep.subr.mxu0 0.0
        %2054 = vmatpush1.msra.mxu0 %v1764
        %2055 = vmatprep.subr.mxu0 0.0
        %2056 = vmatpush1.msra.mxu0 %v1770
        %2057 = vmatprep.subr.mxu0 0.0
        %2058 = vmatpush1.msra.mxu0 %v1776
        %2059 = vmatprep.subr.mxu0 0.0
        %2060 = vmatpush1.msra.mxu0 %v1782
        %2061 = vmatprep.subr.mxu0 0.0
        %2062 = vmatpush1.msra.mxu0 %v1788
        %2063 = vmatprep.subr.mxu0 0.0
        %2064 = vmatpush1.msra.mxu0 %v1794
        %2065 = vmatprep.subr.mxu0 0.0
        %2066 = vmatpush1.msra.mxu0 %v1800
        %2067 = vmatprep.subr.mxu0 0.0
        %2068 = vmatpush1.msra.mxu0 0.0
        %2069 = vmatprep.subr.mxu0 0.0
        %2070 = vmatpush1.msra.mxu0 0.0
        %2071 = vmatprep.subr.mxu0 0.0
        %2072 = vmatpush1.msra.mxu0 0.0
        %2073 = vmatprep.subr.mxu0 0.0
        %2074 = vmatpush1.msra.mxu0 0.0
        %2075 = vmatprep.subr.mxu0 0.0
        %2076 = vmatpush1.msra.mxu0 0.0
        %2077 = vmatprep.subr.mxu0 0.0
        %2078 = vmatpush1.msra.mxu0 0.0
        %2079 = vmatprep.subr.mxu0 0.0
        %2080 = vmatpush1.msra.mxu0 0.0
        %2081 = vmatprep.subr.mxu0 0.0
        %2082 = vmatpush1.msra.mxu0 0.0
        %2083 = vmatprep.subr.mxu0 0.0
        %2084 = vmatpush1.msra.mxu0 0.0
        %2085 = vmatprep.subr.mxu0 0.0
        %2086 = vmatpush1.msra.mxu0 0.0
        %2087 = vmatprep.subr.mxu0 0.0
        %2088 = vmatpush1.msra.mxu0 0.0
        %2089 = vmatprep.subr.mxu0 0.0
        %2090 = vmatpush1.msra.mxu0 0.0
        %2091 = vmatprep.subr.mxu0 0.0
        %2092 = vmatpush1.msra.mxu0 0.0
        %2093 = vmatprep.subr.mxu0 0.0
        %2094 = vmatpush1.msra.mxu0 0.0
        %2095 = vmatprep.subr.mxu0 0.0
        %2096 = vmatpush1.msra.mxu0 0.0
        %2097 = vmatprep.subr.mxu0 0.0
        %2098 = vmatpush1.msra.mxu0 0.0
        %2099 = vmatprep.subr.mxu0 0.0
        %2100 = vmatpush1.msra.mxu0 0.0
        %2101 = vmatprep.subr.mxu0 0.0
        %2102 = vmatpush1.msra.mxu0 0.0
        %2103 = vmatprep.subr.mxu0 0.0
        %2104 = vmatpush1.msra.mxu0 0.0
        %2105 = vmatprep.subr.mxu0 0.0
        %2106 = vmatpush1.msra.mxu0 0.0
        %2107 = vmatprep.subr.mxu0 0.0
        %2108 = vmatpush1.msra.mxu0 0.0
        %2109 = vmatprep.subr.mxu0 0.0
        %2110 = vmatpush1.msra.mxu0 0.0
        %2111 = vmatprep.subr.mxu0 0.0
        %2112 = vmatpush1.msra.mxu0 0.0
        %2113 = vmatprep.subr.mxu0 0.0
        %2114 = vmatpush1.msra.mxu0 0.0
        %2115 = vmatprep.mubr.f32.mxu0 0.0
        %2116 = vmatmul.mubr.f32.gmra.mrb[0].mxu0 %v1843
        %v2117 = vpop.f32.mrb[0].mxu0
        %v2118 = vadd.f32 0.0, %v2117
        %v2119 = vpop.f32.mrb[0].mxu0
        %2120 = vmatprep.mubr.f32.mxu0 0.0
        %2121 = vmatmul.mubr.f32.gmra.mrb[0].mxu0 %v1846
        %v2122 = vpop.f32.mrb[0].mxu0
        %v2123 = vadd.f32 0.0, %v2122
        %v2124 = vpop.f32.mrb[0].mxu0
        %2125 = vmatprep.mubr.f32.mxu0 0.0
        %2126 = vmatmul.mubr.f32.gmra.mrb[0].mxu0 %v1849
        %v2127 = vpop.f32.mrb[0].mxu0
        %v2128 = vadd.f32 0.0, %v2127
        %v2129 = vpop.f32.mrb[0].mxu0
        %2130 = vmatprep.mubr.f32.mxu0 0.0
        %2131 = vmatmul.mubr.f32.gmra.mrb[0].mxu0 %v1852
        %v2132 = vpop.f32.mrb[0].mxu0
        %v2133 = vadd.f32 0.0, %v2132
        %v2134 = vpop.f32.mrb[0].mxu0
        %2135 = vmatprep.mubr.f32.mxu0 0.0
        %2136 = vmatmul.mubr.f32.gmra.mrb[0].mxu0 %v1855
        %v2137 = vpop.f32.mrb[0].mxu0
        %v2138 = vadd.f32 0.0, %v2137
        %v2139 = vpop.f32.mrb[0].mxu0
        %2140 = vmatprep.mubr.f32.mxu0 0.0
        %2141 = vmatmul.mubr.f32.gmra.mrb[0].mxu0 %v1858
        %v2142 = vpop.f32.mrb[0].mxu0
        %v2143 = vadd.f32 0.0, %v2142
        %v2144 = vpop.f32.mrb[0].mxu0
        %2145 = vmatprep.mubr.f32.mxu0 0.0
        %2146 = vmatmul.mubr.f32.gmra.mrb[0].mxu0 %v1861
        %v2147 = vpop.f32.mrb[0].mxu0
        %v2148 = vadd.f32 0.0, %v2147
        %v2149 = vpop.f32.mrb[0].mxu0
        %2150 = vmatprep.mubr.f32.mxu0 0.0
        %2151 = vmatmul.mubr.f32.gmra.mrb[0].mxu0 %v1864
        %v2152 = vpop.f32.mrb[0].mxu0
        %v2153 = vadd.f32 0.0, %v2152
        %v2154 = vpop.f32.mrb[0].mxu0
        %2155 = vmatprep.mubr.f32.mxu0 0.0
        %2156 = vmatmul.mubr.f32.gmra.mrb[0].mxu0 %v1867
        %v2157 = vpop.f32.mrb[0].mxu0
        %v2158 = vadd.f32 0.0, %v2157
        %v2159 = vpop.f32.mrb[0].mxu0
        %2160 = vmatprep.mubr.f32.mxu0 0.0
        %2161 = vmatmul.mubr.f32.gmra.mrb[0].mxu0 %v1870
        %v2162 = vpop.f32.mrb[0].mxu0
        %v2163 = vadd.f32 0.0, %v2162
        %v2164 = vpop.f32.mrb[0].mxu0
        %2165 = vmatprep.mubr.f32.mxu0 0.0
        %2166 = vmatmul.mubr.f32.gmra.mrb[0].mxu0 %v1873
        %v2167 = vpop.f32.mrb[0].mxu0
        %v2168 = vadd.f32 0.0, %v2167
        %v2169 = vpop.f32.mrb[0].mxu0
        %2170 = vmatprep.mubr.f32.mxu0 0.0
        %2171 = vmatmul.mubr.f32.gmra.mrb[0].mxu0 %v1876
        %v2172 = vpop.f32.mrb[0].mxu0
        %v2173 = vadd.f32 0.0, %v2172
        %v2174 = vpop.f32.mrb[0].mxu0
        %2175 = vmatprep.mubr.f32.mxu0 0.0
        %2176 = vmatmul.mubr.f32.gmra.mrb[0].mxu0 %v1879
        %v2177 = vpop.f32.mrb[0].mxu0
        %v2178 = vadd.f32 0.0, %v2177
        %v2179 = vpop.f32.mrb[0].mxu0
        %2180 = vmatprep.mubr.f32.mxu0 0.0
        %2181 = vmatmul.mubr.f32.gmra.mrb[0].mxu0 %v1882
        %v2182 = vpop.f32.mrb[0].mxu0
        %v2183 = vadd.f32 0.0, %v2182
        %v2184 = vpop.f32.mrb[0].mxu0
        %2185 = vmatprep.mubr.f32.mxu0 0.0
        %2186 = vmatmul.mubr.f32.gmra.mrb[0].mxu0 %v1885
        %v2187 = vpop.f32.mrb[0].mxu0
        %v2188 = vadd.f32 0.0, %v2187
        %v2189 = vpop.f32.mrb[0].mxu0
        %2190 = vmatprep.mubr.f32.mxu0 0.0
        %2191 = vmatmul.mubr.f32.gmra.mrb[0].mxu0 %v1888
        %v2192 = vpop.f32.mrb[0].mxu0
        %v2193 = vadd.f32 0.0, %v2192
        %v2194 = vpop.f32.mrb[0].mxu0
        %2195 = vdwg.mxu0
        %v2196 = vadd.f32 %v1688, %v1957
        %v2197 = vadd.f32 %v1689, %v1959
        %v2198 = vadd.f32 %v1690, %v2118
        %v2199 = vadd.f32 %v1691, %v1963
        %v2200 = vadd.f32 %v1692, %v1965
        %v2201 = vadd.f32 %v1693, %v2123
        %v2202 = vadd.f32 %v1694, %v1969
        %v2203 = vadd.f32 %v1695, %v1971
        %v2204 = vadd.f32 %v1696, %v2128
        %v2205 = vadd.f32 %v1697, %v1975
        %v2206 = vadd.f32 %v1698, %v1977
        %v2207 = vadd.f32 %v1699, %v2133
        %v2208 = vadd.f32 %v1700, %v1981
        %v2209 = vadd.f32 %v1701, %v1983
        %v2210 = vadd.f32 %v1702, %v2138
        %v2211 = vadd.f32 %v1703, %v1987
        %v2212 = vadd.f32 %v1704, %v1989
        %v2213 = vadd.f32 %v1705, %v2143
        %v2214 = vadd.f32 %v1706, %v1993
        %v2215 = vadd.f32 %v1707, %v1995
        %v2216 = vadd.f32 %v1708, %v2148
        %v2217 = vadd.f32 %v1709, %v1999
        %v2218 = vadd.f32 %v1710, %v2001
        %v2219 = vadd.f32 %v1711, %v2153
        %v2220 = vadd.f32 %v1712, %v2005
        %v2221 = vadd.f32 %v1713, %v2007
        %v2222 = vadd.f32 %v1714, %v2158
        %v2223 = vadd.f32 %v1715, %v2011
        %v2224 = vadd.f32 %v1716, %v2013
        %v2225 = vadd.f32 %v1717, %v2163
        %v2226 = vadd.f32 %v1718, %v2017
        %v2227 = vadd.f32 %v1719, %v2019
        %v2228 = vadd.f32 %v1720, %v2168
        %v2229 = vadd.f32 %v1721, %v2023
        %v2230 = vadd.f32 %v1722, %v2025
        %v2231 = vadd.f32 %v1723, %v2173
        %v2232 = vadd.f32 %v1724, %v2029
        %v2233 = vadd.f32 %v1725, %v2031
        %v2234 = vadd.f32 %v1726, %v2178
        %v2235 = vadd.f32 %v1727, %v2035
        %v2236 = vadd.f32 %v1728, %v2037
        %v2237 = vadd.f32 %v1729, %v2183
        %v2238 = vadd.f32 %v1730, %v2041
        %v2239 = vadd.f32 %v1731, %v2043
        %v2240 = vadd.f32 %v1732, %v2188
        %v2241 = vadd.f32 %v1733, %v2047
        %v2242 = vadd.f32 %v1734, %v2049
        %v2243 = vadd.f32 %v1735, %v2193
        %s2244 = scalar_lea.vmem [#allocation10], 256
        %v2245 = vld [vmem:[%s2244] sm:$0xff]
        %v2246 = vld [vmem:[%s2244 + $0x8] sm:$0xff]
        %v2247 = vld [vmem:[%s2244 + $0x10] sm:$0xff]
        %v2248 = vld [vmem:[%s2244 + $0x18] sm:$0xff]
        %v2249 = vld [vmem:[%s2244 + $0x20] sm:$0xff]
        %v2250 = vld [vmem:[%s2244 + $0x28] sm:$0xff]
        %v2251 = vld [vmem:[%s2244 + $0x30] sm:$0xff]
        %v2252 = vld [vmem:[%s2244 + $0x38] sm:$0xff]
        %v2253 = vld [vmem:[%s2244 + $0x40] sm:$0xff]
        %v2254 = vld [vmem:[%s2244 + $0x48] sm:$0xff]
        %v2255 = vld [vmem:[%s2244 + $0x50] sm:$0xff]
        %v2256 = vld [vmem:[%s2244 + $0x58] sm:$0xff]
        %v2257 = vld [vmem:[%s2244 + $0x60] sm:$0xff]
        %v2258 = vld [vmem:[%s2244 + $0x68] sm:$0xff]
        %v2259 = vld [vmem:[%s2244 + $0x70] sm:$0xff]
        %v2260 = vld [vmem:[%s2244 + $0x78] sm:$0xff]
        %2261 = vrot.lane.b32.xlu0 %v1068, 105
        %v2262 = vpop.permute.xlu0 %2261
        %2263 = vrot.lane.b32.xlu0 %v1069, 105
        %v2264 = vpop.permute.xlu0 %2263
        %2265 = vrot.lane.b32.xlu0 %v1070, 105
        %v2266 = vpop.permute.xlu0 %2265
        %2267 = vrot.lane.b32.xlu0 %v1071, 105
        %v2268 = vpop.permute.xlu0 %2267
        %2269 = vrot.lane.b32.xlu0 %v1072, 105
        %v2270 = vpop.permute.xlu0 %2269
        %2271 = vrot.lane.b32.xlu0 %v1073, 105
        %v2272 = vpop.permute.xlu0 %2271
        %2273 = vrot.lane.b32.xlu0 %v1074, 105
        %v2274 = vpop.permute.xlu0 %2273
        %2275 = vrot.lane.b32.xlu0 %v1075, 105
        %v2276 = vpop.permute.xlu0 %2275
        %2277 = vrot.lane.b32.xlu0 %v1076, 105
        %v2278 = vpop.permute.xlu0 %2277
        %2279 = vrot.lane.b32.xlu0 %v1077, 105
        %v2280 = vpop.permute.xlu0 %2279
        %2281 = vrot.lane.b32.xlu0 %v1078, 105
        %v2282 = vpop.permute.xlu0 %2281
        %2283 = vrot.lane.b32.xlu0 %v1079, 105
        %v2284 = vpop.permute.xlu0 %2283
        %2285 = vrot.lane.b32.xlu0 %v1080, 105
        %v2286 = vpop.permute.xlu0 %2285
        %2287 = vrot.lane.b32.xlu0 %v1081, 105
        %v2288 = vpop.permute.xlu0 %2287
        %2289 = vrot.lane.b32.xlu0 %v1082, 105
        %v2290 = vpop.permute.xlu0 %2289
        %2291 = vrot.lane.b32.xlu0 %v1083, 105
        %v2292 = vpop.permute.xlu0 %2291
        %2293 = vrot.lane.b32.xlu0 %v1084, 105
        %v2294 = vpop.permute.xlu0 %2293
        %2295 = vrot.lane.b32.xlu0 %v1085, 105
        %v2296 = vpop.permute.xlu0 %2295
        %2297 = vrot.lane.b32.xlu0 %v1086, 105
        %v2298 = vpop.permute.xlu0 %2297
        %2299 = vrot.lane.b32.xlu0 %v1087, 105
        %v2300 = vpop.permute.xlu0 %2299
        %2301 = vrot.lane.b32.xlu0 %v1088, 105
        %v2302 = vpop.permute.xlu0 %2301
        %2303 = vrot.lane.b32.xlu0 %v1089, 105
        %v2304 = vpop.permute.xlu0 %2303
        %2305 = vrot.lane.b32.xlu0 %v1090, 105
        %v2306 = vpop.permute.xlu0 %2305
        %2307 = vrot.lane.b32.xlu0 %v1091, 105
        %v2308 = vpop.permute.xlu0 %2307
        %vm2309 = vcmask 859136
        %v2310 = vsel %vm2309, %v2262, %v2264
        %v2311 = vsel %vm2309, %v2264, %v2266
        %v2312 = vsel %vm2309, %v2268, %v2270
        %v2313 = vsel %vm2309, %v2270, %v2272
        %v2314 = vsel %vm2309, %v2274, %v2276
        %v2315 = vsel %vm2309, %v2276, %v2278
        %v2316 = vsel %vm2309, %v2280, %v2282
        %v2317 = vsel %vm2309, %v2282, %v2284
        %v2318 = vsel %vm2309, %v2286, %v2288
        %v2319 = vsel %vm2309, %v2288, %v2290
        %v2320 = vsel %vm2309, %v2292, %v2294
        %v2321 = vsel %vm2309, %v2294, %v2296
        %v2322 = vsel %vm2309, %v2298, %v2300
        %v2323 = vsel %vm2309, %v2300, %v2302
        %v2324 = vsel %vm2309, %v2304, %v2306
        %v2325 = vsel %vm2309, %v2306, %v2308
        %v2351 = vsel %vm1333, %v2245, 0
        %v2354 = vsel %vm1333, %v2246, 0
        %v2357 = vsel %vm1333, %v2247, 0
        %v2360 = vsel %vm1333, %v2248, 0
        %v2363 = vsel %vm1333, %v2249, 0
        %v2366 = vsel %vm1333, %v2250, 0
        %v2369 = vsel %vm1333, %v2251, 0
        %v2372 = vsel %vm1333, %v2252, 0
        %v2375 = vsel %vm1333, %v2253, 0
        %v2378 = vsel %vm1333, %v2254, 0
        %v2381 = vsel %vm1333, %v2255, 0
        %v2384 = vsel %vm1333, %v2256, 0
        %v2387 = vsel %vm1333, %v2257, 0
        %v2390 = vsel %vm1333, %v2258, 0
        %v2393 = vsel %vm1333, %v2259, 0
        %v2396 = vsel %vm1333, %v2260, 0
        %2398 = vmatprep.subr.mxu0 %v2311
        %2399 = vmatpush1.msra.mxu0 %v2310
        %2400 = vmatprep.subr.mxu0 %v2313
        %2401 = vmatpush1.msra.mxu0 %v2312
        %2402 = vmatprep.subr.mxu0 %v2315
        %2403 = vmatpush1.msra.mxu0 %v2314
        %2404 = vmatprep.subr.mxu0 %v2317
        %2405 = vmatpush1.msra.mxu0 %v2316
        %2406 = vmatprep.subr.mxu0 %v2319
        %2407 = vmatpush1.msra.mxu0 %v2318
        %2408 = vmatprep.subr.mxu0 %v2321
        %2409 = vmatpush1.msra.mxu0 %v2320
        %2410 = vmatprep.subr.mxu0 %v2323
        %2411 = vmatpush1.msra.mxu0 %v2322
        %2412 = vmatprep.subr.mxu0 %v2325
        %2413 = vmatpush1.msra.mxu0 %v2324
        %2414 = vmatprep.subr.mxu0 0.0
        %2415 = vmatpush1.msra.mxu0 0.0
        %2416 = vmatprep.subr.mxu0 0.0
        %2417 = vmatpush1.msra.mxu0 0.0
        %2418 = vmatprep.subr.mxu0 0.0
        %2419 = vmatpush1.msra.mxu0 0.0
        %2420 = vmatprep.subr.mxu0 0.0
        %2421 = vmatpush1.msra.mxu0 0.0
        %2422 = vmatprep.subr.mxu0 0.0
        %2423 = vmatpush1.msra.mxu0 0.0
        %2424 = vmatprep.subr.mxu0 0.0
        %2425 = vmatpush1.msra.mxu0 0.0
        %2426 = vmatprep.subr.mxu0 0.0
        %2427 = vmatpush1.msra.mxu0 0.0
        %2428 = vmatprep.subr.mxu0 0.0
        %2429 = vmatpush1.msra.mxu0 0.0
        %2430 = vmatprep.subr.mxu0 0.0
        %2431 = vmatpush1.msra.mxu0 0.0
        %2432 = vmatprep.subr.mxu0 0.0
        %2433 = vmatpush1.msra.mxu0 0.0
        %2434 = vmatprep.subr.mxu0 0.0
        %2435 = vmatpush1.msra.mxu0 0.0
        %2436 = vmatprep.subr.mxu0 0.0
        %2437 = vmatpush1.msra.mxu0 0.0
        %2438 = vmatprep.subr.mxu0 0.0
        %2439 = vmatpush1.msra.mxu0 0.0
        %2440 = vmatprep.subr.mxu0 0.0
        %2441 = vmatpush1.msra.mxu0 0.0
        %2442 = vmatprep.subr.mxu0 0.0
        %2443 = vmatpush1.msra.mxu0 0.0
        %2444 = vmatprep.subr.mxu0 0.0
        %2445 = vmatpush1.msra.mxu0 0.0
        %2446 = vmatprep.subr.mxu0 0.0
        %2447 = vmatpush1.msra.mxu0 0.0
        %2448 = vmatprep.subr.mxu0 0.0
        %2449 = vmatpush1.msra.mxu0 0.0
        %2450 = vmatprep.subr.mxu0 0.0
        %2451 = vmatpush1.msra.mxu0 0.0
        %2452 = vmatprep.subr.mxu0 0.0
        %2453 = vmatpush1.msra.mxu0 0.0
        %2454 = vmatprep.subr.mxu0 0.0
        %2455 = vmatpush1.msra.mxu0 0.0
        %2456 = vmatprep.subr.mxu0 0.0
        %2457 = vmatpush1.msra.mxu0 0.0
        %2458 = vmatprep.subr.mxu0 0.0
        %2459 = vmatpush1.msra.mxu0 0.0
        %2460 = vmatprep.subr.mxu0 0.0
        %2461 = vmatpush1.msra.mxu0 0.0
        %2462 = vmatprep.mubr.f32.mxu0 0.0
        %2463 = vmatmul.mubr.f32.gmra.mrb[0].mxu0 %v2351
        %v2464 = vpop.f32.mrb[0].mxu0
        %v2465 = vadd.f32 0.0, %v2464
        %v2466 = vpop.f32.mrb[0].mxu0
        %v2467 = vadd.f32 0.0, %v2466
        %2468 = vmatprep.mubr.f32.mxu0 0.0
        %2469 = vmatmul.mubr.f32.gmra.mrb[0].mxu0 %v2354
        %v2470 = vpop.f32.mrb[0].mxu0
        %v2471 = vadd.f32 0.0, %v2470
        %v2472 = vpop.f32.mrb[0].mxu0
        %v2473 = vadd.f32 0.0, %v2472
        %2474 = vmatprep.mubr.f32.mxu0 0.0
        %2475 = vmatmul.mubr.f32.gmra.mrb[0].mxu0 %v2357
        %v2476 = vpop.f32.mrb[0].mxu0
        %v2477 = vadd.f32 0.0, %v2476
        %v2478 = vpop.f32.mrb[0].mxu0
        %v2479 = vadd.f32 0.0, %v2478
        %2480 = vmatprep.mubr.f32.mxu0 0.0
        %2481 = vmatmul.mubr.f32.gmra.mrb[0].mxu0 %v2360
        %v2482 = vpop.f32.mrb[0].mxu0
        %v2483 = vadd.f32 0.0, %v2482
        %v2484 = vpop.f32.mrb[0].mxu0
        %v2485 = vadd.f32 0.0, %v2484
        %2486 = vmatprep.mubr.f32.mxu0 0.0
        %2487 = vmatmul.mubr.f32.gmra.mrb[0].mxu0 %v2363
        %v2488 = vpop.f32.mrb[0].mxu0
        %v2489 = vadd.f32 0.0, %v2488
        %v2490 = vpop.f32.mrb[0].mxu0
        %v2491 = vadd.f32 0.0, %v2490
        %2492 = vmatprep.mubr.f32.mxu0 0.0
        %2493 = vmatmul.mubr.f32.gmra.mrb[0].mxu0 %v2366
        %v2494 = vpop.f32.mrb[0].mxu0
        %v2495 = vadd.f32 0.0, %v2494
        %v2496 = vpop.f32.mrb[0].mxu0
        %v2497 = vadd.f32 0.0, %v2496
        %2498 = vmatprep.mubr.f32.mxu0 0.0
        %2499 = vmatmul.mubr.f32.gmra.mrb[0].mxu0 %v2369
        %v2500 = vpop.f32.mrb[0].mxu0
        %v2501 = vadd.f32 0.0, %v2500
        %v2502 = vpop.f32.mrb[0].mxu0
        %v2503 = vadd.f32 0.0, %v2502
        %2504 = vmatprep.mubr.f32.mxu0 0.0
        %2505 = vmatmul.mubr.f32.gmra.mrb[0].mxu0 %v2372
        %v2506 = vpop.f32.mrb[0].mxu0
        %v2507 = vadd.f32 0.0, %v2506
        %v2508 = vpop.f32.mrb[0].mxu0
        %v2509 = vadd.f32 0.0, %v2508
        %2510 = vmatprep.mubr.f32.mxu0 0.0
        %2511 = vmatmul.mubr.f32.gmra.mrb[0].mxu0 %v2375
        %v2512 = vpop.f32.mrb[0].mxu0
        %v2513 = vadd.f32 0.0, %v2512
        %v2514 = vpop.f32.mrb[0].mxu0
        %v2515 = vadd.f32 0.0, %v2514
        %2516 = vmatprep.mubr.f32.mxu0 0.0
        %2517 = vmatmul.mubr.f32.gmra.mrb[0].mxu0 %v2378
        %v2518 = vpop.f32.mrb[0].mxu0
        %v2519 = vadd.f32 0.0, %v2518
        %v2520 = vpop.f32.mrb[0].mxu0
        %v2521 = vadd.f32 0.0, %v2520
        %2522 = vmatprep.mubr.f32.mxu0 0.0
        %2523 = vmatmul.mubr.f32.gmra.mrb[0].mxu0 %v2381
        %v2524 = vpop.f32.mrb[0].mxu0
        %v2525 = vadd.f32 0.0, %v2524
        %v2526 = vpop.f32.mrb[0].mxu0
        %v2527 = vadd.f32 0.0, %v2526
        %2528 = vmatprep.mubr.f32.mxu0 0.0
        %2529 = vmatmul.mubr.f32.gmra.mrb[0].mxu0 %v2384
        %v2530 = vpop.f32.mrb[0].mxu0
        %v2531 = vadd.f32 0.0, %v2530
        %v2532 = vpop.f32.mrb[0].mxu0
        %v2533 = vadd.f32 0.0, %v2532
        %2534 = vmatprep.mubr.f32.mxu0 0.0
        %2535 = vmatmul.mubr.f32.gmra.mrb[0].mxu0 %v2387
        %v2536 = vpop.f32.mrb[0].mxu0
        %v2537 = vadd.f32 0.0, %v2536
        %v2538 = vpop.f32.mrb[0].mxu0
        %v2539 = vadd.f32 0.0, %v2538
        %2540 = vmatprep.mubr.f32.mxu0 0.0
        %2541 = vmatmul.mubr.f32.gmra.mrb[0].mxu0 %v2390
        %v2542 = vpop.f32.mrb[0].mxu0
        %v2543 = vadd.f32 0.0, %v2542
        %v2544 = vpop.f32.mrb[0].mxu0
        %v2545 = vadd.f32 0.0, %v2544
        %2546 = vmatprep.mubr.f32.mxu0 0.0
        %2547 = vmatmul.mubr.f32.gmra.mrb[0].mxu0 %v2393
        %v2548 = vpop.f32.mrb[0].mxu0
        %v2549 = vadd.f32 0.0, %v2548
        %v2550 = vpop.f32.mrb[0].mxu0
        %v2551 = vadd.f32 0.0, %v2550
        %2552 = vmatprep.mubr.f32.mxu0 0.0
        %2553 = vmatmul.mubr.f32.gmra.mrb[0].mxu0 %v2396
        %v2554 = vpop.f32.mrb[0].mxu0
        %v2555 = vadd.f32 0.0, %v2554
        %v2556 = vpop.f32.mrb[0].mxu0
        %v2557 = vadd.f32 0.0, %v2556
        %2558 = vdwg.mxu0
        %2559 = vmatprep.subr.mxu0 0.0
        %2560 = vmatpush1.msra.mxu0 %v2266
        %2561 = vmatprep.subr.mxu0 0.0
        %2562 = vmatpush1.msra.mxu0 %v2272
        %2563 = vmatprep.subr.mxu0 0.0
        %2564 = vmatpush1.msra.mxu0 %v2278
        %2565 = vmatprep.subr.mxu0 0.0
        %2566 = vmatpush1.msra.mxu0 %v2284
        %2567 = vmatprep.subr.mxu0 0.0
        %2568 = vmatpush1.msra.mxu0 %v2290
        %2569 = vmatprep.subr.mxu0 0.0
        %2570 = vmatpush1.msra.mxu0 %v2296
        %2571 = vmatprep.subr.mxu0 0.0
        %2572 = vmatpush1.msra.mxu0 %v2302
        %2573 = vmatprep.subr.mxu0 0.0
        %2574 = vmatpush1.msra.mxu0 %v2308
        %2575 = vmatprep.subr.mxu0 0.0
        %2576 = vmatpush1.msra.mxu0 0.0
        %2577 = vmatprep.subr.mxu0 0.0
        %2578 = vmatpush1.msra.mxu0 0.0
        %2579 = vmatprep.subr.mxu0 0.0
        %2580 = vmatpush1.msra.mxu0 0.0
        %2581 = vmatprep.subr.mxu0 0.0
        %2582 = vmatpush1.msra.mxu0 0.0
        %2583 = vmatprep.subr.mxu0 0.0
        %2584 = vmatpush1.msra.mxu0 0.0
        %2585 = vmatprep.subr.mxu0 0.0
        %2586 = vmatpush1.msra.mxu0 0.0
        %2587 = vmatprep.subr.mxu0 0.0
        %2588 = vmatpush1.msra.mxu0 0.0
        %2589 = vmatprep.subr.mxu0 0.0
        %2590 = vmatpush1.msra.mxu0 0.0
        %2591 = vmatprep.subr.mxu0 0.0
        %2592 = vmatpush1.msra.mxu0 0.0
        %2593 = vmatprep.subr.mxu0 0.0
        %2594 = vmatpush1.msra.mxu0 0.0
        %2595 = vmatprep.subr.mxu0 0.0
        %2596 = vmatpush1.msra.mxu0 0.0
        %2597 = vmatprep.subr.mxu0 0.0
        %2598 = vmatpush1.msra.mxu0 0.0
        %2599 = vmatprep.subr.mxu0 0.0
        %2600 = vmatpush1.msra.mxu0 0.0
        %2601 = vmatprep.subr.mxu0 0.0
        %2602 = vmatpush1.msra.mxu0 0.0
        %2603 = vmatprep.subr.mxu0 0.0
        %2604 = vmatpush1.msra.mxu0 0.0
        %2605 = vmatprep.subr.mxu0 0.0
        %2606 = vmatpush1.msra.mxu0 0.0
        %2607 = vmatprep.subr.mxu0 0.0
        %2608 = vmatpush1.msra.mxu0 0.0
        %2609 = vmatprep.subr.mxu0 0.0
        %2610 = vmatpush1.msra.mxu0 0.0
        %2611 = vmatprep.subr.mxu0 0.0
        %2612 = vmatpush1.msra.mxu0 0.0
        %2613 = vmatprep.subr.mxu0 0.0
        %2614 = vmatpush1.msra.mxu0 0.0
        %2615 = vmatprep.subr.mxu0 0.0
        %2616 = vmatpush1.msra.mxu0 0.0
        %2617 = vmatprep.subr.mxu0 0.0
        %2618 = vmatpush1.msra.mxu0 0.0
        %2619 = vmatprep.subr.mxu0 0.0
        %2620 = vmatpush1.msra.mxu0 0.0
        %2621 = vmatprep.subr.mxu0 0.0
        %2622 = vmatpush1.msra.mxu0 0.0
        %2623 = vmatprep.mubr.f32.mxu0 0.0
        %2624 = vmatmul.mubr.f32.gmra.mrb[0].mxu0 %v2351
        %v2625 = vpop.f32.mrb[0].mxu0
        %v2626 = vadd.f32 0.0, %v2625
        %v2627 = vpop.f32.mrb[0].mxu0
        %2628 = vmatprep.mubr.f32.mxu0 0.0
        %2629 = vmatmul.mubr.f32.gmra.mrb[0].mxu0 %v2354
        %v2630 = vpop.f32.mrb[0].mxu0
        %v2631 = vadd.f32 0.0, %v2630
        %v2632 = vpop.f32.mrb[0].mxu0
        %2633 = vmatprep.mubr.f32.mxu0 0.0
        %2634 = vmatmul.mubr.f32.gmra.mrb[0].mxu0 %v2357
        %v2635 = vpop.f32.mrb[0].mxu0
        %v2636 = vadd.f32 0.0, %v2635
        %v2637 = vpop.f32.mrb[0].mxu0
        %2638 = vmatprep.mubr.f32.mxu0 0.0
        %2639 = vmatmul.mubr.f32.gmra.mrb[0].mxu0 %v2360
        %v2640 = vpop.f32.mrb[0].mxu0
        %v2641 = vadd.f32 0.0, %v2640
        %v2642 = vpop.f32.mrb[0].mxu0
        %2643 = vmatprep.mubr.f32.mxu0 0.0
        %2644 = vmatmul.mubr.f32.gmra.mrb[0].mxu0 %v2363
        %v2645 = vpop.f32.mrb[0].mxu0
        %v2646 = vadd.f32 0.0, %v2645
        %v2647 = vpop.f32.mrb[0].mxu0
        %2648 = vmatprep.mubr.f32.mxu0 0.0
        %2649 = vmatmul.mubr.f32.gmra.mrb[0].mxu0 %v2366
        %v2650 = vpop.f32.mrb[0].mxu0
        %v2651 = vadd.f32 0.0, %v2650
        %v2652 = vpop.f32.mrb[0].mxu0
        %2653 = vmatprep.mubr.f32.mxu0 0.0
        %2654 = vmatmul.mubr.f32.gmra.mrb[0].mxu0 %v2369
        %v2655 = vpop.f32.mrb[0].mxu0
        %v2656 = vadd.f32 0.0, %v2655
        %v2657 = vpop.f32.mrb[0].mxu0
        %2658 = vmatprep.mubr.f32.mxu0 0.0
        %2659 = vmatmul.mubr.f32.gmra.mrb[0].mxu0 %v2372
        %v2660 = vpop.f32.mrb[0].mxu0
        %v2661 = vadd.f32 0.0, %v2660
        %v2662 = vpop.f32.mrb[0].mxu0
        %2663 = vmatprep.mubr.f32.mxu0 0.0
        %2664 = vmatmul.mubr.f32.gmra.mrb[0].mxu0 %v2375
        %v2665 = vpop.f32.mrb[0].mxu0
        %v2666 = vadd.f32 0.0, %v2665
        %v2667 = vpop.f32.mrb[0].mxu0
        %2668 = vmatprep.mubr.f32.mxu0 0.0
        %2669 = vmatmul.mubr.f32.gmra.mrb[0].mxu0 %v2378
        %v2670 = vpop.f32.mrb[0].mxu0
        %v2671 = vadd.f32 0.0, %v2670
        %v2672 = vpop.f32.mrb[0].mxu0
        %2673 = vmatprep.mubr.f32.mxu0 0.0
        %2674 = vmatmul.mubr.f32.gmra.mrb[0].mxu0 %v2381
        %v2675 = vpop.f32.mrb[0].mxu0
        %v2676 = vadd.f32 0.0, %v2675
        %v2677 = vpop.f32.mrb[0].mxu0
        %2678 = vmatprep.mubr.f32.mxu0 0.0
        %2679 = vmatmul.mubr.f32.gmra.mrb[0].mxu0 %v2384
        %v2680 = vpop.f32.mrb[0].mxu0
        %v2681 = vadd.f32 0.0, %v2680
        %v2682 = vpop.f32.mrb[0].mxu0
        %2683 = vmatprep.mubr.f32.mxu0 0.0
        %2684 = vmatmul.mubr.f32.gmra.mrb[0].mxu0 %v2387
        %v2685 = vpop.f32.mrb[0].mxu0
        %v2686 = vadd.f32 0.0, %v2685
        %v2687 = vpop.f32.mrb[0].mxu0
        %2688 = vmatprep.mubr.f32.mxu0 0.0
        %2689 = vmatmul.mubr.f32.gmra.mrb[0].mxu0 %v2390
        %v2690 = vpop.f32.mrb[0].mxu0
        %v2691 = vadd.f32 0.0, %v2690
        %v2692 = vpop.f32.mrb[0].mxu0
        %2693 = vmatprep.mubr.f32.mxu0 0.0
        %2694 = vmatmul.mubr.f32.gmra.mrb[0].mxu0 %v2393
        %v2695 = vpop.f32.mrb[0].mxu0
        %v2696 = vadd.f32 0.0, %v2695
        %v2697 = vpop.f32.mrb[0].mxu0
        %2698 = vmatprep.mubr.f32.mxu0 0.0
        %2699 = vmatmul.mubr.f32.gmra.mrb[0].mxu0 %v2396
        %v2700 = vpop.f32.mrb[0].mxu0
        %v2701 = vadd.f32 0.0, %v2700
        %v2702 = vpop.f32.mrb[0].mxu0
        %2703 = vdwg.mxu0
        %v2704 = vadd.f32 %v2196, %v2465
        %v2705 = vadd.f32 %v2197, %v2467
        %v2706 = vadd.f32 %v2198, %v2626
        %v2707 = vadd.f32 %v2199, %v2471
        %v2708 = vadd.f32 %v2200, %v2473
        %v2709 = vadd.f32 %v2201, %v2631
        %v2710 = vadd.f32 %v2202, %v2477
        %v2711 = vadd.f32 %v2203, %v2479
        %v2712 = vadd.f32 %v2204, %v2636
        %v2713 = vadd.f32 %v2205, %v2483
        %v2714 = vadd.f32 %v2206, %v2485
        %v2715 = vadd.f32 %v2207, %v2641
        %v2716 = vadd.f32 %v2208, %v2489
        %v2717 = vadd.f32 %v2209, %v2491
        %v2718 = vadd.f32 %v2210, %v2646
        %v2719 = vadd.f32 %v2211, %v2495
        %v2720 = vadd.f32 %v2212, %v2497
        %v2721 = vadd.f32 %v2213, %v2651
        %v2722 = vadd.f32 %v2214, %v2501
        %v2723 = vadd.f32 %v2215, %v2503
        %v2724 = vadd.f32 %v2216, %v2656
        %v2725 = vadd.f32 %v2217, %v2507
        %v2726 = vadd.f32 %v2218, %v2509
        %v2727 = vadd.f32 %v2219, %v2661
        %v2728 = vadd.f32 %v2220, %v2513
        %v2729 = vadd.f32 %v2221, %v2515
        %v2730 = vadd.f32 %v2222, %v2666
        %v2731 = vadd.f32 %v2223, %v2519
        %v2732 = vadd.f32 %v2224, %v2521
        %v2733 = vadd.f32 %v2225, %v2671
        %v2734 = vadd.f32 %v2226, %v2525
        %v2735 = vadd.f32 %v2227, %v2527
        %v2736 = vadd.f32 %v2228, %v2676
        %v2737 = vadd.f32 %v2229, %v2531
        %v2738 = vadd.f32 %v2230, %v2533
        %v2739 = vadd.f32 %v2231, %v2681
        %v2740 = vadd.f32 %v2232, %v2537
        %v2741 = vadd.f32 %v2233, %v2539
        %v2742 = vadd.f32 %v2234, %v2686
        %v2743 = vadd.f32 %v2235, %v2543
        %v2744 = vadd.f32 %v2236, %v2545
        %v2745 = vadd.f32 %v2237, %v2691
        %v2746 = vadd.f32 %v2238, %v2549
        %v2747 = vadd.f32 %v2239, %v2551
        %v2748 = vadd.f32 %v2240, %v2696
        %v2749 = vadd.f32 %v2241, %v2555
        %v2750 = vadd.f32 %v2242, %v2557
        %v2751 = vadd.f32 %v2243, %v2701
        %s2752 = scalar_lea.vmem [#allocation10], 384
        %v2753 = vld [vmem:[%s2752] sm:$0xff]
        %v2754 = vld [vmem:[%s2752 + $0x8] sm:$0xff]
        %v2755 = vld [vmem:[%s2752 + $0x10] sm:$0xff]
        %v2756 = vld [vmem:[%s2752 + $0x18] sm:$0xff]
        %v2757 = vld [vmem:[%s2752 + $0x20] sm:$0xff]
        %v2758 = vld [vmem:[%s2752 + $0x28] sm:$0xff]
        %v2759 = vld [vmem:[%s2752 + $0x30] sm:$0xff]
        %v2760 = vld [vmem:[%s2752 + $0x38] sm:$0xff]
        %v2761 = vld [vmem:[%s2752 + $0x40] sm:$0xff]
        %v2762 = vld [vmem:[%s2752 + $0x48] sm:$0xff]
        %v2763 = vld [vmem:[%s2752 + $0x50] sm:$0xff]
        %v2764 = vld [vmem:[%s2752 + $0x58] sm:$0xff]
        %v2765 = vld [vmem:[%s2752 + $0x60] sm:$0xff]
        %v2766 = vld [vmem:[%s2752 + $0x68] sm:$0xff]
        %v2767 = vld [vmem:[%s2752 + $0x70] sm:$0xff]
        %v2768 = vld [vmem:[%s2752 + $0x78] sm:$0xff]
        %2769 = vrot.lane.b32.xlu0 %v1068, 87
        %v2770 = vpop.permute.xlu0 %2769
        %2771 = vrot.lane.b32.xlu0 %v1069, 87
        %v2772 = vpop.permute.xlu0 %2771
        %2773 = vrot.lane.b32.xlu0 %v1070, 87
        %v2774 = vpop.permute.xlu0 %2773
        %2775 = vrot.lane.b32.xlu0 %v1071, 87
        %v2776 = vpop.permute.xlu0 %2775
        %2777 = vrot.lane.b32.xlu0 %v1072, 87
        %v2778 = vpop.permute.xlu0 %2777
        %2779 = vrot.lane.b32.xlu0 %v1073, 87
        %v2780 = vpop.permute.xlu0 %2779
        %2781 = vrot.lane.b32.xlu0 %v1074, 87
        %v2782 = vpop.permute.xlu0 %2781
        %2783 = vrot.lane.b32.xlu0 %v1075, 87
        %v2784 = vpop.permute.xlu0 %2783
        %2785 = vrot.lane.b32.xlu0 %v1076, 87
        %v2786 = vpop.permute.xlu0 %2785
        %2787 = vrot.lane.b32.xlu0 %v1077, 87
        %v2788 = vpop.permute.xlu0 %2787
        %2789 = vrot.lane.b32.xlu0 %v1078, 87
        %v2790 = vpop.permute.xlu0 %2789
        %2791 = vrot.lane.b32.xlu0 %v1079, 87
        %v2792 = vpop.permute.xlu0 %2791
        %2793 = vrot.lane.b32.xlu0 %v1080, 87
        %v2794 = vpop.permute.xlu0 %2793
        %2795 = vrot.lane.b32.xlu0 %v1081, 87
        %v2796 = vpop.permute.xlu0 %2795
        %2797 = vrot.lane.b32.xlu0 %v1082, 87
        %v2798 = vpop.permute.xlu0 %2797
        %2799 = vrot.lane.b32.xlu0 %v1083, 87
        %v2800 = vpop.permute.xlu0 %2799
        %2801 = vrot.lane.b32.xlu0 %v1084, 87
        %v2802 = vpop.permute.xlu0 %2801
        %2803 = vrot.lane.b32.xlu0 %v1085, 87
        %v2804 = vpop.permute.xlu0 %2803
        %2805 = vrot.lane.b32.xlu0 %v1086, 87
        %v2806 = vpop.permute.xlu0 %2805
        %2807 = vrot.lane.b32.xlu0 %v1087, 87
        %v2808 = vpop.permute.xlu0 %2807
        %2809 = vrot.lane.b32.xlu0 %v1088, 87
        %v2810 = vpop.permute.xlu0 %2809
        %2811 = vrot.lane.b32.xlu0 %v1089, 87
        %v2812 = vpop.permute.xlu0 %2811
        %2813 = vrot.lane.b32.xlu0 %v1090, 87
        %v2814 = vpop.permute.xlu0 %2813
        %2815 = vrot.lane.b32.xlu0 %v1091, 87
        %v2816 = vpop.permute.xlu0 %2815
        %vm2817 = vcmask 711680
        %v2818 = vsel %vm2817, %v2770, %v2772
        %v2819 = vsel %vm2817, %v2772, %v2774
        %v2820 = vsel %vm2817, %v2776, %v2778
        %v2821 = vsel %vm2817, %v2778, %v2780
        %v2822 = vsel %vm2817, %v2782, %v2784
        %v2823 = vsel %vm2817, %v2784, %v2786
        %v2824 = vsel %vm2817, %v2788, %v2790
        %v2825 = vsel %vm2817, %v2790, %v2792
        %v2826 = vsel %vm2817, %v2794, %v2796
        %v2827 = vsel %vm2817, %v2796, %v2798
        %v2828 = vsel %vm2817, %v2800, %v2802
        %v2829 = vsel %vm2817, %v2802, %v2804
        %v2830 = vsel %vm2817, %v2806, %v2808
        %v2831 = vsel %vm2817, %v2808, %v2810
        %v2832 = vsel %vm2817, %v2812, %v2814
        %v2833 = vsel %vm2817, %v2814, %v2816
        %v2859 = vsel %vm1333, %v2753, 0
        %v2862 = vsel %vm1333, %v2754, 0
        %v2865 = vsel %vm1333, %v2755, 0
        %v2868 = vsel %vm1333, %v2756, 0
        %v2871 = vsel %vm1333, %v2757, 0
        %v2874 = vsel %vm1333, %v2758, 0
        %v2877 = vsel %vm1333, %v2759, 0
        %v2880 = vsel %vm1333, %v2760, 0
        %v2883 = vsel %vm1333, %v2761, 0
        %v2886 = vsel %vm1333, %v2762, 0
        %v2889 = vsel %vm1333, %v2763, 0
        %v2892 = vsel %vm1333, %v2764, 0
        %v2895 = vsel %vm1333, %v2765, 0
        %v2898 = vsel %vm1333, %v2766, 0
        %v2901 = vsel %vm1333, %v2767, 0
        %v2904 = vsel %vm1333, %v2768, 0
        %2906 = vmatprep.subr.mxu0 %v2819
        %2907 = vmatpush1.msra.mxu0 %v2818
        %2908 = vmatprep.subr.mxu0 %v2821
        %2909 = vmatpush1.msra.mxu0 %v2820
        %2910 = vmatprep.subr.mxu0 %v2823
        %2911 = vmatpush1.msra.mxu0 %v2822
        %2912 = vmatprep.subr.mxu0 %v2825
        %2913 = vmatpush1.msra.mxu0 %v2824
        %2914 = vmatprep.subr.mxu0 %v2827
        %2915 = vmatpush1.msra.mxu0 %v2826
        %2916 = vmatprep.subr.mxu0 %v2829
        %2917 = vmatpush1.msra.mxu0 %v2828
        %2918 = vmatprep.subr.mxu0 %v2831
        %2919 = vmatpush1.msra.mxu0 %v2830
        %2920 = vmatprep.subr.mxu0 %v2833
        %2921 = vmatpush1.msra.mxu0 %v2832
        %2922 = vmatprep.subr.mxu0 0.0
        %2923 = vmatpush1.msra.mxu0 0.0
        %2924 = vmatprep.subr.mxu0 0.0
        %2925 = vmatpush1.msra.mxu0 0.0
        %2926 = vmatprep.subr.mxu0 0.0
        %2927 = vmatpush1.msra.mxu0 0.0
        %2928 = vmatprep.subr.mxu0 0.0
        %2929 = vmatpush1.msra.mxu0 0.0
        %2930 = vmatprep.subr.mxu0 0.0
        %2931 = vmatpush1.msra.mxu0 0.0
        %2932 = vmatprep.subr.mxu0 0.0
        %2933 = vmatpush1.msra.mxu0 0.0
        %2934 = vmatprep.subr.mxu0 0.0
        %2935 = vmatpush1.msra.mxu0 0.0
        %2936 = vmatprep.subr.mxu0 0.0
        %2937 = vmatpush1.msra.mxu0 0.0
        %2938 = vmatprep.subr.mxu0 0.0
        %2939 = vmatpush1.msra.mxu0 0.0
        %2940 = vmatprep.subr.mxu0 0.0
        %2941 = vmatpush1.msra.mxu0 0.0
        %2942 = vmatprep.subr.mxu0 0.0
        %2943 = vmatpush1.msra.mxu0 0.0
        %2944 = vmatprep.subr.mxu0 0.0
        %2945 = vmatpush1.msra.mxu0 0.0
        %2946 = vmatprep.subr.mxu0 0.0
        %2947 = vmatpush1.msra.mxu0 0.0
        %2948 = vmatprep.subr.mxu0 0.0
        %2949 = vmatpush1.msra.mxu0 0.0
        %2950 = vmatprep.subr.mxu0 0.0
        %2951 = vmatpush1.msra.mxu0 0.0
        %2952 = vmatprep.subr.mxu0 0.0
        %2953 = vmatpush1.msra.mxu0 0.0
        %2954 = vmatprep.subr.mxu0 0.0
        %2955 = vmatpush1.msra.mxu0 0.0
        %2956 = vmatprep.subr.mxu0 0.0
        %2957 = vmatpush1.msra.mxu0 0.0
        %2958 = vmatprep.subr.mxu0 0.0
        %2959 = vmatpush1.msra.mxu0 0.0
        %2960 = vmatprep.subr.mxu0 0.0
        %2961 = vmatpush1.msra.mxu0 0.0
        %2962 = vmatprep.subr.mxu0 0.0
        %2963 = vmatpush1.msra.mxu0 0.0
        %2964 = vmatprep.subr.mxu0 0.0
        %2965 = vmatpush1.msra.mxu0 0.0
        %2966 = vmatprep.subr.mxu0 0.0
        %2967 = vmatpush1.msra.mxu0 0.0
        %2968 = vmatprep.subr.mxu0 0.0
        %2969 = vmatpush1.msra.mxu0 0.0
        %2970 = vmatprep.mubr.f32.mxu0 0.0
        %2971 = vmatmul.mubr.f32.gmra.mrb[0].mxu0 %v2859
        %v2972 = vpop.f32.mrb[0].mxu0
        %v2973 = vadd.f32 0.0, %v2972
        %v2974 = vpop.f32.mrb[0].mxu0
        %v2975 = vadd.f32 0.0, %v2974
        %2976 = vmatprep.mubr.f32.mxu0 0.0
        %2977 = vmatmul.mubr.f32.gmra.mrb[0].mxu0 %v2862
        %v2978 = vpop.f32.mrb[0].mxu0
        %v2979 = vadd.f32 0.0, %v2978
        %v2980 = vpop.f32.mrb[0].mxu0
        %v2981 = vadd.f32 0.0, %v2980
        %2982 = vmatprep.mubr.f32.mxu0 0.0
        %2983 = vmatmul.mubr.f32.gmra.mrb[0].mxu0 %v2865
        %v2984 = vpop.f32.mrb[0].mxu0
        %v2985 = vadd.f32 0.0, %v2984
        %v2986 = vpop.f32.mrb[0].mxu0
        %v2987 = vadd.f32 0.0, %v2986
        %2988 = vmatprep.mubr.f32.mxu0 0.0
        %2989 = vmatmul.mubr.f32.gmra.mrb[0].mxu0 %v2868
        %v2990 = vpop.f32.mrb[0].mxu0
        %v2991 = vadd.f32 0.0, %v2990
        %v2992 = vpop.f32.mrb[0].mxu0
        %v2993 = vadd.f32 0.0, %v2992
        %2994 = vmatprep.mubr.f32.mxu0 0.0
        %2995 = vmatmul.mubr.f32.gmra.mrb[0].mxu0 %v2871
        %v2996 = vpop.f32.mrb[0].mxu0
        %v2997 = vadd.f32 0.0, %v2996
        %v2998 = vpop.f32.mrb[0].mxu0
        %v2999 = vadd.f32 0.0, %v2998
        %3000 = vmatprep.mubr.f32.mxu0 0.0
        %3001 = vmatmul.mubr.f32.gmra.mrb[0].mxu0 %v2874
        %v3002 = vpop.f32.mrb[0].mxu0
        %v3003 = vadd.f32 0.0, %v3002
        %v3004 = vpop.f32.mrb[0].mxu0
        %v3005 = vadd.f32 0.0, %v3004
        %3006 = vmatprep.mubr.f32.mxu0 0.0
        %3007 = vmatmul.mubr.f32.gmra.mrb[0].mxu0 %v2877
        %v3008 = vpop.f32.mrb[0].mxu0
        %v3009 = vadd.f32 0.0, %v3008
        %v3010 = vpop.f32.mrb[0].mxu0
        %v3011 = vadd.f32 0.0, %v3010
        %3012 = vmatprep.mubr.f32.mxu0 0.0
        %3013 = vmatmul.mubr.f32.gmra.mrb[0].mxu0 %v2880
        %v3014 = vpop.f32.mrb[0].mxu0
        %v3015 = vadd.f32 0.0, %v3014
        %v3016 = vpop.f32.mrb[0].mxu0
        %v3017 = vadd.f32 0.0, %v3016
        %3018 = vmatprep.mubr.f32.mxu0 0.0
        %3019 = vmatmul.mubr.f32.gmra.mrb[0].mxu0 %v2883
        %v3020 = vpop.f32.mrb[0].mxu0
        %v3021 = vadd.f32 0.0, %v3020
        %v3022 = vpop.f32.mrb[0].mxu0
        %v3023 = vadd.f32 0.0, %v3022
        %3024 = vmatprep.mubr.f32.mxu0 0.0
        %3025 = vmatmul.mubr.f32.gmra.mrb[0].mxu0 %v2886
        %v3026 = vpop.f32.mrb[0].mxu0
        %v3027 = vadd.f32 0.0, %v3026
        %v3028 = vpop.f32.mrb[0].mxu0
        %v3029 = vadd.f32 0.0, %v3028
        %3030 = vmatprep.mubr.f32.mxu0 0.0
        %3031 = vmatmul.mubr.f32.gmra.mrb[0].mxu0 %v2889
        %v3032 = vpop.f32.mrb[0].mxu0
        %v3033 = vadd.f32 0.0, %v3032
        %v3034 = vpop.f32.mrb[0].mxu0
        %v3035 = vadd.f32 0.0, %v3034
        %3036 = vmatprep.mubr.f32.mxu0 0.0
        %3037 = vmatmul.mubr.f32.gmra.mrb[0].mxu0 %v2892
        %v3038 = vpop.f32.mrb[0].mxu0
        %v3039 = vadd.f32 0.0, %v3038
        %v3040 = vpop.f32.mrb[0].mxu0
        %v3041 = vadd.f32 0.0, %v3040
        %3042 = vmatprep.mubr.f32.mxu0 0.0
        %3043 = vmatmul.mubr.f32.gmra.mrb[0].mxu0 %v2895
        %v3044 = vpop.f32.mrb[0].mxu0
        %v3045 = vadd.f32 0.0, %v3044
        %v3046 = vpop.f32.mrb[0].mxu0
        %v3047 = vadd.f32 0.0, %v3046
        %3048 = vmatprep.mubr.f32.mxu0 0.0
        %3049 = vmatmul.mubr.f32.gmra.mrb[0].mxu0 %v2898
        %v3050 = vpop.f32.mrb[0].mxu0
        %v3051 = vadd.f32 0.0, %v3050
        %v3052 = vpop.f32.mrb[0].mxu0
        %v3053 = vadd.f32 0.0, %v3052
        %3054 = vmatprep.mubr.f32.mxu0 0.0
        %3055 = vmatmul.mubr.f32.gmra.mrb[0].mxu0 %v2901
        %v3056 = vpop.f32.mrb[0].mxu0
        %v3057 = vadd.f32 0.0, %v3056
        %v3058 = vpop.f32.mrb[0].mxu0
        %v3059 = vadd.f32 0.0, %v3058
        %3060 = vmatprep.mubr.f32.mxu0 0.0
        %3061 = vmatmul.mubr.f32.gmra.mrb[0].mxu0 %v2904
        %v3062 = vpop.f32.mrb[0].mxu0
        %v3063 = vadd.f32 0.0, %v3062
        %v3064 = vpop.f32.mrb[0].mxu0
        %v3065 = vadd.f32 0.0, %v3064
        %3066 = vdwg.mxu0
        %3067 = vmatprep.subr.mxu0 0.0
        %3068 = vmatpush1.msra.mxu0 %v2774
        %3069 = vmatprep.subr.mxu0 0.0
        %3070 = vmatpush1.msra.mxu0 %v2780
        %3071 = vmatprep.subr.mxu0 0.0
        %3072 = vmatpush1.msra.mxu0 %v2786
        %3073 = vmatprep.subr.mxu0 0.0
        %3074 = vmatpush1.msra.mxu0 %v2792
        %3075 = vmatprep.subr.mxu0 0.0
        %3076 = vmatpush1.msra.mxu0 %v2798
        %3077 = vmatprep.subr.mxu0 0.0
        %3078 = vmatpush1.msra.mxu0 %v2804
        %3079 = vmatprep.subr.mxu0 0.0
        %3080 = vmatpush1.msra.mxu0 %v2810
        %3081 = vmatprep.subr.mxu0 0.0
        %3082 = vmatpush1.msra.mxu0 %v2816
        %3083 = vmatprep.subr.mxu0 0.0
        %3084 = vmatpush1.msra.mxu0 0.0
        %3085 = vmatprep.subr.mxu0 0.0
        %3086 = vmatpush1.msra.mxu0 0.0
        %3087 = vmatprep.subr.mxu0 0.0
        %3088 = vmatpush1.msra.mxu0 0.0
        %3089 = vmatprep.subr.mxu0 0.0
        %3090 = vmatpush1.msra.mxu0 0.0
        %3091 = vmatprep.subr.mxu0 0.0
        %3092 = vmatpush1.msra.mxu0 0.0
        %3093 = vmatprep.subr.mxu0 0.0
        %3094 = vmatpush1.msra.mxu0 0.0
        %3095 = vmatprep.subr.mxu0 0.0
        %3096 = vmatpush1.msra.mxu0 0.0
        %3097 = vmatprep.subr.mxu0 0.0
        %3098 = vmatpush1.msra.mxu0 0.0
        %3099 = vmatprep.subr.mxu0 0.0
        %3100 = vmatpush1.msra.mxu0 0.0
        %3101 = vmatprep.subr.mxu0 0.0
        %3102 = vmatpush1.msra.mxu0 0.0
        %3103 = vmatprep.subr.mxu0 0.0
        %3104 = vmatpush1.msra.mxu0 0.0
        %3105 = vmatprep.subr.mxu0 0.0
        %3106 = vmatpush1.msra.mxu0 0.0
        %3107 = vmatprep.subr.mxu0 0.0
        %3108 = vmatpush1.msra.mxu0 0.0
        %3109 = vmatprep.subr.mxu0 0.0
        %3110 = vmatpush1.msra.mxu0 0.0
        %3111 = vmatprep.subr.mxu0 0.0
        %3112 = vmatpush1.msra.mxu0 0.0
        %3113 = vmatprep.subr.mxu0 0.0
        %3114 = vmatpush1.msra.mxu0 0.0
        %3115 = vmatprep.subr.mxu0 0.0
        %3116 = vmatpush1.msra.mxu0 0.0
        %3117 = vmatprep.subr.mxu0 0.0
        %3118 = vmatpush1.msra.mxu0 0.0
        %3119 = vmatprep.subr.mxu0 0.0
        %3120 = vmatpush1.msra.mxu0 0.0
        %3121 = vmatprep.subr.mxu0 0.0
        %3122 = vmatpush1.msra.mxu0 0.0
        %3123 = vmatprep.subr.mxu0 0.0
        %3124 = vmatpush1.msra.mxu0 0.0
        %3125 = vmatprep.subr.mxu0 0.0
        %3126 = vmatpush1.msra.mxu0 0.0
        %3127 = vmatprep.subr.mxu0 0.0
        %3128 = vmatpush1.msra.mxu0 0.0
        %3129 = vmatprep.subr.mxu0 0.0
        %3130 = vmatpush1.msra.mxu0 0.0
        %3131 = vmatprep.mubr.f32.mxu0 0.0
        %3132 = vmatmul.mubr.f32.gmra.mrb[0].mxu0 %v2859
        %v3133 = vpop.f32.mrb[0].mxu0
        %v3134 = vadd.f32 0.0, %v3133
        %v3135 = vpop.f32.mrb[0].mxu0
        %3136 = vmatprep.mubr.f32.mxu0 0.0
        %3137 = vmatmul.mubr.f32.gmra.mrb[0].mxu0 %v2862
        %v3138 = vpop.f32.mrb[0].mxu0
        %v3139 = vadd.f32 0.0, %v3138
        %v3140 = vpop.f32.mrb[0].mxu0
        %3141 = vmatprep.mubr.f32.mxu0 0.0
        %3142 = vmatmul.mubr.f32.gmra.mrb[0].mxu0 %v2865
        %v3143 = vpop.f32.mrb[0].mxu0
        %v3144 = vadd.f32 0.0, %v3143
        %v3145 = vpop.f32.mrb[0].mxu0
        %3146 = vmatprep.mubr.f32.mxu0 0.0
        %3147 = vmatmul.mubr.f32.gmra.mrb[0].mxu0 %v2868
        %v3148 = vpop.f32.mrb[0].mxu0
        %v3149 = vadd.f32 0.0, %v3148
        %v3150 = vpop.f32.mrb[0].mxu0
        %3151 = vmatprep.mubr.f32.mxu0 0.0
        %3152 = vmatmul.mubr.f32.gmra.mrb[0].mxu0 %v2871
        %v3153 = vpop.f32.mrb[0].mxu0
        %v3154 = vadd.f32 0.0, %v3153
        %v3155 = vpop.f32.mrb[0].mxu0
        %3156 = vmatprep.mubr.f32.mxu0 0.0
        %3157 = vmatmul.mubr.f32.gmra.mrb[0].mxu0 %v2874
        %v3158 = vpop.f32.mrb[0].mxu0
        %v3159 = vadd.f32 0.0, %v3158
        %v3160 = vpop.f32.mrb[0].mxu0
        %3161 = vmatprep.mubr.f32.mxu0 0.0
        %3162 = vmatmul.mubr.f32.gmra.mrb[0].mxu0 %v2877
        %v3163 = vpop.f32.mrb[0].mxu0
        %v3164 = vadd.f32 0.0, %v3163
        %v3165 = vpop.f32.mrb[0].mxu0
        %3166 = vmatprep.mubr.f32.mxu0 0.0
        %3167 = vmatmul.mubr.f32.gmra.mrb[0].mxu0 %v2880
        %v3168 = vpop.f32.mrb[0].mxu0
        %v3169 = vadd.f32 0.0, %v3168
        %v3170 = vpop.f32.mrb[0].mxu0
        %3171 = vmatprep.mubr.f32.mxu0 0.0
        %3172 = vmatmul.mubr.f32.gmra.mrb[0].mxu0 %v2883
        %v3173 = vpop.f32.mrb[0].mxu0
        %v3174 = vadd.f32 0.0, %v3173
        %v3175 = vpop.f32.mrb[0].mxu0
        %3176 = vmatprep.mubr.f32.mxu0 0.0
        %3177 = vmatmul.mubr.f32.gmra.mrb[0].mxu0 %v2886
        %v3178 = vpop.f32.mrb[0].mxu0
        %v3179 = vadd.f32 0.0, %v3178
        %v3180 = vpop.f32.mrb[0].mxu0
        %3181 = vmatprep.mubr.f32.mxu0 0.0
        %3182 = vmatmul.mubr.f32.gmra.mrb[0].mxu0 %v2889
        %v3183 = vpop.f32.mrb[0].mxu0
        %v3184 = vadd.f32 0.0, %v3183
        %v3185 = vpop.f32.mrb[0].mxu0
        %3186 = vmatprep.mubr.f32.mxu0 0.0
        %3187 = vmatmul.mubr.f32.gmra.mrb[0].mxu0 %v2892
        %v3188 = vpop.f32.mrb[0].mxu0
        %v3189 = vadd.f32 0.0, %v3188
        %v3190 = vpop.f32.mrb[0].mxu0
        %3191 = vmatprep.mubr.f32.mxu0 0.0
        %3192 = vmatmul.mubr.f32.gmra.mrb[0].mxu0 %v2895
        %v3193 = vpop.f32.mrb[0].mxu0
        %v3194 = vadd.f32 0.0, %v3193
        %v3195 = vpop.f32.mrb[0].mxu0
        %3196 = vmatprep.mubr.f32.mxu0 0.0
        %3197 = vmatmul.mubr.f32.gmra.mrb[0].mxu0 %v2898
        %v3198 = vpop.f32.mrb[0].mxu0
        %v3199 = vadd.f32 0.0, %v3198
        %v3200 = vpop.f32.mrb[0].mxu0
        %3201 = vmatprep.mubr.f32.mxu0 0.0
        %3202 = vmatmul.mubr.f32.gmra.mrb[0].mxu0 %v2901
        %v3203 = vpop.f32.mrb[0].mxu0
        %v3204 = vadd.f32 0.0, %v3203
        %v3205 = vpop.f32.mrb[0].mxu0
        %3206 = vmatprep.mubr.f32.mxu0 0.0
        %3207 = vmatmul.mubr.f32.gmra.mrb[0].mxu0 %v2904
        %v3208 = vpop.f32.mrb[0].mxu0
        %v3209 = vadd.f32 0.0, %v3208
        %v3210 = vpop.f32.mrb[0].mxu0
        %3211 = vdwg.mxu0
        %v3212 = vadd.f32 %v2704, %v2973
        %v3213 = vadd.f32 %v2705, %v2975
        %v3214 = vadd.f32 %v2706, %v3134
        %v3215 = vadd.f32 %v2707, %v2979
        %v3216 = vadd.f32 %v2708, %v2981
        %v3217 = vadd.f32 %v2709, %v3139
        %v3218 = vadd.f32 %v2710, %v2985
        %v3219 = vadd.f32 %v2711, %v2987
        %v3220 = vadd.f32 %v2712, %v3144
        %v3221 = vadd.f32 %v2713, %v2991
        %v3222 = vadd.f32 %v2714, %v2993
        %v3223 = vadd.f32 %v2715, %v3149
        %v3224 = vadd.f32 %v2716, %v2997
        %v3225 = vadd.f32 %v2717, %v2999
        %v3226 = vadd.f32 %v2718, %v3154
        %v3227 = vadd.f32 %v2719, %v3003
        %v3228 = vadd.f32 %v2720, %v3005
        %v3229 = vadd.f32 %v2721, %v3159
        %v3230 = vadd.f32 %v2722, %v3009
        %v3231 = vadd.f32 %v2723, %v3011
        %v3232 = vadd.f32 %v2724, %v3164
        %v3233 = vadd.f32 %v2725, %v3015
        %v3234 = vadd.f32 %v2726, %v3017
        %v3235 = vadd.f32 %v2727, %v3169
        %v3236 = vadd.f32 %v2728, %v3021
        %v3237 = vadd.f32 %v2729, %v3023
        %v3238 = vadd.f32 %v2730, %v3174
        %v3239 = vadd.f32 %v2731, %v3027
        %v3240 = vadd.f32 %v2732, %v3029
        %v3241 = vadd.f32 %v2733, %v3179
        %v3242 = vadd.f32 %v2734, %v3033
        %v3243 = vadd.f32 %v2735, %v3035
        %v3244 = vadd.f32 %v2736, %v3184
        %v3245 = vadd.f32 %v2737, %v3039
        %v3246 = vadd.f32 %v2738, %v3041
        %v3247 = vadd.f32 %v2739, %v3189
        %v3248 = vadd.f32 %v2740, %v3045
        %v3249 = vadd.f32 %v2741, %v3047
        %v3250 = vadd.f32 %v2742, %v3194
        %v3251 = vadd.f32 %v2743, %v3051
        %v3252 = vadd.f32 %v2744, %v3053
        %v3253 = vadd.f32 %v2745, %v3199
        %v3254 = vadd.f32 %v2746, %v3057
        %v3255 = vadd.f32 %v2747, %v3059
        %v3256 = vadd.f32 %v2748, %v3204
        %v3257 = vadd.f32 %v2749, %v3063
        %v3258 = vadd.f32 %v2750, %v3065
        %v3259 = vadd.f32 %v2751, %v3209
        %s3260 = scalar_lea.vmem [#allocation10], 512
        %v3261 = vld [vmem:[%s3260] sm:$0xff]
        %v3262 = vld [vmem:[%s3260 + $0x8] sm:$0xff]
        %v3263 = vld [vmem:[%s3260 + $0x10] sm:$0xff]
        %v3264 = vld [vmem:[%s3260 + $0x18] sm:$0xff]
        %v3265 = vld [vmem:[%s3260 + $0x20] sm:$0xff]
        %v3266 = vld [vmem:[%s3260 + $0x28] sm:$0xff]
        %v3267 = vld [vmem:[%s3260 + $0x30] sm:$0xff]
        %v3268 = vld [vmem:[%s3260 + $0x38] sm:$0xff]
        %v3269 = vld [vmem:[%s3260 + $0x40] sm:$0xff]
        %v3270 = vld [vmem:[%s3260 + $0x48] sm:$0xff]
        %v3271 = vld [vmem:[%s3260 + $0x50] sm:$0xff]
        %v3272 = vld [vmem:[%s3260 + $0x58] sm:$0xff]
        %v3273 = vld [vmem:[%s3260 + $0x60] sm:$0xff]
        %v3274 = vld [vmem:[%s3260 + $0x68] sm:$0xff]
        %v3275 = vld [vmem:[%s3260 + $0x70] sm:$0xff]
        %v3276 = vld [vmem:[%s3260 + $0x78] sm:$0xff]
        %3277 = vrot.lane.b32.xlu0 %v1068, 86
        %v3278 = vpop.permute.xlu0 %3277
        %3279 = vrot.lane.b32.xlu0 %v1069, 86
        %v3280 = vpop.permute.xlu0 %3279
        %3281 = vrot.lane.b32.xlu0 %v1070, 86
        %v3282 = vpop.permute.xlu0 %3281
        %3283 = vrot.lane.b32.xlu0 %v1071, 86
        %v3284 = vpop.permute.xlu0 %3283
        %3285 = vrot.lane.b32.xlu0 %v1072, 86
        %v3286 = vpop.permute.xlu0 %3285
        %3287 = vrot.lane.b32.xlu0 %v1073, 86
        %v3288 = vpop.permute.xlu0 %3287
        %3289 = vrot.lane.b32.xlu0 %v1074, 86
        %v3290 = vpop.permute.xlu0 %3289
        %3291 = vrot.lane.b32.xlu0 %v1075, 86
        %v3292 = vpop.permute.xlu0 %3291
        %3293 = vrot.lane.b32.xlu0 %v1076, 86
        %v3294 = vpop.permute.xlu0 %3293
        %3295 = vrot.lane.b32.xlu0 %v1077, 86
        %v3296 = vpop.permute.xlu0 %3295
        %3297 = vrot.lane.b32.xlu0 %v1078, 86
        %v3298 = vpop.permute.xlu0 %3297
        %3299 = vrot.lane.b32.xlu0 %v1079, 86
        %v3300 = vpop.permute.xlu0 %3299
        %3301 = vrot.lane.b32.xlu0 %v1080, 86
        %v3302 = vpop.permute.xlu0 %3301
        %3303 = vrot.lane.b32.xlu0 %v1081, 86
        %v3304 = vpop.permute.xlu0 %3303
        %3305 = vrot.lane.b32.xlu0 %v1082, 86
        %v3306 = vpop.permute.xlu0 %3305
        %3307 = vrot.lane.b32.xlu0 %v1083, 86
        %v3308 = vpop.permute.xlu0 %3307
        %3309 = vrot.lane.b32.xlu0 %v1084, 86
        %v3310 = vpop.permute.xlu0 %3309
        %3311 = vrot.lane.b32.xlu0 %v1085, 86
        %v3312 = vpop.permute.xlu0 %3311
        %3313 = vrot.lane.b32.xlu0 %v1086, 86
        %v3314 = vpop.permute.xlu0 %3313
        %3315 = vrot.lane.b32.xlu0 %v1087, 86
        %v3316 = vpop.permute.xlu0 %3315
        %3317 = vrot.lane.b32.xlu0 %v1088, 86
        %v3318 = vpop.permute.xlu0 %3317
        %3319 = vrot.lane.b32.xlu0 %v1089, 86
        %v3320 = vpop.permute.xlu0 %3319
        %3321 = vrot.lane.b32.xlu0 %v1090, 86
        %v3322 = vpop.permute.xlu0 %3321
        %3323 = vrot.lane.b32.xlu0 %v1091, 86
        %v3324 = vpop.permute.xlu0 %3323
        %vm3325 = vcmask 703488
        %v3326 = vsel %vm3325, %v3278, %v3280
        %v3327 = vsel %vm3325, %v3280, %v3282
        %v3328 = vsel %vm3325, %v3284, %v3286
        %v3329 = vsel %vm3325, %v3286, %v3288
        %v3330 = vsel %vm3325, %v3290, %v3292
        %v3331 = vsel %vm3325, %v3292, %v3294
        %v3332 = vsel %vm3325, %v3296, %v3298
        %v3333 = vsel %vm3325, %v3298, %v3300
        %v3334 = vsel %vm3325, %v3302, %v3304
        %v3335 = vsel %vm3325, %v3304, %v3306
        %v3336 = vsel %vm3325, %v3308, %v3310
        %v3337 = vsel %vm3325, %v3310, %v3312
        %v3338 = vsel %vm3325, %v3314, %v3316
        %v3339 = vsel %vm3325, %v3316, %v3318
        %v3340 = vsel %vm3325, %v3320, %v3322
        %v3341 = vsel %vm3325, %v3322, %v3324
        %v3367 = vsel %vm1333, %v3261, 0
        %v3370 = vsel %vm1333, %v3262, 0
        %v3373 = vsel %vm1333, %v3263, 0
        %v3376 = vsel %vm1333, %v3264, 0
        %v3379 = vsel %vm1333, %v3265, 0
        %v3382 = vsel %vm1333, %v3266, 0
        %v3385 = vsel %vm1333, %v3267, 0
        %v3388 = vsel %vm1333, %v3268, 0
        %v3391 = vsel %vm1333, %v3269, 0
        %v3394 = vsel %vm1333, %v3270, 0
        %v3397 = vsel %vm1333, %v3271, 0
        %v3400 = vsel %vm1333, %v3272, 0
        %v3403 = vsel %vm1333, %v3273, 0
        %v3406 = vsel %vm1333, %v3274, 0
        %v3409 = vsel %vm1333, %v3275, 0
        %v3412 = vsel %vm1333, %v3276, 0
        %3414 = vmatprep.subr.mxu0 %v3327
        %3415 = vmatpush1.msra.mxu0 %v3326
        %3416 = vmatprep.subr.mxu0 %v3329
        %3417 = vmatpush1.msra.mxu0 %v3328
        %3418 = vmatprep.subr.mxu0 %v3331
        %3419 = vmatpush1.msra.mxu0 %v3330
        %3420 = vmatprep.subr.mxu0 %v3333
        %3421 = vmatpush1.msra.mxu0 %v3332
        %3422 = vmatprep.subr.mxu0 %v3335
        %3423 = vmatpush1.msra.mxu0 %v3334
        %3424 = vmatprep.subr.mxu0 %v3337
        %3425 = vmatpush1.msra.mxu0 %v3336
        %3426 = vmatprep.subr.mxu0 %v3339
        %3427 = vmatpush1.msra.mxu0 %v3338
        %3428 = vmatprep.subr.mxu0 %v3341
        %3429 = vmatpush1.msra.mxu0 %v3340
        %3430 = vmatprep.subr.mxu0 0.0
        %3431 = vmatpush1.msra.mxu0 0.0
        %3432 = vmatprep.subr.mxu0 0.0
        %3433 = vmatpush1.msra.mxu0 0.0
        %3434 = vmatprep.subr.mxu0 0.0
        %3435 = vmatpush1.msra.mxu0 0.0
        %3436 = vmatprep.subr.mxu0 0.0
        %3437 = vmatpush1.msra.mxu0 0.0
        %3438 = vmatprep.subr.mxu0 0.0
        %3439 = vmatpush1.msra.mxu0 0.0
        %3440 = vmatprep.subr.mxu0 0.0
        %3441 = vmatpush1.msra.mxu0 0.0
        %3442 = vmatprep.subr.mxu0 0.0
        %3443 = vmatpush1.msra.mxu0 0.0
        %3444 = vmatprep.subr.mxu0 0.0
        %3445 = vmatpush1.msra.mxu0 0.0
        %3446 = vmatprep.subr.mxu0 0.0
        %3447 = vmatpush1.msra.mxu0 0.0
        %3448 = vmatprep.subr.mxu0 0.0
        %3449 = vmatpush1.msra.mxu0 0.0
        %3450 = vmatprep.subr.mxu0 0.0
        %3451 = vmatpush1.msra.mxu0 0.0
        %3452 = vmatprep.subr.mxu0 0.0
        %3453 = vmatpush1.msra.mxu0 0.0
        %3454 = vmatprep.subr.mxu0 0.0
        %3455 = vmatpush1.msra.mxu0 0.0
        %3456 = vmatprep.subr.mxu0 0.0
        %3457 = vmatpush1.msra.mxu0 0.0
        %3458 = vmatprep.subr.mxu0 0.0
        %3459 = vmatpush1.msra.mxu0 0.0
        %3460 = vmatprep.subr.mxu0 0.0
        %3461 = vmatpush1.msra.mxu0 0.0
        %3462 = vmatprep.subr.mxu0 0.0
        %3463 = vmatpush1.msra.mxu0 0.0
        %3464 = vmatprep.subr.mxu0 0.0
        %3465 = vmatpush1.msra.mxu0 0.0
        %3466 = vmatprep.subr.mxu0 0.0
        %3467 = vmatpush1.msra.mxu0 0.0
        %3468 = vmatprep.subr.mxu0 0.0
        %3469 = vmatpush1.msra.mxu0 0.0
        %3470 = vmatprep.subr.mxu0 0.0
        %3471 = vmatpush1.msra.mxu0 0.0
        %3472 = vmatprep.subr.mxu0 0.0
        %3473 = vmatpush1.msra.mxu0 0.0
        %3474 = vmatprep.subr.mxu0 0.0
        %3475 = vmatpush1.msra.mxu0 0.0
        %3476 = vmatprep.subr.mxu0 0.0
        %3477 = vmatpush1.msra.mxu0 0.0
        %3478 = vmatprep.mubr.f32.mxu0 0.0
        %3479 = vmatmul.mubr.f32.gmra.mrb[0].mxu0 %v3367
        %v3480 = vpop.f32.mrb[0].mxu0
        %v3481 = vadd.f32 0.0, %v3480
        %v3482 = vpop.f32.mrb[0].mxu0
        %v3483 = vadd.f32 0.0, %v3482
        %3484 = vmatprep.mubr.f32.mxu0 0.0
        %3485 = vmatmul.mubr.f32.gmra.mrb[0].mxu0 %v3370
        %v3486 = vpop.f32.mrb[0].mxu0
        %v3487 = vadd.f32 0.0, %v3486
        %v3488 = vpop.f32.mrb[0].mxu0
        %v3489 = vadd.f32 0.0, %v3488
        %3490 = vmatprep.mubr.f32.mxu0 0.0
        %3491 = vmatmul.mubr.f32.gmra.mrb[0].mxu0 %v3373
        %v3492 = vpop.f32.mrb[0].mxu0
        %v3493 = vadd.f32 0.0, %v3492
        %v3494 = vpop.f32.mrb[0].mxu0
        %v3495 = vadd.f32 0.0, %v3494
        %3496 = vmatprep.mubr.f32.mxu0 0.0
        %3497 = vmatmul.mubr.f32.gmra.mrb[0].mxu0 %v3376
        %v3498 = vpop.f32.mrb[0].mxu0
        %v3499 = vadd.f32 0.0, %v3498
        %v3500 = vpop.f32.mrb[0].mxu0
        %v3501 = vadd.f32 0.0, %v3500
        %3502 = vmatprep.mubr.f32.mxu0 0.0
        %3503 = vmatmul.mubr.f32.gmra.mrb[0].mxu0 %v3379
        %v3504 = vpop.f32.mrb[0].mxu0
        %v3505 = vadd.f32 0.0, %v3504
        %v3506 = vpop.f32.mrb[0].mxu0
        %v3507 = vadd.f32 0.0, %v3506
        %3508 = vmatprep.mubr.f32.mxu0 0.0
        %3509 = vmatmul.mubr.f32.gmra.mrb[0].mxu0 %v3382
        %v3510 = vpop.f32.mrb[0].mxu0
        %v3511 = vadd.f32 0.0, %v3510
        %v3512 = vpop.f32.mrb[0].mxu0
        %v3513 = vadd.f32 0.0, %v3512
        %3514 = vmatprep.mubr.f32.mxu0 0.0
        %3515 = vmatmul.mubr.f32.gmra.mrb[0].mxu0 %v3385
        %v3516 = vpop.f32.mrb[0].mxu0
        %v3517 = vadd.f32 0.0, %v3516
        %v3518 = vpop.f32.mrb[0].mxu0
        %v3519 = vadd.f32 0.0, %v3518
        %3520 = vmatprep.mubr.f32.mxu0 0.0
        %3521 = vmatmul.mubr.f32.gmra.mrb[0].mxu0 %v3388
        %v3522 = vpop.f32.mrb[0].mxu0
        %v3523 = vadd.f32 0.0, %v3522
        %v3524 = vpop.f32.mrb[0].mxu0
        %v3525 = vadd.f32 0.0, %v3524
        %3526 = vmatprep.mubr.f32.mxu0 0.0
        %3527 = vmatmul.mubr.f32.gmra.mrb[0].mxu0 %v3391
        %v3528 = vpop.f32.mrb[0].mxu0
        %v3529 = vadd.f32 0.0, %v3528
        %v3530 = vpop.f32.mrb[0].mxu0
        %v3531 = vadd.f32 0.0, %v3530
        %3532 = vmatprep.mubr.f32.mxu0 0.0
        %3533 = vmatmul.mubr.f32.gmra.mrb[0].mxu0 %v3394
        %v3534 = vpop.f32.mrb[0].mxu0
        %v3535 = vadd.f32 0.0, %v3534
        %v3536 = vpop.f32.mrb[0].mxu0
        %v3537 = vadd.f32 0.0, %v3536
        %3538 = vmatprep.mubr.f32.mxu0 0.0
        %3539 = vmatmul.mubr.f32.gmra.mrb[0].mxu0 %v3397
        %v3540 = vpop.f32.mrb[0].mxu0
        %v3541 = vadd.f32 0.0, %v3540
        %v3542 = vpop.f32.mrb[0].mxu0
        %v3543 = vadd.f32 0.0, %v3542
        %3544 = vmatprep.mubr.f32.mxu0 0.0
        %3545 = vmatmul.mubr.f32.gmra.mrb[0].mxu0 %v3400
        %v3546 = vpop.f32.mrb[0].mxu0
        %v3547 = vadd.f32 0.0, %v3546
        %v3548 = vpop.f32.mrb[0].mxu0
        %v3549 = vadd.f32 0.0, %v3548
        %3550 = vmatprep.mubr.f32.mxu0 0.0
        %3551 = vmatmul.mubr.f32.gmra.mrb[0].mxu0 %v3403
        %v3552 = vpop.f32.mrb[0].mxu0
        %v3553 = vadd.f32 0.0, %v3552
        %v3554 = vpop.f32.mrb[0].mxu0
        %v3555 = vadd.f32 0.0, %v3554
        %3556 = vmatprep.mubr.f32.mxu0 0.0
        %3557 = vmatmul.mubr.f32.gmra.mrb[0].mxu0 %v3406
        %v3558 = vpop.f32.mrb[0].mxu0
        %v3559 = vadd.f32 0.0, %v3558
        %v3560 = vpop.f32.mrb[0].mxu0
        %v3561 = vadd.f32 0.0, %v3560
        %3562 = vmatprep.mubr.f32.mxu0 0.0
        %3563 = vmatmul.mubr.f32.gmra.mrb[0].mxu0 %v3409
        %v3564 = vpop.f32.mrb[0].mxu0
        %v3565 = vadd.f32 0.0, %v3564
        %v3566 = vpop.f32.mrb[0].mxu0
        %v3567 = vadd.f32 0.0, %v3566
        %3568 = vmatprep.mubr.f32.mxu0 0.0
        %3569 = vmatmul.mubr.f32.gmra.mrb[0].mxu0 %v3412
        %v3570 = vpop.f32.mrb[0].mxu0
        %v3571 = vadd.f32 0.0, %v3570
        %v3572 = vpop.f32.mrb[0].mxu0
        %v3573 = vadd.f32 0.0, %v3572
        %3574 = vdwg.mxu0
        %3575 = vmatprep.subr.mxu0 0.0
        %3576 = vmatpush1.msra.mxu0 %v3282
        %3577 = vmatprep.subr.mxu0 0.0
        %3578 = vmatpush1.msra.mxu0 %v3288
        %3579 = vmatprep.subr.mxu0 0.0
        %3580 = vmatpush1.msra.mxu0 %v3294
        %3581 = vmatprep.subr.mxu0 0.0
        %3582 = vmatpush1.msra.mxu0 %v3300
        %3583 = vmatprep.subr.mxu0 0.0
        %3584 = vmatpush1.msra.mxu0 %v3306
        %3585 = vmatprep.subr.mxu0 0.0
        %3586 = vmatpush1.msra.mxu0 %v3312
        %3587 = vmatprep.subr.mxu0 0.0
        %3588 = vmatpush1.msra.mxu0 %v3318
        %3589 = vmatprep.subr.mxu0 0.0
        %3590 = vmatpush1.msra.mxu0 %v3324
        %3591 = vmatprep.subr.mxu0 0.0
        %3592 = vmatpush1.msra.mxu0 0.0
        %3593 = vmatprep.subr.mxu0 0.0
        %3594 = vmatpush1.msra.mxu0 0.0
        %3595 = vmatprep.subr.mxu0 0.0
        %3596 = vmatpush1.msra.mxu0 0.0
        %3597 = vmatprep.subr.mxu0 0.0
        %3598 = vmatpush1.msra.mxu0 0.0
        %3599 = vmatprep.subr.mxu0 0.0
        %3600 = vmatpush1.msra.mxu0 0.0
        %3601 = vmatprep.subr.mxu0 0.0
        %3602 = vmatpush1.msra.mxu0 0.0
        %3603 = vmatprep.subr.mxu0 0.0
        %3604 = vmatpush1.msra.mxu0 0.0
        %3605 = vmatprep.subr.mxu0 0.0
        %3606 = vmatpush1.msra.mxu0 0.0
        %3607 = vmatprep.subr.mxu0 0.0
        %3608 = vmatpush1.msra.mxu0 0.0
        %3609 = vmatprep.subr.mxu0 0.0
        %3610 = vmatpush1.msra.mxu0 0.0
        %3611 = vmatprep.subr.mxu0 0.0
        %3612 = vmatpush1.msra.mxu0 0.0
        %3613 = vmatprep.subr.mxu0 0.0
        %3614 = vmatpush1.msra.mxu0 0.0
        %3615 = vmatprep.subr.mxu0 0.0
        %3616 = vmatpush1.msra.mxu0 0.0
        %3617 = vmatprep.subr.mxu0 0.0
        %3618 = vmatpush1.msra.mxu0 0.0
        %3619 = vmatprep.subr.mxu0 0.0
        %3620 = vmatpush1.msra.mxu0 0.0
        %3621 = vmatprep.subr.mxu0 0.0
        %3622 = vmatpush1.msra.mxu0 0.0
        %3623 = vmatprep.subr.mxu0 0.0
        %3624 = vmatpush1.msra.mxu0 0.0
        %3625 = vmatprep.subr.mxu0 0.0
        %3626 = vmatpush1.msra.mxu0 0.0
        %3627 = vmatprep.subr.mxu0 0.0
        %3628 = vmatpush1.msra.mxu0 0.0
        %3629 = vmatprep.subr.mxu0 0.0
        %3630 = vmatpush1.msra.mxu0 0.0
        %3631 = vmatprep.subr.mxu0 0.0
        %3632 = vmatpush1.msra.mxu0 0.0
        %3633 = vmatprep.subr.mxu0 0.0
        %3634 = vmatpush1.msra.mxu0 0.0
        %3635 = vmatprep.subr.mxu0 0.0
        %3636 = vmatpush1.msra.mxu0 0.0
        %3637 = vmatprep.subr.mxu0 0.0
        %3638 = vmatpush1.msra.mxu0 0.0
        %3639 = vmatprep.mubr.f32.mxu0 0.0
        %3640 = vmatmul.mubr.f32.gmra.mrb[0].mxu0 %v3367
        %v3641 = vpop.f32.mrb[0].mxu0
        %v3642 = vadd.f32 0.0, %v3641
        %v3643 = vpop.f32.mrb[0].mxu0
        %3644 = vmatprep.mubr.f32.mxu0 0.0
        %3645 = vmatmul.mubr.f32.gmra.mrb[0].mxu0 %v3370
        %v3646 = vpop.f32.mrb[0].mxu0
        %v3647 = vadd.f32 0.0, %v3646
        %v3648 = vpop.f32.mrb[0].mxu0
        %3649 = vmatprep.mubr.f32.mxu0 0.0
        %3650 = vmatmul.mubr.f32.gmra.mrb[0].mxu0 %v3373
        %v3651 = vpop.f32.mrb[0].mxu0
        %v3652 = vadd.f32 0.0, %v3651
        %v3653 = vpop.f32.mrb[0].mxu0
        %3654 = vmatprep.mubr.f32.mxu0 0.0
        %3655 = vmatmul.mubr.f32.gmra.mrb[0].mxu0 %v3376
        %v3656 = vpop.f32.mrb[0].mxu0
        %v3657 = vadd.f32 0.0, %v3656
        %v3658 = vpop.f32.mrb[0].mxu0
        %3659 = vmatprep.mubr.f32.mxu0 0.0
        %3660 = vmatmul.mubr.f32.gmra.mrb[0].mxu0 %v3379
        %v3661 = vpop.f32.mrb[0].mxu0
        %v3662 = vadd.f32 0.0, %v3661
        %v3663 = vpop.f32.mrb[0].mxu0
        %3664 = vmatprep.mubr.f32.mxu0 0.0
        %3665 = vmatmul.mubr.f32.gmra.mrb[0].mxu0 %v3382
        %v3666 = vpop.f32.mrb[0].mxu0
        %v3667 = vadd.f32 0.0, %v3666
        %v3668 = vpop.f32.mrb[0].mxu0
        %3669 = vmatprep.mubr.f32.mxu0 0.0
        %3670 = vmatmul.mubr.f32.gmra.mrb[0].mxu0 %v3385
        %v3671 = vpop.f32.mrb[0].mxu0
        %v3672 = vadd.f32 0.0, %v3671
        %v3673 = vpop.f32.mrb[0].mxu0
        %3674 = vmatprep.mubr.f32.mxu0 0.0
        %3675 = vmatmul.mubr.f32.gmra.mrb[0].mxu0 %v3388
        %v3676 = vpop.f32.mrb[0].mxu0
        %v3677 = vadd.f32 0.0, %v3676
        %v3678 = vpop.f32.mrb[0].mxu0
        %3679 = vmatprep.mubr.f32.mxu0 0.0
        %3680 = vmatmul.mubr.f32.gmra.mrb[0].mxu0 %v3391
        %v3681 = vpop.f32.mrb[0].mxu0
        %v3682 = vadd.f32 0.0, %v3681
        %v3683 = vpop.f32.mrb[0].mxu0
        %3684 = vmatprep.mubr.f32.mxu0 0.0
        %3685 = vmatmul.mubr.f32.gmra.mrb[0].mxu0 %v3394
        %v3686 = vpop.f32.mrb[0].mxu0
        %v3687 = vadd.f32 0.0, %v3686
        %v3688 = vpop.f32.mrb[0].mxu0
        %3689 = vmatprep.mubr.f32.mxu0 0.0
        %3690 = vmatmul.mubr.f32.gmra.mrb[0].mxu0 %v3397
        %v3691 = vpop.f32.mrb[0].mxu0
        %v3692 = vadd.f32 0.0, %v3691
        %v3693 = vpop.f32.mrb[0].mxu0
        %3694 = vmatprep.mubr.f32.mxu0 0.0
        %3695 = vmatmul.mubr.f32.gmra.mrb[0].mxu0 %v3400
        %v3696 = vpop.f32.mrb[0].mxu0
        %v3697 = vadd.f32 0.0, %v3696
        %v3698 = vpop.f32.mrb[0].mxu0
        %3699 = vmatprep.mubr.f32.mxu0 0.0
        %3700 = vmatmul.mubr.f32.gmra.mrb[0].mxu0 %v3403
        %v3701 = vpop.f32.mrb[0].mxu0
        %v3702 = vadd.f32 0.0, %v3701
        %v3703 = vpop.f32.mrb[0].mxu0
        %3704 = vmatprep.mubr.f32.mxu0 0.0
        %3705 = vmatmul.mubr.f32.gmra.mrb[0].mxu0 %v3406
        %v3706 = vpop.f32.mrb[0].mxu0
        %v3707 = vadd.f32 0.0, %v3706
        %v3708 = vpop.f32.mrb[0].mxu0
        %3709 = vmatprep.mubr.f32.mxu0 0.0
        %3710 = vmatmul.mubr.f32.gmra.mrb[0].mxu0 %v3409
        %v3711 = vpop.f32.mrb[0].mxu0
        %v3712 = vadd.f32 0.0, %v3711
        %v3713 = vpop.f32.mrb[0].mxu0
        %3714 = vmatprep.mubr.f32.mxu0 0.0
        %3715 = vmatmul.mubr.f32.gmra.mrb[0].mxu0 %v3412
        %v3716 = vpop.f32.mrb[0].mxu0
        %v3717 = vadd.f32 0.0, %v3716
        %v3718 = vpop.f32.mrb[0].mxu0
        %3719 = vdwg.mxu0
        %v3720 = vadd.f32 %v3212, %v3481
        %v3721 = vadd.f32 %v3213, %v3483
        %v3722 = vadd.f32 %v3214, %v3642
        %v3723 = vadd.f32 %v3215, %v3487
        %v3724 = vadd.f32 %v3216, %v3489
        %v3725 = vadd.f32 %v3217, %v3647
        %v3726 = vadd.f32 %v3218, %v3493
        %v3727 = vadd.f32 %v3219, %v3495
        %v3728 = vadd.f32 %v3220, %v3652
        %v3729 = vadd.f32 %v3221, %v3499
        %v3730 = vadd.f32 %v3222, %v3501
        %v3731 = vadd.f32 %v3223, %v3657
        %v3732 = vadd.f32 %v3224, %v3505
        %v3733 = vadd.f32 %v3225, %v3507
        %v3734 = vadd.f32 %v3226, %v3662
        %v3735 = vadd.f32 %v3227, %v3511
        %v3736 = vadd.f32 %v3228, %v3513
        %v3737 = vadd.f32 %v3229, %v3667
        %v3738 = vadd.f32 %v3230, %v3517
        %v3739 = vadd.f32 %v3231, %v3519
        %v3740 = vadd.f32 %v3232, %v3672
        %v3741 = vadd.f32 %v3233, %v3523
        %v3742 = vadd.f32 %v3234, %v3525
        %v3743 = vadd.f32 %v3235, %v3677
        %v3744 = vadd.f32 %v3236, %v3529
        %v3745 = vadd.f32 %v3237, %v3531
        %v3746 = vadd.f32 %v3238, %v3682
        %v3747 = vadd.f32 %v3239, %v3535
        %v3748 = vadd.f32 %v3240, %v3537
        %v3749 = vadd.f32 %v3241, %v3687
        %v3750 = vadd.f32 %v3242, %v3541
        %v3751 = vadd.f32 %v3243, %v3543
        %v3752 = vadd.f32 %v3244, %v3692
        %v3753 = vadd.f32 %v3245, %v3547
        %v3754 = vadd.f32 %v3246, %v3549
        %v3755 = vadd.f32 %v3247, %v3697
        %v3756 = vadd.f32 %v3248, %v3553
        %v3757 = vadd.f32 %v3249, %v3555
        %v3758 = vadd.f32 %v3250, %v3702
        %v3759 = vadd.f32 %v3251, %v3559
        %v3760 = vadd.f32 %v3252, %v3561
        %v3761 = vadd.f32 %v3253, %v3707
        %v3762 = vadd.f32 %v3254, %v3565
        %v3763 = vadd.f32 %v3255, %v3567
        %v3764 = vadd.f32 %v3256, %v3712
        %v3765 = vadd.f32 %v3257, %v3571
        %v3766 = vadd.f32 %v3258, %v3573
        %v3767 = vadd.f32 %v3259, %v3717
        %s3768 = scalar_lea.vmem [#allocation10], 640
        %v3769 = vld [vmem:[%s3768] sm:$0xff]
        %v3770 = vld [vmem:[%s3768 + $0x8] sm:$0xff]
        %v3771 = vld [vmem:[%s3768 + $0x10] sm:$0xff]
        %v3772 = vld [vmem:[%s3768 + $0x18] sm:$0xff]
        %v3773 = vld [vmem:[%s3768 + $0x20] sm:$0xff]
        %v3774 = vld [vmem:[%s3768 + $0x28] sm:$0xff]
        %v3775 = vld [vmem:[%s3768 + $0x30] sm:$0xff]
        %v3776 = vld [vmem:[%s3768 + $0x38] sm:$0xff]
        %v3777 = vld [vmem:[%s3768 + $0x40] sm:$0xff]
        %v3778 = vld [vmem:[%s3768 + $0x48] sm:$0xff]
        %v3779 = vld [vmem:[%s3768 + $0x50] sm:$0xff]
        %v3780 = vld [vmem:[%s3768 + $0x58] sm:$0xff]
        %v3781 = vld [vmem:[%s3768 + $0x60] sm:$0xff]
        %v3782 = vld [vmem:[%s3768 + $0x68] sm:$0xff]
        %v3783 = vld [vmem:[%s3768 + $0x70] sm:$0xff]
        %v3784 = vld [vmem:[%s3768 + $0x78] sm:$0xff]
        %3785 = vrot.lane.b32.xlu0 %v1068, 85
        %v3786 = vpop.permute.xlu0 %3785
        %3787 = vrot.lane.b32.xlu0 %v1069, 85
        %v3788 = vpop.permute.xlu0 %3787
        %3789 = vrot.lane.b32.xlu0 %v1070, 85
        %v3790 = vpop.permute.xlu0 %3789
        %3791 = vrot.lane.b32.xlu0 %v1071, 85
        %v3792 = vpop.permute.xlu0 %3791
        %3793 = vrot.lane.b32.xlu0 %v1072, 85
        %v3794 = vpop.permute.xlu0 %3793
        %3795 = vrot.lane.b32.xlu0 %v1073, 85
        %v3796 = vpop.permute.xlu0 %3795
        %3797 = vrot.lane.b32.xlu0 %v1074, 85
        %v3798 = vpop.permute.xlu0 %3797
        %3799 = vrot.lane.b32.xlu0 %v1075, 85
        %v3800 = vpop.permute.xlu0 %3799
        %3801 = vrot.lane.b32.xlu0 %v1076, 85
        %v3802 = vpop.permute.xlu0 %3801
        %3803 = vrot.lane.b32.xlu0 %v1077, 85
        %v3804 = vpop.permute.xlu0 %3803
        %3805 = vrot.lane.b32.xlu0 %v1078, 85
        %v3806 = vpop.permute.xlu0 %3805
        %3807 = vrot.lane.b32.xlu0 %v1079, 85
        %v3808 = vpop.permute.xlu0 %3807
        %3809 = vrot.lane.b32.xlu0 %v1080, 85
        %v3810 = vpop.permute.xlu0 %3809
        %3811 = vrot.lane.b32.xlu0 %v1081, 85
        %v3812 = vpop.permute.xlu0 %3811
        %3813 = vrot.lane.b32.xlu0 %v1082, 85
        %v3814 = vpop.permute.xlu0 %3813
        %3815 = vrot.lane.b32.xlu0 %v1083, 85
        %v3816 = vpop.permute.xlu0 %3815
        %3817 = vrot.lane.b32.xlu0 %v1084, 85
        %v3818 = vpop.permute.xlu0 %3817
        %3819 = vrot.lane.b32.xlu0 %v1085, 85
        %v3820 = vpop.permute.xlu0 %3819
        %3821 = vrot.lane.b32.xlu0 %v1086, 85
        %v3822 = vpop.permute.xlu0 %3821
        %3823 = vrot.lane.b32.xlu0 %v1087, 85
        %v3824 = vpop.permute.xlu0 %3823
        %3825 = vrot.lane.b32.xlu0 %v1088, 85
        %v3826 = vpop.permute.xlu0 %3825
        %3827 = vrot.lane.b32.xlu0 %v1089, 85
        %v3828 = vpop.permute.xlu0 %3827
        %3829 = vrot.lane.b32.xlu0 %v1090, 85
        %v3830 = vpop.permute.xlu0 %3829
        %3831 = vrot.lane.b32.xlu0 %v1091, 85
        %v3832 = vpop.permute.xlu0 %3831
        %vm3833 = vcmask 695296
        %v3834 = vsel %vm3833, %v3786, %v3788
        %v3835 = vsel %vm3833, %v3788, %v3790
        %v3836 = vsel %vm3833, %v3792, %v3794
        %v3837 = vsel %vm3833, %v3794, %v3796
        %v3838 = vsel %vm3833, %v3798, %v3800
        %v3839 = vsel %vm3833, %v3800, %v3802
        %v3840 = vsel %vm3833, %v3804, %v3806
        %v3841 = vsel %vm3833, %v3806, %v3808
        %v3842 = vsel %vm3833, %v3810, %v3812
        %v3843 = vsel %vm3833, %v3812, %v3814
        %v3844 = vsel %vm3833, %v3816, %v3818
        %v3845 = vsel %vm3833, %v3818, %v3820
        %v3846 = vsel %vm3833, %v3822, %v3824
        %v3847 = vsel %vm3833, %v3824, %v3826
        %v3848 = vsel %vm3833, %v3828, %v3830
        %v3849 = vsel %vm3833, %v3830, %v3832
        %v3875 = vsel %vm1333, %v3769, 0
        %v3878 = vsel %vm1333, %v3770, 0
        %v3881 = vsel %vm1333, %v3771, 0
        %v3884 = vsel %vm1333, %v3772, 0
        %v3887 = vsel %vm1333, %v3773, 0
        %v3890 = vsel %vm1333, %v3774, 0
        %v3893 = vsel %vm1333, %v3775, 0
        %v3896 = vsel %vm1333, %v3776, 0
        %v3899 = vsel %vm1333, %v3777, 0
        %v3902 = vsel %vm1333, %v3778, 0
        %v3905 = vsel %vm1333, %v3779, 0
        %v3908 = vsel %vm1333, %v3780, 0
        %v3911 = vsel %vm1333, %v3781, 0
        %v3914 = vsel %vm1333, %v3782, 0
        %v3917 = vsel %vm1333, %v3783, 0
        %v3920 = vsel %vm1333, %v3784, 0
        %3922 = vmatprep.subr.mxu0 %v3835
        %3923 = vmatpush1.msra.mxu0 %v3834
        %3924 = vmatprep.subr.mxu0 %v3837
        %3925 = vmatpush1.msra.mxu0 %v3836
        %3926 = vmatprep.subr.mxu0 %v3839
        %3927 = vmatpush1.msra.mxu0 %v3838
        %3928 = vmatprep.subr.mxu0 %v3841
        %3929 = vmatpush1.msra.mxu0 %v3840
        %3930 = vmatprep.subr.mxu0 %v3843
        %3931 = vmatpush1.msra.mxu0 %v3842
        %3932 = vmatprep.subr.mxu0 %v3845
        %3933 = vmatpush1.msra.mxu0 %v3844
        %3934 = vmatprep.subr.mxu0 %v3847
        %3935 = vmatpush1.msra.mxu0 %v3846
        %3936 = vmatprep.subr.mxu0 %v3849
        %3937 = vmatpush1.msra.mxu0 %v3848
        %3938 = vmatprep.subr.mxu0 0.0
        %3939 = vmatpush1.msra.mxu0 0.0
        %3940 = vmatprep.subr.mxu0 0.0
        %3941 = vmatpush1.msra.mxu0 0.0
        %3942 = vmatprep.subr.mxu0 0.0
        %3943 = vmatpush1.msra.mxu0 0.0
        %3944 = vmatprep.subr.mxu0 0.0
        %3945 = vmatpush1.msra.mxu0 0.0
        %3946 = vmatprep.subr.mxu0 0.0
        %3947 = vmatpush1.msra.mxu0 0.0
        %3948 = vmatprep.subr.mxu0 0.0
        %3949 = vmatpush1.msra.mxu0 0.0
        %3950 = vmatprep.subr.mxu0 0.0
        %3951 = vmatpush1.msra.mxu0 0.0
        %3952 = vmatprep.subr.mxu0 0.0
        %3953 = vmatpush1.msra.mxu0 0.0
        %3954 = vmatprep.subr.mxu0 0.0
        %3955 = vmatpush1.msra.mxu0 0.0
        %3956 = vmatprep.subr.mxu0 0.0
        %3957 = vmatpush1.msra.mxu0 0.0
        %3958 = vmatprep.subr.mxu0 0.0
        %3959 = vmatpush1.msra.mxu0 0.0
        %3960 = vmatprep.subr.mxu0 0.0
        %3961 = vmatpush1.msra.mxu0 0.0
        %3962 = vmatprep.subr.mxu0 0.0
        %3963 = vmatpush1.msra.mxu0 0.0
        %3964 = vmatprep.subr.mxu0 0.0
        %3965 = vmatpush1.msra.mxu0 0.0
        %3966 = vmatprep.subr.mxu0 0.0
        %3967 = vmatpush1.msra.mxu0 0.0
        %3968 = vmatprep.subr.mxu0 0.0
        %3969 = vmatpush1.msra.mxu0 0.0
        %3970 = vmatprep.subr.mxu0 0.0
        %3971 = vmatpush1.msra.mxu0 0.0
        %3972 = vmatprep.subr.mxu0 0.0
        %3973 = vmatpush1.msra.mxu0 0.0
        %3974 = vmatprep.subr.mxu0 0.0
        %3975 = vmatpush1.msra.mxu0 0.0
        %3976 = vmatprep.subr.mxu0 0.0
        %3977 = vmatpush1.msra.mxu0 0.0
        %3978 = vmatprep.subr.mxu0 0.0
        %3979 = vmatpush1.msra.mxu0 0.0
        %3980 = vmatprep.subr.mxu0 0.0
        %3981 = vmatpush1.msra.mxu0 0.0
        %3982 = vmatprep.subr.mxu0 0.0
        %3983 = vmatpush1.msra.mxu0 0.0
        %3984 = vmatprep.subr.mxu0 0.0
        %3985 = vmatpush1.msra.mxu0 0.0
        %3986 = vmatprep.mubr.f32.mxu0 0.0
        %3987 = vmatmul.mubr.f32.gmra.mrb[0].mxu0 %v3875
        %v3988 = vpop.f32.mrb[0].mxu0
        %v3989 = vadd.f32 0.0, %v3988
        %v3990 = vpop.f32.mrb[0].mxu0
        %v3991 = vadd.f32 0.0, %v3990
        %3992 = vmatprep.mubr.f32.mxu0 0.0
        %3993 = vmatmul.mubr.f32.gmra.mrb[0].mxu0 %v3878
        %v3994 = vpop.f32.mrb[0].mxu0
        %v3995 = vadd.f32 0.0, %v3994
        %v3996 = vpop.f32.mrb[0].mxu0
        %v3997 = vadd.f32 0.0, %v3996
        %3998 = vmatprep.mubr.f32.mxu0 0.0
        %3999 = vmatmul.mubr.f32.gmra.mrb[0].mxu0 %v3881
        %v4000 = vpop.f32.mrb[0].mxu0
        %v4001 = vadd.f32 0.0, %v4000
        %v4002 = vpop.f32.mrb[0].mxu0
        %v4003 = vadd.f32 0.0, %v4002
        %4004 = vmatprep.mubr.f32.mxu0 0.0
        %4005 = vmatmul.mubr.f32.gmra.mrb[0].mxu0 %v3884
        %v4006 = vpop.f32.mrb[0].mxu0
        %v4007 = vadd.f32 0.0, %v4006
        %v4008 = vpop.f32.mrb[0].mxu0
        %v4009 = vadd.f32 0.0, %v4008
        %4010 = vmatprep.mubr.f32.mxu0 0.0
        %4011 = vmatmul.mubr.f32.gmra.mrb[0].mxu0 %v3887
        %v4012 = vpop.f32.mrb[0].mxu0
        %v4013 = vadd.f32 0.0, %v4012
        %v4014 = vpop.f32.mrb[0].mxu0
        %v4015 = vadd.f32 0.0, %v4014
        %4016 = vmatprep.mubr.f32.mxu0 0.0
        %4017 = vmatmul.mubr.f32.gmra.mrb[0].mxu0 %v3890
        %v4018 = vpop.f32.mrb[0].mxu0
        %v4019 = vadd.f32 0.0, %v4018
        %v4020 = vpop.f32.mrb[0].mxu0
        %v4021 = vadd.f32 0.0, %v4020
        %4022 = vmatprep.mubr.f32.mxu0 0.0
        %4023 = vmatmul.mubr.f32.gmra.mrb[0].mxu0 %v3893
        %v4024 = vpop.f32.mrb[0].mxu0
        %v4025 = vadd.f32 0.0, %v4024
        %v4026 = vpop.f32.mrb[0].mxu0
        %v4027 = vadd.f32 0.0, %v4026
        %4028 = vmatprep.mubr.f32.mxu0 0.0
        %4029 = vmatmul.mubr.f32.gmra.mrb[0].mxu0 %v3896
        %v4030 = vpop.f32.mrb[0].mxu0
        %v4031 = vadd.f32 0.0, %v4030
        %v4032 = vpop.f32.mrb[0].mxu0
        %v4033 = vadd.f32 0.0, %v4032
        %4034 = vmatprep.mubr.f32.mxu0 0.0
        %4035 = vmatmul.mubr.f32.gmra.mrb[0].mxu0 %v3899
        %v4036 = vpop.f32.mrb[0].mxu0
        %v4037 = vadd.f32 0.0, %v4036
        %v4038 = vpop.f32.mrb[0].mxu0
        %v4039 = vadd.f32 0.0, %v4038
        %4040 = vmatprep.mubr.f32.mxu0 0.0
        %4041 = vmatmul.mubr.f32.gmra.mrb[0].mxu0 %v3902
        %v4042 = vpop.f32.mrb[0].mxu0
        %v4043 = vadd.f32 0.0, %v4042
        %v4044 = vpop.f32.mrb[0].mxu0
        %v4045 = vadd.f32 0.0, %v4044
        %4046 = vmatprep.mubr.f32.mxu0 0.0
        %4047 = vmatmul.mubr.f32.gmra.mrb[0].mxu0 %v3905
        %v4048 = vpop.f32.mrb[0].mxu0
        %v4049 = vadd.f32 0.0, %v4048
        %v4050 = vpop.f32.mrb[0].mxu0
        %v4051 = vadd.f32 0.0, %v4050
        %4052 = vmatprep.mubr.f32.mxu0 0.0
        %4053 = vmatmul.mubr.f32.gmra.mrb[0].mxu0 %v3908
        %v4054 = vpop.f32.mrb[0].mxu0
        %v4055 = vadd.f32 0.0, %v4054
        %v4056 = vpop.f32.mrb[0].mxu0
        %v4057 = vadd.f32 0.0, %v4056
        %4058 = vmatprep.mubr.f32.mxu0 0.0
        %4059 = vmatmul.mubr.f32.gmra.mrb[0].mxu0 %v3911
        %v4060 = vpop.f32.mrb[0].mxu0
        %v4061 = vadd.f32 0.0, %v4060
        %v4062 = vpop.f32.mrb[0].mxu0
        %v4063 = vadd.f32 0.0, %v4062
        %4064 = vmatprep.mubr.f32.mxu0 0.0
        %4065 = vmatmul.mubr.f32.gmra.mrb[0].mxu0 %v3914
        %v4066 = vpop.f32.mrb[0].mxu0
        %v4067 = vadd.f32 0.0, %v4066
        %v4068 = vpop.f32.mrb[0].mxu0
        %v4069 = vadd.f32 0.0, %v4068
        %4070 = vmatprep.mubr.f32.mxu0 0.0
        %4071 = vmatmul.mubr.f32.gmra.mrb[0].mxu0 %v3917
        %v4072 = vpop.f32.mrb[0].mxu0
        %v4073 = vadd.f32 0.0, %v4072
        %v4074 = vpop.f32.mrb[0].mxu0
        %v4075 = vadd.f32 0.0, %v4074
        %4076 = vmatprep.mubr.f32.mxu0 0.0
        %4077 = vmatmul.mubr.f32.gmra.mrb[0].mxu0 %v3920
        %v4078 = vpop.f32.mrb[0].mxu0
        %v4079 = vadd.f32 0.0, %v4078
        %v4080 = vpop.f32.mrb[0].mxu0
        %v4081 = vadd.f32 0.0, %v4080
        %4082 = vdwg.mxu0
        %4083 = vmatprep.subr.mxu0 0.0
        %4084 = vmatpush1.msra.mxu0 %v3790
        %4085 = vmatprep.subr.mxu0 0.0
        %4086 = vmatpush1.msra.mxu0 %v3796
        %4087 = vmatprep.subr.mxu0 0.0
        %4088 = vmatpush1.msra.mxu0 %v3802
        %4089 = vmatprep.subr.mxu0 0.0
        %4090 = vmatpush1.msra.mxu0 %v3808
        %4091 = vmatprep.subr.mxu0 0.0
        %4092 = vmatpush1.msra.mxu0 %v3814
        %4093 = vmatprep.subr.mxu0 0.0
        %4094 = vmatpush1.msra.mxu0 %v3820
        %4095 = vmatprep.subr.mxu0 0.0
        %4096 = vmatpush1.msra.mxu0 %v3826
        %4097 = vmatprep.subr.mxu0 0.0
        %4098 = vmatpush1.msra.mxu0 %v3832
        %4099 = vmatprep.subr.mxu0 0.0
        %4100 = vmatpush1.msra.mxu0 0.0
        %4101 = vmatprep.subr.mxu0 0.0
        %4102 = vmatpush1.msra.mxu0 0.0
        %4103 = vmatprep.subr.mxu0 0.0
        %4104 = vmatpush1.msra.mxu0 0.0
        %4105 = vmatprep.subr.mxu0 0.0
        %4106 = vmatpush1.msra.mxu0 0.0
        %4107 = vmatprep.subr.mxu0 0.0
        %4108 = vmatpush1.msra.mxu0 0.0
        %4109 = vmatprep.subr.mxu0 0.0
        %4110 = vmatpush1.msra.mxu0 0.0
        %4111 = vmatprep.subr.mxu0 0.0
        %4112 = vmatpush1.msra.mxu0 0.0
        %4113 = vmatprep.subr.mxu0 0.0
        %4114 = vmatpush1.msra.mxu0 0.0
        %4115 = vmatprep.subr.mxu0 0.0
        %4116 = vmatpush1.msra.mxu0 0.0
        %4117 = vmatprep.subr.mxu0 0.0
        %4118 = vmatpush1.msra.mxu0 0.0
        %4119 = vmatprep.subr.mxu0 0.0
        %4120 = vmatpush1.msra.mxu0 0.0
        %4121 = vmatprep.subr.mxu0 0.0
        %4122 = vmatpush1.msra.mxu0 0.0
        %4123 = vmatprep.subr.mxu0 0.0
        %4124 = vmatpush1.msra.mxu0 0.0
        %4125 = vmatprep.subr.mxu0 0.0
        %4126 = vmatpush1.msra.mxu0 0.0
        %4127 = vmatprep.subr.mxu0 0.0
        %4128 = vmatpush1.msra.mxu0 0.0
        %4129 = vmatprep.subr.mxu0 0.0
        %4130 = vmatpush1.msra.mxu0 0.0
        %4131 = vmatprep.subr.mxu0 0.0
        %4132 = vmatpush1.msra.mxu0 0.0
        %4133 = vmatprep.subr.mxu0 0.0
        %4134 = vmatpush1.msra.mxu0 0.0
        %4135 = vmatprep.subr.mxu0 0.0
        %4136 = vmatpush1.msra.mxu0 0.0
        %4137 = vmatprep.subr.mxu0 0.0
        %4138 = vmatpush1.msra.mxu0 0.0
        %4139 = vmatprep.subr.mxu0 0.0
        %4140 = vmatpush1.msra.mxu0 0.0
        %4141 = vmatprep.subr.mxu0 0.0
        %4142 = vmatpush1.msra.mxu0 0.0
        %4143 = vmatprep.subr.mxu0 0.0
        %4144 = vmatpush1.msra.mxu0 0.0
        %4145 = vmatprep.subr.mxu0 0.0
        %4146 = vmatpush1.msra.mxu0 0.0
        %4147 = vmatprep.mubr.f32.mxu0 0.0
        %4148 = vmatmul.mubr.f32.gmra.mrb[0].mxu0 %v3875
        %v4149 = vpop.f32.mrb[0].mxu0
        %v4150 = vadd.f32 0.0, %v4149
        %v4151 = vpop.f32.mrb[0].mxu0
        %4152 = vmatprep.mubr.f32.mxu0 0.0
        %4153 = vmatmul.mubr.f32.gmra.mrb[0].mxu0 %v3878
        %v4154 = vpop.f32.mrb[0].mxu0
        %v4155 = vadd.f32 0.0, %v4154
        %v4156 = vpop.f32.mrb[0].mxu0
        %4157 = vmatprep.mubr.f32.mxu0 0.0
        %4158 = vmatmul.mubr.f32.gmra.mrb[0].mxu0 %v3881
        %v4159 = vpop.f32.mrb[0].mxu0
        %v4160 = vadd.f32 0.0, %v4159
        %v4161 = vpop.f32.mrb[0].mxu0
        %4162 = vmatprep.mubr.f32.mxu0 0.0
        %4163 = vmatmul.mubr.f32.gmra.mrb[0].mxu0 %v3884
        %v4164 = vpop.f32.mrb[0].mxu0
        %v4165 = vadd.f32 0.0, %v4164
        %v4166 = vpop.f32.mrb[0].mxu0
        %4167 = vmatprep.mubr.f32.mxu0 0.0
        %4168 = vmatmul.mubr.f32.gmra.mrb[0].mxu0 %v3887
        %v4169 = vpop.f32.mrb[0].mxu0
        %v4170 = vadd.f32 0.0, %v4169
        %v4171 = vpop.f32.mrb[0].mxu0
        %4172 = vmatprep.mubr.f32.mxu0 0.0
        %4173 = vmatmul.mubr.f32.gmra.mrb[0].mxu0 %v3890
        %v4174 = vpop.f32.mrb[0].mxu0
        %v4175 = vadd.f32 0.0, %v4174
        %v4176 = vpop.f32.mrb[0].mxu0
        %4177 = vmatprep.mubr.f32.mxu0 0.0
        %4178 = vmatmul.mubr.f32.gmra.mrb[0].mxu0 %v3893
        %v4179 = vpop.f32.mrb[0].mxu0
        %v4180 = vadd.f32 0.0, %v4179
        %v4181 = vpop.f32.mrb[0].mxu0
        %4182 = vmatprep.mubr.f32.mxu0 0.0
        %4183 = vmatmul.mubr.f32.gmra.mrb[0].mxu0 %v3896
        %v4184 = vpop.f32.mrb[0].mxu0
        %v4185 = vadd.f32 0.0, %v4184
        %v4186 = vpop.f32.mrb[0].mxu0
        %4187 = vmatprep.mubr.f32.mxu0 0.0
        %4188 = vmatmul.mubr.f32.gmra.mrb[0].mxu0 %v3899
        %v4189 = vpop.f32.mrb[0].mxu0
        %v4190 = vadd.f32 0.0, %v4189
        %v4191 = vpop.f32.mrb[0].mxu0
        %4192 = vmatprep.mubr.f32.mxu0 0.0
        %4193 = vmatmul.mubr.f32.gmra.mrb[0].mxu0 %v3902
        %v4194 = vpop.f32.mrb[0].mxu0
        %v4195 = vadd.f32 0.0, %v4194
        %v4196 = vpop.f32.mrb[0].mxu0
        %4197 = vmatprep.mubr.f32.mxu0 0.0
        %4198 = vmatmul.mubr.f32.gmra.mrb[0].mxu0 %v3905
        %v4199 = vpop.f32.mrb[0].mxu0
        %v4200 = vadd.f32 0.0, %v4199
        %v4201 = vpop.f32.mrb[0].mxu0
        %4202 = vmatprep.mubr.f32.mxu0 0.0
        %4203 = vmatmul.mubr.f32.gmra.mrb[0].mxu0 %v3908
        %v4204 = vpop.f32.mrb[0].mxu0
        %v4205 = vadd.f32 0.0, %v4204
        %v4206 = vpop.f32.mrb[0].mxu0
        %4207 = vmatprep.mubr.f32.mxu0 0.0
        %4208 = vmatmul.mubr.f32.gmra.mrb[0].mxu0 %v3911
        %v4209 = vpop.f32.mrb[0].mxu0
        %v4210 = vadd.f32 0.0, %v4209
        %v4211 = vpop.f32.mrb[0].mxu0
        %4212 = vmatprep.mubr.f32.mxu0 0.0
        %4213 = vmatmul.mubr.f32.gmra.mrb[0].mxu0 %v3914
        %v4214 = vpop.f32.mrb[0].mxu0
        %v4215 = vadd.f32 0.0, %v4214
        %v4216 = vpop.f32.mrb[0].mxu0
        %4217 = vmatprep.mubr.f32.mxu0 0.0
        %4218 = vmatmul.mubr.f32.gmra.mrb[0].mxu0 %v3917
        %v4219 = vpop.f32.mrb[0].mxu0
        %v4220 = vadd.f32 0.0, %v4219
        %v4221 = vpop.f32.mrb[0].mxu0
        %4222 = vmatprep.mubr.f32.mxu0 0.0
        %4223 = vmatmul.mubr.f32.gmra.mrb[0].mxu0 %v3920
        %v4224 = vpop.f32.mrb[0].mxu0
        %v4225 = vadd.f32 0.0, %v4224
        %v4226 = vpop.f32.mrb[0].mxu0
        %4227 = vdwg.mxu0
        %v4228 = vadd.f32 %v3720, %v3989
        %v4229 = vadd.f32 %v3721, %v3991
        %v4230 = vadd.f32 %v3722, %v4150
        %v4231 = vadd.f32 %v3723, %v3995
        %v4232 = vadd.f32 %v3724, %v3997
        %v4233 = vadd.f32 %v3725, %v4155
        %v4234 = vadd.f32 %v3726, %v4001
        %v4235 = vadd.f32 %v3727, %v4003
        %v4236 = vadd.f32 %v3728, %v4160
        %v4237 = vadd.f32 %v3729, %v4007
        %v4238 = vadd.f32 %v3730, %v4009
        %v4239 = vadd.f32 %v3731, %v4165
        %v4240 = vadd.f32 %v3732, %v4013
        %v4241 = vadd.f32 %v3733, %v4015
        %v4242 = vadd.f32 %v3734, %v4170
        %v4243 = vadd.f32 %v3735, %v4019
        %v4244 = vadd.f32 %v3736, %v4021
        %v4245 = vadd.f32 %v3737, %v4175
        %v4246 = vadd.f32 %v3738, %v4025
        %v4247 = vadd.f32 %v3739, %v4027
        %v4248 = vadd.f32 %v3740, %v4180
        %v4249 = vadd.f32 %v3741, %v4031
        %v4250 = vadd.f32 %v3742, %v4033
        %v4251 = vadd.f32 %v3743, %v4185
        %v4252 = vadd.f32 %v3744, %v4037
        %v4253 = vadd.f32 %v3745, %v4039
        %v4254 = vadd.f32 %v3746, %v4190
        %v4255 = vadd.f32 %v3747, %v4043
        %v4256 = vadd.f32 %v3748, %v4045
        %v4257 = vadd.f32 %v3749, %v4195
        %v4258 = vadd.f32 %v3750, %v4049
        %v4259 = vadd.f32 %v3751, %v4051
        %v4260 = vadd.f32 %v3752, %v4200
        %v4261 = vadd.f32 %v3753, %v4055
        %v4262 = vadd.f32 %v3754, %v4057
        %v4263 = vadd.f32 %v3755, %v4205
        %v4264 = vadd.f32 %v3756, %v4061
        %v4265 = vadd.f32 %v3757, %v4063
        %v4266 = vadd.f32 %v3758, %v4210
        %v4267 = vadd.f32 %v3759, %v4067
        %v4268 = vadd.f32 %v3760, %v4069
        %v4269 = vadd.f32 %v3761, %v4215
        %v4270 = vadd.f32 %v3762, %v4073
        %v4271 = vadd.f32 %v3763, %v4075
        %v4272 = vadd.f32 %v3764, %v4220
        %v4273 = vadd.f32 %v3765, %v4079
        %v4274 = vadd.f32 %v3766, %v4081
        %v4275 = vadd.f32 %v3767, %v4225
        %s4276 = scalar_lea.vmem [#allocation10], 768
        %v4277 = vld [vmem:[%s4276] sm:$0xff]
        %v4278 = vld [vmem:[%s4276 + $0x8] sm:$0xff]
        %v4279 = vld [vmem:[%s4276 + $0x10] sm:$0xff]
        %v4280 = vld [vmem:[%s4276 + $0x18] sm:$0xff]
        %v4281 = vld [vmem:[%s4276 + $0x20] sm:$0xff]
        %v4282 = vld [vmem:[%s4276 + $0x28] sm:$0xff]
        %v4283 = vld [vmem:[%s4276 + $0x30] sm:$0xff]
        %v4284 = vld [vmem:[%s4276 + $0x38] sm:$0xff]
        %v4285 = vld [vmem:[%s4276 + $0x40] sm:$0xff]
        %v4286 = vld [vmem:[%s4276 + $0x48] sm:$0xff]
        %v4287 = vld [vmem:[%s4276 + $0x50] sm:$0xff]
        %v4288 = vld [vmem:[%s4276 + $0x58] sm:$0xff]
        %v4289 = vld [vmem:[%s4276 + $0x60] sm:$0xff]
        %v4290 = vld [vmem:[%s4276 + $0x68] sm:$0xff]
        %v4291 = vld [vmem:[%s4276 + $0x70] sm:$0xff]
        %v4292 = vld [vmem:[%s4276 + $0x78] sm:$0xff]
        %4293 = vrot.lane.b32.xlu0 %v1068, 67
        %v4294 = vpop.permute.xlu0 %4293
        %4295 = vrot.lane.b32.xlu0 %v1069, 67
        %v4296 = vpop.permute.xlu0 %4295
        %4297 = vrot.lane.b32.xlu0 %v1070, 67
        %v4298 = vpop.permute.xlu0 %4297
        %4299 = vrot.lane.b32.xlu0 %v1071, 67
        %v4300 = vpop.permute.xlu0 %4299
        %4301 = vrot.lane.b32.xlu0 %v1072, 67
        %v4302 = vpop.permute.xlu0 %4301
        %4303 = vrot.lane.b32.xlu0 %v1073, 67
        %v4304 = vpop.permute.xlu0 %4303
        %4305 = vrot.lane.b32.xlu0 %v1074, 67
        %v4306 = vpop.permute.xlu0 %4305
        %4307 = vrot.lane.b32.xlu0 %v1075, 67
        %v4308 = vpop.permute.xlu0 %4307
        %4309 = vrot.lane.b32.xlu0 %v1076, 67
        %v4310 = vpop.permute.xlu0 %4309
        %4311 = vrot.lane.b32.xlu0 %v1077, 67
        %v4312 = vpop.permute.xlu0 %4311
        %4313 = vrot.lane.b32.xlu0 %v1078, 67
        %v4314 = vpop.permute.xlu0 %4313
        %4315 = vrot.lane.b32.xlu0 %v1079, 67
        %v4316 = vpop.permute.xlu0 %4315
        %4317 = vrot.lane.b32.xlu0 %v1080, 67
        %v4318 = vpop.permute.xlu0 %4317
        %4319 = vrot.lane.b32.xlu0 %v1081, 67
        %v4320 = vpop.permute.xlu0 %4319
        %4321 = vrot.lane.b32.xlu0 %v1082, 67
        %v4322 = vpop.permute.xlu0 %4321
        %4323 = vrot.lane.b32.xlu0 %v1083, 67
        %v4324 = vpop.permute.xlu0 %4323
        %4325 = vrot.lane.b32.xlu0 %v1084, 67
        %v4326 = vpop.permute.xlu0 %4325
        %4327 = vrot.lane.b32.xlu0 %v1085, 67
        %v4328 = vpop.permute.xlu0 %4327
        %4329 = vrot.lane.b32.xlu0 %v1086, 67
        %v4330 = vpop.permute.xlu0 %4329
        %4331 = vrot.lane.b32.xlu0 %v1087, 67
        %v4332 = vpop.permute.xlu0 %4331
        %4333 = vrot.lane.b32.xlu0 %v1088, 67
        %v4334 = vpop.permute.xlu0 %4333
        %4335 = vrot.lane.b32.xlu0 %v1089, 67
        %v4336 = vpop.permute.xlu0 %4335
        %4337 = vrot.lane.b32.xlu0 %v1090, 67
        %v4338 = vpop.permute.xlu0 %4337
        %4339 = vrot.lane.b32.xlu0 %v1091, 67
        %v4340 = vpop.permute.xlu0 %4339
        %vm4341 = vcmask 547840
        %v4342 = vsel %vm4341, %v4294, %v4296
        %v4343 = vsel %vm4341, %v4296, %v4298
        %v4344 = vsel %vm4341, %v4300, %v4302
        %v4345 = vsel %vm4341, %v4302, %v4304
        %v4346 = vsel %vm4341, %v4306, %v4308
        %v4347 = vsel %vm4341, %v4308, %v4310
        %v4348 = vsel %vm4341, %v4312, %v4314
        %v4349 = vsel %vm4341, %v4314, %v4316
        %v4350 = vsel %vm4341, %v4318, %v4320
        %v4351 = vsel %vm4341, %v4320, %v4322
        %v4352 = vsel %vm4341, %v4324, %v4326
        %v4353 = vsel %vm4341, %v4326, %v4328
        %v4354 = vsel %vm4341, %v4330, %v4332
        %v4355 = vsel %vm4341, %v4332, %v4334
        %v4356 = vsel %vm4341, %v4336, %v4338
        %v4357 = vsel %vm4341, %v4338, %v4340
        %v4383 = vsel %vm1333, %v4277, 0
        %v4386 = vsel %vm1333, %v4278, 0
        %v4389 = vsel %vm1333, %v4279, 0
        %v4392 = vsel %vm1333, %v4280, 0
        %v4395 = vsel %vm1333, %v4281, 0
        %v4398 = vsel %vm1333, %v4282, 0
        %v4401 = vsel %vm1333, %v4283, 0
        %v4404 = vsel %vm1333, %v4284, 0
        %v4407 = vsel %vm1333, %v4285, 0
        %v4410 = vsel %vm1333, %v4286, 0
        %v4413 = vsel %vm1333, %v4287, 0
        %v4416 = vsel %vm1333, %v4288, 0
        %v4419 = vsel %vm1333, %v4289, 0
        %v4422 = vsel %vm1333, %v4290, 0
        %v4425 = vsel %vm1333, %v4291, 0
        %v4428 = vsel %vm1333, %v4292, 0
        %4430 = vmatprep.subr.mxu0 %v4343
        %4431 = vmatpush1.msra.mxu0 %v4342
        %4432 = vmatprep.subr.mxu0 %v4345
        %4433 = vmatpush1.msra.mxu0 %v4344
        %4434 = vmatprep.subr.mxu0 %v4347
        %4435 = vmatpush1.msra.mxu0 %v4346
        %4436 = vmatprep.subr.mxu0 %v4349
        %4437 = vmatpush1.msra.mxu0 %v4348
        %4438 = vmatprep.subr.mxu0 %v4351
        %4439 = vmatpush1.msra.mxu0 %v4350
        %4440 = vmatprep.subr.mxu0 %v4353
        %4441 = vmatpush1.msra.mxu0 %v4352
        %4442 = vmatprep.subr.mxu0 %v4355
        %4443 = vmatpush1.msra.mxu0 %v4354
        %4444 = vmatprep.subr.mxu0 %v4357
        %4445 = vmatpush1.msra.mxu0 %v4356
        %4446 = vmatprep.subr.mxu0 0.0
        %4447 = vmatpush1.msra.mxu0 0.0
        %4448 = vmatprep.subr.mxu0 0.0
        %4449 = vmatpush1.msra.mxu0 0.0
        %4450 = vmatprep.subr.mxu0 0.0
        %4451 = vmatpush1.msra.mxu0 0.0
        %4452 = vmatprep.subr.mxu0 0.0
        %4453 = vmatpush1.msra.mxu0 0.0
        %4454 = vmatprep.subr.mxu0 0.0
        %4455 = vmatpush1.msra.mxu0 0.0
        %4456 = vmatprep.subr.mxu0 0.0
        %4457 = vmatpush1.msra.mxu0 0.0
        %4458 = vmatprep.subr.mxu0 0.0
        %4459 = vmatpush1.msra.mxu0 0.0
        %4460 = vmatprep.subr.mxu0 0.0
        %4461 = vmatpush1.msra.mxu0 0.0
        %4462 = vmatprep.subr.mxu0 0.0
        %4463 = vmatpush1.msra.mxu0 0.0
        %4464 = vmatprep.subr.mxu0 0.0
        %4465 = vmatpush1.msra.mxu0 0.0
        %4466 = vmatprep.subr.mxu0 0.0
        %4467 = vmatpush1.msra.mxu0 0.0
        %4468 = vmatprep.subr.mxu0 0.0
        %4469 = vmatpush1.msra.mxu0 0.0
        %4470 = vmatprep.subr.mxu0 0.0
        %4471 = vmatpush1.msra.mxu0 0.0
        %4472 = vmatprep.subr.mxu0 0.0
        %4473 = vmatpush1.msra.mxu0 0.0
        %4474 = vmatprep.subr.mxu0 0.0
        %4475 = vmatpush1.msra.mxu0 0.0
        %4476 = vmatprep.subr.mxu0 0.0
        %4477 = vmatpush1.msra.mxu0 0.0
        %4478 = vmatprep.subr.mxu0 0.0
        %4479 = vmatpush1.msra.mxu0 0.0
        %4480 = vmatprep.subr.mxu0 0.0
        %4481 = vmatpush1.msra.mxu0 0.0
        %4482 = vmatprep.subr.mxu0 0.0
        %4483 = vmatpush1.msra.mxu0 0.0
        %4484 = vmatprep.subr.mxu0 0.0
        %4485 = vmatpush1.msra.mxu0 0.0
        %4486 = vmatprep.subr.mxu0 0.0
        %4487 = vmatpush1.msra.mxu0 0.0
        %4488 = vmatprep.subr.mxu0 0.0
        %4489 = vmatpush1.msra.mxu0 0.0
        %4490 = vmatprep.subr.mxu0 0.0
        %4491 = vmatpush1.msra.mxu0 0.0
        %4492 = vmatprep.subr.mxu0 0.0
        %4493 = vmatpush1.msra.mxu0 0.0
        %4494 = vmatprep.mubr.f32.mxu0 0.0
        %4495 = vmatmul.mubr.f32.gmra.mrb[0].mxu0 %v4383
        %v4496 = vpop.f32.mrb[0].mxu0
        %v4497 = vadd.f32 0.0, %v4496
        %v4498 = vpop.f32.mrb[0].mxu0
        %v4499 = vadd.f32 0.0, %v4498
        %4500 = vmatprep.mubr.f32.mxu0 0.0
        %4501 = vmatmul.mubr.f32.gmra.mrb[0].mxu0 %v4386
        %v4502 = vpop.f32.mrb[0].mxu0
        %v4503 = vadd.f32 0.0, %v4502
        %v4504 = vpop.f32.mrb[0].mxu0
        %v4505 = vadd.f32 0.0, %v4504
        %4506 = vmatprep.mubr.f32.mxu0 0.0
        %4507 = vmatmul.mubr.f32.gmra.mrb[0].mxu0 %v4389
        %v4508 = vpop.f32.mrb[0].mxu0
        %v4509 = vadd.f32 0.0, %v4508
        %v4510 = vpop.f32.mrb[0].mxu0
        %v4511 = vadd.f32 0.0, %v4510
        %4512 = vmatprep.mubr.f32.mxu0 0.0
        %4513 = vmatmul.mubr.f32.gmra.mrb[0].mxu0 %v4392
        %v4514 = vpop.f32.mrb[0].mxu0
        %v4515 = vadd.f32 0.0, %v4514
        %v4516 = vpop.f32.mrb[0].mxu0
        %v4517 = vadd.f32 0.0, %v4516
        %4518 = vmatprep.mubr.f32.mxu0 0.0
        %4519 = vmatmul.mubr.f32.gmra.mrb[0].mxu0 %v4395
        %v4520 = vpop.f32.mrb[0].mxu0
        %v4521 = vadd.f32 0.0, %v4520
        %v4522 = vpop.f32.mrb[0].mxu0
        %v4523 = vadd.f32 0.0, %v4522
        %4524 = vmatprep.mubr.f32.mxu0 0.0
        %4525 = vmatmul.mubr.f32.gmra.mrb[0].mxu0 %v4398
        %v4526 = vpop.f32.mrb[0].mxu0
        %v4527 = vadd.f32 0.0, %v4526
        %v4528 = vpop.f32.mrb[0].mxu0
        %v4529 = vadd.f32 0.0, %v4528
        %4530 = vmatprep.mubr.f32.mxu0 0.0
        %4531 = vmatmul.mubr.f32.gmra.mrb[0].mxu0 %v4401
        %v4532 = vpop.f32.mrb[0].mxu0
        %v4533 = vadd.f32 0.0, %v4532
        %v4534 = vpop.f32.mrb[0].mxu0
        %v4535 = vadd.f32 0.0, %v4534
        %4536 = vmatprep.mubr.f32.mxu0 0.0
        %4537 = vmatmul.mubr.f32.gmra.mrb[0].mxu0 %v4404
        %v4538 = vpop.f32.mrb[0].mxu0
        %v4539 = vadd.f32 0.0, %v4538
        %v4540 = vpop.f32.mrb[0].mxu0
        %v4541 = vadd.f32 0.0, %v4540
        %4542 = vmatprep.mubr.f32.mxu0 0.0
        %4543 = vmatmul.mubr.f32.gmra.mrb[0].mxu0 %v4407
        %v4544 = vpop.f32.mrb[0].mxu0
        %v4545 = vadd.f32 0.0, %v4544
        %v4546 = vpop.f32.mrb[0].mxu0
        %v4547 = vadd.f32 0.0, %v4546
        %4548 = vmatprep.mubr.f32.mxu0 0.0
        %4549 = vmatmul.mubr.f32.gmra.mrb[0].mxu0 %v4410
        %v4550 = vpop.f32.mrb[0].mxu0
        %v4551 = vadd.f32 0.0, %v4550
        %v4552 = vpop.f32.mrb[0].mxu0
        %v4553 = vadd.f32 0.0, %v4552
        %4554 = vmatprep.mubr.f32.mxu0 0.0
        %4555 = vmatmul.mubr.f32.gmra.mrb[0].mxu0 %v4413
        %v4556 = vpop.f32.mrb[0].mxu0
        %v4557 = vadd.f32 0.0, %v4556
        %v4558 = vpop.f32.mrb[0].mxu0
        %v4559 = vadd.f32 0.0, %v4558
        %4560 = vmatprep.mubr.f32.mxu0 0.0
        %4561 = vmatmul.mubr.f32.gmra.mrb[0].mxu0 %v4416
        %v4562 = vpop.f32.mrb[0].mxu0
        %v4563 = vadd.f32 0.0, %v4562
        %v4564 = vpop.f32.mrb[0].mxu0
        %v4565 = vadd.f32 0.0, %v4564
        %4566 = vmatprep.mubr.f32.mxu0 0.0
        %4567 = vmatmul.mubr.f32.gmra.mrb[0].mxu0 %v4419
        %v4568 = vpop.f32.mrb[0].mxu0
        %v4569 = vadd.f32 0.0, %v4568
        %v4570 = vpop.f32.mrb[0].mxu0
        %v4571 = vadd.f32 0.0, %v4570
        %4572 = vmatprep.mubr.f32.mxu0 0.0
        %4573 = vmatmul.mubr.f32.gmra.mrb[0].mxu0 %v4422
        %v4574 = vpop.f32.mrb[0].mxu0
        %v4575 = vadd.f32 0.0, %v4574
        %v4576 = vpop.f32.mrb[0].mxu0
        %v4577 = vadd.f32 0.0, %v4576
        %4578 = vmatprep.mubr.f32.mxu0 0.0
        %4579 = vmatmul.mubr.f32.gmra.mrb[0].mxu0 %v4425
        %v4580 = vpop.f32.mrb[0].mxu0
        %v4581 = vadd.f32 0.0, %v4580
        %v4582 = vpop.f32.mrb[0].mxu0
        %v4583 = vadd.f32 0.0, %v4582
        %4584 = vmatprep.mubr.f32.mxu0 0.0
        %4585 = vmatmul.mubr.f32.gmra.mrb[0].mxu0 %v4428
        %v4586 = vpop.f32.mrb[0].mxu0
        %v4587 = vadd.f32 0.0, %v4586
        %v4588 = vpop.f32.mrb[0].mxu0
        %v4589 = vadd.f32 0.0, %v4588
        %4590 = vdwg.mxu0
        %4591 = vmatprep.subr.mxu0 0.0
        %4592 = vmatpush1.msra.mxu0 %v4298
        %4593 = vmatprep.subr.mxu0 0.0
        %4594 = vmatpush1.msra.mxu0 %v4304
        %4595 = vmatprep.subr.mxu0 0.0
        %4596 = vmatpush1.msra.mxu0 %v4310
        %4597 = vmatprep.subr.mxu0 0.0
        %4598 = vmatpush1.msra.mxu0 %v4316
        %4599 = vmatprep.subr.mxu0 0.0
        %4600 = vmatpush1.msra.mxu0 %v4322
        %4601 = vmatprep.subr.mxu0 0.0
        %4602 = vmatpush1.msra.mxu0 %v4328
        %4603 = vmatprep.subr.mxu0 0.0
        %4604 = vmatpush1.msra.mxu0 %v4334
        %4605 = vmatprep.subr.mxu0 0.0
        %4606 = vmatpush1.msra.mxu0 %v4340
        %4607 = vmatprep.subr.mxu0 0.0
        %4608 = vmatpush1.msra.mxu0 0.0
        %4609 = vmatprep.subr.mxu0 0.0
        %4610 = vmatpush1.msra.mxu0 0.0
        %4611 = vmatprep.subr.mxu0 0.0
        %4612 = vmatpush1.msra.mxu0 0.0
        %4613 = vmatprep.subr.mxu0 0.0
        %4614 = vmatpush1.msra.mxu0 0.0
        %4615 = vmatprep.subr.mxu0 0.0
        %4616 = vmatpush1.msra.mxu0 0.0
        %4617 = vmatprep.subr.mxu0 0.0
        %4618 = vmatpush1.msra.mxu0 0.0
        %4619 = vmatprep.subr.mxu0 0.0
        %4620 = vmatpush1.msra.mxu0 0.0
        %4621 = vmatprep.subr.mxu0 0.0
        %4622 = vmatpush1.msra.mxu0 0.0
        %4623 = vmatprep.subr.mxu0 0.0
        %4624 = vmatpush1.msra.mxu0 0.0
        %4625 = vmatprep.subr.mxu0 0.0
        %4626 = vmatpush1.msra.mxu0 0.0
        %4627 = vmatprep.subr.mxu0 0.0
        %4628 = vmatpush1.msra.mxu0 0.0
        %4629 = vmatprep.subr.mxu0 0.0
        %4630 = vmatpush1.msra.mxu0 0.0
        %4631 = vmatprep.subr.mxu0 0.0
        %4632 = vmatpush1.msra.mxu0 0.0
        %4633 = vmatprep.subr.mxu0 0.0
        %4634 = vmatpush1.msra.mxu0 0.0
        %4635 = vmatprep.subr.mxu0 0.0
        %4636 = vmatpush1.msra.mxu0 0.0
        %4637 = vmatprep.subr.mxu0 0.0
        %4638 = vmatpush1.msra.mxu0 0.0
        %4639 = vmatprep.subr.mxu0 0.0
        %4640 = vmatpush1.msra.mxu0 0.0
        %4641 = vmatprep.subr.mxu0 0.0
        %4642 = vmatpush1.msra.mxu0 0.0
        %4643 = vmatprep.subr.mxu0 0.0
        %4644 = vmatpush1.msra.mxu0 0.0
        %4645 = vmatprep.subr.mxu0 0.0
        %4646 = vmatpush1.msra.mxu0 0.0
        %4647 = vmatprep.subr.mxu0 0.0
        %4648 = vmatpush1.msra.mxu0 0.0
        %4649 = vmatprep.subr.mxu0 0.0
        %4650 = vmatpush1.msra.mxu0 0.0
        %4651 = vmatprep.subr.mxu0 0.0
        %4652 = vmatpush1.msra.mxu0 0.0
        %4653 = vmatprep.subr.mxu0 0.0
        %4654 = vmatpush1.msra.mxu0 0.0
        %4655 = vmatprep.mubr.f32.mxu0 0.0
        %4656 = vmatmul.mubr.f32.gmra.mrb[0].mxu0 %v4383
        %v4657 = vpop.f32.mrb[0].mxu0
        %v4658 = vadd.f32 0.0, %v4657
        %v4659 = vpop.f32.mrb[0].mxu0
        %4660 = vmatprep.mubr.f32.mxu0 0.0
        %4661 = vmatmul.mubr.f32.gmra.mrb[0].mxu0 %v4386
        %v4662 = vpop.f32.mrb[0].mxu0
        %v4663 = vadd.f32 0.0, %v4662
        %v4664 = vpop.f32.mrb[0].mxu0
        %4665 = vmatprep.mubr.f32.mxu0 0.0
        %4666 = vmatmul.mubr.f32.gmra.mrb[0].mxu0 %v4389
        %v4667 = vpop.f32.mrb[0].mxu0
        %v4668 = vadd.f32 0.0, %v4667
        %v4669 = vpop.f32.mrb[0].mxu0
        %4670 = vmatprep.mubr.f32.mxu0 0.0
        %4671 = vmatmul.mubr.f32.gmra.mrb[0].mxu0 %v4392
        %v4672 = vpop.f32.mrb[0].mxu0
        %v4673 = vadd.f32 0.0, %v4672
        %v4674 = vpop.f32.mrb[0].mxu0
        %4675 = vmatprep.mubr.f32.mxu0 0.0
        %4676 = vmatmul.mubr.f32.gmra.mrb[0].mxu0 %v4395
        %v4677 = vpop.f32.mrb[0].mxu0
        %v4678 = vadd.f32 0.0, %v4677
        %v4679 = vpop.f32.mrb[0].mxu0
        %4680 = vmatprep.mubr.f32.mxu0 0.0
        %4681 = vmatmul.mubr.f32.gmra.mrb[0].mxu0 %v4398
        %v4682 = vpop.f32.mrb[0].mxu0
        %v4683 = vadd.f32 0.0, %v4682
        %v4684 = vpop.f32.mrb[0].mxu0
        %4685 = vmatprep.mubr.f32.mxu0 0.0
        %4686 = vmatmul.mubr.f32.gmra.mrb[0].mxu0 %v4401
        %v4687 = vpop.f32.mrb[0].mxu0
        %v4688 = vadd.f32 0.0, %v4687
        %v4689 = vpop.f32.mrb[0].mxu0
        %4690 = vmatprep.mubr.f32.mxu0 0.0
        %4691 = vmatmul.mubr.f32.gmra.mrb[0].mxu0 %v4404
        %v4692 = vpop.f32.mrb[0].mxu0
        %v4693 = vadd.f32 0.0, %v4692
        %v4694 = vpop.f32.mrb[0].mxu0
        %4695 = vmatprep.mubr.f32.mxu0 0.0
        %4696 = vmatmul.mubr.f32.gmra.mrb[0].mxu0 %v4407
        %v4697 = vpop.f32.mrb[0].mxu0
        %v4698 = vadd.f32 0.0, %v4697
        %v4699 = vpop.f32.mrb[0].mxu0
        %4700 = vmatprep.mubr.f32.mxu0 0.0
        %4701 = vmatmul.mubr.f32.gmra.mrb[0].mxu0 %v4410
        %v4702 = vpop.f32.mrb[0].mxu0
        %v4703 = vadd.f32 0.0, %v4702
        %v4704 = vpop.f32.mrb[0].mxu0
        %4705 = vmatprep.mubr.f32.mxu0 0.0
        %4706 = vmatmul.mubr.f32.gmra.mrb[0].mxu0 %v4413
        %v4707 = vpop.f32.mrb[0].mxu0
        %v4708 = vadd.f32 0.0, %v4707
        %v4709 = vpop.f32.mrb[0].mxu0
        %4710 = vmatprep.mubr.f32.mxu0 0.0
        %4711 = vmatmul.mubr.f32.gmra.mrb[0].mxu0 %v4416
        %v4712 = vpop.f32.mrb[0].mxu0
        %v4713 = vadd.f32 0.0, %v4712
        %v4714 = vpop.f32.mrb[0].mxu0
        %4715 = vmatprep.mubr.f32.mxu0 0.0
        %4716 = vmatmul.mubr.f32.gmra.mrb[0].mxu0 %v4419
        %v4717 = vpop.f32.mrb[0].mxu0
        %v4718 = vadd.f32 0.0, %v4717
        %v4719 = vpop.f32.mrb[0].mxu0
        %4720 = vmatprep.mubr.f32.mxu0 0.0
        %4721 = vmatmul.mubr.f32.gmra.mrb[0].mxu0 %v4422
        %v4722 = vpop.f32.mrb[0].mxu0
        %v4723 = vadd.f32 0.0, %v4722
        %v4724 = vpop.f32.mrb[0].mxu0
        %4725 = vmatprep.mubr.f32.mxu0 0.0
        %4726 = vmatmul.mubr.f32.gmra.mrb[0].mxu0 %v4425
        %v4727 = vpop.f32.mrb[0].mxu0
        %v4728 = vadd.f32 0.0, %v4727
        %v4729 = vpop.f32.mrb[0].mxu0
        %4730 = vmatprep.mubr.f32.mxu0 0.0
        %4731 = vmatmul.mubr.f32.gmra.mrb[0].mxu0 %v4428
        %v4732 = vpop.f32.mrb[0].mxu0
        %v4733 = vadd.f32 0.0, %v4732
        %v4734 = vpop.f32.mrb[0].mxu0
        %4735 = vdwg.mxu0
        %v4736 = vadd.f32 %v4228, %v4497
        %v4737 = vadd.f32 %v4229, %v4499
        %v4738 = vadd.f32 %v4230, %v4658
        %v4739 = vadd.f32 %v4231, %v4503
        %v4740 = vadd.f32 %v4232, %v4505
        %v4741 = vadd.f32 %v4233, %v4663
        %v4742 = vadd.f32 %v4234, %v4509
        %v4743 = vadd.f32 %v4235, %v4511
        %v4744 = vadd.f32 %v4236, %v4668
        %v4745 = vadd.f32 %v4237, %v4515
        %v4746 = vadd.f32 %v4238, %v4517
        %v4747 = vadd.f32 %v4239, %v4673
        %v4748 = vadd.f32 %v4240, %v4521
        %v4749 = vadd.f32 %v4241, %v4523
        %v4750 = vadd.f32 %v4242, %v4678
        %v4751 = vadd.f32 %v4243, %v4527
        %v4752 = vadd.f32 %v4244, %v4529
        %v4753 = vadd.f32 %v4245, %v4683
        %v4754 = vadd.f32 %v4246, %v4533
        %v4755 = vadd.f32 %v4247, %v4535
        %v4756 = vadd.f32 %v4248, %v4688
        %v4757 = vadd.f32 %v4249, %v4539
        %v4758 = vadd.f32 %v4250, %v4541
        %v4759 = vadd.f32 %v4251, %v4693
        %v4760 = vadd.f32 %v4252, %v4545
        %v4761 = vadd.f32 %v4253, %v4547
        %v4762 = vadd.f32 %v4254, %v4698
        %v4763 = vadd.f32 %v4255, %v4551
        %v4764 = vadd.f32 %v4256, %v4553
        %v4765 = vadd.f32 %v4257, %v4703
        %v4766 = vadd.f32 %v4258, %v4557
        %v4767 = vadd.f32 %v4259, %v4559
        %v4768 = vadd.f32 %v4260, %v4708
        %v4769 = vadd.f32 %v4261, %v4563
        %v4770 = vadd.f32 %v4262, %v4565
        %v4771 = vadd.f32 %v4263, %v4713
        %v4772 = vadd.f32 %v4264, %v4569
        %v4773 = vadd.f32 %v4265, %v4571
        %v4774 = vadd.f32 %v4266, %v4718
        %v4775 = vadd.f32 %v4267, %v4575
        %v4776 = vadd.f32 %v4268, %v4577
        %v4777 = vadd.f32 %v4269, %v4723
        %v4778 = vadd.f32 %v4270, %v4581
        %v4779 = vadd.f32 %v4271, %v4583
        %v4780 = vadd.f32 %v4272, %v4728
        %v4781 = vadd.f32 %v4273, %v4587
        %v4782 = vadd.f32 %v4274, %v4589
        %v4783 = vadd.f32 %v4275, %v4733
        %s4784 = scalar_lea.vmem [#allocation10], 896
        %v4785 = vld [vmem:[%s4784] sm:$0xff]
        %v4786 = vld [vmem:[%s4784 + $0x8] sm:$0xff]
        %v4787 = vld [vmem:[%s4784 + $0x10] sm:$0xff]
        %v4788 = vld [vmem:[%s4784 + $0x18] sm:$0xff]
        %v4789 = vld [vmem:[%s4784 + $0x20] sm:$0xff]
        %v4790 = vld [vmem:[%s4784 + $0x28] sm:$0xff]
        %v4791 = vld [vmem:[%s4784 + $0x30] sm:$0xff]
        %v4792 = vld [vmem:[%s4784 + $0x38] sm:$0xff]
        %v4793 = vld [vmem:[%s4784 + $0x40] sm:$0xff]
        %v4794 = vld [vmem:[%s4784 + $0x48] sm:$0xff]
        %v4795 = vld [vmem:[%s4784 + $0x50] sm:$0xff]
        %v4796 = vld [vmem:[%s4784 + $0x58] sm:$0xff]
        %v4797 = vld [vmem:[%s4784 + $0x60] sm:$0xff]
        %v4798 = vld [vmem:[%s4784 + $0x68] sm:$0xff]
        %v4799 = vld [vmem:[%s4784 + $0x70] sm:$0xff]
        %v4800 = vld [vmem:[%s4784 + $0x78] sm:$0xff]
        %4801 = vrot.lane.b32.xlu0 %v1068, 66
        %v4802 = vpop.permute.xlu0 %4801
        %4803 = vrot.lane.b32.xlu0 %v1069, 66
        %v4804 = vpop.permute.xlu0 %4803
        %4805 = vrot.lane.b32.xlu0 %v1070, 66
        %v4806 = vpop.permute.xlu0 %4805
        %4807 = vrot.lane.b32.xlu0 %v1071, 66
        %v4808 = vpop.permute.xlu0 %4807
        %4809 = vrot.lane.b32.xlu0 %v1072, 66
        %v4810 = vpop.permute.xlu0 %4809
        %4811 = vrot.lane.b32.xlu0 %v1073, 66
        %v4812 = vpop.permute.xlu0 %4811
        %4813 = vrot.lane.b32.xlu0 %v1074, 66
        %v4814 = vpop.permute.xlu0 %4813
        %4815 = vrot.lane.b32.xlu0 %v1075, 66
        %v4816 = vpop.permute.xlu0 %4815
        %4817 = vrot.lane.b32.xlu0 %v1076, 66
        %v4818 = vpop.permute.xlu0 %4817
        %4819 = vrot.lane.b32.xlu0 %v1077, 66
        %v4820 = vpop.permute.xlu0 %4819
        %4821 = vrot.lane.b32.xlu0 %v1078, 66
        %v4822 = vpop.permute.xlu0 %4821
        %4823 = vrot.lane.b32.xlu0 %v1079, 66
        %v4824 = vpop.permute.xlu0 %4823
        %4825 = vrot.lane.b32.xlu0 %v1080, 66
        %v4826 = vpop.permute.xlu0 %4825
        %4827 = vrot.lane.b32.xlu0 %v1081, 66
        %v4828 = vpop.permute.xlu0 %4827
        %4829 = vrot.lane.b32.xlu0 %v1082, 66
        %v4830 = vpop.permute.xlu0 %4829
        %4831 = vrot.lane.b32.xlu0 %v1083, 66
        %v4832 = vpop.permute.xlu0 %4831
        %4833 = vrot.lane.b32.xlu0 %v1084, 66
        %v4834 = vpop.permute.xlu0 %4833
        %4835 = vrot.lane.b32.xlu0 %v1085, 66
        %v4836 = vpop.permute.xlu0 %4835
        %4837 = vrot.lane.b32.xlu0 %v1086, 66
        %v4838 = vpop.permute.xlu0 %4837
        %4839 = vrot.lane.b32.xlu0 %v1087, 66
        %v4840 = vpop.permute.xlu0 %4839
        %4841 = vrot.lane.b32.xlu0 %v1088, 66
        %v4842 = vpop.permute.xlu0 %4841
        %4843 = vrot.lane.b32.xlu0 %v1089, 66
        %v4844 = vpop.permute.xlu0 %4843
        %4845 = vrot.lane.b32.xlu0 %v1090, 66
        %v4846 = vpop.permute.xlu0 %4845
        %4847 = vrot.lane.b32.xlu0 %v1091, 66
        %v4848 = vpop.permute.xlu0 %4847
        %vm4849 = vcmask 539648
        %v4850 = vsel %vm4849, %v4802, %v4804
        %v4851 = vsel %vm4849, %v4804, %v4806
        %v4852 = vsel %vm4849, %v4808, %v4810
        %v4853 = vsel %vm4849, %v4810, %v4812
        %v4854 = vsel %vm4849, %v4814, %v4816
        %v4855 = vsel %vm4849, %v4816, %v4818
        %v4856 = vsel %vm4849, %v4820, %v4822
        %v4857 = vsel %vm4849, %v4822, %v4824
        %v4858 = vsel %vm4849, %v4826, %v4828
        %v4859 = vsel %vm4849, %v4828, %v4830
        %v4860 = vsel %vm4849, %v4832, %v4834
        %v4861 = vsel %vm4849, %v4834, %v4836
        %v4862 = vsel %vm4849, %v4838, %v4840
        %v4863 = vsel %vm4849, %v4840, %v4842
        %v4864 = vsel %vm4849, %v4844, %v4846
        %v4865 = vsel %vm4849, %v4846, %v4848
        %v4891 = vsel %vm1333, %v4785, 0
        %v4894 = vsel %vm1333, %v4786, 0
        %v4897 = vsel %vm1333, %v4787, 0
        %v4900 = vsel %vm1333, %v4788, 0
        %v4903 = vsel %vm1333, %v4789, 0
        %v4906 = vsel %vm1333, %v4790, 0
        %v4909 = vsel %vm1333, %v4791, 0
        %v4912 = vsel %vm1333, %v4792, 0
        %v4915 = vsel %vm1333, %v4793, 0
        %v4918 = vsel %vm1333, %v4794, 0
        %v4921 = vsel %vm1333, %v4795, 0
        %v4924 = vsel %vm1333, %v4796, 0
        %v4927 = vsel %vm1333, %v4797, 0
        %v4930 = vsel %vm1333, %v4798, 0
        %v4933 = vsel %vm1333, %v4799, 0
        %v4936 = vsel %vm1333, %v4800, 0
        %4938 = vmatprep.subr.mxu0 %v4851
        %4939 = vmatpush1.msra.mxu0 %v4850
        %4940 = vmatprep.subr.mxu0 %v4853
        %4941 = vmatpush1.msra.mxu0 %v4852
        %4942 = vmatprep.subr.mxu0 %v4855
        %4943 = vmatpush1.msra.mxu0 %v4854
        %4944 = vmatprep.subr.mxu0 %v4857
        %4945 = vmatpush1.msra.mxu0 %v4856
        %4946 = vmatprep.subr.mxu0 %v4859
        %4947 = vmatpush1.msra.mxu0 %v4858
        %4948 = vmatprep.subr.mxu0 %v4861
        %4949 = vmatpush1.msra.mxu0 %v4860
        %4950 = vmatprep.subr.mxu0 %v4863
        %4951 = vmatpush1.msra.mxu0 %v4862
        %4952 = vmatprep.subr.mxu0 %v4865
        %4953 = vmatpush1.msra.mxu0 %v4864
        %4954 = vmatprep.subr.mxu0 0.0
        %4955 = vmatpush1.msra.mxu0 0.0
        %4956 = vmatprep.subr.mxu0 0.0
        %4957 = vmatpush1.msra.mxu0 0.0
        %4958 = vmatprep.subr.mxu0 0.0
        %4959 = vmatpush1.msra.mxu0 0.0
        %4960 = vmatprep.subr.mxu0 0.0
        %4961 = vmatpush1.msra.mxu0 0.0
        %4962 = vmatprep.subr.mxu0 0.0
        %4963 = vmatpush1.msra.mxu0 0.0
        %4964 = vmatprep.subr.mxu0 0.0
        %4965 = vmatpush1.msra.mxu0 0.0
        %4966 = vmatprep.subr.mxu0 0.0
        %4967 = vmatpush1.msra.mxu0 0.0
        %4968 = vmatprep.subr.mxu0 0.0
        %4969 = vmatpush1.msra.mxu0 0.0
        %4970 = vmatprep.subr.mxu0 0.0
        %4971 = vmatpush1.msra.mxu0 0.0
        %4972 = vmatprep.subr.mxu0 0.0
        %4973 = vmatpush1.msra.mxu0 0.0
        %4974 = vmatprep.subr.mxu0 0.0
        %4975 = vmatpush1.msra.mxu0 0.0
        %4976 = vmatprep.subr.mxu0 0.0
        %4977 = vmatpush1.msra.mxu0 0.0
        %4978 = vmatprep.subr.mxu0 0.0
        %4979 = vmatpush1.msra.mxu0 0.0
        %4980 = vmatprep.subr.mxu0 0.0
        %4981 = vmatpush1.msra.mxu0 0.0
        %4982 = vmatprep.subr.mxu0 0.0
        %4983 = vmatpush1.msra.mxu0 0.0
        %4984 = vmatprep.subr.mxu0 0.0
        %4985 = vmatpush1.msra.mxu0 0.0
        %4986 = vmatprep.subr.mxu0 0.0
        %4987 = vmatpush1.msra.mxu0 0.0
        %4988 = vmatprep.subr.mxu0 0.0
        %4989 = vmatpush1.msra.mxu0 0.0
        %4990 = vmatprep.subr.mxu0 0.0
        %4991 = vmatpush1.msra.mxu0 0.0
        %4992 = vmatprep.subr.mxu0 0.0
        %4993 = vmatpush1.msra.mxu0 0.0
        %4994 = vmatprep.subr.mxu0 0.0
        %4995 = vmatpush1.msra.mxu0 0.0
        %4996 = vmatprep.subr.mxu0 0.0
        %4997 = vmatpush1.msra.mxu0 0.0
        %4998 = vmatprep.subr.mxu0 0.0
        %4999 = vmatpush1.msra.mxu0 0.0
        %5000 = vmatprep.subr.mxu0 0.0
        %5001 = vmatpush1.msra.mxu0 0.0
        %5002 = vmatprep.mubr.f32.mxu0 0.0
        %5003 = vmatmul.mubr.f32.gmra.mrb[0].mxu0 %v4891
        %v5004 = vpop.f32.mrb[0].mxu0
        %v5005 = vadd.f32 0.0, %v5004
        %v5006 = vpop.f32.mrb[0].mxu0
        %v5007 = vadd.f32 0.0, %v5006
        %5008 = vmatprep.mubr.f32.mxu0 0.0
        %5009 = vmatmul.mubr.f32.gmra.mrb[0].mxu0 %v4894
        %v5010 = vpop.f32.mrb[0].mxu0
        %v5011 = vadd.f32 0.0, %v5010
        %v5012 = vpop.f32.mrb[0].mxu0
        %v5013 = vadd.f32 0.0, %v5012
        %5014 = vmatprep.mubr.f32.mxu0 0.0
        %5015 = vmatmul.mubr.f32.gmra.mrb[0].mxu0 %v4897
        %v5016 = vpop.f32.mrb[0].mxu0
        %v5017 = vadd.f32 0.0, %v5016
        %v5018 = vpop.f32.mrb[0].mxu0
        %v5019 = vadd.f32 0.0, %v5018
        %5020 = vmatprep.mubr.f32.mxu0 0.0
        %5021 = vmatmul.mubr.f32.gmra.mrb[0].mxu0 %v4900
        %v5022 = vpop.f32.mrb[0].mxu0
        %v5023 = vadd.f32 0.0, %v5022
        %v5024 = vpop.f32.mrb[0].mxu0
        %v5025 = vadd.f32 0.0, %v5024
        %5026 = vmatprep.mubr.f32.mxu0 0.0
        %5027 = vmatmul.mubr.f32.gmra.mrb[0].mxu0 %v4903
        %v5028 = vpop.f32.mrb[0].mxu0
        %v5029 = vadd.f32 0.0, %v5028
        %v5030 = vpop.f32.mrb[0].mxu0
        %v5031 = vadd.f32 0.0, %v5030
        %5032 = vmatprep.mubr.f32.mxu0 0.0
        %5033 = vmatmul.mubr.f32.gmra.mrb[0].mxu0 %v4906
        %v5034 = vpop.f32.mrb[0].mxu0
        %v5035 = vadd.f32 0.0, %v5034
        %v5036 = vpop.f32.mrb[0].mxu0
        %v5037 = vadd.f32 0.0, %v5036
        %5038 = vmatprep.mubr.f32.mxu0 0.0
        %5039 = vmatmul.mubr.f32.gmra.mrb[0].mxu0 %v4909
        %v5040 = vpop.f32.mrb[0].mxu0
        %v5041 = vadd.f32 0.0, %v5040
        %v5042 = vpop.f32.mrb[0].mxu0
        %v5043 = vadd.f32 0.0, %v5042
        %5044 = vmatprep.mubr.f32.mxu0 0.0
        %5045 = vmatmul.mubr.f32.gmra.mrb[0].mxu0 %v4912
        %v5046 = vpop.f32.mrb[0].mxu0
        %v5047 = vadd.f32 0.0, %v5046
        %v5048 = vpop.f32.mrb[0].mxu0
        %v5049 = vadd.f32 0.0, %v5048
        %5050 = vmatprep.mubr.f32.mxu0 0.0
        %5051 = vmatmul.mubr.f32.gmra.mrb[0].mxu0 %v4915
        %v5052 = vpop.f32.mrb[0].mxu0
        %v5053 = vadd.f32 0.0, %v5052
        %v5054 = vpop.f32.mrb[0].mxu0
        %v5055 = vadd.f32 0.0, %v5054
        %5056 = vmatprep.mubr.f32.mxu0 0.0
        %5057 = vmatmul.mubr.f32.gmra.mrb[0].mxu0 %v4918
        %v5058 = vpop.f32.mrb[0].mxu0
        %v5059 = vadd.f32 0.0, %v5058
        %v5060 = vpop.f32.mrb[0].mxu0
        %v5061 = vadd.f32 0.0, %v5060
        %5062 = vmatprep.mubr.f32.mxu0 0.0
        %5063 = vmatmul.mubr.f32.gmra.mrb[0].mxu0 %v4921
        %v5064 = vpop.f32.mrb[0].mxu0
        %v5065 = vadd.f32 0.0, %v5064
        %v5066 = vpop.f32.mrb[0].mxu0
        %v5067 = vadd.f32 0.0, %v5066
        %5068 = vmatprep.mubr.f32.mxu0 0.0
        %5069 = vmatmul.mubr.f32.gmra.mrb[0].mxu0 %v4924
        %v5070 = vpop.f32.mrb[0].mxu0
        %v5071 = vadd.f32 0.0, %v5070
        %v5072 = vpop.f32.mrb[0].mxu0
        %v5073 = vadd.f32 0.0, %v5072
        %5074 = vmatprep.mubr.f32.mxu0 0.0
        %5075 = vmatmul.mubr.f32.gmra.mrb[0].mxu0 %v4927
        %v5076 = vpop.f32.mrb[0].mxu0
        %v5077 = vadd.f32 0.0, %v5076
        %v5078 = vpop.f32.mrb[0].mxu0
        %v5079 = vadd.f32 0.0, %v5078
        %5080 = vmatprep.mubr.f32.mxu0 0.0
        %5081 = vmatmul.mubr.f32.gmra.mrb[0].mxu0 %v4930
        %v5082 = vpop.f32.mrb[0].mxu0
        %v5083 = vadd.f32 0.0, %v5082
        %v5084 = vpop.f32.mrb[0].mxu0
        %v5085 = vadd.f32 0.0, %v5084
        %5086 = vmatprep.mubr.f32.mxu0 0.0
        %5087 = vmatmul.mubr.f32.gmra.mrb[0].mxu0 %v4933
        %v5088 = vpop.f32.mrb[0].mxu0
        %v5089 = vadd.f32 0.0, %v5088
        %v5090 = vpop.f32.mrb[0].mxu0
        %v5091 = vadd.f32 0.0, %v5090
        %5092 = vmatprep.mubr.f32.mxu0 0.0
        %5093 = vmatmul.mubr.f32.gmra.mrb[0].mxu0 %v4936
        %v5094 = vpop.f32.mrb[0].mxu0
        %v5095 = vadd.f32 0.0, %v5094
        %v5096 = vpop.f32.mrb[0].mxu0
        %v5097 = vadd.f32 0.0, %v5096
        %5098 = vdwg.mxu0
        %5099 = vmatprep.subr.mxu0 0.0
        %5100 = vmatpush1.msra.mxu0 %v4806
        %5101 = vmatprep.subr.mxu0 0.0
        %5102 = vmatpush1.msra.mxu0 %v4812
        %5103 = vmatprep.subr.mxu0 0.0
        %5104 = vmatpush1.msra.mxu0 %v4818
        %5105 = vmatprep.subr.mxu0 0.0
        %5106 = vmatpush1.msra.mxu0 %v4824
        %5107 = vmatprep.subr.mxu0 0.0
        %5108 = vmatpush1.msra.mxu0 %v4830
        %5109 = vmatprep.subr.mxu0 0.0
        %5110 = vmatpush1.msra.mxu0 %v4836
        %5111 = vmatprep.subr.mxu0 0.0
        %5112 = vmatpush1.msra.mxu0 %v4842
        %5113 = vmatprep.subr.mxu0 0.0
        %5114 = vmatpush1.msra.mxu0 %v4848
        %5115 = vmatprep.subr.mxu0 0.0
        %5116 = vmatpush1.msra.mxu0 0.0
        %5117 = vmatprep.subr.mxu0 0.0
        %5118 = vmatpush1.msra.mxu0 0.0
        %5119 = vmatprep.subr.mxu0 0.0
        %5120 = vmatpush1.msra.mxu0 0.0
        %5121 = vmatprep.subr.mxu0 0.0
        %5122 = vmatpush1.msra.mxu0 0.0
        %5123 = vmatprep.subr.mxu0 0.0
        %5124 = vmatpush1.msra.mxu0 0.0
        %5125 = vmatprep.subr.mxu0 0.0
        %5126 = vmatpush1.msra.mxu0 0.0
        %5127 = vmatprep.subr.mxu0 0.0
        %5128 = vmatpush1.msra.mxu0 0.0
        %5129 = vmatprep.subr.mxu0 0.0
        %5130 = vmatpush1.msra.mxu0 0.0
        %5131 = vmatprep.subr.mxu0 0.0
        %5132 = vmatpush1.msra.mxu0 0.0
        %5133 = vmatprep.subr.mxu0 0.0
        %5134 = vmatpush1.msra.mxu0 0.0
        %5135 = vmatprep.subr.mxu0 0.0
        %5136 = vmatpush1.msra.mxu0 0.0
        %5137 = vmatprep.subr.mxu0 0.0
        %5138 = vmatpush1.msra.mxu0 0.0
        %5139 = vmatprep.subr.mxu0 0.0
        %5140 = vmatpush1.msra.mxu0 0.0
        %5141 = vmatprep.subr.mxu0 0.0
        %5142 = vmatpush1.msra.mxu0 0.0
        %5143 = vmatprep.subr.mxu0 0.0
        %5144 = vmatpush1.msra.mxu0 0.0
        %5145 = vmatprep.subr.mxu0 0.0
        %5146 = vmatpush1.msra.mxu0 0.0
        %5147 = vmatprep.subr.mxu0 0.0
        %5148 = vmatpush1.msra.mxu0 0.0
        %5149 = vmatprep.subr.mxu0 0.0
        %5150 = vmatpush1.msra.mxu0 0.0
        %5151 = vmatprep.subr.mxu0 0.0
        %5152 = vmatpush1.msra.mxu0 0.0
        %5153 = vmatprep.subr.mxu0 0.0
        %5154 = vmatpush1.msra.mxu0 0.0
        %5155 = vmatprep.subr.mxu0 0.0
        %5156 = vmatpush1.msra.mxu0 0.0
        %5157 = vmatprep.subr.mxu0 0.0
        %5158 = vmatpush1.msra.mxu0 0.0
        %5159 = vmatprep.subr.mxu0 0.0
        %5160 = vmatpush1.msra.mxu0 0.0
        %5161 = vmatprep.subr.mxu0 0.0
        %5162 = vmatpush1.msra.mxu0 0.0
        %5163 = vmatprep.mubr.f32.mxu0 0.0
        %5164 = vmatmul.mubr.f32.gmra.mrb[0].mxu0 %v4891
        %v5165 = vpop.f32.mrb[0].mxu0
        %v5166 = vadd.f32 0.0, %v5165
        %v5167 = vpop.f32.mrb[0].mxu0
        %5168 = vmatprep.mubr.f32.mxu0 0.0
        %5169 = vmatmul.mubr.f32.gmra.mrb[0].mxu0 %v4894
        %v5170 = vpop.f32.mrb[0].mxu0
        %v5171 = vadd.f32 0.0, %v5170
        %v5172 = vpop.f32.mrb[0].mxu0
        %5173 = vmatprep.mubr.f32.mxu0 0.0
        %5174 = vmatmul.mubr.f32.gmra.mrb[0].mxu0 %v4897
        %v5175 = vpop.f32.mrb[0].mxu0
        %v5176 = vadd.f32 0.0, %v5175
        %v5177 = vpop.f32.mrb[0].mxu0
        %5178 = vmatprep.mubr.f32.mxu0 0.0
        %5179 = vmatmul.mubr.f32.gmra.mrb[0].mxu0 %v4900
        %v5180 = vpop.f32.mrb[0].mxu0
        %v5181 = vadd.f32 0.0, %v5180
        %v5182 = vpop.f32.mrb[0].mxu0
        %5183 = vmatprep.mubr.f32.mxu0 0.0
        %5184 = vmatmul.mubr.f32.gmra.mrb[0].mxu0 %v4903
        %v5185 = vpop.f32.mrb[0].mxu0
        %v5186 = vadd.f32 0.0, %v5185
        %v5187 = vpop.f32.mrb[0].mxu0
        %5188 = vmatprep.mubr.f32.mxu0 0.0
        %5189 = vmatmul.mubr.f32.gmra.mrb[0].mxu0 %v4906
        %v5190 = vpop.f32.mrb[0].mxu0
        %v5191 = vadd.f32 0.0, %v5190
        %v5192 = vpop.f32.mrb[0].mxu0
        %5193 = vmatprep.mubr.f32.mxu0 0.0
        %5194 = vmatmul.mubr.f32.gmra.mrb[0].mxu0 %v4909
        %v5195 = vpop.f32.mrb[0].mxu0
        %v5196 = vadd.f32 0.0, %v5195
        %v5197 = vpop.f32.mrb[0].mxu0
        %5198 = vmatprep.mubr.f32.mxu0 0.0
        %5199 = vmatmul.mubr.f32.gmra.mrb[0].mxu0 %v4912
        %v5200 = vpop.f32.mrb[0].mxu0
        %v5201 = vadd.f32 0.0, %v5200
        %v5202 = vpop.f32.mrb[0].mxu0
        %5203 = vmatprep.mubr.f32.mxu0 0.0
        %5204 = vmatmul.mubr.f32.gmra.mrb[0].mxu0 %v4915
        %v5205 = vpop.f32.mrb[0].mxu0
        %v5206 = vadd.f32 0.0, %v5205
        %v5207 = vpop.f32.mrb[0].mxu0
        %5208 = vmatprep.mubr.f32.mxu0 0.0
        %5209 = vmatmul.mubr.f32.gmra.mrb[0].mxu0 %v4918
        %v5210 = vpop.f32.mrb[0].mxu0
        %v5211 = vadd.f32 0.0, %v5210
        %v5212 = vpop.f32.mrb[0].mxu0
        %5213 = vmatprep.mubr.f32.mxu0 0.0
        %5214 = vmatmul.mubr.f32.gmra.mrb[0].mxu0 %v4921
        %v5215 = vpop.f32.mrb[0].mxu0
        %v5216 = vadd.f32 0.0, %v5215
        %v5217 = vpop.f32.mrb[0].mxu0
        %5218 = vmatprep.mubr.f32.mxu0 0.0
        %5219 = vmatmul.mubr.f32.gmra.mrb[0].mxu0 %v4924
        %v5220 = vpop.f32.mrb[0].mxu0
        %v5221 = vadd.f32 0.0, %v5220
        %v5222 = vpop.f32.mrb[0].mxu0
        %5223 = vmatprep.mubr.f32.mxu0 0.0
        %5224 = vmatmul.mubr.f32.gmra.mrb[0].mxu0 %v4927
        %v5225 = vpop.f32.mrb[0].mxu0
        %v5226 = vadd.f32 0.0, %v5225
        %v5227 = vpop.f32.mrb[0].mxu0
        %5228 = vmatprep.mubr.f32.mxu0 0.0
        %5229 = vmatmul.mubr.f32.gmra.mrb[0].mxu0 %v4930
        %v5230 = vpop.f32.mrb[0].mxu0
        %v5231 = vadd.f32 0.0, %v5230
        %v5232 = vpop.f32.mrb[0].mxu0
        %5233 = vmatprep.mubr.f32.mxu0 0.0
        %5234 = vmatmul.mubr.f32.gmra.mrb[0].mxu0 %v4933
        %v5235 = vpop.f32.mrb[0].mxu0
        %v5236 = vadd.f32 0.0, %v5235
        %v5237 = vpop.f32.mrb[0].mxu0
        %5238 = vmatprep.mubr.f32.mxu0 0.0
        %5239 = vmatmul.mubr.f32.gmra.mrb[0].mxu0 %v4936
        %v5240 = vpop.f32.mrb[0].mxu0
        %v5241 = vadd.f32 0.0, %v5240
        %v5242 = vpop.f32.mrb[0].mxu0
        %5243 = vdwg.mxu0
        %v5244 = vadd.f32 %v4736, %v5005
        %v5245 = vadd.f32 %v4737, %v5007
        %v5246 = vadd.f32 %v4738, %v5166
        %v5247 = vadd.f32 %v4739, %v5011
        %v5248 = vadd.f32 %v4740, %v5013
        %v5249 = vadd.f32 %v4741, %v5171
        %v5250 = vadd.f32 %v4742, %v5017
        %v5251 = vadd.f32 %v4743, %v5019
        %v5252 = vadd.f32 %v4744, %v5176
        %v5253 = vadd.f32 %v4745, %v5023
        %v5254 = vadd.f32 %v4746, %v5025
        %v5255 = vadd.f32 %v4747, %v5181
        %v5256 = vadd.f32 %v4748, %v5029
        %v5257 = vadd.f32 %v4749, %v5031
        %v5258 = vadd.f32 %v4750, %v5186
        %v5259 = vadd.f32 %v4751, %v5035
        %v5260 = vadd.f32 %v4752, %v5037
        %v5261 = vadd.f32 %v4753, %v5191
        %v5262 = vadd.f32 %v4754, %v5041
        %v5263 = vadd.f32 %v4755, %v5043
        %v5264 = vadd.f32 %v4756, %v5196
        %v5265 = vadd.f32 %v4757, %v5047
        %v5266 = vadd.f32 %v4758, %v5049
        %v5267 = vadd.f32 %v4759, %v5201
        %v5268 = vadd.f32 %v4760, %v5053
        %v5269 = vadd.f32 %v4761, %v5055
        %v5270 = vadd.f32 %v4762, %v5206
        %v5271 = vadd.f32 %v4763, %v5059
        %v5272 = vadd.f32 %v4764, %v5061
        %v5273 = vadd.f32 %v4765, %v5211
        %v5274 = vadd.f32 %v4766, %v5065
        %v5275 = vadd.f32 %v4767, %v5067
        %v5276 = vadd.f32 %v4768, %v5216
        %v5277 = vadd.f32 %v4769, %v5071
        %v5278 = vadd.f32 %v4770, %v5073
        %v5279 = vadd.f32 %v4771, %v5221
        %v5280 = vadd.f32 %v4772, %v5077
        %v5281 = vadd.f32 %v4773, %v5079
        %v5282 = vadd.f32 %v4774, %v5226
        %v5283 = vadd.f32 %v4775, %v5083
        %v5284 = vadd.f32 %v4776, %v5085
        %v5285 = vadd.f32 %v4777, %v5231
        %v5286 = vadd.f32 %v4778, %v5089
        %v5287 = vadd.f32 %v4779, %v5091
        %v5288 = vadd.f32 %v4780, %v5236
        %v5289 = vadd.f32 %v4781, %v5095
        %v5290 = vadd.f32 %v4782, %v5097
        %v5291 = vadd.f32 %v4783, %v5241
        %s5292 = scalar_lea.vmem [#allocation10], 1024
        %v5293 = vld [vmem:[%s5292] sm:$0xff]
        %v5294 = vld [vmem:[%s5292 + $0x8] sm:$0xff]
        %v5295 = vld [vmem:[%s5292 + $0x10] sm:$0xff]
        %v5296 = vld [vmem:[%s5292 + $0x18] sm:$0xff]
        %v5297 = vld [vmem:[%s5292 + $0x20] sm:$0xff]
        %v5298 = vld [vmem:[%s5292 + $0x28] sm:$0xff]
        %v5299 = vld [vmem:[%s5292 + $0x30] sm:$0xff]
        %v5300 = vld [vmem:[%s5292 + $0x38] sm:$0xff]
        %v5301 = vld [vmem:[%s5292 + $0x40] sm:$0xff]
        %v5302 = vld [vmem:[%s5292 + $0x48] sm:$0xff]
        %v5303 = vld [vmem:[%s5292 + $0x50] sm:$0xff]
        %v5304 = vld [vmem:[%s5292 + $0x58] sm:$0xff]
        %v5305 = vld [vmem:[%s5292 + $0x60] sm:$0xff]
        %v5306 = vld [vmem:[%s5292 + $0x68] sm:$0xff]
        %v5307 = vld [vmem:[%s5292 + $0x70] sm:$0xff]
        %v5308 = vld [vmem:[%s5292 + $0x78] sm:$0xff]
        %5309 = vrot.lane.b32.xlu0 %v1068, 65
        %v5310 = vpop.permute.xlu0 %5309
        %5311 = vrot.lane.b32.xlu0 %v1069, 65
        %v5312 = vpop.permute.xlu0 %5311
        %5313 = vrot.lane.b32.xlu0 %v1070, 65
        %v5314 = vpop.permute.xlu0 %5313
        %5315 = vrot.lane.b32.xlu0 %v1071, 65
        %v5316 = vpop.permute.xlu0 %5315
        %5317 = vrot.lane.b32.xlu0 %v1072, 65
        %v5318 = vpop.permute.xlu0 %5317
        %5319 = vrot.lane.b32.xlu0 %v1073, 65
        %v5320 = vpop.permute.xlu0 %5319
        %5321 = vrot.lane.b32.xlu0 %v1074, 65
        %v5322 = vpop.permute.xlu0 %5321
        %5323 = vrot.lane.b32.xlu0 %v1075, 65
        %v5324 = vpop.permute.xlu0 %5323
        %5325 = vrot.lane.b32.xlu0 %v1076, 65
        %v5326 = vpop.permute.xlu0 %5325
        %5327 = vrot.lane.b32.xlu0 %v1077, 65
        %v5328 = vpop.permute.xlu0 %5327
        %5329 = vrot.lane.b32.xlu0 %v1078, 65
        %v5330 = vpop.permute.xlu0 %5329
        %5331 = vrot.lane.b32.xlu0 %v1079, 65
        %v5332 = vpop.permute.xlu0 %5331
        %5333 = vrot.lane.b32.xlu0 %v1080, 65
        %v5334 = vpop.permute.xlu0 %5333
        %5335 = vrot.lane.b32.xlu0 %v1081, 65
        %v5336 = vpop.permute.xlu0 %5335
        %5337 = vrot.lane.b32.xlu0 %v1082, 65
        %v5338 = vpop.permute.xlu0 %5337
        %5339 = vrot.lane.b32.xlu0 %v1083, 65
        %v5340 = vpop.permute.xlu0 %5339
        %5341 = vrot.lane.b32.xlu0 %v1084, 65
        %v5342 = vpop.permute.xlu0 %5341
        %5343 = vrot.lane.b32.xlu0 %v1085, 65
        %v5344 = vpop.permute.xlu0 %5343
        %5345 = vrot.lane.b32.xlu0 %v1086, 65
        %v5346 = vpop.permute.xlu0 %5345
        %5347 = vrot.lane.b32.xlu0 %v1087, 65
        %v5348 = vpop.permute.xlu0 %5347
        %5349 = vrot.lane.b32.xlu0 %v1088, 65
        %v5350 = vpop.permute.xlu0 %5349
        %5351 = vrot.lane.b32.xlu0 %v1089, 65
        %v5352 = vpop.permute.xlu0 %5351
        %5353 = vrot.lane.b32.xlu0 %v1090, 65
        %v5354 = vpop.permute.xlu0 %5353
        %5355 = vrot.lane.b32.xlu0 %v1091, 65
        %v5356 = vpop.permute.xlu0 %5355
        %vm5357 = vcmask 531456
        %v5358 = vsel %vm5357, %v5310, %v5312
        %v5359 = vsel %vm5357, %v5312, %v5314
        %v5360 = vsel %vm5357, %v5316, %v5318
        %v5361 = vsel %vm5357, %v5318, %v5320
        %v5362 = vsel %vm5357, %v5322, %v5324
        %v5363 = vsel %vm5357, %v5324, %v5326
        %v5364 = vsel %vm5357, %v5328, %v5330
        %v5365 = vsel %vm5357, %v5330, %v5332
        %v5366 = vsel %vm5357, %v5334, %v5336
        %v5367 = vsel %vm5357, %v5336, %v5338
        %v5368 = vsel %vm5357, %v5340, %v5342
        %v5369 = vsel %vm5357, %v5342, %v5344
        %v5370 = vsel %vm5357, %v5346, %v5348
        %v5371 = vsel %vm5357, %v5348, %v5350
        %v5372 = vsel %vm5357, %v5352, %v5354
        %v5373 = vsel %vm5357, %v5354, %v5356
        %v5399 = vsel %vm1333, %v5293, 0
        %v5402 = vsel %vm1333, %v5294, 0
        %v5405 = vsel %vm1333, %v5295, 0
        %v5408 = vsel %vm1333, %v5296, 0
        %v5411 = vsel %vm1333, %v5297, 0
        %v5414 = vsel %vm1333, %v5298, 0
        %v5417 = vsel %vm1333, %v5299, 0
        %v5420 = vsel %vm1333, %v5300, 0
        %v5423 = vsel %vm1333, %v5301, 0
        %v5426 = vsel %vm1333, %v5302, 0
        %v5429 = vsel %vm1333, %v5303, 0
        %v5432 = vsel %vm1333, %v5304, 0
        %v5435 = vsel %vm1333, %v5305, 0
        %v5438 = vsel %vm1333, %v5306, 0
        %v5441 = vsel %vm1333, %v5307, 0
        %v5444 = vsel %vm1333, %v5308, 0
        %5446 = vmatprep.subr.mxu0 %v5359
        %5447 = vmatpush1.msra.mxu0 %v5358
        %5448 = vmatprep.subr.mxu0 %v5361
        %5449 = vmatpush1.msra.mxu0 %v5360
        %5450 = vmatprep.subr.mxu0 %v5363
        %5451 = vmatpush1.msra.mxu0 %v5362
        %5452 = vmatprep.subr.mxu0 %v5365
        %5453 = vmatpush1.msra.mxu0 %v5364
        %5454 = vmatprep.subr.mxu0 %v5367
        %5455 = vmatpush1.msra.mxu0 %v5366
        %5456 = vmatprep.subr.mxu0 %v5369
        %5457 = vmatpush1.msra.mxu0 %v5368
        %5458 = vmatprep.subr.mxu0 %v5371
        %5459 = vmatpush1.msra.mxu0 %v5370
        %5460 = vmatprep.subr.mxu0 %v5373
        %5461 = vmatpush1.msra.mxu0 %v5372
        %5462 = vmatprep.subr.mxu0 0.0
        %5463 = vmatpush1.msra.mxu0 0.0
        %5464 = vmatprep.subr.mxu0 0.0
        %5465 = vmatpush1.msra.mxu0 0.0
        %5466 = vmatprep.subr.mxu0 0.0
        %5467 = vmatpush1.msra.mxu0 0.0
        %5468 = vmatprep.subr.mxu0 0.0
        %5469 = vmatpush1.msra.mxu0 0.0
        %5470 = vmatprep.subr.mxu0 0.0
        %5471 = vmatpush1.msra.mxu0 0.0
        %5472 = vmatprep.subr.mxu0 0.0
        %5473 = vmatpush1.msra.mxu0 0.0
        %5474 = vmatprep.subr.mxu0 0.0
        %5475 = vmatpush1.msra.mxu0 0.0
        %5476 = vmatprep.subr.mxu0 0.0
        %5477 = vmatpush1.msra.mxu0 0.0
        %5478 = vmatprep.subr.mxu0 0.0
        %5479 = vmatpush1.msra.mxu0 0.0
        %5480 = vmatprep.subr.mxu0 0.0
        %5481 = vmatpush1.msra.mxu0 0.0
        %5482 = vmatprep.subr.mxu0 0.0
        %5483 = vmatpush1.msra.mxu0 0.0
        %5484 = vmatprep.subr.mxu0 0.0
        %5485 = vmatpush1.msra.mxu0 0.0
        %5486 = vmatprep.subr.mxu0 0.0
        %5487 = vmatpush1.msra.mxu0 0.0
        %5488 = vmatprep.subr.mxu0 0.0
        %5489 = vmatpush1.msra.mxu0 0.0
        %5490 = vmatprep.subr.mxu0 0.0
        %5491 = vmatpush1.msra.mxu0 0.0
        %5492 = vmatprep.subr.mxu0 0.0
        %5493 = vmatpush1.msra.mxu0 0.0
        %5494 = vmatprep.subr.mxu0 0.0
        %5495 = vmatpush1.msra.mxu0 0.0
        %5496 = vmatprep.subr.mxu0 0.0
        %5497 = vmatpush1.msra.mxu0 0.0
        %5498 = vmatprep.subr.mxu0 0.0
        %5499 = vmatpush1.msra.mxu0 0.0
        %5500 = vmatprep.subr.mxu0 0.0
        %5501 = vmatpush1.msra.mxu0 0.0
        %5502 = vmatprep.subr.mxu0 0.0
        %5503 = vmatpush1.msra.mxu0 0.0
        %5504 = vmatprep.subr.mxu0 0.0
        %5505 = vmatpush1.msra.mxu0 0.0
        %5506 = vmatprep.subr.mxu0 0.0
        %5507 = vmatpush1.msra.mxu0 0.0
        %5508 = vmatprep.subr.mxu0 0.0
        %5509 = vmatpush1.msra.mxu0 0.0
        %5510 = vmatprep.mubr.f32.mxu0 0.0
        %5511 = vmatmul.mubr.f32.gmra.mrb[0].mxu0 %v5399
        %v5512 = vpop.f32.mrb[0].mxu0
        %v5513 = vadd.f32 0.0, %v5512
        %v5514 = vpop.f32.mrb[0].mxu0
        %v5515 = vadd.f32 0.0, %v5514
        %5516 = vmatprep.mubr.f32.mxu0 0.0
        %5517 = vmatmul.mubr.f32.gmra.mrb[0].mxu0 %v5402
        %v5518 = vpop.f32.mrb[0].mxu0
        %v5519 = vadd.f32 0.0, %v5518
        %v5520 = vpop.f32.mrb[0].mxu0
        %v5521 = vadd.f32 0.0, %v5520
        %5522 = vmatprep.mubr.f32.mxu0 0.0
        %5523 = vmatmul.mubr.f32.gmra.mrb[0].mxu0 %v5405
        %v5524 = vpop.f32.mrb[0].mxu0
        %v5525 = vadd.f32 0.0, %v5524
        %v5526 = vpop.f32.mrb[0].mxu0
        %v5527 = vadd.f32 0.0, %v5526
        %5528 = vmatprep.mubr.f32.mxu0 0.0
        %5529 = vmatmul.mubr.f32.gmra.mrb[0].mxu0 %v5408
        %v5530 = vpop.f32.mrb[0].mxu0
        %v5531 = vadd.f32 0.0, %v5530
        %v5532 = vpop.f32.mrb[0].mxu0
        %v5533 = vadd.f32 0.0, %v5532
        %5534 = vmatprep.mubr.f32.mxu0 0.0
        %5535 = vmatmul.mubr.f32.gmra.mrb[0].mxu0 %v5411
        %v5536 = vpop.f32.mrb[0].mxu0
        %v5537 = vadd.f32 0.0, %v5536
        %v5538 = vpop.f32.mrb[0].mxu0
        %v5539 = vadd.f32 0.0, %v5538
        %5540 = vmatprep.mubr.f32.mxu0 0.0
        %5541 = vmatmul.mubr.f32.gmra.mrb[0].mxu0 %v5414
        %v5542 = vpop.f32.mrb[0].mxu0
        %v5543 = vadd.f32 0.0, %v5542
        %v5544 = vpop.f32.mrb[0].mxu0
        %v5545 = vadd.f32 0.0, %v5544
        %5546 = vmatprep.mubr.f32.mxu0 0.0
        %5547 = vmatmul.mubr.f32.gmra.mrb[0].mxu0 %v5417
        %v5548 = vpop.f32.mrb[0].mxu0
        %v5549 = vadd.f32 0.0, %v5548
        %v5550 = vpop.f32.mrb[0].mxu0
        %v5551 = vadd.f32 0.0, %v5550
        %5552 = vmatprep.mubr.f32.mxu0 0.0
        %5553 = vmatmul.mubr.f32.gmra.mrb[0].mxu0 %v5420
        %v5554 = vpop.f32.mrb[0].mxu0
        %v5555 = vadd.f32 0.0, %v5554
        %v5556 = vpop.f32.mrb[0].mxu0
        %v5557 = vadd.f32 0.0, %v5556
        %5558 = vmatprep.mubr.f32.mxu0 0.0
        %5559 = vmatmul.mubr.f32.gmra.mrb[0].mxu0 %v5423
        %v5560 = vpop.f32.mrb[0].mxu0
        %v5561 = vadd.f32 0.0, %v5560
        %v5562 = vpop.f32.mrb[0].mxu0
        %v5563 = vadd.f32 0.0, %v5562
        %5564 = vmatprep.mubr.f32.mxu0 0.0
        %5565 = vmatmul.mubr.f32.gmra.mrb[0].mxu0 %v5426
        %v5566 = vpop.f32.mrb[0].mxu0
        %v5567 = vadd.f32 0.0, %v5566
        %v5568 = vpop.f32.mrb[0].mxu0
        %v5569 = vadd.f32 0.0, %v5568
        %5570 = vmatprep.mubr.f32.mxu0 0.0
        %5571 = vmatmul.mubr.f32.gmra.mrb[0].mxu0 %v5429
        %v5572 = vpop.f32.mrb[0].mxu0
        %v5573 = vadd.f32 0.0, %v5572
        %v5574 = vpop.f32.mrb[0].mxu0
        %v5575 = vadd.f32 0.0, %v5574
        %5576 = vmatprep.mubr.f32.mxu0 0.0
        %5577 = vmatmul.mubr.f32.gmra.mrb[0].mxu0 %v5432
        %v5578 = vpop.f32.mrb[0].mxu0
        %v5579 = vadd.f32 0.0, %v5578
        %v5580 = vpop.f32.mrb[0].mxu0
        %v5581 = vadd.f32 0.0, %v5580
        %5582 = vmatprep.mubr.f32.mxu0 0.0
        %5583 = vmatmul.mubr.f32.gmra.mrb[0].mxu0 %v5435
        %v5584 = vpop.f32.mrb[0].mxu0
        %v5585 = vadd.f32 0.0, %v5584
        %v5586 = vpop.f32.mrb[0].mxu0
        %v5587 = vadd.f32 0.0, %v5586
        %5588 = vmatprep.mubr.f32.mxu0 0.0
        %5589 = vmatmul.mubr.f32.gmra.mrb[0].mxu0 %v5438
        %v5590 = vpop.f32.mrb[0].mxu0
        %v5591 = vadd.f32 0.0, %v5590
        %v5592 = vpop.f32.mrb[0].mxu0
        %v5593 = vadd.f32 0.0, %v5592
        %5594 = vmatprep.mubr.f32.mxu0 0.0
        %5595 = vmatmul.mubr.f32.gmra.mrb[0].mxu0 %v5441
        %v5596 = vpop.f32.mrb[0].mxu0
        %v5597 = vadd.f32 0.0, %v5596
        %v5598 = vpop.f32.mrb[0].mxu0
        %v5599 = vadd.f32 0.0, %v5598
        %5600 = vmatprep.mubr.f32.mxu0 0.0
        %5601 = vmatmul.mubr.f32.gmra.mrb[0].mxu0 %v5444
        %v5602 = vpop.f32.mrb[0].mxu0
        %v5603 = vadd.f32 0.0, %v5602
        %v5604 = vpop.f32.mrb[0].mxu0
        %v5605 = vadd.f32 0.0, %v5604
        %5606 = vdwg.mxu0
        %5607 = vmatprep.subr.mxu0 0.0
        %5608 = vmatpush1.msra.mxu0 %v5314
        %5609 = vmatprep.subr.mxu0 0.0
        %5610 = vmatpush1.msra.mxu0 %v5320
        %5611 = vmatprep.subr.mxu0 0.0
        %5612 = vmatpush1.msra.mxu0 %v5326
        %5613 = vmatprep.subr.mxu0 0.0
        %5614 = vmatpush1.msra.mxu0 %v5332
        %5615 = vmatprep.subr.mxu0 0.0
        %5616 = vmatpush1.msra.mxu0 %v5338
        %5617 = vmatprep.subr.mxu0 0.0
        %5618 = vmatpush1.msra.mxu0 %v5344
        %5619 = vmatprep.subr.mxu0 0.0
        %5620 = vmatpush1.msra.mxu0 %v5350
        %5621 = vmatprep.subr.mxu0 0.0
        %5622 = vmatpush1.msra.mxu0 %v5356
        %5623 = vmatprep.subr.mxu0 0.0
        %5624 = vmatpush1.msra.mxu0 0.0
        %5625 = vmatprep.subr.mxu0 0.0
        %5626 = vmatpush1.msra.mxu0 0.0
        %5627 = vmatprep.subr.mxu0 0.0
        %5628 = vmatpush1.msra.mxu0 0.0
        %5629 = vmatprep.subr.mxu0 0.0
        %5630 = vmatpush1.msra.mxu0 0.0
        %5631 = vmatprep.subr.mxu0 0.0
        %5632 = vmatpush1.msra.mxu0 0.0
        %5633 = vmatprep.subr.mxu0 0.0
        %5634 = vmatpush1.msra.mxu0 0.0
        %5635 = vmatprep.subr.mxu0 0.0
        %5636 = vmatpush1.msra.mxu0 0.0
        %5637 = vmatprep.subr.mxu0 0.0
        %5638 = vmatpush1.msra.mxu0 0.0
        %5639 = vmatprep.subr.mxu0 0.0
        %5640 = vmatpush1.msra.mxu0 0.0
        %5641 = vmatprep.subr.mxu0 0.0
        %5642 = vmatpush1.msra.mxu0 0.0
        %5643 = vmatprep.subr.mxu0 0.0
        %5644 = vmatpush1.msra.mxu0 0.0
        %5645 = vmatprep.subr.mxu0 0.0
        %5646 = vmatpush1.msra.mxu0 0.0
        %5647 = vmatprep.subr.mxu0 0.0
        %5648 = vmatpush1.msra.mxu0 0.0
        %5649 = vmatprep.subr.mxu0 0.0
        %5650 = vmatpush1.msra.mxu0 0.0
        %5651 = vmatprep.subr.mxu0 0.0
        %5652 = vmatpush1.msra.mxu0 0.0
        %5653 = vmatprep.subr.mxu0 0.0
        %5654 = vmatpush1.msra.mxu0 0.0
        %5655 = vmatprep.subr.mxu0 0.0
        %5656 = vmatpush1.msra.mxu0 0.0
        %5657 = vmatprep.subr.mxu0 0.0
        %5658 = vmatpush1.msra.mxu0 0.0
        %5659 = vmatprep.subr.mxu0 0.0
        %5660 = vmatpush1.msra.mxu0 0.0
        %5661 = vmatprep.subr.mxu0 0.0
        %5662 = vmatpush1.msra.mxu0 0.0
        %5663 = vmatprep.subr.mxu0 0.0
        %5664 = vmatpush1.msra.mxu0 0.0
        %5665 = vmatprep.subr.mxu0 0.0
        %5666 = vmatpush1.msra.mxu0 0.0
        %5667 = vmatprep.subr.mxu0 0.0
        %5668 = vmatpush1.msra.mxu0 0.0
        %5669 = vmatprep.subr.mxu0 0.0
        %5670 = vmatpush1.msra.mxu0 0.0
        %5671 = vmatprep.mubr.f32.mxu0 0.0
        %5672 = vmatmul.mubr.f32.gmra.mrb[0].mxu0 %v5399
        %v5673 = vpop.f32.mrb[0].mxu0
        %v5674 = vadd.f32 0.0, %v5673
        %v5675 = vpop.f32.mrb[0].mxu0
        %5676 = vmatprep.mubr.f32.mxu0 0.0
        %5677 = vmatmul.mubr.f32.gmra.mrb[0].mxu0 %v5402
        %v5678 = vpop.f32.mrb[0].mxu0
        %v5679 = vadd.f32 0.0, %v5678
        %v5680 = vpop.f32.mrb[0].mxu0
        %5681 = vmatprep.mubr.f32.mxu0 0.0
        %5682 = vmatmul.mubr.f32.gmra.mrb[0].mxu0 %v5405
        %v5683 = vpop.f32.mrb[0].mxu0
        %v5684 = vadd.f32 0.0, %v5683
        %v5685 = vpop.f32.mrb[0].mxu0
        %5686 = vmatprep.mubr.f32.mxu0 0.0
        %5687 = vmatmul.mubr.f32.gmra.mrb[0].mxu0 %v5408
        %v5688 = vpop.f32.mrb[0].mxu0
        %v5689 = vadd.f32 0.0, %v5688
        %v5690 = vpop.f32.mrb[0].mxu0
        %5691 = vmatprep.mubr.f32.mxu0 0.0
        %5692 = vmatmul.mubr.f32.gmra.mrb[0].mxu0 %v5411
        %v5693 = vpop.f32.mrb[0].mxu0
        %v5694 = vadd.f32 0.0, %v5693
        %v5695 = vpop.f32.mrb[0].mxu0
        %5696 = vmatprep.mubr.f32.mxu0 0.0
        %5697 = vmatmul.mubr.f32.gmra.mrb[0].mxu0 %v5414
        %v5698 = vpop.f32.mrb[0].mxu0
        %v5699 = vadd.f32 0.0, %v5698
        %v5700 = vpop.f32.mrb[0].mxu0
        %5701 = vmatprep.mubr.f32.mxu0 0.0
        %5702 = vmatmul.mubr.f32.gmra.mrb[0].mxu0 %v5417
        %v5703 = vpop.f32.mrb[0].mxu0
        %v5704 = vadd.f32 0.0, %v5703
        %v5705 = vpop.f32.mrb[0].mxu0
        %5706 = vmatprep.mubr.f32.mxu0 0.0
        %5707 = vmatmul.mubr.f32.gmra.mrb[0].mxu0 %v5420
        %v5708 = vpop.f32.mrb[0].mxu0
        %v5709 = vadd.f32 0.0, %v5708
        %v5710 = vpop.f32.mrb[0].mxu0
        %5711 = vmatprep.mubr.f32.mxu0 0.0
        %5712 = vmatmul.mubr.f32.gmra.mrb[0].mxu0 %v5423
        %v5713 = vpop.f32.mrb[0].mxu0
        %v5714 = vadd.f32 0.0, %v5713
        %v5715 = vpop.f32.mrb[0].mxu0
        %5716 = vmatprep.mubr.f32.mxu0 0.0
        %5717 = vmatmul.mubr.f32.gmra.mrb[0].mxu0 %v5426
        %v5718 = vpop.f32.mrb[0].mxu0
        %v5719 = vadd.f32 0.0, %v5718
        %v5720 = vpop.f32.mrb[0].mxu0
        %5721 = vmatprep.mubr.f32.mxu0 0.0
        %5722 = vmatmul.mubr.f32.gmra.mrb[0].mxu0 %v5429
        %v5723 = vpop.f32.mrb[0].mxu0
        %v5724 = vadd.f32 0.0, %v5723
        %v5725 = vpop.f32.mrb[0].mxu0
        %5726 = vmatprep.mubr.f32.mxu0 0.0
        %5727 = vmatmul.mubr.f32.gmra.mrb[0].mxu0 %v5432
        %v5728 = vpop.f32.mrb[0].mxu0
        %v5729 = vadd.f32 0.0, %v5728
        %v5730 = vpop.f32.mrb[0].mxu0
        %5731 = vmatprep.mubr.f32.mxu0 0.0
        %5732 = vmatmul.mubr.f32.gmra.mrb[0].mxu0 %v5435
        %v5733 = vpop.f32.mrb[0].mxu0
        %v5734 = vadd.f32 0.0, %v5733
        %v5735 = vpop.f32.mrb[0].mxu0
        %5736 = vmatprep.mubr.f32.mxu0 0.0
        %5737 = vmatmul.mubr.f32.gmra.mrb[0].mxu0 %v5438
        %v5738 = vpop.f32.mrb[0].mxu0
        %v5739 = vadd.f32 0.0, %v5738
        %v5740 = vpop.f32.mrb[0].mxu0
        %5741 = vmatprep.mubr.f32.mxu0 0.0
        %5742 = vmatmul.mubr.f32.gmra.mrb[0].mxu0 %v5441
        %v5743 = vpop.f32.mrb[0].mxu0
        %v5744 = vadd.f32 0.0, %v5743
        %v5745 = vpop.f32.mrb[0].mxu0
        %5746 = vmatprep.mubr.f32.mxu0 0.0
        %5747 = vmatmul.mubr.f32.gmra.mrb[0].mxu0 %v5444
        %v5748 = vpop.f32.mrb[0].mxu0
        %v5749 = vadd.f32 0.0, %v5748
        %v5750 = vpop.f32.mrb[0].mxu0
        %5751 = vdwg.mxu0
        %v5752 = vadd.f32 %v5244, %v5513
        %v5753 = vadd.f32 %v5245, %v5515
        %v5754 = vadd.f32 %v5246, %v5674
        %v5755 = vadd.f32 %v5247, %v5519
        %v5756 = vadd.f32 %v5248, %v5521
        %v5757 = vadd.f32 %v5249, %v5679
        %v5758 = vadd.f32 %v5250, %v5525
        %v5759 = vadd.f32 %v5251, %v5527
        %v5760 = vadd.f32 %v5252, %v5684
        %v5761 = vadd.f32 %v5253, %v5531
        %v5762 = vadd.f32 %v5254, %v5533
        %v5763 = vadd.f32 %v5255, %v5689
        %v5764 = vadd.f32 %v5256, %v5537
        %v5765 = vadd.f32 %v5257, %v5539
        %v5766 = vadd.f32 %v5258, %v5694
        %v5767 = vadd.f32 %v5259, %v5543
        %v5768 = vadd.f32 %v5260, %v5545
        %v5769 = vadd.f32 %v5261, %v5699
        %v5770 = vadd.f32 %v5262, %v5549
        %v5771 = vadd.f32 %v5263, %v5551
        %v5772 = vadd.f32 %v5264, %v5704
        %v5773 = vadd.f32 %v5265, %v5555
        %v5774 = vadd.f32 %v5266, %v5557
        %v5775 = vadd.f32 %v5267, %v5709
        %v5776 = vadd.f32 %v5268, %v5561
        %v5777 = vadd.f32 %v5269, %v5563
        %v5778 = vadd.f32 %v5270, %v5714
        %v5779 = vadd.f32 %v5271, %v5567
        %v5780 = vadd.f32 %v5272, %v5569
        %v5781 = vadd.f32 %v5273, %v5719
        %v5782 = vadd.f32 %v5274, %v5573
        %v5783 = vadd.f32 %v5275, %v5575
        %v5784 = vadd.f32 %v5276, %v5724
        %v5785 = vadd.f32 %v5277, %v5579
        %v5786 = vadd.f32 %v5278, %v5581
        %v5787 = vadd.f32 %v5279, %v5729
        %v5788 = vadd.f32 %v5280, %v5585
        %v5789 = vadd.f32 %v5281, %v5587
        %v5790 = vadd.f32 %v5282, %v5734
        %v5791 = vadd.f32 %v5283, %v5591
        %v5792 = vadd.f32 %v5284, %v5593
        %v5793 = vadd.f32 %v5285, %v5739
        %v5794 = vadd.f32 %v5286, %v5597
        %v5795 = vadd.f32 %v5287, %v5599
        %v5796 = vadd.f32 %v5288, %v5744
        %v5797 = vadd.f32 %v5289, %v5603
        %v5798 = vadd.f32 %v5290, %v5605
        %v5799 = vadd.f32 %v5291, %v5749
        %v5800 = vmax.f32 %v5752, %v5758
        %vm5801 = vcmask 1040384
        %v5802 = vsel %vm5801, %v5761, -inf
        %v5803 = vmax.f32 %v5755, %v5802
        %v5804 = vmax.f32 %v5800, %v5803
        %v5805 = vrot.slane %v5804, 4
        %v5806 = vmax.f32 %v5804, %v5805
        %v5807 = vrot.slane %v5806, 2
        %v5808 = vmax.f32 %v5806, %v5807
        %v5809 = vrot.slane %v5808, 1
        %v5810 = vmax.f32 %v5808, %v5809
        %v5811 = vmax.f32 %v5753, %v5759
        %v5812 = vsel %vm5801, %v5762, -inf
        %v5813 = vmax.f32 %v5756, %v5812
        %v5814 = vmax.f32 %v5811, %v5813
        %v5815 = vrot.slane %v5814, 4
        %v5816 = vmax.f32 %v5814, %v5815
        %v5817 = vrot.slane %v5816, 2
        %v5818 = vmax.f32 %v5816, %v5817
        %v5819 = vrot.slane %v5818, 1
        %v5820 = vmax.f32 %v5818, %v5819
        %v5821 = vsel %vm1333, %v5754, -inf
        %v5822 = vsel %vm1333, %v5757, -inf
        %v5823 = vsel %vm1333, %v5760, -inf
        %v5824 = vmax.f32 %v5821, %v5823
        %vm5825 = vcmask 516096
        %v5826 = vsel %vm5825, %v5763, -inf
        %v5827 = vmax.f32 %v5822, %v5826
        %v5828 = vmax.f32 %v5824, %v5827
        %v5829 = vrot.slane %v5828, 4
        %v5830 = vmax.f32 %v5828, %v5829
        %v5831 = vrot.slane %v5830, 2
        %v5832 = vmax.f32 %v5830, %v5831
        %v5833 = vrot.slane %v5832, 1
        %v5834 = vmax.f32 %v5832, %v5833
        %v5835 = vsub.f32 %v5752, %v5810
        %v5836 = vsub.f32 %v5753, %v5820
        %v5837 = vsub.f32 %v5754, %v5834
        %v5838 = vsub.f32 %v5755, %v5810
        %v5839 = vsub.f32 %v5756, %v5820
        %v5840 = vsub.f32 %v5757, %v5834
        %v5841 = vsub.f32 %v5758, %v5810
        %v5842 = vsub.f32 %v5759, %v5820
        %v5843 = vsub.f32 %v5760, %v5834
        %v5844 = vsub.f32 %v5761, %v5810
        %v5845 = vsub.f32 %v5762, %v5820
        %v5846 = vsub.f32 %v5763, %v5834
        %v5847 = vmul.f32 %v5835, 1.442695
        %v5848 = vpow.pop %v5847
        %v5849 = vmul.f32 %v5836, 1.442695
        %v5850 = vpow.pop %v5849
        %v5851 = vmul.f32 %v5837, 1.442695
        %v5852 = vpow.pop %v5851
        %v5853 = vmul.f32 %v5838, 1.442695
        %v5854 = vpow.pop %v5853
        %v5855 = vmul.f32 %v5839, 1.442695
        %v5856 = vpow.pop %v5855
        %v5857 = vmul.f32 %v5840, 1.442695
        %v5858 = vpow.pop %v5857
        %v5859 = vmul.f32 %v5841, 1.442695
        %v5860 = vpow.pop %v5859
        %v5861 = vmul.f32 %v5842, 1.442695
        %v5862 = vpow.pop %v5861
        %v5863 = vmul.f32 %v5843, 1.442695
        %v5864 = vpow.pop %v5863
        %v5865 = vmul.f32 %v5844, 1.442695
        %v5866 = vpow.pop %v5865
        %v5867 = vmul.f32 %v5845, 1.442695
        %v5868 = vpow.pop %v5867
        %v5869 = vmul.f32 %v5846, 1.442695
        %v5870 = vpow.pop %v5869
        %v5871 = vadd.f32 %v5848, %v5854
        %v5872 = vadd.f32 %v5871, %v5860
        %v5873 = vsel %vm5801, %v5866, 0.0
        %v5874 = vadd.f32 %v5872, %v5873
        %v5875 = vrot.slane %v5874, 4
        %v5876 = vadd.f32 %v5874, %v5875
        %v5877 = vrot.slane %v5876, 2
        %v5878 = vadd.f32 %v5876, %v5877
        %v5879 = vrot.slane %v5878, 1
        %v5880 = vadd.f32 %v5878, %v5879
        %v5881 = vadd.f32 %v5850, %v5856
        %v5882 = vadd.f32 %v5881, %v5862
        %v5883 = vsel %vm5801, %v5868, 0.0
        %v5884 = vadd.f32 %v5882, %v5883
        %v5885 = vrot.slane %v5884, 4
        %v5886 = vadd.f32 %v5884, %v5885
        %v5887 = vrot.slane %v5886, 2
        %v5888 = vadd.f32 %v5886, %v5887
        %v5889 = vrot.slane %v5888, 1
        %v5890 = vadd.f32 %v5888, %v5889
        %v5891 = vsel %vm1333, %v5852, 0.0
        %v5892 = vsel %vm1333, %v5858, 0.0
        %v5893 = vadd.f32 %v5891, %v5892
        %v5894 = vsel %vm1333, %v5864, 0.0
        %v5895 = vadd.f32 %v5893, %v5894
        %v5896 = vsel %vm5825, %v5870, 0.0
        %v5897 = vadd.f32 %v5895, %v5896
        %v5898 = vrot.slane %v5897, 4
        %v5899 = vadd.f32 %v5897, %v5898
        %v5900 = vrot.slane %v5899, 2
        %v5901 = vadd.f32 %v5899, %v5900
        %v5902 = vrot.slane %v5901, 1
        %v5903 = vadd.f32 %v5901, %v5902
        %v5904 = vrcp.pop %v5880
        %v5905 = vrcp.pop %v5890
        %v5906 = vrcp.pop %v5903
        %v5907 = vmul.f32 %v5848, %v5904
        %v5908 = vmul.f32 %v5850, %v5905
        %v5909 = vmul.f32 %v5852, %v5906
        %v5910 = vmul.f32 %v5854, %v5904
        %v5911 = vmul.f32 %v5856, %v5905
        %v5912 = vmul.f32 %v5858, %v5906
        %v5913 = vmul.f32 %v5860, %v5904
        %v5914 = vmul.f32 %v5862, %v5905
        %v5915 = vmul.f32 %v5864, %v5906
        %v5916 = vmul.f32 %v5866, %v5904
        %v5917 = vmul.f32 %v5868, %v5905
        %v5918 = vmul.f32 %v5870, %v5906
        %v5919 = vmax.f32 %v5764, %v5770
        %v5920 = vsel %vm5801, %v5773, -inf
        %v5921 = vmax.f32 %v5767, %v5920
        %v5922 = vmax.f32 %v5919, %v5921
        %v5923 = vrot.slane %v5922, 4
        %v5924 = vmax.f32 %v5922, %v5923
        %v5925 = vrot.slane %v5924, 2
        %v5926 = vmax.f32 %v5924, %v5925
        %v5927 = vrot.slane %v5926, 1
        %v5928 = vmax.f32 %v5926, %v5927
        %v5929 = vmax.f32 %v5765, %v5771
        %v5930 = vsel %vm5801, %v5774, -inf
        %v5931 = vmax.f32 %v5768, %v5930
        %v5932 = vmax.f32 %v5929, %v5931
        %v5933 = vrot.slane %v5932, 4
        %v5934 = vmax.f32 %v5932, %v5933
        %v5935 = vrot.slane %v5934, 2
        %v5936 = vmax.f32 %v5934, %v5935
        %v5937 = vrot.slane %v5936, 1
        %v5938 = vmax.f32 %v5936, %v5937
        %v5939 = vsel %vm1333, %v5766, -inf
        %v5940 = vsel %vm1333, %v5769, -inf
        %v5941 = vsel %vm1333, %v5772, -inf
        %v5942 = vmax.f32 %v5939, %v5941
        %v5943 = vsel %vm5825, %v5775, -inf
        %v5944 = vmax.f32 %v5940, %v5943
        %v5945 = vmax.f32 %v5942, %v5944
        %v5946 = vrot.slane %v5945, 4
        %v5947 = vmax.f32 %v5945, %v5946
        %v5948 = vrot.slane %v5947, 2
        %v5949 = vmax.f32 %v5947, %v5948
        %v5950 = vrot.slane %v5949, 1
        %v5951 = vmax.f32 %v5949, %v5950
        %v5952 = vsub.f32 %v5764, %v5928
        %v5953 = vsub.f32 %v5765, %v5938
        %v5954 = vsub.f32 %v5766, %v5951
        %v5955 = vsub.f32 %v5767, %v5928
        %v5956 = vsub.f32 %v5768, %v5938
        %v5957 = vsub.f32 %v5769, %v5951
        %v5958 = vsub.f32 %v5770, %v5928
        %v5959 = vsub.f32 %v5771, %v5938
        %v5960 = vsub.f32 %v5772, %v5951
        %v5961 = vsub.f32 %v5773, %v5928
        %v5962 = vsub.f32 %v5774, %v5938
        %v5963 = vsub.f32 %v5775, %v5951
        %v5964 = vmul.f32 %v5952, 1.442695
        %v5965 = vpow.pop %v5964
        %v5966 = vmul.f32 %v5953, 1.442695
        %v5967 = vpow.pop %v5966
        %v5968 = vmul.f32 %v5954, 1.442695
        %v5969 = vpow.pop %v5968
        %v5970 = vmul.f32 %v5955, 1.442695
        %v5971 = vpow.pop %v5970
        %v5972 = vmul.f32 %v5956, 1.442695
        %v5973 = vpow.pop %v5972
        %v5974 = vmul.f32 %v5957, 1.442695
        %v5975 = vpow.pop %v5974
        %v5976 = vmul.f32 %v5958, 1.442695
        %v5977 = vpow.pop %v5976
        %v5978 = vmul.f32 %v5959, 1.442695
        %v5979 = vpow.pop %v5978
        %v5980 = vmul.f32 %v5960, 1.442695
        %v5981 = vpow.pop %v5980
        %v5982 = vmul.f32 %v5961, 1.442695
        %v5983 = vpow.pop %v5982
        %v5984 = vmul.f32 %v5962, 1.442695
        %v5985 = vpow.pop %v5984
        %v5986 = vmul.f32 %v5963, 1.442695
        %v5987 = vpow.pop %v5986
        %v5988 = vadd.f32 %v5965, %v5971
        %v5989 = vadd.f32 %v5988, %v5977
        %v5990 = vsel %vm5801, %v5983, 0.0
        %v5991 = vadd.f32 %v5989, %v5990
        %v5992 = vrot.slane %v5991, 4
        %v5993 = vadd.f32 %v5991, %v5992
        %v5994 = vrot.slane %v5993, 2
        %v5995 = vadd.f32 %v5993, %v5994
        %v5996 = vrot.slane %v5995, 1
        %v5997 = vadd.f32 %v5995, %v5996
        %v5998 = vadd.f32 %v5967, %v5973
        %v5999 = vadd.f32 %v5998, %v5979
        %v6000 = vsel %vm5801, %v5985, 0.0
        %v6001 = vadd.f32 %v5999, %v6000
        %v6002 = vrot.slane %v6001, 4
        %v6003 = vadd.f32 %v6001, %v6002
        %v6004 = vrot.slane %v6003, 2
        %v6005 = vadd.f32 %v6003, %v6004
        %v6006 = vrot.slane %v6005, 1
        %v6007 = vadd.f32 %v6005, %v6006
        %v6008 = vsel %vm1333, %v5969, 0.0
        %v6009 = vsel %vm1333, %v5975, 0.0
        %v6010 = vadd.f32 %v6008, %v6009
        %v6011 = vsel %vm1333, %v5981, 0.0
        %v6012 = vadd.f32 %v6010, %v6011
        %v6013 = vsel %vm5825, %v5987, 0.0
        %v6014 = vadd.f32 %v6012, %v6013
        %v6015 = vrot.slane %v6014, 4
        %v6016 = vadd.f32 %v6014, %v6015
        %v6017 = vrot.slane %v6016, 2
        %v6018 = vadd.f32 %v6016, %v6017
        %v6019 = vrot.slane %v6018, 1
        %v6020 = vadd.f32 %v6018, %v6019
        %v6021 = vrcp.pop %v5997
        %v6022 = vrcp.pop %v6007
        %v6023 = vrcp.pop %v6020
        %v6024 = vmul.f32 %v5965, %v6021
        %v6025 = vmul.f32 %v5967, %v6022
        %v6026 = vmul.f32 %v5969, %v6023
        %v6027 = vmul.f32 %v5971, %v6021
        %v6028 = vmul.f32 %v5973, %v6022
        %v6029 = vmul.f32 %v5975, %v6023
        %v6030 = vmul.f32 %v5977, %v6021
        %v6031 = vmul.f32 %v5979, %v6022
        %v6032 = vmul.f32 %v5981, %v6023
        %v6033 = vmul.f32 %v5983, %v6021
        %v6034 = vmul.f32 %v5985, %v6022
        %v6035 = vmul.f32 %v5987, %v6023
        %v6036 = vmax.f32 %v5776, %v5782
        %v6037 = vsel %vm5801, %v5785, -inf
        %v6038 = vmax.f32 %v5779, %v6037
        %v6039 = vmax.f32 %v6036, %v6038
        %v6040 = vrot.slane %v6039, 4
        %v6041 = vmax.f32 %v6039, %v6040
        %v6042 = vrot.slane %v6041, 2
        %v6043 = vmax.f32 %v6041, %v6042
        %v6044 = vrot.slane %v6043, 1
        %v6045 = vmax.f32 %v6043, %v6044
        %v6046 = vmax.f32 %v5777, %v5783
        %v6047 = vsel %vm5801, %v5786, -inf
        %v6048 = vmax.f32 %v5780, %v6047
        %v6049 = vmax.f32 %v6046, %v6048
        %v6050 = vrot.slane %v6049, 4
        %v6051 = vmax.f32 %v6049, %v6050
        %v6052 = vrot.slane %v6051, 2
        %v6053 = vmax.f32 %v6051, %v6052
        %v6054 = vrot.slane %v6053, 1
        %v6055 = vmax.f32 %v6053, %v6054
        %v6056 = vsel %vm1333, %v5778, -inf
        %v6057 = vsel %vm1333, %v5781, -inf
        %v6058 = vsel %vm1333, %v5784, -inf
        %v6059 = vmax.f32 %v6056, %v6058
        %v6060 = vsel %vm5825, %v5787, -inf
        %v6061 = vmax.f32 %v6057, %v6060
        %v6062 = vmax.f32 %v6059, %v6061
        %v6063 = vrot.slane %v6062, 4
        %v6064 = vmax.f32 %v6062, %v6063
        %v6065 = vrot.slane %v6064, 2
        %v6066 = vmax.f32 %v6064, %v6065
        %v6067 = vrot.slane %v6066, 1
        %v6068 = vmax.f32 %v6066, %v6067
        %v6069 = vsub.f32 %v5776, %v6045
        %v6070 = vsub.f32 %v5777, %v6055
        %v6071 = vsub.f32 %v5778, %v6068
        %v6072 = vsub.f32 %v5779, %v6045
        %v6073 = vsub.f32 %v5780, %v6055
        %v6074 = vsub.f32 %v5781, %v6068
        %v6075 = vsub.f32 %v5782, %v6045
        %v6076 = vsub.f32 %v5783, %v6055
        %v6077 = vsub.f32 %v5784, %v6068
        %v6078 = vsub.f32 %v5785, %v6045
        %v6079 = vsub.f32 %v5786, %v6055
        %v6080 = vsub.f32 %v5787, %v6068
        %v6081 = vmul.f32 %v6069, 1.442695
        %v6082 = vpow.pop %v6081
        %v6083 = vmul.f32 %v6070, 1.442695
        %v6084 = vpow.pop %v6083
        %v6085 = vmul.f32 %v6071, 1.442695
        %v6086 = vpow.pop %v6085
        %v6087 = vmul.f32 %v6072, 1.442695
        %v6088 = vpow.pop %v6087
        %v6089 = vmul.f32 %v6073, 1.442695
        %v6090 = vpow.pop %v6089
        %v6091 = vmul.f32 %v6074, 1.442695
        %v6092 = vpow.pop %v6091
        %v6093 = vmul.f32 %v6075, 1.442695
        %v6094 = vpow.pop %v6093
        %v6095 = vmul.f32 %v6076, 1.442695
        %v6096 = vpow.pop %v6095
        %v6097 = vmul.f32 %v6077, 1.442695
        %v6098 = vpow.pop %v6097
        %v6099 = vmul.f32 %v6078, 1.442695
        %v6100 = vpow.pop %v6099
        %v6101 = vmul.f32 %v6079, 1.442695
        %v6102 = vpow.pop %v6101
        %v6103 = vmul.f32 %v6080, 1.442695
        %v6104 = vpow.pop %v6103
        %v6105 = vadd.f32 %v6082, %v6088
        %v6106 = vadd.f32 %v6105, %v6094
        %v6107 = vsel %vm5801, %v6100, 0.0
        %v6108 = vadd.f32 %v6106, %v6107
        %v6109 = vrot.slane %v6108, 4
        %v6110 = vadd.f32 %v6108, %v6109
        %v6111 = vrot.slane %v6110, 2
        %v6112 = vadd.f32 %v6110, %v6111
        %v6113 = vrot.slane %v6112, 1
        %v6114 = vadd.f32 %v6112, %v6113
        %v6115 = vadd.f32 %v6084, %v6090
        %v6116 = vadd.f32 %v6115, %v6096
        %v6117 = vsel %vm5801, %v6102, 0.0
        %v6118 = vadd.f32 %v6116, %v6117
        %v6119 = vrot.slane %v6118, 4
        %v6120 = vadd.f32 %v6118, %v6119
        %v6121 = vrot.slane %v6120, 2
        %v6122 = vadd.f32 %v6120, %v6121
        %v6123 = vrot.slane %v6122, 1
        %v6124 = vadd.f32 %v6122, %v6123
        %v6125 = vsel %vm1333, %v6086, 0.0
        %v6126 = vsel %vm1333, %v6092, 0.0
        %v6127 = vadd.f32 %v6125, %v6126
        %v6128 = vsel %vm1333, %v6098, 0.0
        %v6129 = vadd.f32 %v6127, %v6128
        %v6130 = vsel %vm5825, %v6104, 0.0
        %v6131 = vadd.f32 %v6129, %v6130
        %v6132 = vrot.slane %v6131, 4
        %v6133 = vadd.f32 %v6131, %v6132
        %v6134 = vrot.slane %v6133, 2
        %v6135 = vadd.f32 %v6133, %v6134
        %v6136 = vrot.slane %v6135, 1
        %v6137 = vadd.f32 %v6135, %v6136
        %v6138 = vrcp.pop %v6114
        %v6139 = vrcp.pop %v6124
        %v6140 = vrcp.pop %v6137
        %v6141 = vmul.f32 %v6082, %v6138
        %v6142 = vmul.f32 %v6084, %v6139
        %v6143 = vmul.f32 %v6086, %v6140
        %v6144 = vmul.f32 %v6088, %v6138
        %v6145 = vmul.f32 %v6090, %v6139
        %v6146 = vmul.f32 %v6092, %v6140
        %v6147 = vmul.f32 %v6094, %v6138
        %v6148 = vmul.f32 %v6096, %v6139
        %v6149 = vmul.f32 %v6098, %v6140
        %v6150 = vmul.f32 %v6100, %v6138
        %v6151 = vmul.f32 %v6102, %v6139
        %v6152 = vmul.f32 %v6104, %v6140
        %v6153 = vmax.f32 %v5788, %v5794
        %v6154 = vsel %vm5801, %v5797, -inf
        %v6155 = vmax.f32 %v5791, %v6154
        %v6156 = vmax.f32 %v6153, %v6155
        %v6157 = vrot.slane %v6156, 4
        %v6158 = vmax.f32 %v6156, %v6157
        %v6159 = vrot.slane %v6158, 2
        %v6160 = vmax.f32 %v6158, %v6159
        %v6161 = vrot.slane %v6160, 1
        %v6162 = vmax.f32 %v6160, %v6161
        %v6163 = vmax.f32 %v5789, %v5795
        %v6164 = vsel %vm5801, %v5798, -inf
        %v6165 = vmax.f32 %v5792, %v6164
        %v6166 = vmax.f32 %v6163, %v6165
        %v6167 = vrot.slane %v6166, 4
        %v6168 = vmax.f32 %v6166, %v6167
        %v6169 = vrot.slane %v6168, 2
        %v6170 = vmax.f32 %v6168, %v6169
        %v6171 = vrot.slane %v6170, 1
        %v6172 = vmax.f32 %v6170, %v6171
        %v6173 = vsel %vm1333, %v5790, -inf
        %v6174 = vsel %vm1333, %v5793, -inf
        %v6175 = vsel %vm1333, %v5796, -inf
        %v6176 = vmax.f32 %v6173, %v6175
        %v6177 = vsel %vm5825, %v5799, -inf
        %v6178 = vmax.f32 %v6174, %v6177
        %v6179 = vmax.f32 %v6176, %v6178
        %v6180 = vrot.slane %v6179, 4
        %v6181 = vmax.f32 %v6179, %v6180
        %v6182 = vrot.slane %v6181, 2
        %v6183 = vmax.f32 %v6181, %v6182
        %v6184 = vrot.slane %v6183, 1
        %v6185 = vmax.f32 %v6183, %v6184
        %v6186 = vsub.f32 %v5788, %v6162
        %v6187 = vsub.f32 %v5789, %v6172
        %v6188 = vsub.f32 %v5790, %v6185
        %v6189 = vsub.f32 %v5791, %v6162
        %v6190 = vsub.f32 %v5792, %v6172
        %v6191 = vsub.f32 %v5793, %v6185
        %v6192 = vsub.f32 %v5794, %v6162
        %v6193 = vsub.f32 %v5795, %v6172
        %v6194 = vsub.f32 %v5796, %v6185
        %v6195 = vsub.f32 %v5797, %v6162
        %v6196 = vsub.f32 %v5798, %v6172
        %v6197 = vsub.f32 %v5799, %v6185
        %v6198 = vmul.f32 %v6186, 1.442695
        %v6199 = vpow.pop %v6198
        %v6200 = vmul.f32 %v6187, 1.442695
        %v6201 = vpow.pop %v6200
        %v6202 = vmul.f32 %v6188, 1.442695
        %v6203 = vpow.pop %v6202
        %v6204 = vmul.f32 %v6189, 1.442695
        %v6205 = vpow.pop %v6204
        %v6206 = vmul.f32 %v6190, 1.442695
        %v6207 = vpow.pop %v6206
        %v6208 = vmul.f32 %v6191, 1.442695
        %v6209 = vpow.pop %v6208
        %v6210 = vmul.f32 %v6192, 1.442695
        %v6211 = vpow.pop %v6210
        %v6212 = vmul.f32 %v6193, 1.442695
        %v6213 = vpow.pop %v6212
        %v6214 = vmul.f32 %v6194, 1.442695
        %v6215 = vpow.pop %v6214
        %v6216 = vmul.f32 %v6195, 1.442695
        %v6217 = vpow.pop %v6216
        %v6218 = vmul.f32 %v6196, 1.442695
        %v6219 = vpow.pop %v6218
        %v6220 = vmul.f32 %v6197, 1.442695
        %v6221 = vpow.pop %v6220
        %v6222 = vadd.f32 %v6199, %v6205
        %v6223 = vadd.f32 %v6222, %v6211
        %v6224 = vsel %vm5801, %v6217, 0.0
        %v6225 = vadd.f32 %v6223, %v6224
        %v6226 = vrot.slane %v6225, 4
        %v6227 = vadd.f32 %v6225, %v6226
        %v6228 = vrot.slane %v6227, 2
        %v6229 = vadd.f32 %v6227, %v6228
        %v6230 = vrot.slane %v6229, 1
        %v6231 = vadd.f32 %v6229, %v6230
        %v6232 = vadd.f32 %v6201, %v6207
        %v6233 = vadd.f32 %v6232, %v6213
        %v6234 = vsel %vm5801, %v6219, 0.0
        %v6235 = vadd.f32 %v6233, %v6234
        %v6236 = vrot.slane %v6235, 4
        %v6237 = vadd.f32 %v6235, %v6236
        %v6238 = vrot.slane %v6237, 2
        %v6239 = vadd.f32 %v6237, %v6238
        %v6240 = vrot.slane %v6239, 1
        %v6241 = vadd.f32 %v6239, %v6240
        %v6242 = vsel %vm1333, %v6203, 0.0
        %v6243 = vsel %vm1333, %v6209, 0.0
        %v6244 = vadd.f32 %v6242, %v6243
        %v6245 = vsel %vm1333, %v6215, 0.0
        %v6246 = vadd.f32 %v6244, %v6245
        %v6247 = vsel %vm5825, %v6221, 0.0
        %v6248 = vadd.f32 %v6246, %v6247
        %v6249 = vrot.slane %v6248, 4
        %v6250 = vadd.f32 %v6248, %v6249
        %v6251 = vrot.slane %v6250, 2
        %v6252 = vadd.f32 %v6250, %v6251
        %v6253 = vrot.slane %v6252, 1
        %v6254 = vadd.f32 %v6252, %v6253
        %v6255 = vrcp.pop %v6231
        %v6256 = vrcp.pop %v6241
        %v6257 = vrcp.pop %v6254
        %v6258 = vmul.f32 %v6199, %v6255
        %v6259 = vmul.f32 %v6201, %v6256
        %v6260 = vmul.f32 %v6203, %v6257
        %v6261 = vmul.f32 %v6205, %v6255
        %v6262 = vmul.f32 %v6207, %v6256
        %v6263 = vmul.f32 %v6209, %v6257
        %v6264 = vmul.f32 %v6211, %v6255
        %v6265 = vmul.f32 %v6213, %v6256
        %v6266 = vmul.f32 %v6215, %v6257
        %v6267 = vmul.f32 %v6217, %v6255
        %v6268 = vmul.f32 %v6219, %v6256
        %v6269 = vmul.f32 %v6221, %v6257
        %v6270 = vlaneseq
        %v6271 = vshrl.u32 %v6270, 7
        %v6272 = vsub.s32 0, %v6271
        %v6273 = vrot.slane %v5907, %v6272
        %v6274 = vlaneseq
        %v6275 = vshrl.u32 %v6274, 7
        %v6276 = vsub.s32 0, %v6275
        %v6277 = vrot.slane %v5908, %v6276
        %v6278 = vlaneseq
        %v6279 = vshrl.u32 %v6278, 7
        %v6280 = vsub.s32 0, %v6279
        %v6281 = vrot.slane %v5909, %v6280
        %v6284 = vcombine.high %v366, %v366
        %v6286 = vmul.f32 %v6273, %v366
        %v6287 = vmul.f32 %v6277, %v6284
        %v6288 = vmul.f32 %v6281, %v367
        %v6289 = vadd.f32 %v6286, 0.0
        %v6290 = vadd.f32 %v6287, 0.0
        %v6291 = vadd.f32 %v6288, 0.0
        %v6292 = vlaneseq
        %v6293 = vshrl.u32 %v6292, 7
        %v6294 = vsub.s32 0, %v6293
        %v6295 = vrot.slane %v6024, %v6294
        %v6296 = vlaneseq
        %v6297 = vshrl.u32 %v6296, 7
        %v6298 = vsub.s32 0, %v6297
        %v6299 = vrot.slane %v6025, %v6298
        %v6300 = vlaneseq
        %v6301 = vshrl.u32 %v6300, 7
        %v6302 = vsub.s32 0, %v6301
        %v6303 = vrot.slane %v6026, %v6302
        %v6304 = vmul.f32 %v6295, %v366
        %v6305 = vmul.f32 %v6299, %v6284
        %v6306 = vmul.f32 %v6303, %v367
        %v6307 = vadd.f32 %v6304, 0.0
        %v6308 = vadd.f32 %v6305, 0.0
        %v6309 = vadd.f32 %v6306, 0.0
        %v6310 = vlaneseq
        %v6311 = vshrl.u32 %v6310, 7
        %v6312 = vsub.s32 0, %v6311
        %v6313 = vrot.slane %v6141, %v6312
        %v6314 = vlaneseq
        %v6315 = vshrl.u32 %v6314, 7
        %v6316 = vsub.s32 0, %v6315
        %v6317 = vrot.slane %v6142, %v6316
        %v6318 = vlaneseq
        %v6319 = vshrl.u32 %v6318, 7
        %v6320 = vsub.s32 0, %v6319
        %v6321 = vrot.slane %v6143, %v6320
        %v6322 = vmul.f32 %v6313, %v366
        %v6323 = vmul.f32 %v6317, %v6284
        %v6324 = vmul.f32 %v6321, %v367
        %v6325 = vadd.f32 %v6322, 0.0
        %v6326 = vadd.f32 %v6323, 0.0
        %v6327 = vadd.f32 %v6324, 0.0
        %v6328 = vlaneseq
        %v6329 = vshrl.u32 %v6328, 7
        %v6330 = vsub.s32 0, %v6329
        %v6331 = vrot.slane %v6258, %v6330
        %v6332 = vlaneseq
        %v6333 = vshrl.u32 %v6332, 7
        %v6334 = vsub.s32 0, %v6333
        %v6335 = vrot.slane %v6259, %v6334
        %v6336 = vlaneseq
        %v6337 = vshrl.u32 %v6336, 7
        %v6338 = vsub.s32 0, %v6337
        %v6339 = vrot.slane %v6260, %v6338
        %v6340 = vmul.f32 %v6331, %v366
        %v6341 = vmul.f32 %v6335, %v6284
        %v6342 = vmul.f32 %v6339, %v367
        %v6343 = vadd.f32 %v6340, 0.0
        %v6344 = vadd.f32 %v6341, 0.0
        %v6345 = vadd.f32 %v6342, 0.0
        %v6346 = vlaneseq
        %v6347 = vshrl.u32 %v6346, 7
        %v6348 = vsub.s32 1, %v6347
        %v6349 = vrot.slane %v5907, %v6348
        %v6350 = vlaneseq
        %v6351 = vshrl.u32 %v6350, 7
        %v6352 = vsub.s32 1, %v6351
        %v6353 = vrot.slane %v5908, %v6352
        %v6354 = vlaneseq
        %v6355 = vshrl.u32 %v6354, 7
        %v6356 = vsub.s32 1, %v6355
        %v6357 = vrot.slane %v5909, %v6356
        %6358 = vrot.lane.b32.xlu0 %v366, 127
        %v6359 = vpop.permute.xlu0 %6358
        %6360 = vrot.lane.b32.xlu0 %v6284, 127
        %v6361 = vpop.permute.xlu0 %6360
        %6362 = vrot.lane.b32.xlu0 %v367, 127
        %v6363 = vpop.permute.xlu0 %6362
        %vm6364 = vcmask 1039360
        %v6365 = vsel %vm6364, %v6359, %v6361
        %v6366 = vsel %vm6364, %v6361, %v6363
        %v6370 = vmul.f32 %v6349, %v6365
        %v6371 = vmul.f32 %v6353, %v6366
        %v6372 = vmul.f32 %v6357, %v6363
        %v6373 = vadd.f32 %v6289, %v6370
        %v6374 = vadd.f32 %v6290, %v6371
        %v6375 = vadd.f32 %v6291, %v6372
        %v6376 = vlaneseq
        %v6377 = vshrl.u32 %v6376, 7
        %v6378 = vsub.s32 1, %v6377
        %v6379 = vrot.slane %v6024, %v6378
        %v6380 = vlaneseq
        %v6381 = vshrl.u32 %v6380, 7
        %v6382 = vsub.s32 1, %v6381
        %v6383 = vrot.slane %v6025, %v6382
        %v6384 = vlaneseq
        %v6385 = vshrl.u32 %v6384, 7
        %v6386 = vsub.s32 1, %v6385
        %v6387 = vrot.slane %v6026, %v6386
        %v6388 = vmul.f32 %v6379, %v6365
        %v6389 = vmul.f32 %v6383, %v6366
        %v6390 = vmul.f32 %v6387, %v6363
        %v6391 = vadd.f32 %v6307, %v6388
        %v6392 = vadd.f32 %v6308, %v6389
        %v6393 = vadd.f32 %v6309, %v6390
        %v6394 = vlaneseq
        %v6395 = vshrl.u32 %v6394, 7
        %v6396 = vsub.s32 1, %v6395
        %v6397 = vrot.slane %v6141, %v6396
        %v6398 = vlaneseq
        %v6399 = vshrl.u32 %v6398, 7
        %v6400 = vsub.s32 1, %v6399
        %v6401 = vrot.slane %v6142, %v6400
        %v6402 = vlaneseq
        %v6403 = vshrl.u32 %v6402, 7
        %v6404 = vsub.s32 1, %v6403
        %v6405 = vrot.slane %v6143, %v6404
        %v6406 = vmul.f32 %v6397, %v6365
        %v6407 = vmul.f32 %v6401, %v6366
        %v6408 = vmul.f32 %v6405, %v6363
        %v6409 = vadd.f32 %v6325, %v6406
        %v6410 = vadd.f32 %v6326, %v6407
        %v6411 = vadd.f32 %v6327, %v6408
        %v6412 = vlaneseq
        %v6413 = vshrl.u32 %v6412, 7
        %v6414 = vsub.s32 1, %v6413
        %v6415 = vrot.slane %v6258, %v6414
        %v6416 = vlaneseq
        %v6417 = vshrl.u32 %v6416, 7
        %v6418 = vsub.s32 1, %v6417
        %v6419 = vrot.slane %v6259, %v6418
        %v6420 = vlaneseq
        %v6421 = vshrl.u32 %v6420, 7
        %v6422 = vsub.s32 1, %v6421
        %v6423 = vrot.slane %v6260, %v6422
        %v6424 = vmul.f32 %v6415, %v6365
        %v6425 = vmul.f32 %v6419, %v6366
        %v6426 = vmul.f32 %v6423, %v6363
        %v6427 = vadd.f32 %v6343, %v6424
        %v6428 = vadd.f32 %v6344, %v6425
        %v6429 = vadd.f32 %v6345, %v6426
        %v6430 = vlaneseq
        %v6431 = vshrl.u32 %v6430, 7
        %v6432 = vsub.s32 2, %v6431
        %v6433 = vrot.slane %v5907, %v6432
        %v6434 = vlaneseq
        %v6435 = vshrl.u32 %v6434, 7
        %v6436 = vsub.s32 2, %v6435
        %v6437 = vrot.slane %v5908, %v6436
        %v6438 = vlaneseq
        %v6439 = vshrl.u32 %v6438, 7
        %v6440 = vsub.s32 2, %v6439
        %v6441 = vrot.slane %v5909, %v6440
        %6442 = vrot.lane.b32.xlu0 %v366, 126
        %v6443 = vpop.permute.xlu0 %6442
        %6444 = vrot.lane.b32.xlu0 %v6284, 126
        %v6445 = vpop.permute.xlu0 %6444
        %6446 = vrot.lane.b32.xlu0 %v367, 126
        %v6447 = vpop.permute.xlu0 %6446
        %vm6448 = vcmask 1031168
        %v6449 = vsel %vm6448, %v6443, %v6445
        %v6450 = vsel %vm6448, %v6445, %v6447
        %v6454 = vmul.f32 %v6433, %v6449
        %v6455 = vmul.f32 %v6437, %v6450
        %v6456 = vmul.f32 %v6441, %v6447
        %v6457 = vadd.f32 %v6373, %v6454
        %v6458 = vadd.f32 %v6374, %v6455
        %v6459 = vadd.f32 %v6375, %v6456
        %v6460 = vlaneseq
        %v6461 = vshrl.u32 %v6460, 7
        %v6462 = vsub.s32 2, %v6461
        %v6463 = vrot.slane %v6024, %v6462
        %v6464 = vlaneseq
        %v6465 = vshrl.u32 %v6464, 7
        %v6466 = vsub.s32 2, %v6465
        %v6467 = vrot.slane %v6025, %v6466
        %v6468 = vlaneseq
        %v6469 = vshrl.u32 %v6468, 7
        %v6470 = vsub.s32 2, %v6469
        %v6471 = vrot.slane %v6026, %v6470
        %v6472 = vmul.f32 %v6463, %v6449
        %v6473 = vmul.f32 %v6467, %v6450
        %v6474 = vmul.f32 %v6471, %v6447
        %v6475 = vadd.f32 %v6391, %v6472
        %v6476 = vadd.f32 %v6392, %v6473
        %v6477 = vadd.f32 %v6393, %v6474
        %v6478 = vlaneseq
        %v6479 = vshrl.u32 %v6478, 7
        %v6480 = vsub.s32 2, %v6479
        %v6481 = vrot.slane %v6141, %v6480
        %v6482 = vlaneseq
        %v6483 = vshrl.u32 %v6482, 7
        %v6484 = vsub.s32 2, %v6483
        %v6485 = vrot.slane %v6142, %v6484
        %v6486 = vlaneseq
        %v6487 = vshrl.u32 %v6486, 7
        %v6488 = vsub.s32 2, %v6487
        %v6489 = vrot.slane %v6143, %v6488
        %v6490 = vmul.f32 %v6481, %v6449
        %v6491 = vmul.f32 %v6485, %v6450
        %v6492 = vmul.f32 %v6489, %v6447
        %v6493 = vadd.f32 %v6409, %v6490
        %v6494 = vadd.f32 %v6410, %v6491
        %v6495 = vadd.f32 %v6411, %v6492
        %v6496 = vlaneseq
        %v6497 = vshrl.u32 %v6496, 7
        %v6498 = vsub.s32 2, %v6497
        %v6499 = vrot.slane %v6258, %v6498
        %v6500 = vlaneseq
        %v6501 = vshrl.u32 %v6500, 7
        %v6502 = vsub.s32 2, %v6501
        %v6503 = vrot.slane %v6259, %v6502
        %v6504 = vlaneseq
        %v6505 = vshrl.u32 %v6504, 7
        %v6506 = vsub.s32 2, %v6505
        %v6507 = vrot.slane %v6260, %v6506
        %v6508 = vmul.f32 %v6499, %v6449
        %v6509 = vmul.f32 %v6503, %v6450
        %v6510 = vmul.f32 %v6507, %v6447
        %v6511 = vadd.f32 %v6427, %v6508
        %v6512 = vadd.f32 %v6428, %v6509
        %v6513 = vadd.f32 %v6429, %v6510
        %v6514 = vlaneseq
        %v6515 = vshrl.u32 %v6514, 7
        %v6516 = vsub.s32 3, %v6515
        %v6517 = vrot.slane %v5907, %v6516
        %v6518 = vlaneseq
        %v6519 = vshrl.u32 %v6518, 7
        %v6520 = vsub.s32 3, %v6519
        %v6521 = vrot.slane %v5908, %v6520
        %v6522 = vlaneseq
        %v6523 = vshrl.u32 %v6522, 7
        %v6524 = vsub.s32 3, %v6523
        %v6525 = vrot.slane %v5909, %v6524
        %6526 = vrot.lane.b32.xlu0 %v366, 125
        %v6527 = vpop.permute.xlu0 %6526
        %6528 = vrot.lane.b32.xlu0 %v6284, 125
        %v6529 = vpop.permute.xlu0 %6528
        %6530 = vrot.lane.b32.xlu0 %v367, 125
        %v6531 = vpop.permute.xlu0 %6530
        %vm6532 = vcmask 1022976
        %v6533 = vsel %vm6532, %v6527, %v6529
        %v6534 = vsel %vm6532, %v6529, %v6531
        %v6538 = vmul.f32 %v6517, %v6533
        %v6539 = vmul.f32 %v6521, %v6534
        %v6540 = vmul.f32 %v6525, %v6531
        %v6541 = vadd.f32 %v6457, %v6538
        %v6542 = vadd.f32 %v6458, %v6539
        %v6543 = vadd.f32 %v6459, %v6540
        %v6544 = vlaneseq
        %v6545 = vshrl.u32 %v6544, 7
        %v6546 = vsub.s32 3, %v6545
        %v6547 = vrot.slane %v6024, %v6546
        %v6548 = vlaneseq
        %v6549 = vshrl.u32 %v6548, 7
        %v6550 = vsub.s32 3, %v6549
        %v6551 = vrot.slane %v6025, %v6550
        %v6552 = vlaneseq
        %v6553 = vshrl.u32 %v6552, 7
        %v6554 = vsub.s32 3, %v6553
        %v6555 = vrot.slane %v6026, %v6554
        %v6556 = vmul.f32 %v6547, %v6533
        %v6557 = vmul.f32 %v6551, %v6534
        %v6558 = vmul.f32 %v6555, %v6531
        %v6559 = vadd.f32 %v6475, %v6556
        %v6560 = vadd.f32 %v6476, %v6557
        %v6561 = vadd.f32 %v6477, %v6558
        %v6562 = vlaneseq
        %v6563 = vshrl.u32 %v6562, 7
        %v6564 = vsub.s32 3, %v6563
        %v6565 = vrot.slane %v6141, %v6564
        %v6566 = vlaneseq
        %v6567 = vshrl.u32 %v6566, 7
        %v6568 = vsub.s32 3, %v6567
        %v6569 = vrot.slane %v6142, %v6568
        %v6570 = vlaneseq
        %v6571 = vshrl.u32 %v6570, 7
        %v6572 = vsub.s32 3, %v6571
        %v6573 = vrot.slane %v6143, %v6572
        %v6574 = vmul.f32 %v6565, %v6533
        %v6575 = vmul.f32 %v6569, %v6534
        %v6576 = vmul.f32 %v6573, %v6531
        %v6577 = vadd.f32 %v6493, %v6574
        %v6578 = vadd.f32 %v6494, %v6575
        %v6579 = vadd.f32 %v6495, %v6576
        %v6580 = vlaneseq
        %v6581 = vshrl.u32 %v6580, 7
        %v6582 = vsub.s32 3, %v6581
        %v6583 = vrot.slane %v6258, %v6582
        %v6584 = vlaneseq
        %v6585 = vshrl.u32 %v6584, 7
        %v6586 = vsub.s32 3, %v6585
        %v6587 = vrot.slane %v6259, %v6586
        %v6588 = vlaneseq
        %v6589 = vshrl.u32 %v6588, 7
        %v6590 = vsub.s32 3, %v6589
        %v6591 = vrot.slane %v6260, %v6590
        %v6592 = vmul.f32 %v6583, %v6533
        %v6593 = vmul.f32 %v6587, %v6534
        %v6594 = vmul.f32 %v6591, %v6531
        %v6595 = vadd.f32 %v6511, %v6592
        %v6596 = vadd.f32 %v6512, %v6593
        %v6597 = vadd.f32 %v6513, %v6594
        %v6598 = vlaneseq
        %v6599 = vshrl.u32 %v6598, 7
        %v6600 = vsub.s32 4, %v6599
        %v6601 = vrot.slane %v5907, %v6600
        %v6602 = vlaneseq
        %v6603 = vshrl.u32 %v6602, 7
        %v6604 = vsub.s32 4, %v6603
        %v6605 = vrot.slane %v5908, %v6604
        %v6606 = vlaneseq
        %v6607 = vshrl.u32 %v6606, 7
        %v6608 = vsub.s32 4, %v6607
        %v6609 = vrot.slane %v5909, %v6608
        %6610 = vrot.lane.b32.xlu0 %v366, 124
        %v6611 = vpop.permute.xlu0 %6610
        %6612 = vrot.lane.b32.xlu0 %v6284, 124
        %v6613 = vpop.permute.xlu0 %6612
        %6614 = vrot.lane.b32.xlu0 %v367, 124
        %v6615 = vpop.permute.xlu0 %6614
        %vm6616 = vcmask 1014784
        %v6617 = vsel %vm6616, %v6611, %v6613
        %v6618 = vsel %vm6616, %v6613, %v6615
        %v6622 = vmul.f32 %v6601, %v6617
        %v6623 = vmul.f32 %v6605, %v6618
        %v6624 = vmul.f32 %v6609, %v6615
        %v6625 = vadd.f32 %v6541, %v6622
        %v6626 = vadd.f32 %v6542, %v6623
        %v6627 = vadd.f32 %v6543, %v6624
        %v6628 = vlaneseq
        %v6629 = vshrl.u32 %v6628, 7
        %v6630 = vsub.s32 4, %v6629
        %v6631 = vrot.slane %v6024, %v6630
        %v6632 = vlaneseq
        %v6633 = vshrl.u32 %v6632, 7
        %v6634 = vsub.s32 4, %v6633
        %v6635 = vrot.slane %v6025, %v6634
        %v6636 = vlaneseq
        %v6637 = vshrl.u32 %v6636, 7
        %v6638 = vsub.s32 4, %v6637
        %v6639 = vrot.slane %v6026, %v6638
        %v6640 = vmul.f32 %v6631, %v6617
        %v6641 = vmul.f32 %v6635, %v6618
        %v6642 = vmul.f32 %v6639, %v6615
        %v6643 = vadd.f32 %v6559, %v6640
        %v6644 = vadd.f32 %v6560, %v6641
        %v6645 = vadd.f32 %v6561, %v6642
        %v6646 = vlaneseq
        %v6647 = vshrl.u32 %v6646, 7
        %v6648 = vsub.s32 4, %v6647
        %v6649 = vrot.slane %v6141, %v6648
        %v6650 = vlaneseq
        %v6651 = vshrl.u32 %v6650, 7
        %v6652 = vsub.s32 4, %v6651
        %v6653 = vrot.slane %v6142, %v6652
        %v6654 = vlaneseq
        %v6655 = vshrl.u32 %v6654, 7
        %v6656 = vsub.s32 4, %v6655
        %v6657 = vrot.slane %v6143, %v6656
        %v6658 = vmul.f32 %v6649, %v6617
        %v6659 = vmul.f32 %v6653, %v6618
        %v6660 = vmul.f32 %v6657, %v6615
        %v6661 = vadd.f32 %v6577, %v6658
        %v6662 = vadd.f32 %v6578, %v6659
        %v6663 = vadd.f32 %v6579, %v6660
        %v6664 = vlaneseq
        %v6665 = vshrl.u32 %v6664, 7
        %v6666 = vsub.s32 4, %v6665
        %v6667 = vrot.slane %v6258, %v6666
        %v6668 = vlaneseq
        %v6669 = vshrl.u32 %v6668, 7
        %v6670 = vsub.s32 4, %v6669
        %v6671 = vrot.slane %v6259, %v6670
        %v6672 = vlaneseq
        %v6673 = vshrl.u32 %v6672, 7
        %v6674 = vsub.s32 4, %v6673
        %v6675 = vrot.slane %v6260, %v6674
        %v6676 = vmul.f32 %v6667, %v6617
        %v6677 = vmul.f32 %v6671, %v6618
        %v6678 = vmul.f32 %v6675, %v6615
        %v6679 = vadd.f32 %v6595, %v6676
        %v6680 = vadd.f32 %v6596, %v6677
        %v6681 = vadd.f32 %v6597, %v6678
        %v6682 = vlaneseq
        %v6683 = vshrl.u32 %v6682, 7
        %v6684 = vsub.s32 5, %v6683
        %v6685 = vrot.slane %v5907, %v6684
        %v6686 = vlaneseq
        %v6687 = vshrl.u32 %v6686, 7
        %v6688 = vsub.s32 5, %v6687
        %v6689 = vrot.slane %v5908, %v6688
        %v6690 = vlaneseq
        %v6691 = vshrl.u32 %v6690, 7
        %v6692 = vsub.s32 5, %v6691
        %v6693 = vrot.slane %v5909, %v6692
        %6694 = vrot.lane.b32.xlu0 %v366, 108
        %v6695 = vpop.permute.xlu0 %6694
        %6696 = vrot.lane.b32.xlu0 %v6284, 108
        %v6697 = vpop.permute.xlu0 %6696
        %6698 = vrot.lane.b32.xlu0 %v367, 108
        %v6699 = vpop.permute.xlu0 %6698
        %vm6700 = vcmask 883712
        %v6701 = vsel %vm6700, %v6695, %v6697
        %v6702 = vsel %vm6700, %v6697, %v6699
        %v6706 = vmul.f32 %v6685, %v6701
        %v6707 = vmul.f32 %v6689, %v6702
        %v6708 = vmul.f32 %v6693, %v6699
        %v6709 = vadd.f32 %v6625, %v6706
        %v6710 = vadd.f32 %v6626, %v6707
        %v6711 = vadd.f32 %v6627, %v6708
        %v6712 = vlaneseq
        %v6713 = vshrl.u32 %v6712, 7
        %v6714 = vsub.s32 5, %v6713
        %v6715 = vrot.slane %v6024, %v6714
        %v6716 = vlaneseq
        %v6717 = vshrl.u32 %v6716, 7
        %v6718 = vsub.s32 5, %v6717
        %v6719 = vrot.slane %v6025, %v6718
        %v6720 = vlaneseq
        %v6721 = vshrl.u32 %v6720, 7
        %v6722 = vsub.s32 5, %v6721
        %v6723 = vrot.slane %v6026, %v6722
        %v6724 = vmul.f32 %v6715, %v6701
        %v6725 = vmul.f32 %v6719, %v6702
        %v6726 = vmul.f32 %v6723, %v6699
        %v6727 = vadd.f32 %v6643, %v6724
        %v6728 = vadd.f32 %v6644, %v6725
        %v6729 = vadd.f32 %v6645, %v6726
        %v6730 = vlaneseq
        %v6731 = vshrl.u32 %v6730, 7
        %v6732 = vsub.s32 5, %v6731
        %v6733 = vrot.slane %v6141, %v6732
        %v6734 = vlaneseq
        %v6735 = vshrl.u32 %v6734, 7
        %v6736 = vsub.s32 5, %v6735
        %v6737 = vrot.slane %v6142, %v6736
        %v6738 = vlaneseq
        %v6739 = vshrl.u32 %v6738, 7
        %v6740 = vsub.s32 5, %v6739
        %v6741 = vrot.slane %v6143, %v6740
        %v6742 = vmul.f32 %v6733, %v6701
        %v6743 = vmul.f32 %v6737, %v6702
        %v6744 = vmul.f32 %v6741, %v6699
        %v6745 = vadd.f32 %v6661, %v6742
        %v6746 = vadd.f32 %v6662, %v6743
        %v6747 = vadd.f32 %v6663, %v6744
        %v6748 = vlaneseq
        %v6749 = vshrl.u32 %v6748, 7
        %v6750 = vsub.s32 5, %v6749
        %v6751 = vrot.slane %v6258, %v6750
        %v6752 = vlaneseq
        %v6753 = vshrl.u32 %v6752, 7
        %v6754 = vsub.s32 5, %v6753
        %v6755 = vrot.slane %v6259, %v6754
        %v6756 = vlaneseq
        %v6757 = vshrl.u32 %v6756, 7
        %v6758 = vsub.s32 5, %v6757
        %v6759 = vrot.slane %v6260, %v6758
        %v6760 = vmul.f32 %v6751, %v6701
        %v6761 = vmul.f32 %v6755, %v6702
        %v6762 = vmul.f32 %v6759, %v6699
        %v6763 = vadd.f32 %v6679, %v6760
        %v6764 = vadd.f32 %v6680, %v6761
        %v6765 = vadd.f32 %v6681, %v6762
        %v6766 = vlaneseq
        %v6767 = vshrl.u32 %v6766, 7
        %v6768 = vsub.s32 6, %v6767
        %v6769 = vrot.slane %v5907, %v6768
        %v6770 = vlaneseq
        %v6771 = vshrl.u32 %v6770, 7
        %v6772 = vsub.s32 6, %v6771
        %v6773 = vrot.slane %v5908, %v6772
        %v6774 = vlaneseq
        %v6775 = vshrl.u32 %v6774, 7
        %v6776 = vsub.s32 6, %v6775
        %v6777 = vrot.slane %v5909, %v6776
        %6778 = vrot.lane.b32.xlu0 %v366, 107
        %v6779 = vpop.permute.xlu0 %6778
        %6780 = vrot.lane.b32.xlu0 %v6284, 107
        %v6781 = vpop.permute.xlu0 %6780
        %6782 = vrot.lane.b32.xlu0 %v367, 107
        %v6783 = vpop.permute.xlu0 %6782
        %v6784 = vsel %vm1292, %v6779, %v6781
        %v6785 = vsel %vm1292, %v6781, %v6783
        %v6789 = vmul.f32 %v6769, %v6784
        %v6790 = vmul.f32 %v6773, %v6785
        %v6791 = vmul.f32 %v6777, %v6783
        %v6792 = vadd.f32 %v6709, %v6789
        %v6793 = vadd.f32 %v6710, %v6790
        %v6794 = vadd.f32 %v6711, %v6791
        %v6795 = vlaneseq
        %v6796 = vshrl.u32 %v6795, 7
        %v6797 = vsub.s32 6, %v6796
        %v6798 = vrot.slane %v6024, %v6797
        %v6799 = vlaneseq
        %v6800 = vshrl.u32 %v6799, 7
        %v6801 = vsub.s32 6, %v6800
        %v6802 = vrot.slane %v6025, %v6801
        %v6803 = vlaneseq
        %v6804 = vshrl.u32 %v6803, 7
        %v6805 = vsub.s32 6, %v6804
        %v6806 = vrot.slane %v6026, %v6805
        %v6807 = vmul.f32 %v6798, %v6784
        %v6808 = vmul.f32 %v6802, %v6785
        %v6809 = vmul.f32 %v6806, %v6783
        %v6810 = vadd.f32 %v6727, %v6807
        %v6811 = vadd.f32 %v6728, %v6808
        %v6812 = vadd.f32 %v6729, %v6809
        %v6813 = vlaneseq
        %v6814 = vshrl.u32 %v6813, 7
        %v6815 = vsub.s32 6, %v6814
        %v6816 = vrot.slane %v6141, %v6815
        %v6817 = vlaneseq
        %v6818 = vshrl.u32 %v6817, 7
        %v6819 = vsub.s32 6, %v6818
        %v6820 = vrot.slane %v6142, %v6819
        %v6821 = vlaneseq
        %v6822 = vshrl.u32 %v6821, 7
        %v6823 = vsub.s32 6, %v6822
        %v6824 = vrot.slane %v6143, %v6823
        %v6825 = vmul.f32 %v6816, %v6784
        %v6826 = vmul.f32 %v6820, %v6785
        %v6827 = vmul.f32 %v6824, %v6783
        %v6828 = vadd.f32 %v6745, %v6825
        %v6829 = vadd.f32 %v6746, %v6826
        %v6830 = vadd.f32 %v6747, %v6827
        %v6831 = vlaneseq
        %v6832 = vshrl.u32 %v6831, 7
        %v6833 = vsub.s32 6, %v6832
        %v6834 = vrot.slane %v6258, %v6833
        %v6835 = vlaneseq
        %v6836 = vshrl.u32 %v6835, 7
        %v6837 = vsub.s32 6, %v6836
        %v6838 = vrot.slane %v6259, %v6837
        %v6839 = vlaneseq
        %v6840 = vshrl.u32 %v6839, 7
        %v6841 = vsub.s32 6, %v6840
        %v6842 = vrot.slane %v6260, %v6841
        %v6843 = vmul.f32 %v6834, %v6784
        %v6844 = vmul.f32 %v6838, %v6785
        %v6845 = vmul.f32 %v6842, %v6783
        %v6846 = vadd.f32 %v6763, %v6843
        %v6847 = vadd.f32 %v6764, %v6844
        %v6848 = vadd.f32 %v6765, %v6845
        %v6849 = vlaneseq
        %v6850 = vshrl.u32 %v6849, 7
        %v6851 = vsub.s32 7, %v6850
        %v6852 = vrot.slane %v5907, %v6851
        %v6853 = vlaneseq
        %v6854 = vshrl.u32 %v6853, 7
        %v6855 = vsub.s32 7, %v6854
        %v6856 = vrot.slane %v5908, %v6855
        %v6857 = vlaneseq
        %v6858 = vshrl.u32 %v6857, 7
        %v6859 = vsub.s32 7, %v6858
        %v6860 = vrot.slane %v5909, %v6859
        %6861 = vrot.lane.b32.xlu0 %v366, 106
        %v6862 = vpop.permute.xlu0 %6861
        %6863 = vrot.lane.b32.xlu0 %v6284, 106
        %v6864 = vpop.permute.xlu0 %6863
        %6865 = vrot.lane.b32.xlu0 %v367, 106
        %v6866 = vpop.permute.xlu0 %6865
        %v6867 = vsel %vm1801, %v6862, %v6864
        %v6868 = vsel %vm1801, %v6864, %v6866
        %v6872 = vmul.f32 %v6852, %v6867
        %v6873 = vmul.f32 %v6856, %v6868
        %v6874 = vmul.f32 %v6860, %v6866
        %v6875 = vadd.f32 %v6792, %v6872
        %v6876 = vadd.f32 %v6793, %v6873
        %v6877 = vadd.f32 %v6794, %v6874
        %v6878 = vlaneseq
        %v6879 = vshrl.u32 %v6878, 7
        %v6880 = vsub.s32 7, %v6879
        %v6881 = vrot.slane %v6024, %v6880
        %v6882 = vlaneseq
        %v6883 = vshrl.u32 %v6882, 7
        %v6884 = vsub.s32 7, %v6883
        %v6885 = vrot.slane %v6025, %v6884
        %v6886 = vlaneseq
        %v6887 = vshrl.u32 %v6886, 7
        %v6888 = vsub.s32 7, %v6887
        %v6889 = vrot.slane %v6026, %v6888
        %v6890 = vmul.f32 %v6881, %v6867
        %v6891 = vmul.f32 %v6885, %v6868
        %v6892 = vmul.f32 %v6889, %v6866
        %v6893 = vadd.f32 %v6810, %v6890
        %v6894 = vadd.f32 %v6811, %v6891
        %v6895 = vadd.f32 %v6812, %v6892
        %v6896 = vlaneseq
        %v6897 = vshrl.u32 %v6896, 7
        %v6898 = vsub.s32 7, %v6897
        %v6899 = vrot.slane %v6141, %v6898
        %v6900 = vlaneseq
        %v6901 = vshrl.u32 %v6900, 7
        %v6902 = vsub.s32 7, %v6901
        %v6903 = vrot.slane %v6142, %v6902
        %v6904 = vlaneseq
        %v6905 = vshrl.u32 %v6904, 7
        %v6906 = vsub.s32 7, %v6905
        %v6907 = vrot.slane %v6143, %v6906
        %v6908 = vmul.f32 %v6899, %v6867
        %v6909 = vmul.f32 %v6903, %v6868
        %v6910 = vmul.f32 %v6907, %v6866
        %v6911 = vadd.f32 %v6828, %v6908
        %v6912 = vadd.f32 %v6829, %v6909
        %v6913 = vadd.f32 %v6830, %v6910
        %v6914 = vlaneseq
        %v6915 = vshrl.u32 %v6914, 7
        %v6916 = vsub.s32 7, %v6915
        %v6917 = vrot.slane %v6258, %v6916
        %v6918 = vlaneseq
        %v6919 = vshrl.u32 %v6918, 7
        %v6920 = vsub.s32 7, %v6919
        %v6921 = vrot.slane %v6259, %v6920
        %v6922 = vlaneseq
        %v6923 = vshrl.u32 %v6922, 7
        %v6924 = vsub.s32 7, %v6923
        %v6925 = vrot.slane %v6260, %v6924
        %v6926 = vmul.f32 %v6917, %v6867
        %v6927 = vmul.f32 %v6921, %v6868
        %v6928 = vmul.f32 %v6925, %v6866
        %v6929 = vadd.f32 %v6846, %v6926
        %v6930 = vadd.f32 %v6847, %v6927
        %v6931 = vadd.f32 %v6848, %v6928
        %v6932 = vlaneseq
        %v6933 = vshrl.u32 %v6932, 7
        %v6934 = vsub.s32 0, %v6933
        %v6935 = vrot.slane %v5910, %v6934
        %v6936 = vlaneseq
        %v6937 = vshrl.u32 %v6936, 7
        %v6938 = vsub.s32 0, %v6937
        %v6939 = vrot.slane %v5911, %v6938
        %v6940 = vlaneseq
        %v6941 = vshrl.u32 %v6940, 7
        %v6942 = vsub.s32 0, %v6941
        %v6943 = vrot.slane %v5912, %v6942
        %6944 = vrot.lane.b32.xlu0 %v366, 105
        %v6945 = vpop.permute.xlu0 %6944
        %6946 = vrot.lane.b32.xlu0 %v6284, 105
        %v6947 = vpop.permute.xlu0 %6946
        %6948 = vrot.lane.b32.xlu0 %v367, 105
        %v6949 = vpop.permute.xlu0 %6948
        %v6950 = vsel %vm2309, %v6945, %v6947
        %v6951 = vsel %vm2309, %v6947, %v6949
        %v6955 = vmul.f32 %v6935, %v6950
        %v6956 = vmul.f32 %v6939, %v6951
        %v6957 = vmul.f32 %v6943, %v6949
        %v6958 = vadd.f32 %v6875, %v6955
        %v6959 = vadd.f32 %v6876, %v6956
        %v6960 = vadd.f32 %v6877, %v6957
        %v6961 = vlaneseq
        %v6962 = vshrl.u32 %v6961, 7
        %v6963 = vsub.s32 0, %v6962
        %v6964 = vrot.slane %v6027, %v6963
        %v6965 = vlaneseq
        %v6966 = vshrl.u32 %v6965, 7
        %v6967 = vsub.s32 0, %v6966
        %v6968 = vrot.slane %v6028, %v6967
        %v6969 = vlaneseq
        %v6970 = vshrl.u32 %v6969, 7
        %v6971 = vsub.s32 0, %v6970
        %v6972 = vrot.slane %v6029, %v6971
        %v6973 = vmul.f32 %v6964, %v6950
        %v6974 = vmul.f32 %v6968, %v6951
        %v6975 = vmul.f32 %v6972, %v6949
        %v6976 = vadd.f32 %v6893, %v6973
        %v6977 = vadd.f32 %v6894, %v6974
        %v6978 = vadd.f32 %v6895, %v6975
        %v6979 = vlaneseq
        %v6980 = vshrl.u32 %v6979, 7
        %v6981 = vsub.s32 0, %v6980
        %v6982 = vrot.slane %v6144, %v6981
        %v6983 = vlaneseq
        %v6984 = vshrl.u32 %v6983, 7
        %v6985 = vsub.s32 0, %v6984
        %v6986 = vrot.slane %v6145, %v6985
        %v6987 = vlaneseq
        %v6988 = vshrl.u32 %v6987, 7
        %v6989 = vsub.s32 0, %v6988
        %v6990 = vrot.slane %v6146, %v6989
        %v6991 = vmul.f32 %v6982, %v6950
        %v6992 = vmul.f32 %v6986, %v6951
        %v6993 = vmul.f32 %v6990, %v6949
        %v6994 = vadd.f32 %v6911, %v6991
        %v6995 = vadd.f32 %v6912, %v6992
        %v6996 = vadd.f32 %v6913, %v6993
        %v6997 = vlaneseq
        %v6998 = vshrl.u32 %v6997, 7
        %v6999 = vsub.s32 0, %v6998
        %v7000 = vrot.slane %v6261, %v6999
        %v7001 = vlaneseq
        %v7002 = vshrl.u32 %v7001, 7
        %v7003 = vsub.s32 0, %v7002
        %v7004 = vrot.slane %v6262, %v7003
        %v7005 = vlaneseq
        %v7006 = vshrl.u32 %v7005, 7
        %v7007 = vsub.s32 0, %v7006
        %v7008 = vrot.slane %v6263, %v7007
        %v7009 = vmul.f32 %v7000, %v6950
        %v7010 = vmul.f32 %v7004, %v6951
        %v7011 = vmul.f32 %v7008, %v6949
        %v7012 = vadd.f32 %v6929, %v7009
        %v7013 = vadd.f32 %v6930, %v7010
        %v7014 = vadd.f32 %v6931, %v7011
        %v7015 = vlaneseq
        %v7016 = vshrl.u32 %v7015, 7
        %v7017 = vsub.s32 1, %v7016
        %v7018 = vrot.slane %v5910, %v7017
        %v7019 = vlaneseq
        %v7020 = vshrl.u32 %v7019, 7
        %v7021 = vsub.s32 1, %v7020
        %v7022 = vrot.slane %v5911, %v7021
        %v7023 = vlaneseq
        %v7024 = vshrl.u32 %v7023, 7
        %v7025 = vsub.s32 1, %v7024
        %v7026 = vrot.slane %v5912, %v7025
        %7027 = vrot.lane.b32.xlu0 %v366, 104
        %v7028 = vpop.permute.xlu0 %7027
        %7029 = vrot.lane.b32.xlu0 %v6284, 104
        %v7030 = vpop.permute.xlu0 %7029
        %7031 = vrot.lane.b32.xlu0 %v367, 104
        %v7032 = vpop.permute.xlu0 %7031
        %vm7033 = vcmask 850944
        %v7034 = vsel %vm7033, %v7028, %v7030
        %v7035 = vsel %vm7033, %v7030, %v7032
        %v7039 = vmul.f32 %v7018, %v7034
        %v7040 = vmul.f32 %v7022, %v7035
        %v7041 = vmul.f32 %v7026, %v7032
        %v7042 = vadd.f32 %v6958, %v7039
        %v7043 = vadd.f32 %v6959, %v7040
        %v7044 = vadd.f32 %v6960, %v7041
        %v7045 = vlaneseq
        %v7046 = vshrl.u32 %v7045, 7
        %v7047 = vsub.s32 1, %v7046
        %v7048 = vrot.slane %v6027, %v7047
        %v7049 = vlaneseq
        %v7050 = vshrl.u32 %v7049, 7
        %v7051 = vsub.s32 1, %v7050
        %v7052 = vrot.slane %v6028, %v7051
        %v7053 = vlaneseq
        %v7054 = vshrl.u32 %v7053, 7
        %v7055 = vsub.s32 1, %v7054
        %v7056 = vrot.slane %v6029, %v7055
        %v7057 = vmul.f32 %v7048, %v7034
        %v7058 = vmul.f32 %v7052, %v7035
        %v7059 = vmul.f32 %v7056, %v7032
        %v7060 = vadd.f32 %v6976, %v7057
        %v7061 = vadd.f32 %v6977, %v7058
        %v7062 = vadd.f32 %v6978, %v7059
        %v7063 = vlaneseq
        %v7064 = vshrl.u32 %v7063, 7
        %v7065 = vsub.s32 1, %v7064
        %v7066 = vrot.slane %v6144, %v7065
        %v7067 = vlaneseq
        %v7068 = vshrl.u32 %v7067, 7
        %v7069 = vsub.s32 1, %v7068
        %v7070 = vrot.slane %v6145, %v7069
        %v7071 = vlaneseq
        %v7072 = vshrl.u32 %v7071, 7
        %v7073 = vsub.s32 1, %v7072
        %v7074 = vrot.slane %v6146, %v7073
        %v7075 = vmul.f32 %v7066, %v7034
        %v7076 = vmul.f32 %v7070, %v7035
        %v7077 = vmul.f32 %v7074, %v7032
        %v7078 = vadd.f32 %v6994, %v7075
        %v7079 = vadd.f32 %v6995, %v7076
        %v7080 = vadd.f32 %v6996, %v7077
        %v7081 = vlaneseq
        %v7082 = vshrl.u32 %v7081, 7
        %v7083 = vsub.s32 1, %v7082
        %v7084 = vrot.slane %v6261, %v7083
        %v7085 = vlaneseq
        %v7086 = vshrl.u32 %v7085, 7
        %v7087 = vsub.s32 1, %v7086
        %v7088 = vrot.slane %v6262, %v7087
        %v7089 = vlaneseq
        %v7090 = vshrl.u32 %v7089, 7
        %v7091 = vsub.s32 1, %v7090
        %v7092 = vrot.slane %v6263, %v7091
        %v7093 = vmul.f32 %v7084, %v7034
        %v7094 = vmul.f32 %v7088, %v7035
        %v7095 = vmul.f32 %v7092, %v7032
        %v7096 = vadd.f32 %v7012, %v7093
        %v7097 = vadd.f32 %v7013, %v7094
        %v7098 = vadd.f32 %v7014, %v7095
        %v7099 = vlaneseq
        %v7100 = vshrl.u32 %v7099, 7
        %v7101 = vsub.s32 2, %v7100
        %v7102 = vrot.slane %v5910, %v7101
        %v7103 = vlaneseq
        %v7104 = vshrl.u32 %v7103, 7
        %v7105 = vsub.s32 2, %v7104
        %v7106 = vrot.slane %v5911, %v7105
        %v7107 = vlaneseq
        %v7108 = vshrl.u32 %v7107, 7
        %v7109 = vsub.s32 2, %v7108
        %v7110 = vrot.slane %v5912, %v7109
        %7111 = vrot.lane.b32.xlu0 %v366, 88
        %v7112 = vpop.permute.xlu0 %7111
        %7113 = vrot.lane.b32.xlu0 %v6284, 88
        %v7114 = vpop.permute.xlu0 %7113
        %7115 = vrot.lane.b32.xlu0 %v367, 88
        %v7116 = vpop.permute.xlu0 %7115
        %vm7117 = vcmask 719872
        %v7118 = vsel %vm7117, %v7112, %v7114
        %v7119 = vsel %vm7117, %v7114, %v7116
        %v7123 = vmul.f32 %v7102, %v7118
        %v7124 = vmul.f32 %v7106, %v7119
        %v7125 = vmul.f32 %v7110, %v7116
        %v7126 = vadd.f32 %v7042, %v7123
        %v7127 = vadd.f32 %v7043, %v7124
        %v7128 = vadd.f32 %v7044, %v7125
        %v7129 = vlaneseq
        %v7130 = vshrl.u32 %v7129, 7
        %v7131 = vsub.s32 2, %v7130
        %v7132 = vrot.slane %v6027, %v7131
        %v7133 = vlaneseq
        %v7134 = vshrl.u32 %v7133, 7
        %v7135 = vsub.s32 2, %v7134
        %v7136 = vrot.slane %v6028, %v7135
        %v7137 = vlaneseq
        %v7138 = vshrl.u32 %v7137, 7
        %v7139 = vsub.s32 2, %v7138
        %v7140 = vrot.slane %v6029, %v7139
        %v7141 = vmul.f32 %v7132, %v7118
        %v7142 = vmul.f32 %v7136, %v7119
        %v7143 = vmul.f32 %v7140, %v7116
        %v7144 = vadd.f32 %v7060, %v7141
        %v7145 = vadd.f32 %v7061, %v7142
        %v7146 = vadd.f32 %v7062, %v7143
        %v7147 = vlaneseq
        %v7148 = vshrl.u32 %v7147, 7
        %v7149 = vsub.s32 2, %v7148
        %v7150 = vrot.slane %v6144, %v7149
        %v7151 = vlaneseq
        %v7152 = vshrl.u32 %v7151, 7
        %v7153 = vsub.s32 2, %v7152
        %v7154 = vrot.slane %v6145, %v7153
        %v7155 = vlaneseq
        %v7156 = vshrl.u32 %v7155, 7
        %v7157 = vsub.s32 2, %v7156
        %v7158 = vrot.slane %v6146, %v7157
        %v7159 = vmul.f32 %v7150, %v7118
        %v7160 = vmul.f32 %v7154, %v7119
        %v7161 = vmul.f32 %v7158, %v7116
        %v7162 = vadd.f32 %v7078, %v7159
        %v7163 = vadd.f32 %v7079, %v7160
        %v7164 = vadd.f32 %v7080, %v7161
        %v7165 = vlaneseq
        %v7166 = vshrl.u32 %v7165, 7
        %v7167 = vsub.s32 2, %v7166
        %v7168 = vrot.slane %v6261, %v7167
        %v7169 = vlaneseq
        %v7170 = vshrl.u32 %v7169, 7
        %v7171 = vsub.s32 2, %v7170
        %v7172 = vrot.slane %v6262, %v7171
        %v7173 = vlaneseq
        %v7174 = vshrl.u32 %v7173, 7
        %v7175 = vsub.s32 2, %v7174
        %v7176 = vrot.slane %v6263, %v7175
        %v7177 = vmul.f32 %v7168, %v7118
        %v7178 = vmul.f32 %v7172, %v7119
        %v7179 = vmul.f32 %v7176, %v7116
        %v7180 = vadd.f32 %v7096, %v7177
        %v7181 = vadd.f32 %v7097, %v7178
        %v7182 = vadd.f32 %v7098, %v7179
        %v7183 = vlaneseq
        %v7184 = vshrl.u32 %v7183, 7
        %v7185 = vsub.s32 3, %v7184
        %v7186 = vrot.slane %v5910, %v7185
        %v7187 = vlaneseq
        %v7188 = vshrl.u32 %v7187, 7
        %v7189 = vsub.s32 3, %v7188
        %v7190 = vrot.slane %v5911, %v7189
        %v7191 = vlaneseq
        %v7192 = vshrl.u32 %v7191, 7
        %v7193 = vsub.s32 3, %v7192
        %v7194 = vrot.slane %v5912, %v7193
        %7195 = vrot.lane.b32.xlu0 %v366, 87
        %v7196 = vpop.permute.xlu0 %7195
        %7197 = vrot.lane.b32.xlu0 %v6284, 87
        %v7198 = vpop.permute.xlu0 %7197
        %7199 = vrot.lane.b32.xlu0 %v367, 87
        %v7200 = vpop.permute.xlu0 %7199
        %v7201 = vsel %vm2817, %v7196, %v7198
        %v7202 = vsel %vm2817, %v7198, %v7200
        %v7206 = vmul.f32 %v7186, %v7201
        %v7207 = vmul.f32 %v7190, %v7202
        %v7208 = vmul.f32 %v7194, %v7200
        %v7209 = vadd.f32 %v7126, %v7206
        %v7210 = vadd.f32 %v7127, %v7207
        %v7211 = vadd.f32 %v7128, %v7208
        %v7212 = vlaneseq
        %v7213 = vshrl.u32 %v7212, 7
        %v7214 = vsub.s32 3, %v7213
        %v7215 = vrot.slane %v6027, %v7214
        %v7216 = vlaneseq
        %v7217 = vshrl.u32 %v7216, 7
        %v7218 = vsub.s32 3, %v7217
        %v7219 = vrot.slane %v6028, %v7218
        %v7220 = vlaneseq
        %v7221 = vshrl.u32 %v7220, 7
        %v7222 = vsub.s32 3, %v7221
        %v7223 = vrot.slane %v6029, %v7222
        %v7224 = vmul.f32 %v7215, %v7201
        %v7225 = vmul.f32 %v7219, %v7202
        %v7226 = vmul.f32 %v7223, %v7200
        %v7227 = vadd.f32 %v7144, %v7224
        %v7228 = vadd.f32 %v7145, %v7225
        %v7229 = vadd.f32 %v7146, %v7226
        %v7230 = vlaneseq
        %v7231 = vshrl.u32 %v7230, 7
        %v7232 = vsub.s32 3, %v7231
        %v7233 = vrot.slane %v6144, %v7232
        %v7234 = vlaneseq
        %v7235 = vshrl.u32 %v7234, 7
        %v7236 = vsub.s32 3, %v7235
        %v7237 = vrot.slane %v6145, %v7236
        %v7238 = vlaneseq
        %v7239 = vshrl.u32 %v7238, 7
        %v7240 = vsub.s32 3, %v7239
        %v7241 = vrot.slane %v6146, %v7240
        %v7242 = vmul.f32 %v7233, %v7201
        %v7243 = vmul.f32 %v7237, %v7202
        %v7244 = vmul.f32 %v7241, %v7200
        %v7245 = vadd.f32 %v7162, %v7242
        %v7246 = vadd.f32 %v7163, %v7243
        %v7247 = vadd.f32 %v7164, %v7244
        %v7248 = vlaneseq
        %v7249 = vshrl.u32 %v7248, 7
        %v7250 = vsub.s32 3, %v7249
        %v7251 = vrot.slane %v6261, %v7250
        %v7252 = vlaneseq
        %v7253 = vshrl.u32 %v7252, 7
        %v7254 = vsub.s32 3, %v7253
        %v7255 = vrot.slane %v6262, %v7254
        %v7256 = vlaneseq
        %v7257 = vshrl.u32 %v7256, 7
        %v7258 = vsub.s32 3, %v7257
        %v7259 = vrot.slane %v6263, %v7258
        %v7260 = vmul.f32 %v7251, %v7201
        %v7261 = vmul.f32 %v7255, %v7202
        %v7262 = vmul.f32 %v7259, %v7200
        %v7263 = vadd.f32 %v7180, %v7260
        %v7264 = vadd.f32 %v7181, %v7261
        %v7265 = vadd.f32 %v7182, %v7262
        %v7266 = vlaneseq
        %v7267 = vshrl.u32 %v7266, 7
        %v7268 = vsub.s32 4, %v7267
        %v7269 = vrot.slane %v5910, %v7268
        %v7270 = vlaneseq
        %v7271 = vshrl.u32 %v7270, 7
        %v7272 = vsub.s32 4, %v7271
        %v7273 = vrot.slane %v5911, %v7272
        %v7274 = vlaneseq
        %v7275 = vshrl.u32 %v7274, 7
        %v7276 = vsub.s32 4, %v7275
        %v7277 = vrot.slane %v5912, %v7276
        %7278 = vrot.lane.b32.xlu0 %v366, 86
        %v7279 = vpop.permute.xlu0 %7278
        %7280 = vrot.lane.b32.xlu0 %v6284, 86
        %v7281 = vpop.permute.xlu0 %7280
        %7282 = vrot.lane.b32.xlu0 %v367, 86
        %v7283 = vpop.permute.xlu0 %7282
        %v7284 = vsel %vm3325, %v7279, %v7281
        %v7285 = vsel %vm3325, %v7281, %v7283
        %v7289 = vmul.f32 %v7269, %v7284
        %v7290 = vmul.f32 %v7273, %v7285
        %v7291 = vmul.f32 %v7277, %v7283
        %v7292 = vadd.f32 %v7209, %v7289
        %v7293 = vadd.f32 %v7210, %v7290
        %v7294 = vadd.f32 %v7211, %v7291
        %v7295 = vlaneseq
        %v7296 = vshrl.u32 %v7295, 7
        %v7297 = vsub.s32 4, %v7296
        %v7298 = vrot.slane %v6027, %v7297
        %v7299 = vlaneseq
        %v7300 = vshrl.u32 %v7299, 7
        %v7301 = vsub.s32 4, %v7300
        %v7302 = vrot.slane %v6028, %v7301
        %v7303 = vlaneseq
        %v7304 = vshrl.u32 %v7303, 7
        %v7305 = vsub.s32 4, %v7304
        %v7306 = vrot.slane %v6029, %v7305
        %v7307 = vmul.f32 %v7298, %v7284
        %v7308 = vmul.f32 %v7302, %v7285
        %v7309 = vmul.f32 %v7306, %v7283
        %v7310 = vadd.f32 %v7227, %v7307
        %v7311 = vadd.f32 %v7228, %v7308
        %v7312 = vadd.f32 %v7229, %v7309
        %v7313 = vlaneseq
        %v7314 = vshrl.u32 %v7313, 7
        %v7315 = vsub.s32 4, %v7314
        %v7316 = vrot.slane %v6144, %v7315
        %v7317 = vlaneseq
        %v7318 = vshrl.u32 %v7317, 7
        %v7319 = vsub.s32 4, %v7318
        %v7320 = vrot.slane %v6145, %v7319
        %v7321 = vlaneseq
        %v7322 = vshrl.u32 %v7321, 7
        %v7323 = vsub.s32 4, %v7322
        %v7324 = vrot.slane %v6146, %v7323
        %v7325 = vmul.f32 %v7316, %v7284
        %v7326 = vmul.f32 %v7320, %v7285
        %v7327 = vmul.f32 %v7324, %v7283
        %v7328 = vadd.f32 %v7245, %v7325
        %v7329 = vadd.f32 %v7246, %v7326
        %v7330 = vadd.f32 %v7247, %v7327
        %v7331 = vlaneseq
        %v7332 = vshrl.u32 %v7331, 7
        %v7333 = vsub.s32 4, %v7332
        %v7334 = vrot.slane %v6261, %v7333
        %v7335 = vlaneseq
        %v7336 = vshrl.u32 %v7335, 7
        %v7337 = vsub.s32 4, %v7336
        %v7338 = vrot.slane %v6262, %v7337
        %v7339 = vlaneseq
        %v7340 = vshrl.u32 %v7339, 7
        %v7341 = vsub.s32 4, %v7340
        %v7342 = vrot.slane %v6263, %v7341
        %v7343 = vmul.f32 %v7334, %v7284
        %v7344 = vmul.f32 %v7338, %v7285
        %v7345 = vmul.f32 %v7342, %v7283
        %v7346 = vadd.f32 %v7263, %v7343
        %v7347 = vadd.f32 %v7264, %v7344
        %v7348 = vadd.f32 %v7265, %v7345
        %v7349 = vlaneseq
        %v7350 = vshrl.u32 %v7349, 7
        %v7351 = vsub.s32 5, %v7350
        %v7352 = vrot.slane %v5910, %v7351
        %v7353 = vlaneseq
        %v7354 = vshrl.u32 %v7353, 7
        %v7355 = vsub.s32 5, %v7354
        %v7356 = vrot.slane %v5911, %v7355
        %v7357 = vlaneseq
        %v7358 = vshrl.u32 %v7357, 7
        %v7359 = vsub.s32 5, %v7358
        %v7360 = vrot.slane %v5912, %v7359
        %7361 = vrot.lane.b32.xlu0 %v366, 85
        %v7362 = vpop.permute.xlu0 %7361
        %7363 = vrot.lane.b32.xlu0 %v6284, 85
        %v7364 = vpop.permute.xlu0 %7363
        %7365 = vrot.lane.b32.xlu0 %v367, 85
        %v7366 = vpop.permute.xlu0 %7365
        %v7367 = vsel %vm3833, %v7362, %v7364
        %v7368 = vsel %vm3833, %v7364, %v7366
        %v7372 = vmul.f32 %v7352, %v7367
        %v7373 = vmul.f32 %v7356, %v7368
        %v7374 = vmul.f32 %v7360, %v7366
        %v7375 = vadd.f32 %v7292, %v7372
        %v7376 = vadd.f32 %v7293, %v7373
        %v7377 = vadd.f32 %v7294, %v7374
        %v7378 = vlaneseq
        %v7379 = vshrl.u32 %v7378, 7
        %v7380 = vsub.s32 5, %v7379
        %v7381 = vrot.slane %v6027, %v7380
        %v7382 = vlaneseq
        %v7383 = vshrl.u32 %v7382, 7
        %v7384 = vsub.s32 5, %v7383
        %v7385 = vrot.slane %v6028, %v7384
        %v7386 = vlaneseq
        %v7387 = vshrl.u32 %v7386, 7
        %v7388 = vsub.s32 5, %v7387
        %v7389 = vrot.slane %v6029, %v7388
        %v7390 = vmul.f32 %v7381, %v7367
        %v7391 = vmul.f32 %v7385, %v7368
        %v7392 = vmul.f32 %v7389, %v7366
        %v7393 = vadd.f32 %v7310, %v7390
        %v7394 = vadd.f32 %v7311, %v7391
        %v7395 = vadd.f32 %v7312, %v7392
        %v7396 = vlaneseq
        %v7397 = vshrl.u32 %v7396, 7
        %v7398 = vsub.s32 5, %v7397
        %v7399 = vrot.slane %v6144, %v7398
        %v7400 = vlaneseq
        %v7401 = vshrl.u32 %v7400, 7
        %v7402 = vsub.s32 5, %v7401
        %v7403 = vrot.slane %v6145, %v7402
        %v7404 = vlaneseq
        %v7405 = vshrl.u32 %v7404, 7
        %v7406 = vsub.s32 5, %v7405
        %v7407 = vrot.slane %v6146, %v7406
        %v7408 = vmul.f32 %v7399, %v7367
        %v7409 = vmul.f32 %v7403, %v7368
        %v7410 = vmul.f32 %v7407, %v7366
        %v7411 = vadd.f32 %v7328, %v7408
        %v7412 = vadd.f32 %v7329, %v7409
        %v7413 = vadd.f32 %v7330, %v7410
        %v7414 = vlaneseq
        %v7415 = vshrl.u32 %v7414, 7
        %v7416 = vsub.s32 5, %v7415
        %v7417 = vrot.slane %v6261, %v7416
        %v7418 = vlaneseq
        %v7419 = vshrl.u32 %v7418, 7
        %v7420 = vsub.s32 5, %v7419
        %v7421 = vrot.slane %v6262, %v7420
        %v7422 = vlaneseq
        %v7423 = vshrl.u32 %v7422, 7
        %v7424 = vsub.s32 5, %v7423
        %v7425 = vrot.slane %v6263, %v7424
        %v7426 = vmul.f32 %v7417, %v7367
        %v7427 = vmul.f32 %v7421, %v7368
        %v7428 = vmul.f32 %v7425, %v7366
        %v7429 = vadd.f32 %v7346, %v7426
        %v7430 = vadd.f32 %v7347, %v7427
        %v7431 = vadd.f32 %v7348, %v7428
        %v7432 = vlaneseq
        %v7433 = vshrl.u32 %v7432, 7
        %v7434 = vsub.s32 6, %v7433
        %v7435 = vrot.slane %v5910, %v7434
        %v7436 = vlaneseq
        %v7437 = vshrl.u32 %v7436, 7
        %v7438 = vsub.s32 6, %v7437
        %v7439 = vrot.slane %v5911, %v7438
        %v7440 = vlaneseq
        %v7441 = vshrl.u32 %v7440, 7
        %v7442 = vsub.s32 6, %v7441
        %v7443 = vrot.slane %v5912, %v7442
        %7444 = vrot.lane.b32.xlu0 %v366, 84
        %v7445 = vpop.permute.xlu0 %7444
        %7446 = vrot.lane.b32.xlu0 %v6284, 84
        %v7447 = vpop.permute.xlu0 %7446
        %7448 = vrot.lane.b32.xlu0 %v367, 84
        %v7449 = vpop.permute.xlu0 %7448
        %vm7450 = vcmask 687104
        %v7451 = vsel %vm7450, %v7445, %v7447
        %v7452 = vsel %vm7450, %v7447, %v7449
        %v7456 = vmul.f32 %v7435, %v7451
        %v7457 = vmul.f32 %v7439, %v7452
        %v7458 = vmul.f32 %v7443, %v7449
        %v7459 = vadd.f32 %v7375, %v7456
        %v7460 = vadd.f32 %v7376, %v7457
        %v7461 = vadd.f32 %v7377, %v7458
        %v7462 = vlaneseq
        %v7463 = vshrl.u32 %v7462, 7
        %v7464 = vsub.s32 6, %v7463
        %v7465 = vrot.slane %v6027, %v7464
        %v7466 = vlaneseq
        %v7467 = vshrl.u32 %v7466, 7
        %v7468 = vsub.s32 6, %v7467
        %v7469 = vrot.slane %v6028, %v7468
        %v7470 = vlaneseq
        %v7471 = vshrl.u32 %v7470, 7
        %v7472 = vsub.s32 6, %v7471
        %v7473 = vrot.slane %v6029, %v7472
        %v7474 = vmul.f32 %v7465, %v7451
        %v7475 = vmul.f32 %v7469, %v7452
        %v7476 = vmul.f32 %v7473, %v7449
        %v7477 = vadd.f32 %v7393, %v7474
        %v7478 = vadd.f32 %v7394, %v7475
        %v7479 = vadd.f32 %v7395, %v7476
        %v7480 = vlaneseq
        %v7481 = vshrl.u32 %v7480, 7
        %v7482 = vsub.s32 6, %v7481
        %v7483 = vrot.slane %v6144, %v7482
        %v7484 = vlaneseq
        %v7485 = vshrl.u32 %v7484, 7
        %v7486 = vsub.s32 6, %v7485
        %v7487 = vrot.slane %v6145, %v7486
        %v7488 = vlaneseq
        %v7489 = vshrl.u32 %v7488, 7
        %v7490 = vsub.s32 6, %v7489
        %v7491 = vrot.slane %v6146, %v7490
        %v7492 = vmul.f32 %v7483, %v7451
        %v7493 = vmul.f32 %v7487, %v7452
        %v7494 = vmul.f32 %v7491, %v7449
        %v7495 = vadd.f32 %v7411, %v7492
        %v7496 = vadd.f32 %v7412, %v7493
        %v7497 = vadd.f32 %v7413, %v7494
        %v7498 = vlaneseq
        %v7499 = vshrl.u32 %v7498, 7
        %v7500 = vsub.s32 6, %v7499
        %v7501 = vrot.slane %v6261, %v7500
        %v7502 = vlaneseq
        %v7503 = vshrl.u32 %v7502, 7
        %v7504 = vsub.s32 6, %v7503
        %v7505 = vrot.slane %v6262, %v7504
        %v7506 = vlaneseq
        %v7507 = vshrl.u32 %v7506, 7
        %v7508 = vsub.s32 6, %v7507
        %v7509 = vrot.slane %v6263, %v7508
        %v7510 = vmul.f32 %v7501, %v7451
        %v7511 = vmul.f32 %v7505, %v7452
        %v7512 = vmul.f32 %v7509, %v7449
        %v7513 = vadd.f32 %v7429, %v7510
        %v7514 = vadd.f32 %v7430, %v7511
        %v7515 = vadd.f32 %v7431, %v7512
        %v7516 = vlaneseq
        %v7517 = vshrl.u32 %v7516, 7
        %v7518 = vsub.s32 7, %v7517
        %v7519 = vrot.slane %v5910, %v7518
        %v7520 = vlaneseq
        %v7521 = vshrl.u32 %v7520, 7
        %v7522 = vsub.s32 7, %v7521
        %v7523 = vrot.slane %v5911, %v7522
        %v7524 = vlaneseq
        %v7525 = vshrl.u32 %v7524, 7
        %v7526 = vsub.s32 7, %v7525
        %v7527 = vrot.slane %v5912, %v7526
        %7528 = vrot.lane.b32.xlu0 %v366, 68
        %v7529 = vpop.permute.xlu0 %7528
        %7530 = vrot.lane.b32.xlu0 %v6284, 68
        %v7531 = vpop.permute.xlu0 %7530
        %7532 = vrot.lane.b32.xlu0 %v367, 68
        %v7533 = vpop.permute.xlu0 %7532
        %vm7534 = vcmask 556032
        %v7535 = vsel %vm7534, %v7529, %v7531
        %v7536 = vsel %vm7534, %v7531, %v7533
        %v7540 = vmul.f32 %v7519, %v7535
        %v7541 = vmul.f32 %v7523, %v7536
        %v7542 = vmul.f32 %v7527, %v7533
        %v7543 = vadd.f32 %v7459, %v7540
        %v7544 = vadd.f32 %v7460, %v7541
        %v7545 = vadd.f32 %v7461, %v7542
        %v7546 = vlaneseq
        %v7547 = vshrl.u32 %v7546, 7
        %v7548 = vsub.s32 7, %v7547
        %v7549 = vrot.slane %v6027, %v7548
        %v7550 = vlaneseq
        %v7551 = vshrl.u32 %v7550, 7
        %v7552 = vsub.s32 7, %v7551
        %v7553 = vrot.slane %v6028, %v7552
        %v7554 = vlaneseq
        %v7555 = vshrl.u32 %v7554, 7
        %v7556 = vsub.s32 7, %v7555
        %v7557 = vrot.slane %v6029, %v7556
        %v7558 = vmul.f32 %v7549, %v7535
        %v7559 = vmul.f32 %v7553, %v7536
        %v7560 = vmul.f32 %v7557, %v7533
        %v7561 = vadd.f32 %v7477, %v7558
        %v7562 = vadd.f32 %v7478, %v7559
        %v7563 = vadd.f32 %v7479, %v7560
        %v7564 = vlaneseq
        %v7565 = vshrl.u32 %v7564, 7
        %v7566 = vsub.s32 7, %v7565
        %v7567 = vrot.slane %v6144, %v7566
        %v7568 = vlaneseq
        %v7569 = vshrl.u32 %v7568, 7
        %v7570 = vsub.s32 7, %v7569
        %v7571 = vrot.slane %v6145, %v7570
        %v7572 = vlaneseq
        %v7573 = vshrl.u32 %v7572, 7
        %v7574 = vsub.s32 7, %v7573
        %v7575 = vrot.slane %v6146, %v7574
        %v7576 = vmul.f32 %v7567, %v7535
        %v7577 = vmul.f32 %v7571, %v7536
        %v7578 = vmul.f32 %v7575, %v7533
        %v7579 = vadd.f32 %v7495, %v7576
        %v7580 = vadd.f32 %v7496, %v7577
        %v7581 = vadd.f32 %v7497, %v7578
        %v7582 = vlaneseq
        %v7583 = vshrl.u32 %v7582, 7
        %v7584 = vsub.s32 7, %v7583
        %v7585 = vrot.slane %v6261, %v7584
        %v7586 = vlaneseq
        %v7587 = vshrl.u32 %v7586, 7
        %v7588 = vsub.s32 7, %v7587
        %v7589 = vrot.slane %v6262, %v7588
        %v7590 = vlaneseq
        %v7591 = vshrl.u32 %v7590, 7
        %v7592 = vsub.s32 7, %v7591
        %v7593 = vrot.slane %v6263, %v7592
        %v7594 = vmul.f32 %v7585, %v7535
        %v7595 = vmul.f32 %v7589, %v7536
        %v7596 = vmul.f32 %v7593, %v7533
        %v7597 = vadd.f32 %v7513, %v7594
        %v7598 = vadd.f32 %v7514, %v7595
        %v7599 = vadd.f32 %v7515, %v7596
        %v7600 = vlaneseq
        %v7601 = vshrl.u32 %v7600, 7
        %v7602 = vsub.s32 0, %v7601
        %v7603 = vrot.slane %v5913, %v7602
        %v7604 = vlaneseq
        %v7605 = vshrl.u32 %v7604, 7
        %v7606 = vsub.s32 0, %v7605
        %v7607 = vrot.slane %v5914, %v7606
        %v7608 = vlaneseq
        %v7609 = vshrl.u32 %v7608, 7
        %v7610 = vsub.s32 0, %v7609
        %v7611 = vrot.slane %v5915, %v7610
        %7612 = vrot.lane.b32.xlu0 %v366, 67
        %v7613 = vpop.permute.xlu0 %7612
        %7614 = vrot.lane.b32.xlu0 %v6284, 67
        %v7615 = vpop.permute.xlu0 %7614
        %7616 = vrot.lane.b32.xlu0 %v367, 67
        %v7617 = vpop.permute.xlu0 %7616
        %v7618 = vsel %vm4341, %v7613, %v7615
        %v7619 = vsel %vm4341, %v7615, %v7617
        %v7623 = vmul.f32 %v7603, %v7618
        %v7624 = vmul.f32 %v7607, %v7619
        %v7625 = vmul.f32 %v7611, %v7617
        %v7626 = vadd.f32 %v7543, %v7623
        %v7627 = vadd.f32 %v7544, %v7624
        %v7628 = vadd.f32 %v7545, %v7625
        %v7629 = vlaneseq
        %v7630 = vshrl.u32 %v7629, 7
        %v7631 = vsub.s32 0, %v7630
        %v7632 = vrot.slane %v6030, %v7631
        %v7633 = vlaneseq
        %v7634 = vshrl.u32 %v7633, 7
        %v7635 = vsub.s32 0, %v7634
        %v7636 = vrot.slane %v6031, %v7635
        %v7637 = vlaneseq
        %v7638 = vshrl.u32 %v7637, 7
        %v7639 = vsub.s32 0, %v7638
        %v7640 = vrot.slane %v6032, %v7639
        %v7641 = vmul.f32 %v7632, %v7618
        %v7642 = vmul.f32 %v7636, %v7619
        %v7643 = vmul.f32 %v7640, %v7617
        %v7644 = vadd.f32 %v7561, %v7641
        %v7645 = vadd.f32 %v7562, %v7642
        %v7646 = vadd.f32 %v7563, %v7643
        %v7647 = vlaneseq
        %v7648 = vshrl.u32 %v7647, 7
        %v7649 = vsub.s32 0, %v7648
        %v7650 = vrot.slane %v6147, %v7649
        %v7651 = vlaneseq
        %v7652 = vshrl.u32 %v7651, 7
        %v7653 = vsub.s32 0, %v7652
        %v7654 = vrot.slane %v6148, %v7653
        %v7655 = vlaneseq
        %v7656 = vshrl.u32 %v7655, 7
        %v7657 = vsub.s32 0, %v7656
        %v7658 = vrot.slane %v6149, %v7657
        %v7659 = vmul.f32 %v7650, %v7618
        %v7660 = vmul.f32 %v7654, %v7619
        %v7661 = vmul.f32 %v7658, %v7617
        %v7662 = vadd.f32 %v7579, %v7659
        %v7663 = vadd.f32 %v7580, %v7660
        %v7664 = vadd.f32 %v7581, %v7661
        %v7665 = vlaneseq
        %v7666 = vshrl.u32 %v7665, 7
        %v7667 = vsub.s32 0, %v7666
        %v7668 = vrot.slane %v6264, %v7667
        %v7669 = vlaneseq
        %v7670 = vshrl.u32 %v7669, 7
        %v7671 = vsub.s32 0, %v7670
        %v7672 = vrot.slane %v6265, %v7671
        %v7673 = vlaneseq
        %v7674 = vshrl.u32 %v7673, 7
        %v7675 = vsub.s32 0, %v7674
        %v7676 = vrot.slane %v6266, %v7675
        %v7677 = vmul.f32 %v7668, %v7618
        %v7678 = vmul.f32 %v7672, %v7619
        %v7679 = vmul.f32 %v7676, %v7617
        %v7680 = vadd.f32 %v7597, %v7677
        %v7681 = vadd.f32 %v7598, %v7678
        %v7682 = vadd.f32 %v7599, %v7679
        %v7683 = vlaneseq
        %v7684 = vshrl.u32 %v7683, 7
        %v7685 = vsub.s32 1, %v7684
        %v7686 = vrot.slane %v5913, %v7685
        %v7687 = vlaneseq
        %v7688 = vshrl.u32 %v7687, 7
        %v7689 = vsub.s32 1, %v7688
        %v7690 = vrot.slane %v5914, %v7689
        %v7691 = vlaneseq
        %v7692 = vshrl.u32 %v7691, 7
        %v7693 = vsub.s32 1, %v7692
        %v7694 = vrot.slane %v5915, %v7693
        %7695 = vrot.lane.b32.xlu0 %v366, 66
        %v7696 = vpop.permute.xlu0 %7695
        %7697 = vrot.lane.b32.xlu0 %v6284, 66
        %v7698 = vpop.permute.xlu0 %7697
        %7699 = vrot.lane.b32.xlu0 %v367, 66
        %v7700 = vpop.permute.xlu0 %7699
        %v7701 = vsel %vm4849, %v7696, %v7698
        %v7702 = vsel %vm4849, %v7698, %v7700
        %v7706 = vmul.f32 %v7686, %v7701
        %v7707 = vmul.f32 %v7690, %v7702
        %v7708 = vmul.f32 %v7694, %v7700
        %v7709 = vadd.f32 %v7626, %v7706
        %v7710 = vadd.f32 %v7627, %v7707
        %v7711 = vadd.f32 %v7628, %v7708
        %v7712 = vlaneseq
        %v7713 = vshrl.u32 %v7712, 7
        %v7714 = vsub.s32 1, %v7713
        %v7715 = vrot.slane %v6030, %v7714
        %v7716 = vlaneseq
        %v7717 = vshrl.u32 %v7716, 7
        %v7718 = vsub.s32 1, %v7717
        %v7719 = vrot.slane %v6031, %v7718
        %v7720 = vlaneseq
        %v7721 = vshrl.u32 %v7720, 7
        %v7722 = vsub.s32 1, %v7721
        %v7723 = vrot.slane %v6032, %v7722
        %v7724 = vmul.f32 %v7715, %v7701
        %v7725 = vmul.f32 %v7719, %v7702
        %v7726 = vmul.f32 %v7723, %v7700
        %v7727 = vadd.f32 %v7644, %v7724
        %v7728 = vadd.f32 %v7645, %v7725
        %v7729 = vadd.f32 %v7646, %v7726
        %v7730 = vlaneseq
        %v7731 = vshrl.u32 %v7730, 7
        %v7732 = vsub.s32 1, %v7731
        %v7733 = vrot.slane %v6147, %v7732
        %v7734 = vlaneseq
        %v7735 = vshrl.u32 %v7734, 7
        %v7736 = vsub.s32 1, %v7735
        %v7737 = vrot.slane %v6148, %v7736
        %v7738 = vlaneseq
        %v7739 = vshrl.u32 %v7738, 7
        %v7740 = vsub.s32 1, %v7739
        %v7741 = vrot.slane %v6149, %v7740
        %v7742 = vmul.f32 %v7733, %v7701
        %v7743 = vmul.f32 %v7737, %v7702
        %v7744 = vmul.f32 %v7741, %v7700
        %v7745 = vadd.f32 %v7662, %v7742
        %v7746 = vadd.f32 %v7663, %v7743
        %v7747 = vadd.f32 %v7664, %v7744
        %v7748 = vlaneseq
        %v7749 = vshrl.u32 %v7748, 7
        %v7750 = vsub.s32 1, %v7749
        %v7751 = vrot.slane %v6264, %v7750
        %v7752 = vlaneseq
        %v7753 = vshrl.u32 %v7752, 7
        %v7754 = vsub.s32 1, %v7753
        %v7755 = vrot.slane %v6265, %v7754
        %v7756 = vlaneseq
        %v7757 = vshrl.u32 %v7756, 7
        %v7758 = vsub.s32 1, %v7757
        %v7759 = vrot.slane %v6266, %v7758
        %v7760 = vmul.f32 %v7751, %v7701
        %v7761 = vmul.f32 %v7755, %v7702
        %v7762 = vmul.f32 %v7759, %v7700
        %v7763 = vadd.f32 %v7680, %v7760
        %v7764 = vadd.f32 %v7681, %v7761
        %v7765 = vadd.f32 %v7682, %v7762
        %v7766 = vlaneseq
        %v7767 = vshrl.u32 %v7766, 7
        %v7768 = vsub.s32 2, %v7767
        %v7769 = vrot.slane %v5913, %v7768
        %v7770 = vlaneseq
        %v7771 = vshrl.u32 %v7770, 7
        %v7772 = vsub.s32 2, %v7771
        %v7773 = vrot.slane %v5914, %v7772
        %v7774 = vlaneseq
        %v7775 = vshrl.u32 %v7774, 7
        %v7776 = vsub.s32 2, %v7775
        %v7777 = vrot.slane %v5915, %v7776
        %7778 = vrot.lane.b32.xlu0 %v366, 65
        %v7779 = vpop.permute.xlu0 %7778
        %7780 = vrot.lane.b32.xlu0 %v6284, 65
        %v7781 = vpop.permute.xlu0 %7780
        %7782 = vrot.lane.b32.xlu0 %v367, 65
        %v7783 = vpop.permute.xlu0 %7782
        %v7784 = vsel %vm5357, %v7779, %v7781
        %v7785 = vsel %vm5357, %v7781, %v7783
        %v7789 = vmul.f32 %v7769, %v7784
        %v7790 = vmul.f32 %v7773, %v7785
        %v7791 = vmul.f32 %v7777, %v7783
        %v7792 = vadd.f32 %v7709, %v7789
        %v7793 = vadd.f32 %v7710, %v7790
        %v7794 = vadd.f32 %v7711, %v7791
        %v7795 = vlaneseq
        %v7796 = vshrl.u32 %v7795, 7
        %v7797 = vsub.s32 2, %v7796
        %v7798 = vrot.slane %v6030, %v7797
        %v7799 = vlaneseq
        %v7800 = vshrl.u32 %v7799, 7
        %v7801 = vsub.s32 2, %v7800
        %v7802 = vrot.slane %v6031, %v7801
        %v7803 = vlaneseq
        %v7804 = vshrl.u32 %v7803, 7
        %v7805 = vsub.s32 2, %v7804
        %v7806 = vrot.slane %v6032, %v7805
        %v7807 = vmul.f32 %v7798, %v7784
        %v7808 = vmul.f32 %v7802, %v7785
        %v7809 = vmul.f32 %v7806, %v7783
        %v7810 = vadd.f32 %v7727, %v7807
        %v7811 = vadd.f32 %v7728, %v7808
        %v7812 = vadd.f32 %v7729, %v7809
        %v7813 = vlaneseq
        %v7814 = vshrl.u32 %v7813, 7
        %v7815 = vsub.s32 2, %v7814
        %v7816 = vrot.slane %v6147, %v7815
        %v7817 = vlaneseq
        %v7818 = vshrl.u32 %v7817, 7
        %v7819 = vsub.s32 2, %v7818
        %v7820 = vrot.slane %v6148, %v7819
        %v7821 = vlaneseq
        %v7822 = vshrl.u32 %v7821, 7
        %v7823 = vsub.s32 2, %v7822
        %v7824 = vrot.slane %v6149, %v7823
        %v7825 = vmul.f32 %v7816, %v7784
        %v7826 = vmul.f32 %v7820, %v7785
        %v7827 = vmul.f32 %v7824, %v7783
        %v7828 = vadd.f32 %v7745, %v7825
        %v7829 = vadd.f32 %v7746, %v7826
        %v7830 = vadd.f32 %v7747, %v7827
        %v7831 = vlaneseq
        %v7832 = vshrl.u32 %v7831, 7
        %v7833 = vsub.s32 2, %v7832
        %v7834 = vrot.slane %v6264, %v7833
        %v7835 = vlaneseq
        %v7836 = vshrl.u32 %v7835, 7
        %v7837 = vsub.s32 2, %v7836
        %v7838 = vrot.slane %v6265, %v7837
        %v7839 = vlaneseq
        %v7840 = vshrl.u32 %v7839, 7
        %v7841 = vsub.s32 2, %v7840
        %v7842 = vrot.slane %v6266, %v7841
        %v7843 = vmul.f32 %v7834, %v7784
        %v7844 = vmul.f32 %v7838, %v7785
        %v7845 = vmul.f32 %v7842, %v7783
        %v7846 = vadd.f32 %v7763, %v7843
        %v7847 = vadd.f32 %v7764, %v7844
        %v7848 = vadd.f32 %v7765, %v7845
        %v7849 = vlaneseq
        %v7850 = vshrl.u32 %v7849, 7
        %v7851 = vsub.s32 3, %v7850
        %v7852 = vrot.slane %v5913, %v7851
        %v7853 = vlaneseq
        %v7854 = vshrl.u32 %v7853, 7
        %v7855 = vsub.s32 3, %v7854
        %v7856 = vrot.slane %v5914, %v7855
        %v7857 = vlaneseq
        %v7858 = vshrl.u32 %v7857, 7
        %v7859 = vsub.s32 3, %v7858
        %v7860 = vrot.slane %v5915, %v7859
        %7861 = vrot.lane.b32.xlu0 %v366, 64
        %v7862 = vpop.permute.xlu0 %7861
        %7863 = vrot.lane.b32.xlu0 %v6284, 64
        %v7864 = vpop.permute.xlu0 %7863
        %7865 = vrot.lane.b32.xlu0 %v367, 64
        %v7866 = vpop.permute.xlu0 %7865
        %v7867 = vsel %vm1333, %v7862, %v7864
        %v7868 = vsel %vm1333, %v7864, %v7866
        %v7872 = vmul.f32 %v7852, %v7867
        %v7873 = vmul.f32 %v7856, %v7868
        %v7874 = vmul.f32 %v7860, %v7866
        %v7875 = vadd.f32 %v7792, %v7872
        %v7876 = vadd.f32 %v7793, %v7873
        %v7877 = vadd.f32 %v7794, %v7874
        %v7878 = vlaneseq
        %v7879 = vshrl.u32 %v7878, 7
        %v7880 = vsub.s32 3, %v7879
        %v7881 = vrot.slane %v6030, %v7880
        %v7882 = vlaneseq
        %v7883 = vshrl.u32 %v7882, 7
        %v7884 = vsub.s32 3, %v7883
        %v7885 = vrot.slane %v6031, %v7884
        %v7886 = vlaneseq
        %v7887 = vshrl.u32 %v7886, 7
        %v7888 = vsub.s32 3, %v7887
        %v7889 = vrot.slane %v6032, %v7888
        %v7890 = vmul.f32 %v7881, %v7867
        %v7891 = vmul.f32 %v7885, %v7868
        %v7892 = vmul.f32 %v7889, %v7866
        %v7893 = vadd.f32 %v7810, %v7890
        %v7894 = vadd.f32 %v7811, %v7891
        %v7895 = vadd.f32 %v7812, %v7892
        %v7896 = vlaneseq
        %v7897 = vshrl.u32 %v7896, 7
        %v7898 = vsub.s32 3, %v7897
        %v7899 = vrot.slane %v6147, %v7898
        %v7900 = vlaneseq
        %v7901 = vshrl.u32 %v7900, 7
        %v7902 = vsub.s32 3, %v7901
        %v7903 = vrot.slane %v6148, %v7902
        %v7904 = vlaneseq
        %v7905 = vshrl.u32 %v7904, 7
        %v7906 = vsub.s32 3, %v7905
        %v7907 = vrot.slane %v6149, %v7906
        %v7908 = vmul.f32 %v7899, %v7867
        %v7909 = vmul.f32 %v7903, %v7868
        %v7910 = vmul.f32 %v7907, %v7866
        %v7911 = vadd.f32 %v7828, %v7908
        %v7912 = vadd.f32 %v7829, %v7909
        %v7913 = vadd.f32 %v7830, %v7910
        %v7914 = vlaneseq
        %v7915 = vshrl.u32 %v7914, 7
        %v7916 = vsub.s32 3, %v7915
        %v7917 = vrot.slane %v6264, %v7916
        %v7918 = vlaneseq
        %v7919 = vshrl.u32 %v7918, 7
        %v7920 = vsub.s32 3, %v7919
        %v7921 = vrot.slane %v6265, %v7920
        %v7922 = vlaneseq
        %v7923 = vshrl.u32 %v7922, 7
        %v7924 = vsub.s32 3, %v7923
        %v7925 = vrot.slane %v6266, %v7924
        %v7926 = vmul.f32 %v7917, %v7867
        %v7927 = vmul.f32 %v7921, %v7868
        %v7928 = vmul.f32 %v7925, %v7866
        %v7929 = vadd.f32 %v7846, %v7926
        %v7930 = vadd.f32 %v7847, %v7927
        %v7931 = vadd.f32 %v7848, %v7928
        %v7932 = vlaneseq
        %v7933 = vshrl.u32 %v7932, 7
        %v7934 = vsub.s32 4, %v7933
        %v7935 = vrot.slane %v5913, %v7934
        %v7936 = vlaneseq
        %v7937 = vshrl.u32 %v7936, 7
        %v7938 = vsub.s32 4, %v7937
        %v7939 = vrot.slane %v5914, %v7938
        %v7940 = vlaneseq
        %v7941 = vshrl.u32 %v7940, 7
        %v7942 = vsub.s32 4, %v7941
        %v7943 = vrot.slane %v5915, %v7942
        %v7944 = vcombine.high %v367, %v367
        %7945 = vrot.lane.b32.xlu0 %v366, 48
        %v7946 = vpop.permute.xlu0 %7945
        %7947 = vrot.lane.b32.xlu0 %v6284, 48
        %v7948 = vpop.permute.xlu0 %7947
        %7949 = vrot.lane.b32.xlu0 %v367, 48
        %v7950 = vpop.permute.xlu0 %7949
        %7951 = vrot.lane.b32.xlu0 %v7944, 48
        %v7952 = vpop.permute.xlu0 %7951
        %vm7953 = vcmask 392192
        %v7954 = vsel %vm7953, %v7946, %v7948
        %v7955 = vsel %vm7953, %v7948, %v7950
        %v7956 = vsel %vm7953, %v7950, %v7952
        %v7960 = vmul.f32 %v7935, %v7954
        %v7961 = vmul.f32 %v7939, %v7955
        %v7962 = vmul.f32 %v7943, %v7956
        %v7963 = vadd.f32 %v7875, %v7960
        %v7964 = vadd.f32 %v7876, %v7961
        %v7965 = vadd.f32 %v7877, %v7962
        %v7966 = vlaneseq
        %v7967 = vshrl.u32 %v7966, 7
        %v7968 = vsub.s32 4, %v7967
        %v7969 = vrot.slane %v6030, %v7968
        %v7970 = vlaneseq
        %v7971 = vshrl.u32 %v7970, 7
        %v7972 = vsub.s32 4, %v7971
        %v7973 = vrot.slane %v6031, %v7972
        %v7974 = vlaneseq
        %v7975 = vshrl.u32 %v7974, 7
        %v7976 = vsub.s32 4, %v7975
        %v7977 = vrot.slane %v6032, %v7976
        %v7978 = vmul.f32 %v7969, %v7954
        %v7979 = vmul.f32 %v7973, %v7955
        %v7980 = vmul.f32 %v7977, %v7956
        %v7981 = vadd.f32 %v7893, %v7978
        %v7982 = vadd.f32 %v7894, %v7979
        %v7983 = vadd.f32 %v7895, %v7980
        %v7984 = vlaneseq
        %v7985 = vshrl.u32 %v7984, 7
        %v7986 = vsub.s32 4, %v7985
        %v7987 = vrot.slane %v6147, %v7986
        %v7988 = vlaneseq
        %v7989 = vshrl.u32 %v7988, 7
        %v7990 = vsub.s32 4, %v7989
        %v7991 = vrot.slane %v6148, %v7990
        %v7992 = vlaneseq
        %v7993 = vshrl.u32 %v7992, 7
        %v7994 = vsub.s32 4, %v7993
        %v7995 = vrot.slane %v6149, %v7994
        %v7996 = vmul.f32 %v7987, %v7954
        %v7997 = vmul.f32 %v7991, %v7955
        %v7998 = vmul.f32 %v7995, %v7956
        %v7999 = vadd.f32 %v7911, %v7996
        %v8000 = vadd.f32 %v7912, %v7997
        %v8001 = vadd.f32 %v7913, %v7998
        %v8002 = vlaneseq
        %v8003 = vshrl.u32 %v8002, 7
        %v8004 = vsub.s32 4, %v8003
        %v8005 = vrot.slane %v6264, %v8004
        %v8006 = vlaneseq
        %v8007 = vshrl.u32 %v8006, 7
        %v8008 = vsub.s32 4, %v8007
        %v8009 = vrot.slane %v6265, %v8008
        %v8010 = vlaneseq
        %v8011 = vshrl.u32 %v8010, 7
        %v8012 = vsub.s32 4, %v8011
        %v8013 = vrot.slane %v6266, %v8012
        %v8014 = vmul.f32 %v8005, %v7954
        %v8015 = vmul.f32 %v8009, %v7955
        %v8016 = vmul.f32 %v8013, %v7956
        %v8017 = vadd.f32 %v7929, %v8014
        %v8018 = vadd.f32 %v7930, %v8015
        %v8019 = vadd.f32 %v7931, %v8016
        %v8020 = vlaneseq
        %v8021 = vshrl.u32 %v8020, 7
        %v8022 = vsub.s32 5, %v8021
        %v8023 = vrot.slane %v5913, %v8022
        %v8024 = vlaneseq
        %v8025 = vshrl.u32 %v8024, 7
        %v8026 = vsub.s32 5, %v8025
        %v8027 = vrot.slane %v5914, %v8026
        %v8028 = vlaneseq
        %v8029 = vshrl.u32 %v8028, 7
        %v8030 = vsub.s32 5, %v8029
        %v8031 = vrot.slane %v5915, %v8030
        %8032 = vrot.lane.b32.xlu0 %v366, 47
        %v8033 = vpop.permute.xlu0 %8032
        %8034 = vrot.lane.b32.xlu0 %v6284, 47
        %v8035 = vpop.permute.xlu0 %8034
        %8036 = vrot.lane.b32.xlu0 %v367, 47
        %v8037 = vpop.permute.xlu0 %8036
        %8038 = vrot.lane.b32.xlu0 %v7944, 47
        %v8039 = vpop.permute.xlu0 %8038
        %vm8040 = vcmask 384000
        %v8041 = vsel %vm8040, %v8033, %v8035
        %v8042 = vsel %vm8040, %v8035, %v8037
        %v8043 = vsel %vm8040, %v8037, %v8039
        %v8047 = vmul.f32 %v8023, %v8041
        %v8048 = vmul.f32 %v8027, %v8042
        %v8049 = vmul.f32 %v8031, %v8043
        %v8050 = vadd.f32 %v7963, %v8047
        %v8051 = vadd.f32 %v7964, %v8048
        %v8052 = vadd.f32 %v7965, %v8049
        %v8053 = vlaneseq
        %v8054 = vshrl.u32 %v8053, 7
        %v8055 = vsub.s32 5, %v8054
        %v8056 = vrot.slane %v6030, %v8055
        %v8057 = vlaneseq
        %v8058 = vshrl.u32 %v8057, 7
        %v8059 = vsub.s32 5, %v8058
        %v8060 = vrot.slane %v6031, %v8059
        %v8061 = vlaneseq
        %v8062 = vshrl.u32 %v8061, 7
        %v8063 = vsub.s32 5, %v8062
        %v8064 = vrot.slane %v6032, %v8063
        %v8065 = vmul.f32 %v8056, %v8041
        %v8066 = vmul.f32 %v8060, %v8042
        %v8067 = vmul.f32 %v8064, %v8043
        %v8068 = vadd.f32 %v7981, %v8065
        %v8069 = vadd.f32 %v7982, %v8066
        %v8070 = vadd.f32 %v7983, %v8067
        %v8071 = vlaneseq
        %v8072 = vshrl.u32 %v8071, 7
        %v8073 = vsub.s32 5, %v8072
        %v8074 = vrot.slane %v6147, %v8073
        %v8075 = vlaneseq
        %v8076 = vshrl.u32 %v8075, 7
        %v8077 = vsub.s32 5, %v8076
        %v8078 = vrot.slane %v6148, %v8077
        %v8079 = vlaneseq
        %v8080 = vshrl.u32 %v8079, 7
        %v8081 = vsub.s32 5, %v8080
        %v8082 = vrot.slane %v6149, %v8081
        %v8083 = vmul.f32 %v8074, %v8041
        %v8084 = vmul.f32 %v8078, %v8042
        %v8085 = vmul.f32 %v8082, %v8043
        %v8086 = vadd.f32 %v7999, %v8083
        %v8087 = vadd.f32 %v8000, %v8084
        %v8088 = vadd.f32 %v8001, %v8085
        %v8089 = vlaneseq
        %v8090 = vshrl.u32 %v8089, 7
        %v8091 = vsub.s32 5, %v8090
        %v8092 = vrot.slane %v6264, %v8091
        %v8093 = vlaneseq
        %v8094 = vshrl.u32 %v8093, 7
        %v8095 = vsub.s32 5, %v8094
        %v8096 = vrot.slane %v6265, %v8095
        %v8097 = vlaneseq
        %v8098 = vshrl.u32 %v8097, 7
        %v8099 = vsub.s32 5, %v8098
        %v8100 = vrot.slane %v6266, %v8099
        %v8101 = vmul.f32 %v8092, %v8041
        %v8102 = vmul.f32 %v8096, %v8042
        %v8103 = vmul.f32 %v8100, %v8043
        %v8104 = vadd.f32 %v8017, %v8101
        %v8105 = vadd.f32 %v8018, %v8102
        %v8106 = vadd.f32 %v8019, %v8103
        %v8107 = vlaneseq
        %v8108 = vshrl.u32 %v8107, 7
        %v8109 = vsub.s32 6, %v8108
        %v8110 = vrot.slane %v5913, %v8109
        %v8111 = vlaneseq
        %v8112 = vshrl.u32 %v8111, 7
        %v8113 = vsub.s32 6, %v8112
        %v8114 = vrot.slane %v5914, %v8113
        %v8115 = vlaneseq
        %v8116 = vshrl.u32 %v8115, 7
        %v8117 = vsub.s32 6, %v8116
        %v8118 = vrot.slane %v5915, %v8117
        %8119 = vrot.lane.b32.xlu0 %v366, 46
        %v8120 = vpop.permute.xlu0 %8119
        %8121 = vrot.lane.b32.xlu0 %v6284, 46
        %v8122 = vpop.permute.xlu0 %8121
        %8123 = vrot.lane.b32.xlu0 %v367, 46
        %v8124 = vpop.permute.xlu0 %8123
        %8125 = vrot.lane.b32.xlu0 %v7944, 46
        %v8126 = vpop.permute.xlu0 %8125
        %vm8127 = vcmask 375808
        %v8128 = vsel %vm8127, %v8120, %v8122
        %v8129 = vsel %vm8127, %v8122, %v8124
        %v8130 = vsel %vm8127, %v8124, %v8126
        %v8134 = vmul.f32 %v8110, %v8128
        %v8135 = vmul.f32 %v8114, %v8129
        %v8136 = vmul.f32 %v8118, %v8130
        %v8137 = vadd.f32 %v8050, %v8134
        %v8138 = vadd.f32 %v8051, %v8135
        %v8139 = vadd.f32 %v8052, %v8136
        %v8140 = vlaneseq
        %v8141 = vshrl.u32 %v8140, 7
        %v8142 = vsub.s32 6, %v8141
        %v8143 = vrot.slane %v6030, %v8142
        %v8144 = vlaneseq
        %v8145 = vshrl.u32 %v8144, 7
        %v8146 = vsub.s32 6, %v8145
        %v8147 = vrot.slane %v6031, %v8146
        %v8148 = vlaneseq
        %v8149 = vshrl.u32 %v8148, 7
        %v8150 = vsub.s32 6, %v8149
        %v8151 = vrot.slane %v6032, %v8150
        %v8152 = vmul.f32 %v8143, %v8128
        %v8153 = vmul.f32 %v8147, %v8129
        %v8154 = vmul.f32 %v8151, %v8130
        %v8155 = vadd.f32 %v8068, %v8152
        %v8156 = vadd.f32 %v8069, %v8153
        %v8157 = vadd.f32 %v8070, %v8154
        %v8158 = vlaneseq
        %v8159 = vshrl.u32 %v8158, 7
        %v8160 = vsub.s32 6, %v8159
        %v8161 = vrot.slane %v6147, %v8160
        %v8162 = vlaneseq
        %v8163 = vshrl.u32 %v8162, 7
        %v8164 = vsub.s32 6, %v8163
        %v8165 = vrot.slane %v6148, %v8164
        %v8166 = vlaneseq
        %v8167 = vshrl.u32 %v8166, 7
        %v8168 = vsub.s32 6, %v8167
        %v8169 = vrot.slane %v6149, %v8168
        %v8170 = vmul.f32 %v8161, %v8128
        %v8171 = vmul.f32 %v8165, %v8129
        %v8172 = vmul.f32 %v8169, %v8130
        %v8173 = vadd.f32 %v8086, %v8170
        %v8174 = vadd.f32 %v8087, %v8171
        %v8175 = vadd.f32 %v8088, %v8172
        %v8176 = vlaneseq
        %v8177 = vshrl.u32 %v8176, 7
        %v8178 = vsub.s32 6, %v8177
        %v8179 = vrot.slane %v6264, %v8178
        %v8180 = vlaneseq
        %v8181 = vshrl.u32 %v8180, 7
        %v8182 = vsub.s32 6, %v8181
        %v8183 = vrot.slane %v6265, %v8182
        %v8184 = vlaneseq
        %v8185 = vshrl.u32 %v8184, 7
        %v8186 = vsub.s32 6, %v8185
        %v8187 = vrot.slane %v6266, %v8186
        %v8188 = vmul.f32 %v8179, %v8128
        %v8189 = vmul.f32 %v8183, %v8129
        %v8190 = vmul.f32 %v8187, %v8130
        %v8191 = vadd.f32 %v8104, %v8188
        %v8192 = vadd.f32 %v8105, %v8189
        %v8193 = vadd.f32 %v8106, %v8190
        %v8194 = vlaneseq
        %v8195 = vshrl.u32 %v8194, 7
        %v8196 = vsub.s32 7, %v8195
        %v8197 = vrot.slane %v5913, %v8196
        %v8198 = vlaneseq
        %v8199 = vshrl.u32 %v8198, 7
        %v8200 = vsub.s32 7, %v8199
        %v8201 = vrot.slane %v5914, %v8200
        %v8202 = vlaneseq
        %v8203 = vshrl.u32 %v8202, 7
        %v8204 = vsub.s32 7, %v8203
        %v8205 = vrot.slane %v5915, %v8204
        %8206 = vrot.lane.b32.xlu0 %v366, 45
        %v8207 = vpop.permute.xlu0 %8206
        %8208 = vrot.lane.b32.xlu0 %v6284, 45
        %v8209 = vpop.permute.xlu0 %8208
        %8210 = vrot.lane.b32.xlu0 %v367, 45
        %v8211 = vpop.permute.xlu0 %8210
        %8212 = vrot.lane.b32.xlu0 %v7944, 45
        %v8213 = vpop.permute.xlu0 %8212
        %vm8214 = vcmask 367616
        %v8215 = vsel %vm8214, %v8207, %v8209
        %v8216 = vsel %vm8214, %v8209, %v8211
        %v8217 = vsel %vm8214, %v8211, %v8213
        %v8221 = vmul.f32 %v8197, %v8215
        %v8222 = vmul.f32 %v8201, %v8216
        %v8223 = vmul.f32 %v8205, %v8217
        %v8224 = vadd.f32 %v8137, %v8221
        %v8225 = vadd.f32 %v8138, %v8222
        %v8226 = vadd.f32 %v8139, %v8223
        %v8227 = vlaneseq
        %v8228 = vshrl.u32 %v8227, 7
        %v8229 = vsub.s32 7, %v8228
        %v8230 = vrot.slane %v6030, %v8229
        %v8231 = vlaneseq
        %v8232 = vshrl.u32 %v8231, 7
        %v8233 = vsub.s32 7, %v8232
        %v8234 = vrot.slane %v6031, %v8233
        %v8235 = vlaneseq
        %v8236 = vshrl.u32 %v8235, 7
        %v8237 = vsub.s32 7, %v8236
        %v8238 = vrot.slane %v6032, %v8237
        %v8239 = vmul.f32 %v8230, %v8215
        %v8240 = vmul.f32 %v8234, %v8216
        %v8241 = vmul.f32 %v8238, %v8217
        %v8242 = vadd.f32 %v8155, %v8239
        %v8243 = vadd.f32 %v8156, %v8240
        %v8244 = vadd.f32 %v8157, %v8241
        %v8245 = vlaneseq
        %v8246 = vshrl.u32 %v8245, 7
        %v8247 = vsub.s32 7, %v8246
        %v8248 = vrot.slane %v6147, %v8247
        %v8249 = vlaneseq
        %v8250 = vshrl.u32 %v8249, 7
        %v8251 = vsub.s32 7, %v8250
        %v8252 = vrot.slane %v6148, %v8251
        %v8253 = vlaneseq
        %v8254 = vshrl.u32 %v8253, 7
        %v8255 = vsub.s32 7, %v8254
        %v8256 = vrot.slane %v6149, %v8255
        %v8257 = vmul.f32 %v8248, %v8215
        %v8258 = vmul.f32 %v8252, %v8216
        %v8259 = vmul.f32 %v8256, %v8217
        %v8260 = vadd.f32 %v8173, %v8257
        %v8261 = vadd.f32 %v8174, %v8258
        %v8262 = vadd.f32 %v8175, %v8259
        %v8263 = vlaneseq
        %v8264 = vshrl.u32 %v8263, 7
        %v8265 = vsub.s32 7, %v8264
        %v8266 = vrot.slane %v6264, %v8265
        %v8267 = vlaneseq
        %v8268 = vshrl.u32 %v8267, 7
        %v8269 = vsub.s32 7, %v8268
        %v8270 = vrot.slane %v6265, %v8269
        %v8271 = vlaneseq
        %v8272 = vshrl.u32 %v8271, 7
        %v8273 = vsub.s32 7, %v8272
        %v8274 = vrot.slane %v6266, %v8273
        %v8275 = vmul.f32 %v8266, %v8215
        %v8276 = vmul.f32 %v8270, %v8216
        %v8277 = vmul.f32 %v8274, %v8217
        %v8278 = vadd.f32 %v8191, %v8275
        %v8279 = vadd.f32 %v8192, %v8276
        %v8280 = vadd.f32 %v8193, %v8277
        %v8281 = vlaneseq
        %v8282 = vshrl.u32 %v8281, 7
        %v8283 = vsub.s32 0, %v8282
        %v8284 = vrot.slane %v5916, %v8283
        %v8285 = vlaneseq
        %v8286 = vshrl.u32 %v8285, 7
        %v8287 = vsub.s32 0, %v8286
        %v8288 = vrot.slane %v5917, %v8287
        %v8289 = vlaneseq
        %v8290 = vshrl.u32 %v8289, 7
        %v8291 = vsub.s32 0, %v8290
        %v8292 = vrot.slane %v5918, %v8291
        %8293 = vrot.lane.b32.xlu0 %v366, 44
        %v8294 = vpop.permute.xlu0 %8293
        %8295 = vrot.lane.b32.xlu0 %v6284, 44
        %v8296 = vpop.permute.xlu0 %8295
        %8297 = vrot.lane.b32.xlu0 %v367, 44
        %v8298 = vpop.permute.xlu0 %8297
        %8299 = vrot.lane.b32.xlu0 %v7944, 44
        %v8300 = vpop.permute.xlu0 %8299
        %vm8301 = vcmask 359424
        %v8302 = vsel %vm8301, %v8294, %v8296
        %v8303 = vsel %vm8301, %v8296, %v8298
        %v8304 = vsel %vm8301, %v8298, %v8300
        %v8308 = vmul.f32 %v8284, %v8302
        %v8309 = vmul.f32 %v8288, %v8303
        %v8310 = vmul.f32 %v8292, %v8304
        %v8311 = vadd.f32 %v8224, %v8308
        %v8312 = vadd.f32 %v8225, %v8309
        %v8313 = vadd.f32 %v8226, %v8310
        %v8314 = vlaneseq
        %v8315 = vshrl.u32 %v8314, 7
        %v8316 = vsub.s32 0, %v8315
        %v8317 = vrot.slane %v6033, %v8316
        %v8318 = vlaneseq
        %v8319 = vshrl.u32 %v8318, 7
        %v8320 = vsub.s32 0, %v8319
        %v8321 = vrot.slane %v6034, %v8320
        %v8322 = vlaneseq
        %v8323 = vshrl.u32 %v8322, 7
        %v8324 = vsub.s32 0, %v8323
        %v8325 = vrot.slane %v6035, %v8324
        %v8326 = vmul.f32 %v8317, %v8302
        %v8327 = vmul.f32 %v8321, %v8303
        %v8328 = vmul.f32 %v8325, %v8304
        %v8329 = vadd.f32 %v8242, %v8326
        %v8330 = vadd.f32 %v8243, %v8327
        %v8331 = vadd.f32 %v8244, %v8328
        %v8332 = vlaneseq
        %v8333 = vshrl.u32 %v8332, 7
        %v8334 = vsub.s32 0, %v8333
        %v8335 = vrot.slane %v6150, %v8334
        %v8336 = vlaneseq
        %v8337 = vshrl.u32 %v8336, 7
        %v8338 = vsub.s32 0, %v8337
        %v8339 = vrot.slane %v6151, %v8338
        %v8340 = vlaneseq
        %v8341 = vshrl.u32 %v8340, 7
        %v8342 = vsub.s32 0, %v8341
        %v8343 = vrot.slane %v6152, %v8342
        %v8344 = vmul.f32 %v8335, %v8302
        %v8345 = vmul.f32 %v8339, %v8303
        %v8346 = vmul.f32 %v8343, %v8304
        %v8347 = vadd.f32 %v8260, %v8344
        %v8348 = vadd.f32 %v8261, %v8345
        %v8349 = vadd.f32 %v8262, %v8346
        %v8350 = vlaneseq
        %v8351 = vshrl.u32 %v8350, 7
        %v8352 = vsub.s32 0, %v8351
        %v8353 = vrot.slane %v6267, %v8352
        %v8354 = vlaneseq
        %v8355 = vshrl.u32 %v8354, 7
        %v8356 = vsub.s32 0, %v8355
        %v8357 = vrot.slane %v6268, %v8356
        %v8358 = vlaneseq
        %v8359 = vshrl.u32 %v8358, 7
        %v8360 = vsub.s32 0, %v8359
        %v8361 = vrot.slane %v6269, %v8360
        %v8362 = vmul.f32 %v8353, %v8302
        %v8363 = vmul.f32 %v8357, %v8303
        %v8364 = vmul.f32 %v8361, %v8304
        %v8365 = vadd.f32 %v8278, %v8362
        %v8366 = vadd.f32 %v8279, %v8363
        %v8367 = vadd.f32 %v8280, %v8364
        %8368 = vst [vmem:[%s364] sm:$0xf] %v8311
        %8369 = vst [vmem:[%s364 + $0x8] sm:$0xf] %v8312
        %vm8370 = vcmask 519168
        %8371 = vst.msk [vmem:[%s364 + $0x10] sm:$0xf] %vm8370, %v8313
        %v8375 = vrot.slane %v8329, 4
        %v8376 = vrot.slane %v8330, 4
        %v8377 = vrot.slane %v8331, 4
        %8381 = vst [vmem:[%s364] sm:$0xf0] %v8375
        %8382 = vst [vmem:[%s364 + $0x8] sm:$0xf0] %v8376
        %vm8383 = vcmask 523268
        %8384 = vst.msk [vmem:[%s364 + $0x10] sm:$0xf0] %vm8383, %v8377
        %8385 = vst [vmem:[%s364 + $0x18] sm:$0xf] %v8347
        %8386 = vst [vmem:[%s364 + $0x20] sm:$0xf] %v8348
        %8387 = vst.msk [vmem:[%s364 + $0x28] sm:$0xf] %vm8370, %v8349
        %v8391 = vrot.slane %v8365, 4
        %v8392 = vrot.slane %v8366, 4
        %v8393 = vrot.slane %v8367, 4
        %8397 = vst [vmem:[%s364 + $0x18] sm:$0xf0] %v8391
        %8398 = vst [vmem:[%s364 + $0x20] sm:$0xf0] %v8392
        %8399 = vst.msk [vmem:[%s364 + $0x28] sm:$0xf0] %vm8383, %v8393
        %s8400 = sand.u32 %s186, 1
        %s8401 = scalar_lea.sflag [#allocation4], %s8400
        %s8402 = sand.u32 %s186, 1
        %s8403 = smul.addr %s8402, 48
        %s8404 = scalar_lea.vmem [#allocation13], %s8403
        // Predicated region
        $region69: #{meta_gamma_forward.1} parent=43 // pred_check
          %p8405 = pneg %p196
        $region70: #{meta_gamma_forward.1} parent=43 // pred_check_branch
          %8407 = sbr.rel (%p8405) target = $region72
        $region71: #{meta_gamma_forward.1} parent=43 // pred_region
          %s8408 = smul.u32 3, %s31
          %s8410 = ssub.s32 768, 768
          %8411 = vsyncadd %s8401, %s8410
          %s8412 = smul.addr %s30, 6
          %s8413 = sadd.s32 %s8408, %s8412
          %s8414 = smul.addr %s8413, 128
          %s8415 = scalar_lea.hbm %s6, %s8414
          %s8416 = sshll.u32 %s8404, 4
          %s8417 = int_to_ptr.vmem [resolvable:$true] %s8416
          %8422 = dma.vmem_to_hbm [thread:$0]  %s8417, 768, %s8415, %s8401, 384, 384, 24
        $region72: #{meta_gamma_forward.1} parent=43 // pred_fallthru
          _
      $region44: #{meta_gamma_forward.1} parent=5 // pred_fallthru
        _
      %p8423 = scmp.le.s32.totalorder 2, %s21
      // Predicated region
      $region73: #{meta_gamma_forward.1} parent=5 // pred_check
        %p8424 = pneg %p8423
      $region74: #{meta_gamma_forward.1} parent=5 // pred_check_branch
        %8426 = sbr.rel (%p8424) target = $region76
      $region75: #{meta_gamma_forward.1} parent=5 // pred_region
        %s8427 = ssub.s32 %s21, 2
        // Predicated region
        $region77: #{meta_gamma_forward.1} parent=75 // pred_check
          %p8428 = pneg %p202
        $region78: #{meta_gamma_forward.1} parent=75 // pred_check_branch
          %8430 = sbr.rel (%p8428) target = $region80
        $region79: #{meta_gamma_forward.1} parent=75 // pred_region
          %s8431 = sand.u32 %s187, 1
          %s8432 = scalar_lea.sflag [#allocation4], %s8431
          %s8433 = sand.u32 %s187, 1
          %s8434 = smul.addr %s8433, 48
          %s8435 = scalar_lea.vmem [#allocation13], %s8434
          %8436 = dma.done %s8432, 768
        $region80: #{meta_gamma_forward.1} parent=75 // pred_fallthru
          _
      $region76: #{meta_gamma_forward.1} parent=5 // pred_fallthru
        _
    $region6: #{meta_gamma_forward.1} parent=1 // loop_footer
      %s25 = sadd.s32 1, %s21
    $region7: #{meta_gamma_forward.1} parent=1 // loop_footer_branch
      %20 = sbr.rel target = $region3
    $region8: #{meta_gamma_forward.1} parent=1 // loop_exit
      _
    %8437 = vsyncpa [#allocation3], 1
    %s8438 = scalar_lea.sflag [#allocation3], 1
    %8439 = vsyncpa %s8438, 1
    %8440 = vsyncpa [#allocation6], 1
    %8441 = vsyncpa [#allocation9], 1
    %8442 = vsyncpa [#allocation12], 1
    %8443 = vsyncpa [#allocation4], 1
    %s8444 = scalar_lea.sflag [#allocation4], 1
    %8445 = vsyncpa %s8444, 1

</llo_original>
